<compile_context>
chip_gen: v6e
topology: v6e:2x2x1
jax: 0.10.0
libtpu: 0.0.40
codegen_flags: <defaults>
</compile_context>

<pallas_src>
import jax
import jax.numpy as jnp
from jax.experimental import pallas as pl
from jax.experimental.pallas import tpu as pltpu

NEG_INF = -1.0e30   # Python float -> jaxpr literal (not a captured jax.Array)


# ---------------------------------------------------------------------------
# static layout of the packed bias vector (shared by wrapper and kernel)
# ---------------------------------------------------------------------------
def _bias_layout(D, R):
    G = 4 * D
    segs = [("b_q", D), ("cell_b", G), ("hid_b", 4 * G + R), ("hv_b", 5)]
    layout, cur = {}, 0
    for name, sz in segs:
        layout[name] = (cur, sz)
        cur += -(-sz // 128) * 128          # every segment starts lane-aligned
    return layout, cur


def _sigmoid(x):
    # single tanh (EUP) + 2 cheap VPU ops instead of exp + divide
    return 0.5 * (jnp.tanh(0.5 * x) + 1.0)


def _softmax(x):
    m = jnp.max(x, axis=-1, keepdims=True)
    e = jnp.exp(x - m)
    return e * pl.reciprocal(jnp.sum(e, axis=-1, keepdims=True), approx=True)


# ---------------------------------------------------------------------------
# the Pallas kernel (entire Decoder.forward hot path for one batch block)
# ---------------------------------------------------------------------------
def decoder_kernel(
    # data (batch-blocked)
    enc_ref, state_ref, prev_ref, mask_ref,
    # packed parameters
    enc_w_ref, hprev_w_ref, hid_w_ref, cell_w_ref, rec_w_ref,
    l2e1_w_ref, vhead_w_ref, relarg_w_ref, bias_ref,
    # packed outputs (lane-dense 2-D slabs)
    rel_out_ref, ptr_out_ref, state_out_ref, arg_out_ref,
):
    enc = enc_ref[...]                                # (B, T, D)
    B, T, D = enc.shape
    H = D                                             # hidden_dim == input_dim
    G = 4 * H                                         # per-direction gate width
    R = rel_out_ref.shape[-1]
    enc2d = enc.reshape(B * T, D)

    state = state_ref[...]                            # (B, 2D) = [h_prev | c_prev]
    h_prev = state[:, 0:D]
    c_prev = state[:, D:2 * D]
    prev_tuples = prev_ref[...]                       # (B, 9D)
    mask = mask_ref[...] > 0.5                        # (B, T) bool, True = pad

    layout, _ = _bias_layout(D, R)

    def seg(name):
        off, sz = layout[name]
        return bias_ref[:, off:off + sz]

    b_q, cell_b, hid_b, hv_b = seg("b_q"), seg("cell_b"), seg("hid_b"), seg("hv_b")
    head_b = hv_b[:, 0:4]
    v_b = hv_b[:, 4:5]

    # ---- fused projections (one wide matmul each) ---------------------------
    # enc rows:  [att_ctx (D) | e1 enc rows (8H) | e2 enc rows (8H)]
    enc_proj = jnp.dot(enc2d, enc_w_ref[...],
                       preferred_element_type=jnp.float32)        # (B*T, D+16H)
    # h_prev rows: [att_query (D) | LSTMCell recurrent gates (4H)]
    hprev_proj = jnp.dot(h_prev, hprev_w_ref[...],
                         preferred_element_type=jnp.float32)      # (B, D+4H)

    # ---- attention (att_type == 0: query = previous decoder hidden) --------
    uh = enc_proj[:, 0:D].reshape(B, T, D)
    wq = hprev_proj[:, 0:D] + b_q
    wquh = jnp.tanh(wq[:, None, :] + uh)                          # (B, T, D)
    scores = jnp.dot(wquh.reshape(B * T, D), vhead_w_ref[0:D, 4:5],
                     preferred_element_type=jnp.float32).reshape(B, T) + v_b
    scores = jnp.where(mask, NEG_INF, scores)
    attn = _softmax(scores)                                       # (B, T)
    ctx = jnp.einsum('bft,btd->bfd', attn[:, None, :], enc,
                     preferred_element_type=jnp.float32)[:, 0, :] # (B, D)

    # ---- LSTMCell (gate columns packed [i|f|o|g], sliced nonlinearities) ----
    gates = (jnp.dot(prev_tuples, cell_w_ref[0:9 * D, :],
                     preferred_element_type=jnp.float32)
             + jnp.dot(ctx, cell_w_ref[9 * D:10 * D, :],
                       preferred_element_type=jnp.float32)
             + hprev_proj[:, D:D + G] + cell_b)
    sg = _sigmoid(gates[:, 0:3 * H])             # i | f | o
    gg = jnp.tanh(gates[:, 3 * H:4 * H])         # g
    c_new = sg[:, H:2 * H] * c_prev + sg[:, 0:H] * gg
    hidden = sg[:, 2 * H:3 * H] * jnp.tanh(c_new)
    state_out_ref[...] = jnp.concatenate([hidden, c_new], axis=1)

    # time-invariant hidden projection: [e1 hid (8H) | e2 hid (8H) | rel hid (R)]
    hid_proj = jnp.dot(hidden, hid_w_ref[...],
                       preferred_element_type=jnp.float32) + hid_b  # (B, 16H+R)

    # ---- shared bi-LSTM: fwd/bwd merged into one recurrent matmul per step --
    def run_bilstm(x_pre, w_rec):
        h_f = jnp.zeros((B, H), jnp.float32)
        c_f = jnp.zeros((B, H), jnp.float32)
        h_b = jnp.zeros((B, H), jnp.float32)
        c_b = jnp.zeros((B, H), jnp.float32)
        hs_f = [None] * T
        hs_b = [None] * T
        for t in range(T):                       # small static T -> unrolled
            tb = T - 1 - t
            hcat = jnp.concatenate([h_f, h_b], axis=1)            # (B, 2H)
            g_hh = jnp.dot(hcat, w_rec, preferred_element_type=jnp.float32)
            gf = x_pre[:, t, 0:G] + g_hh[:, 0:G]
            gb = x_pre[:, tb, G:2 * G] + g_hh[:, G:2 * G]
            sf = _sigmoid(gf[:, 0:3 * H])
            gfg = jnp.tanh(gf[:, 3 * H:4 * H])
            sb = _sigmoid(gb[:, 0:3 * H])
            gbg = jnp.tanh(gb[:, 3 * H:4 * H])
            c_f = sf[:, H:2 * H] * c_f + sf[:, 0:H] * gfg
            h_f = sf[:, 2 * H:3 * H] * jnp.tanh(c_f)
            c_b = sb[:, H:2 * H] * c_b + sb[:, 0:H] * gbg
            h_b = sb[:, 2 * H:3 * H] * jnp.tanh(c_b)
            hs_f[t] = h_f
            hs_b[tb] = h_b
        return jnp.stack(hs_f, axis=1), jnp.stack(hs_b, axis=1)    # (B,T,H) x2

    # e1 bi-LSTM over [enc | hidden]
    x1 = (enc_proj[:, D:D + 2 * G].reshape(B, T, 2 * G)
          + hid_proj[:, 0:2 * G][:, None, :])
    e1f, e1b = run_bilstm(x1, rec_w_ref[0:2 * H, :])
    seq1 = jnp.concatenate([e1f, e1b], axis=2)                     # (B, T, 2H)
    seq1_2d = seq1.reshape(B * T, 2 * H)

    # e2 bi-LSTM over [enc | hidden | e1_fwd | e1_bwd]
    x2 = ((enc_proj[:, D + 2 * G:D + 4 * G]
           + jnp.dot(seq1_2d, l2e1_w_ref[...],
                     preferred_element_type=jnp.float32)).reshape(B, T, 2 * G)
          + hid_proj[:, 2 * G:4 * G][:, None, :])
    e2f, e2b = run_bilstm(x2, rec_w_ref[2 * H:4 * H, :])
    seq2 = jnp.concatenate([e2f, e2b], axis=2)
    seq2_2d = seq2.reshape(B * T, 2 * H)

    # ---- pointer heads: four Linear(2D,1) as two small matmuls --------------
    s1 = (jnp.dot(seq1_2d, vhead_w_ref[:, 0:2],
                  preferred_element_type=jnp.float32).reshape(B, T, 2)
          + head_b[:, 0:2].reshape(1, 1, 2))
    s2 = (jnp.dot(seq2_2d, vhead_w_ref[:, 2:4],
                  preferred_element_type=jnp.float32).reshape(B, T, 2)
          + head_b[:, 2:4].reshape(1, 1, 2))

    a1s = _softmax(jnp.where(mask, NEG_INF, s1[:, :, 0]))
    a1e = _softmax(jnp.where(mask, NEG_INF, s1[:, :, 1]))
    a2s = _softmax(jnp.where(mask, NEG_INF, s2[:, :, 0]))
    a2e = _softmax(jnp.where(mask, NEG_INF, s2[:, :, 1]))
    ptr_out_ref[...] = jnp.concatenate([a1s, a1e, a2s, a2e], axis=1)  # (B, 4T)

    # ---- arg pooling as batched matmuls on the MXU --------------------------
    # reference quirk preserved: *sv uses END weights, *ev uses START weights
    w1 = jnp.stack([a1e, a1s], axis=1)                             # (B, 2, T)
    w2 = jnp.stack([a2e, a2s], axis=1)
    arg1 = jnp.einsum('bft,bth->bfh', w1, seq1,
                      preferred_element_type=jnp.float32).reshape(B, 4 * H)
    arg2 = jnp.einsum('bft,bth->bfh', w2, seq2,
                      preferred_element_type=jnp.float32).reshape(B, 4 * H)
    argcat = jnp.concatenate([arg1, arg2], axis=1)                 # (B, 8D)
    arg_out_ref[...] = argcat

    # ---- relation classifier (hidden contribution already in hid_proj) ------
    rel = (hid_proj[:, 4 * G:4 * G + R]
           + jnp.dot(argcat, relarg_w_ref[...],
                     preferred_element_type=jnp.float32))
    rel_out_ref[...] = _softmax(rel)


# ---------------------------------------------------------------------------
# parameter init (PyTorch layout) and packing into the kernel layout
# ---------------------------------------------------------------------------
def init_params(key, D, R):
    H = D

    def norm(k, shape, scale=0.1):
        return (scale * jax.random.normal(k, shape)).astype(jnp.float32)

    ks = iter(jax.random.split(key, 40))
    p = {}
    p["att_wctx"] = norm(next(ks), (D, D))            # linear_ctx.weight (out,in)
    p["att_wq"] = norm(next(ks), (D, D))
    p["att_bq"] = norm(next(ks), (D,))
    p["att_vw"] = norm(next(ks), (1, D))
    p["att_vb"] = norm(next(ks), (1,))
    p["cell_wih"] = norm(next(ks), (4 * H, 10 * D))
    p["cell_whh"] = norm(next(ks), (4 * H, H))
    p["cell_bih"] = norm(next(ks), (4 * H,))
    p["cell_bhh"] = norm(next(ks), (4 * H,))
    for name, in_dim in (("e1", 2 * D), ("e2", 4 * D)):
        for d in ("f", "b"):
            p[f"{name}{d}_wih"] = norm(next(ks), (4 * H, in_dim))
            p[f"{name}{d}_whh"] = norm(next(ks), (4 * H, H))
            p[f"{name}{d}_bih"] = norm(next(ks), (4 * H,))
            p[f"{name}{d}_bhh"] = norm(next(ks), (4 * H,))
    for name in ("a1s", "a1e", "a2s", "a2e"):
        p[f"{name}_w"] = norm(next(ks), (1, 2 * D))
        p[f"{name}_b"] = norm(next(ks), (1,))
    p["rel_w"] = norm(next(ks), (R, 9 * D))
    p["rel_b"] = norm(next(ks), (R,))
    return p


def _reorder_gate_cols(w):
    """Last-axis gate columns i|f|g|o (PyTorch) -> i|f|o|g (kernel layout)."""
    h4 = w.shape[-1]
    h = h4 // 4
    return jnp.concatenate([w[..., 0:2 * h], w[..., 3 * h:4 * h],
                            w[..., 2 * h:3 * h]], axis=-1)


def pack_params(p, D, R):
    """Split / transpose / fuse the PyTorch-layout params for the kernel."""
    H = D
    G = 4 * H

    def lstm_cols(w):             # pytorch (4H, in) -> (in, 4H) cols [i|f|o|g]
        return _reorder_gate_cols(w.T)

    e1f_ih, e1b_ih = lstm_cols(p["e1f_wih"]), lstm_cols(p["e1b_wih"])   # (2D,4H)
    e2f_ih, e2b_ih = lstm_cols(p["e2f_wih"]), lstm_cols(p["e2b_wih"])   # (4D,4H)
    e1f_hh, e1b_hh = lstm_cols(p["e1f_whh"]), lstm_cols(p["e1b_whh"])   # (H,4H)
    e2f_hh, e2b_hh = lstm_cols(p["e2f_whh"]), lstm_cols(p["e2b_whh"])

    def dirs(wf, wb):             # (rows,4H)+(rows,4H) -> (rows,8H) [fwd|bwd]
        return jnp.concatenate([wf, wb], axis=1)

    # fused enc-side projection columns
    enc_w = jnp.concatenate([
        p["att_wctx"].T,                               # attention ctx     (D)
        dirs(e1f_ih[0:D], e1b_ih[0:D]),                # e1 enc rows       (8H)
        dirs(e2f_ih[0:D], e2b_ih[0:D]),                # e2 enc rows       (8H)
    ], axis=1)                                         # (D, D+16H)

    # fused h_prev projection columns
    hprev_w = jnp.concatenate([p["att_wq"].T,          # attention query   (D)
                               lstm_cols(p["cell_whh"])], axis=1)   # (D, D+4H)

    # fused new-hidden projection columns
    hid_w = jnp.concatenate([
        dirs(e1f_ih[D:2 * D], e1b_ih[D:2 * D]),        # e1 hidden rows    (8H)
        dirs(e2f_ih[D:2 * D], e2b_ih[D:2 * D]),        # e2 hidden rows    (8H)
        p["rel_w"].T[0:D],                             # rel hidden rows   (R)
    ], axis=1)                                         # (D, 16H+R)

    # LSTMCell input gates: rows [prev_tuples (9D); ctx (D)]
    cell_w = lstm_cols(p["cell_wih"])                  # (10D, 4H)

    # block-diagonal recurrent weights of the two bi-LSTMs, stacked
    def rec_block(wf, wb):                             # (H,4H)x2 -> (2H,8H)
        z = jnp.zeros((H, G), jnp.float32)
        return jnp.concatenate([jnp.concatenate([wf, z], axis=1),
                                jnp.concatenate([z, wb], axis=1)], axis=0)
    rec_w = jnp.concatenate([rec_block(e1f_hh, e1b_hh),
                             rec_block(e2f_hh, e2b_hh)], axis=0)    # (4H, 8H)

    # e1-output rows of the e2 bi-LSTM input weights
    l2e1_w = jnp.concatenate([dirs(e2f_ih[2 * D:3 * D], e2b_ih[2 * D:3 * D]),
                              dirs(e2f_ih[3 * D:4 * D], e2b_ih[3 * D:4 * D])],
                             axis=0)                                 # (2D, 8H)

    # pointer heads + attention v as one small weight (2D, 5)
    v_col = jnp.concatenate([p["att_vw"].T, jnp.zeros((D, 1), jnp.float32)],
                            axis=0)
    vhead_w = jnp.concatenate([p["a1s_w"].T, p["a1e_w"].T,
                               p["a2s_w"].T, p["a2e_w"].T, v_col], axis=1)

    relarg_w = p["rel_w"].T[D:9 * D]                                 # (8D, R)

    # --- packed biases -------------------------------------------------------
    def lstm_bias(bih, bhh):
        return _reorder_gate_cols(bih + bhh)

    layout, total = _bias_layout(D, R)
    bias = jnp.zeros((1, total), jnp.float32)

    def put(b, name, vec):
        off, sz = layout[name]
        return b.at[0, off:off + sz].set(vec.reshape(-1))

    bias = put(bias, "b_q", p["att_bq"])
    bias = put(bias, "cell_b", lstm_bias(p["cell_bih"], p["cell_bhh"]))
    bias = put(bias, "hid_b", jnp.concatenate([
        lstm_bias(p["e1f_bih"], p["e1f_bhh"]),
        lstm_bias(p["e1b_bih"], p["e1b_bhh"]),
        lstm_bias(p["e2f_bih"], p["e2f_bhh"]),
        lstm_bias(p["e2b_bih"], p["e2b_bhh"]),
        p["rel_b"],
    ]))
    bias = put(bias, "hv_b", jnp.concatenate(
        [p["a1s_b"], p["a1e_b"], p["a2s_b"], p["a2e_b"], p["att_vb"]]))

    return dict(enc_w=enc_w, hprev_w=hprev_w, hid_w=hid_w, cell_w=cell_w,
                rec_w=rec_w, l2e1_w=l2e1_w, vhead_w=vhead_w,
                relarg_w=relarg_w, bias=bias)


# ---------------------------------------------------------------------------
# wrapper: packs I/O, calls the Pallas kernel, unpacks like the PyTorch module
# ---------------------------------------------------------------------------
def decoder_forward(packed, prev_tuples, h_prev, c_prev, enc_hs, src_mask,
                    *, batch_block=None):
    B, T, D = enc_hs.shape
    R = packed["relarg_w"].shape[1]
    # Default: whole batch per grid step (v5e/v6e have a single TensorCore, the
    # grid is a sequential loop there).  On v7x pass batch_block = B // 2 so
    # the "parallel" axis puts one half on each TensorCore.
    BB = B if batch_block is None else batch_block
    assert B % BB == 0 and (BB == B or BB % 8 == 0)
    grid = (B // BB,)

    state_in = jnp.concatenate([h_prev, c_prev], axis=1)          # (B, 2D)
    mask_f = src_mask.astype(jnp.float32)                         # (B, T)

    def blk2(width):
        return pl.BlockSpec((BB, width), lambda i: (i, 0))

    def wfull(arr):
        # TODO(synk): pipeline_mode=pl.Buffered(1) would halve weight VMEM
        # (the block never changes across the grid).
        return pl.BlockSpec(arr.shape, lambda i: (0, 0))

    in_specs = [
        pl.BlockSpec((BB, T, D), lambda i: (i, 0, 0)),   # enc_hs
        blk2(2 * D),                                     # [h_prev | c_prev]
        blk2(9 * D),                                     # prev_tuples
        blk2(T),                                         # src_mask
        wfull(packed["enc_w"]), wfull(packed["hprev_w"]), wfull(packed["hid_w"]),
        wfull(packed["cell_w"]), wfull(packed["rec_w"]), wfull(packed["l2e1_w"]),
        wfull(packed["vhead_w"]), wfull(packed["relarg_w"]), wfull(packed["bias"]),
    ]
    out_specs = [blk2(R), blk2(4 * T), blk2(2 * D), blk2(8 * D)]
    out_shape = (
        jax.ShapeDtypeStruct((B, R), jnp.float32),        # rel softmax
        jax.ShapeDtypeStruct((B, 4 * T), jnp.float32),    # [a1s|a1e|a2s|a2e]
        jax.ShapeDtypeStruct((B, 2 * D), jnp.float32),    # [hidden|cell]
        jax.ShapeDtypeStruct((B, 8 * D), jnp.float32),    # [arg1|arg2]
    )

    rel, ptr, state_out, args = pl.pallas_call(
        decoder_kernel,
        out_shape=out_shape,
        grid_spec=pltpu.PrefetchScalarGridSpec(
            num_scalar_prefetch=0,
            grid=grid,
            in_specs=in_specs,
            out_specs=out_specs),
        compiler_params=pltpu.CompilerParams(
            dimension_semantics=("parallel",),
            vmem_limit_bytes=32 * 1024 * 1024),
    )(enc_hs, state_in, prev_tuples, mask_f,
      packed["enc_w"], packed["hprev_w"], packed["hid_w"], packed["cell_w"],
      packed["rec_w"], packed["l2e1_w"], packed["vhead_w"], packed["relarg_w"],
      packed["bias"])

    hidden = state_out[:, 0:D]
    cell = state_out[:, D:2 * D]
    a1s = ptr[:, 0 * T:1 * T][:, None, :]
    a1e = ptr[:, 1 * T:2 * T][:, None, :]
    a2s = ptr[:, 2 * T:3 * T][:, None, :]
    a2e = ptr[:, 3 * T:4 * T][:, None, :]
    arg1 = args[:, 0:4 * D]
    arg2 = args[:, 4 * D:8 * D]
    return (rel[:, None, :], a1s, a1e, a2s, a2e, (hidden, cell), arg1, arg2)


if __name__ == "__main__":
    B, T, D, R = 2, 8, 32, 16   # batch, src_time_steps, input_dim(=hidden), rel_size
    key = jax.random.PRNGKey(0)
    k_par, k_enc, k_h, k_c, k_prev = jax.random.split(key, 5)

    params = init_params(k_par, D, R)
    packed = pack_params(params, D, R)

    enc_hs = jax.random.normal(k_enc, (B, T, D), jnp.float32)
    h_prev = jax.random.normal(k_h, (B, D), jnp.float32)
    c_prev = jax.random.normal(k_c, (B, D), jnp.float32)
    prev_tuples = jax.random.normal(k_prev, (B, 9 * D), jnp.float32)
    lengths = jnp.array([T, T - 2])
    src_mask = jnp.arange(T)[None, :] >= lengths[:, None]   # True = padding

    # whole batch per grid step (grid=(1,)); on v7x use batch_block=B//2
    outs = decoder_forward(packed, prev_tuples, h_prev, c_prev,
                           enc_hs, src_mask)
    outs = jax.block_until_ready(outs)

    rel, a1s, a1e, a2s, a2e, (hidden, cell), arg1, arg2 = outs
    assert rel.shape == (B, 1, R) and a1s.shape == (B, 1, T)
    assert hidden.shape == (B, D) and cell.shape == (B, D)
    assert arg1.shape == (B, 4 * D) and arg2.shape == (B, 4 * D)
    assert bool(jnp.all(jnp.isfinite(rel)))
    # approx-reciprocal softmax -> allow a slightly looser sum tolerance
    assert bool(jnp.allclose(jnp.sum(rel, axis=-1), 1.0, atol=5e-3))
    assert bool(jnp.allclose(jnp.sum(a1s, axis=-1), 1.0, atol=5e-3))
    assert bool(jnp.allclose(jnp.sum(a2e, axis=-1), 1.0, atol=5e-3))
    print("KERNEL_OK")
</pallas_src>

<mosaic_0001>
module attributes {stable_mosaic.version = 11 : i64} {
  func.func @decoder_kernel(%arg0: i32, %arg1: memref<2x8x32xf32, #tpu.memory_space<vmem>>, %arg2: memref<2x64xf32, #tpu.memory_space<vmem>>, %arg3: memref<2x288xf32, #tpu.memory_space<vmem>>, %arg4: memref<2x8xf32, #tpu.memory_space<vmem>>, %arg5: memref<32x544xf32, #tpu.memory_space<vmem>>, %arg6: memref<32x160xf32, #tpu.memory_space<vmem>>, %arg7: memref<32x528xf32, #tpu.memory_space<vmem>>, %arg8: memref<320x128xf32, #tpu.memory_space<vmem>>, %arg9: memref<128x256xf32, #tpu.memory_space<vmem>>, %arg10: memref<64x256xf32, #tpu.memory_space<vmem>>, %arg11: memref<64x5xf32, #tpu.memory_space<vmem>>, %arg12: memref<256x16xf32, #tpu.memory_space<vmem>>, %arg13: memref<1x1024xf32, #tpu.memory_space<vmem>>, %arg14: memref<2x16xf32, #tpu.memory_space<vmem>>, %arg15: memref<2x32xf32, #tpu.memory_space<vmem>>, %arg16: memref<2x64xf32, #tpu.memory_space<vmem>>, %arg17: memref<2x256xf32, #tpu.memory_space<vmem>>) attributes {dimension_semantics = [#tpu.dimension_semantics<parallel>], iteration_bounds = array<i64: 1>, scalar_prefetch = 0 : i64, scratch_operands = 0 : i64, tpu.core_type = #tpu.core_type<tc>, window_params = [{transform_indices = @transform_0, window_bounds = array<i64: 2, 8, 32>}, {transform_indices = @transform_1, window_bounds = array<i64: 2, 64>}, {transform_indices = @transform_2, window_bounds = array<i64: 2, 288>}, {transform_indices = @transform_3, window_bounds = array<i64: 2, 8>}, {pipeline_mode = #tpu.pipeline_mode<synchronous>, transform_indices = @transform_4, window_bounds = array<i64: 32, 544>}, {pipeline_mode = #tpu.pipeline_mode<synchronous>, transform_indices = @transform_5, window_bounds = array<i64: 32, 160>}, {pipeline_mode = #tpu.pipeline_mode<synchronous>, transform_indices = @transform_6, window_bounds = array<i64: 32, 528>}, {pipeline_mode = #tpu.pipeline_mode<synchronous>, transform_indices = @transform_7, window_bounds = array<i64: 320, 128>}, {pipeline_mode = #tpu.pipeline_mode<synchronous>, transform_indices = @transform_8, window_bounds = array<i64: 128, 256>}, {pipeline_mode = #tpu.pipeline_mode<synchronous>, transform_indices = @transform_9, window_bounds = array<i64: 64, 256>}, {pipeline_mode = #tpu.pipeline_mode<synchronous>, transform_indices = @transform_10, window_bounds = array<i64: 64, 5>}, {pipeline_mode = #tpu.pipeline_mode<synchronous>, transform_indices = @transform_11, window_bounds = array<i64: 256, 16>}, {pipeline_mode = #tpu.pipeline_mode<synchronous>, transform_indices = @transform_12, window_bounds = array<i64: 1, 1024>}, {transform_indices = @transform_13, window_bounds = array<i64: 2, 16>}, {transform_indices = @transform_14, window_bounds = array<i64: 2, 32>}, {transform_indices = @transform_15, window_bounds = array<i64: 2, 64>}, {transform_indices = @transform_16, window_bounds = array<i64: 2, 256>}]} {
    %c0 = arith.constant 0 : index
    %c0_0 = arith.constant 0 : index
    %c0_1 = arith.constant 0 : index
    %0 = vector.load %arg1[%c0, %c0_0, %c0_1] : memref<2x8x32xf32, #tpu.memory_space<vmem>>, vector<2x8x32xf32>
    %1 = vector.shape_cast %0 : vector<2x8x32xf32> to vector<16x32xf32>
    %c0_2 = arith.constant 0 : index
    %c0_3 = arith.constant 0 : index
    %2 = vector.load %arg2[%c0_2, %c0_3] : memref<2x64xf32, #tpu.memory_space<vmem>>, vector<2x64xf32>
    %3 = vector.extract_strided_slice %2 {offsets = [0, 0], sizes = [2, 32], strides = [1, 1]} : vector<2x64xf32> to vector<2x32xf32>
    %4 = vector.extract_strided_slice %2 {offsets = [0, 32], sizes = [2, 32], strides = [1, 1]} : vector<2x64xf32> to vector<2x32xf32>
    %c0_4 = arith.constant 0 : index
    %c0_5 = arith.constant 0 : index
    %5 = vector.load %arg3[%c0_4, %c0_5] : memref<2x288xf32, #tpu.memory_space<vmem>>, vector<2x288xf32>
    %c0_6 = arith.constant 0 : index
    %c0_7 = arith.constant 0 : index
    %6 = vector.load %arg4[%c0_6, %c0_7] : memref<2x8xf32, #tpu.memory_space<vmem>>, vector<2x8xf32>
    %cst = arith.constant 5.000000e-01 : f32
    %7 = vector.broadcast %cst : f32 to vector<2x8xf32>
    %8 = arith.cmpf ogt, %6, %7 : vector<2x8xf32>
    %c0_8 = arith.constant 0 : index
    %c0_9 = arith.constant 0 : index
    %9 = vector.load %arg13[%c0_8, %c0_9] : memref<1x1024xf32, #tpu.memory_space<vmem>>, vector<1x32xf32>
    %c0_10 = arith.constant 0 : index
    %c128 = arith.constant 128 : index
    %10 = vector.load %arg13[%c0_10, %c128] : memref<1x1024xf32, #tpu.memory_space<vmem>>, vector<1x128xf32>
    %c0_11 = arith.constant 0 : index
    %c256 = arith.constant 256 : index
    %11 = vector.load %arg13[%c0_11, %c256] : memref<1x1024xf32, #tpu.memory_space<vmem>>, vector<1x528xf32>
    %c0_12 = arith.constant 0 : index
    %c896 = arith.constant 896 : index
    %12 = vector.load %arg13[%c0_12, %c896] : memref<1x1024xf32, #tpu.memory_space<vmem>>, vector<1x5xf32>
    %13 = vector.extract_strided_slice %12 {offsets = [0, 0], sizes = [1, 4], strides = [1, 1]} : vector<1x5xf32> to vector<1x4xf32>
    %14 = vector.extract_strided_slice %12 {offsets = [0, 4], sizes = [1, 1], strides = [1, 1]} : vector<1x5xf32> to vector<1x1xf32>
    %c0_13 = arith.constant 0 : index
    %c0_14 = arith.constant 0 : index
    %15 = vector.load %arg5[%c0_13, %c0_14] : memref<32x544xf32, #tpu.memory_space<vmem>>, vector<32x544xf32>
    %cst_15 = arith.constant dense<0.000000e+00> : vector<16x544xf32>
    %16 = tpu.matmul %1, %15, %cst_15 {dimension_numbers = #tpu.dot_dimension_numbers<[1], [0], [0], [1], [0, 0, 1, 1], [], []>} : vector<16x32xf32>, vector<32x544xf32>, vector<16x544xf32> -> vector<16x544xf32>
    %c0_16 = arith.constant 0 : index
    %c0_17 = arith.constant 0 : index
    %17 = vector.load %arg6[%c0_16, %c0_17] : memref<32x160xf32, #tpu.memory_space<vmem>>, vector<32x160xf32>
    %cst_18 = arith.constant dense<0.000000e+00> : vector<2x160xf32>
    %18 = tpu.matmul %3, %17, %cst_18 {dimension_numbers = #tpu.dot_dimension_numbers<[1], [0], [0], [1], [0, 0, 1, 1], [], []>} : vector<2x32xf32>, vector<32x160xf32>, vector<2x160xf32> -> vector<2x160xf32>
    %19 = vector.extract_strided_slice %16 {offsets = [0, 0], sizes = [16, 32], strides = [1, 1]} : vector<16x544xf32> to vector<16x32xf32>
    %20 = vector.shape_cast %19 : vector<16x32xf32> to vector<2x8x32xf32>
    %21 = vector.extract_strided_slice %18 {offsets = [0, 0], sizes = [2, 32], strides = [1, 1]} : vector<2x160xf32> to vector<2x32xf32>
    %22 = vector.broadcast %9 : vector<1x32xf32> to vector<2x32xf32>
    %23 = arith.addf %21, %22 : vector<2x32xf32>
    %24 = vector.shape_cast %23 : vector<2x32xf32> to vector<2x1x32xf32>
    %25 = vector.broadcast %24 : vector<2x1x32xf32> to vector<2x8x32xf32>
    %26 = arith.addf %25, %20 : vector<2x8x32xf32>
    %27 = math.tanh %26 : vector<2x8x32xf32>
    %28 = vector.shape_cast %27 : vector<2x8x32xf32> to vector<16x32xf32>
    %c0_19 = arith.constant 0 : index
    %c4 = arith.constant 4 : index
    %29 = vector.load %arg11[%c0_19, %c4] : memref<64x5xf32, #tpu.memory_space<vmem>>, vector<32x1xf32>
    %cst_20 = arith.constant dense<0.000000e+00> : vector<16x1xf32>
    %30 = tpu.matmul %28, %29, %cst_20 {dimension_numbers = #tpu.dot_dimension_numbers<[1], [0], [0], [1], [0, 0, 1, 1], [], []>} : vector<16x32xf32>, vector<32x1xf32>, vector<16x1xf32> -> vector<16x1xf32>
    %31 = vector.shape_cast %30 : vector<16x1xf32> to vector<2x8xf32>
    %32 = vector.broadcast %14 : vector<1x1xf32> to vector<2x8xf32>
    %33 = arith.addf %31, %32 : vector<2x8xf32>
    %cst_21 = arith.constant -1.000000e+30 : f32
    %34 = vector.broadcast %cst_21 : f32 to vector<2x8xf32>
    %35 = arith.select %8, %34, %33 : vector<2x8xi1>, vector<2x8xf32>
    %cst_22 = arith.constant dense<0xFF800000> : vector<2xf32>
    %36 = vector.multi_reduction <maximumf>, %35, %cst_22 [1] : vector<2x8xf32> to vector<2xf32>
    %37 = vector.shape_cast %36 : vector<2xf32> to vector<2x1xf32>
    %38 = vector.broadcast %37 : vector<2x1xf32> to vector<2x8xf32>
    %39 = arith.subf %35, %38 : vector<2x8xf32>
    %40 = math.exp %39 : vector<2x8xf32>
    %cst_23 = arith.constant dense<0.000000e+00> : vector<2xf32>
    %41 = vector.multi_reduction <add>, %40, %cst_23 [1] : vector<2x8xf32> to vector<2xf32>
    %42 = vector.shape_cast %41 : vector<2xf32> to vector<2x1xf32>
    %43 = tpu.reciprocal %42 {approx = true} : vector<2x1xf32> -> vector<2x1xf32>
    %44 = vector.broadcast %43 : vector<2x1xf32> to vector<2x8xf32>
    %45 = arith.mulf %40, %44 : vector<2x8xf32>
    %46 = vector.shape_cast %45 : vector<2x8xf32> to vector<2x1x8xf32>
    "tpu.trace_start"() <{level = 10 : i32, message = "bft,btd->bfd"}> : () -> ()
    %cst_24 = arith.constant dense<0.000000e+00> : vector<2x1x32xf32>
    %47 = tpu.matmul %46, %0, %cst_24 {dimension_numbers = #tpu.dot_dimension_numbers<[2], [1], [1], [2], [0, 0, 0, 1, 1, 2], [0], [0]>} : vector<2x1x8xf32>, vector<2x8x32xf32>, vector<2x1x32xf32> -> vector<2x1x32xf32>
    "tpu.trace_stop"() : () -> ()
    %48 = vector.shape_cast %47 : vector<2x1x32xf32> to vector<2x32xf32>
    %c0_25 = arith.constant 0 : index
    %c0_26 = arith.constant 0 : index
    %49 = vector.load %arg8[%c0_25, %c0_26] : memref<320x128xf32, #tpu.memory_space<vmem>>, vector<288x128xf32>
    %cst_27 = arith.constant dense<0.000000e+00> : vector<2x128xf32>
    %50 = tpu.matmul %5, %49, %cst_27 {dimension_numbers = #tpu.dot_dimension_numbers<[1], [0], [0], [1], [0, 0, 1, 1], [], []>} : vector<2x288xf32>, vector<288x128xf32>, vector<2x128xf32> -> vector<2x128xf32>
    %c288 = arith.constant 288 : index
    %c0_28 = arith.constant 0 : index
    %51 = vector.load %arg8[%c288, %c0_28] : memref<320x128xf32, #tpu.memory_space<vmem>>, vector<32x128xf32>
    %cst_29 = arith.constant dense<0.000000e+00> : vector<2x128xf32>
    %52 = tpu.matmul %48, %51, %cst_29 {dimension_numbers = #tpu.dot_dimension_numbers<[1], [0], [0], [1], [0, 0, 1, 1], [], []>} : vector<2x32xf32>, vector<32x128xf32>, vector<2x128xf32> -> vector<2x128xf32>
    %53 = arith.addf %50, %52 : vector<2x128xf32>
    %54 = vector.extract_strided_slice %18 {offsets = [0, 32], sizes = [2, 128], strides = [1, 1]} : vector<2x160xf32> to vector<2x128xf32>
    %55 = arith.addf %53, %54 : vector<2x128xf32>
    %56 = vector.broadcast %10 : vector<1x128xf32> to vector<2x128xf32>
    %57 = arith.addf %55, %56 : vector<2x128xf32>
    %58 = vector.extract_strided_slice %57 {offsets = [0, 0], sizes = [2, 96], strides = [1, 1]} : vector<2x128xf32> to vector<2x96xf32>
    %cst_30 = arith.constant 5.000000e-01 : f32
    %59 = vector.broadcast %cst_30 : f32 to vector<2x96xf32>
    %60 = arith.mulf %59, %58 : vector<2x96xf32>
    %61 = math.tanh %60 : vector<2x96xf32>
    %cst_31 = arith.constant 1.000000e+00 : f32
    %62 = vector.broadcast %cst_31 : f32 to vector<2x96xf32>
    %63 = arith.addf %61, %62 : vector<2x96xf32>
    %cst_32 = arith.constant 5.000000e-01 : f32
    %64 = vector.broadcast %cst_32 : f32 to vector<2x96xf32>
    %65 = arith.mulf %64, %63 : vector<2x96xf32>
    %66 = vector.extract_strided_slice %57 {offsets = [0, 96], sizes = [2, 32], strides = [1, 1]} : vector<2x128xf32> to vector<2x32xf32>
    %67 = math.tanh %66 : vector<2x32xf32>
    %68 = vector.extract_strided_slice %65 {offsets = [0, 32], sizes = [2, 32], strides = [1, 1]} : vector<2x96xf32> to vector<2x32xf32>
    %69 = arith.mulf %68, %4 : vector<2x32xf32>
    %70 = vector.extract_strided_slice %65 {offsets = [0, 0], sizes = [2, 32], strides = [1, 1]} : vector<2x96xf32> to vector<2x32xf32>
    %71 = arith.mulf %70, %67 : vector<2x32xf32>
    %72 = arith.addf %69, %71 : vector<2x32xf32>
    %73 = vector.extract_strided_slice %65 {offsets = [0, 64], sizes = [2, 32], strides = [1, 1]} : vector<2x96xf32> to vector<2x32xf32>
    %74 = math.tanh %72 : vector<2x32xf32>
    %75 = arith.mulf %73, %74 : vector<2x32xf32>
    %76 = tpu.concatenate %75, %72 in 1 : vector<2x32xf32>, vector<2x32xf32> -> vector<2x64xf32>
    %c0_33 = arith.constant 0 : index
    %c0_34 = arith.constant 0 : index
    %77 = vector.load %arg16[%c0_33, %c0_34] : memref<2x64xf32, #tpu.memory_space<vmem>>, vector<2x64xf32>
    tpu.vector_store %arg16[%c0_33, %c0_34], %76 {strides = array<i32>} : memref<2x64xf32, #tpu.memory_space<vmem>>, vector<2x64xf32>,
    %c0_35 = arith.constant 0 : index
    %c0_36 = arith.constant 0 : index
    %78 = vector.load %arg7[%c0_35, %c0_36] : memref<32x528xf32, #tpu.memory_space<vmem>>, vector<32x528xf32>
    %cst_37 = arith.constant dense<0.000000e+00> : vector<2x528xf32>
    %79 = tpu.matmul %75, %78, %cst_37 {dimension_numbers = #tpu.dot_dimension_numbers<[1], [0], [0], [1], [0, 0, 1, 1], [], []>} : vector<2x32xf32>, vector<32x528xf32>, vector<2x528xf32> -> vector<2x528xf32>
    %80 = vector.broadcast %11 : vector<1x528xf32> to vector<2x528xf32>
    %81 = arith.addf %79, %80 : vector<2x528xf32>
    %82 = vector.extract_strided_slice %16 {offsets = [0, 32], sizes = [16, 256], strides = [1, 1]} : vector<16x544xf32> to vector<16x256xf32>
    %83 = vector.shape_cast %82 : vector<16x256xf32> to vector<2x8x256xf32>
    %84 = vector.extract_strided_slice %81 {offsets = [0, 0], sizes = [2, 256], strides = [1, 1]} : vector<2x528xf32> to vector<2x256xf32>
    %85 = vector.shape_cast %84 : vector<2x256xf32> to vector<2x1x256xf32>
    %86 = vector.broadcast %85 : vector<2x1x256xf32> to vector<2x8x256xf32>
    %87 = arith.addf %83, %86 : vector<2x8x256xf32>
    %c0_38 = arith.constant 0 : index
    %c0_39 = arith.constant 0 : index
    %88 = vector.load %arg9[%c0_38, %c0_39] : memref<128x256xf32, #tpu.memory_space<vmem>>, vector<64x256xf32>
    %cst_40 = arith.constant 0.000000e+00 : f32
    %89 = vector.broadcast %cst_40 : f32 to vector<2x32xf32>
    %cst_41 = arith.constant 0.000000e+00 : f32
    %90 = vector.broadcast %cst_41 : f32 to vector<2x32xf32>
    %cst_42 = arith.constant 0.000000e+00 : f32
    %91 = vector.broadcast %cst_42 : f32 to vector<2x32xf32>
    %cst_43 = arith.constant 0.000000e+00 : f32
    %92 = vector.broadcast %cst_43 : f32 to vector<2x32xf32>
    %93 = tpu.concatenate %89, %91 in 1 : vector<2x32xf32>, vector<2x32xf32> -> vector<2x64xf32>
    %cst_44 = arith.constant dense<0.000000e+00> : vector<2x256xf32>
    %94 = tpu.matmul %93, %88, %cst_44 {dimension_numbers = #tpu.dot_dimension_numbers<[1], [0], [0], [1], [0, 0, 1, 1], [], []>} : vector<2x64xf32>, vector<64x256xf32>, vector<2x256xf32> -> vector<2x256xf32>
    %95 = vector.extract_strided_slice %87 {offsets = [0, 0, 0], sizes = [2, 1, 128], strides = [1, 1, 1]} : vector<2x8x256xf32> to vector<2x1x128xf32>
    %96 = vector.shape_cast %95 : vector<2x1x128xf32> to vector<2x128xf32>
    %97 = vector.extract_strided_slice %94 {offsets = [0, 0], sizes = [2, 128], strides = [1, 1]} : vector<2x256xf32> to vector<2x128xf32>
    %98 = arith.addf %96, %97 : vector<2x128xf32>
    %99 = vector.extract_strided_slice %87 {offsets = [0, 7, 128], sizes = [2, 1, 128], strides = [1, 1, 1]} : vector<2x8x256xf32> to vector<2x1x128xf32>
    %100 = vector.shape_cast %99 : vector<2x1x128xf32> to vector<2x128xf32>
    %101 = vector.extract_strided_slice %94 {offsets = [0, 128], sizes = [2, 128], strides = [1, 1]} : vector<2x256xf32> to vector<2x128xf32>
    %102 = arith.addf %100, %101 : vector<2x128xf32>
    %103 = vector.extract_strided_slice %98 {offsets = [0, 0], sizes = [2, 96], strides = [1, 1]} : vector<2x128xf32> to vector<2x96xf32>
    %cst_45 = arith.constant 5.000000e-01 : f32
    %104 = vector.broadcast %cst_45 : f32 to vector<2x96xf32>
    %105 = arith.mulf %104, %103 : vector<2x96xf32>
    %106 = math.tanh %105 : vector<2x96xf32>
    %cst_46 = arith.constant 1.000000e+00 : f32
    %107 = vector.broadcast %cst_46 : f32 to vector<2x96xf32>
    %108 = arith.addf %106, %107 : vector<2x96xf32>
    %cst_47 = arith.constant 5.000000e-01 : f32
    %109 = vector.broadcast %cst_47 : f32 to vector<2x96xf32>
    %110 = arith.mulf %109, %108 : vector<2x96xf32>
    %111 = vector.extract_strided_slice %98 {offsets = [0, 96], sizes = [2, 32], strides = [1, 1]} : vector<2x128xf32> to vector<2x32xf32>
    %112 = math.tanh %111 : vector<2x32xf32>
    %113 = vector.extract_strided_slice %102 {offsets = [0, 0], sizes = [2, 96], strides = [1, 1]} : vector<2x128xf32> to vector<2x96xf32>
    %cst_48 = arith.constant 5.000000e-01 : f32
    %114 = vector.broadcast %cst_48 : f32 to vector<2x96xf32>
    %115 = arith.mulf %114, %113 : vector<2x96xf32>
    %116 = math.tanh %115 : vector<2x96xf32>
    %cst_49 = arith.constant 1.000000e+00 : f32
    %117 = vector.broadcast %cst_49 : f32 to vector<2x96xf32>
    %118 = arith.addf %116, %117 : vector<2x96xf32>
    %cst_50 = arith.constant 5.000000e-01 : f32
    %119 = vector.broadcast %cst_50 : f32 to vector<2x96xf32>
    %120 = arith.mulf %119, %118 : vector<2x96xf32>
    %121 = vector.extract_strided_slice %102 {offsets = [0, 96], sizes = [2, 32], strides = [1, 1]} : vector<2x128xf32> to vector<2x32xf32>
    %122 = math.tanh %121 : vector<2x32xf32>
    %123 = vector.extract_strided_slice %110 {offsets = [0, 32], sizes = [2, 32], strides = [1, 1]} : vector<2x96xf32> to vector<2x32xf32>
    %124 = arith.mulf %123, %90 : vector<2x32xf32>
    %125 = vector.extract_strided_slice %110 {offsets = [0, 0], sizes = [2, 32], strides = [1, 1]} : vector<2x96xf32> to vector<2x32xf32>
    %126 = arith.mulf %125, %112 : vector<2x32xf32>
    %127 = arith.addf %124, %126 : vector<2x32xf32>
    %128 = vector.extract_strided_slice %110 {offsets = [0, 64], sizes = [2, 32], strides = [1, 1]} : vector<2x96xf32> to vector<2x32xf32>
    %129 = math.tanh %127 : vector<2x32xf32>
    %130 = arith.mulf %128, %129 : vector<2x32xf32>
    %131 = vector.extract_strided_slice %120 {offsets = [0, 32], sizes = [2, 32], strides = [1, 1]} : vector<2x96xf32> to vector<2x32xf32>
    %132 = arith.mulf %131, %92 : vector<2x32xf32>
    %133 = vector.extract_strided_slice %120 {offsets = [0, 0], sizes = [2, 32], strides = [1, 1]} : vector<2x96xf32> to vector<2x32xf32>
    %134 = arith.mulf %133, %122 : vector<2x32xf32>
    %135 = arith.addf %132, %134 : vector<2x32xf32>
    %136 = vector.extract_strided_slice %120 {offsets = [0, 64], sizes = [2, 32], strides = [1, 1]} : vector<2x96xf32> to vector<2x32xf32>
    %137 = math.tanh %135 : vector<2x32xf32>
    %138 = arith.mulf %136, %137 : vector<2x32xf32>
    %139 = tpu.concatenate %130, %138 in 1 : vector<2x32xf32>, vector<2x32xf32> -> vector<2x64xf32>
    %cst_51 = arith.constant dense<0.000000e+00> : vector<2x256xf32>
    %140 = tpu.matmul %139, %88, %cst_51 {dimension_numbers = #tpu.dot_dimension_numbers<[1], [0], [0], [1], [0, 0, 1, 1], [], []>} : vector<2x64xf32>, vector<64x256xf32>, vector<2x256xf32> -> vector<2x256xf32>
    %141 = vector.extract_strided_slice %87 {offsets = [0, 1, 0], sizes = [2, 1, 128], strides = [1, 1, 1]} : vector<2x8x256xf32> to vector<2x1x128xf32>
    %142 = vector.shape_cast %141 : vector<2x1x128xf32> to vector<2x128xf32>
    %143 = vector.extract_strided_slice %140 {offsets = [0, 0], sizes = [2, 128], strides = [1, 1]} : vector<2x256xf32> to vector<2x128xf32>
    %144 = arith.addf %142, %143 : vector<2x128xf32>
    %145 = vector.extract_strided_slice %87 {offsets = [0, 6, 128], sizes = [2, 1, 128], strides = [1, 1, 1]} : vector<2x8x256xf32> to vector<2x1x128xf32>
    %146 = vector.shape_cast %145 : vector<2x1x128xf32> to vector<2x128xf32>
    %147 = vector.extract_strided_slice %140 {offsets = [0, 128], sizes = [2, 128], strides = [1, 1]} : vector<2x256xf32> to vector<2x128xf32>
    %148 = arith.addf %146, %147 : vector<2x128xf32>
    %149 = vector.extract_strided_slice %144 {offsets = [0, 0], sizes = [2, 96], strides = [1, 1]} : vector<2x128xf32> to vector<2x96xf32>
    %cst_52 = arith.constant 5.000000e-01 : f32
    %150 = vector.broadcast %cst_52 : f32 to vector<2x96xf32>
    %151 = arith.mulf %150, %149 : vector<2x96xf32>
    %152 = math.tanh %151 : vector<2x96xf32>
    %cst_53 = arith.constant 1.000000e+00 : f32
    %153 = vector.broadcast %cst_53 : f32 to vector<2x96xf32>
    %154 = arith.addf %152, %153 : vector<2x96xf32>
    %cst_54 = arith.constant 5.000000e-01 : f32
    %155 = vector.broadcast %cst_54 : f32 to vector<2x96xf32>
    %156 = arith.mulf %155, %154 : vector<2x96xf32>
    %157 = vector.extract_strided_slice %144 {offsets = [0, 96], sizes = [2, 32], strides = [1, 1]} : vector<2x128xf32> to vector<2x32xf32>
    %158 = math.tanh %157 : vector<2x32xf32>
    %159 = vector.extract_strided_slice %148 {offsets = [0, 0], sizes = [2, 96], strides = [1, 1]} : vector<2x128xf32> to vector<2x96xf32>
    %cst_55 = arith.constant 5.000000e-01 : f32
    %160 = vector.broadcast %cst_55 : f32 to vector<2x96xf32>
    %161 = arith.mulf %160, %159 : vector<2x96xf32>
    %162 = math.tanh %161 : vector<2x96xf32>
    %cst_56 = arith.constant 1.000000e+00 : f32
    %163 = vector.broadcast %cst_56 : f32 to vector<2x96xf32>
    %164 = arith.addf %162, %163 : vector<2x96xf32>
    %cst_57 = arith.constant 5.000000e-01 : f32
    %165 = vector.broadcast %cst_57 : f32 to vector<2x96xf32>
    %166 = arith.mulf %165, %164 : vector<2x96xf32>
    %167 = vector.extract_strided_slice %148 {offsets = [0, 96], sizes = [2, 32], strides = [1, 1]} : vector<2x128xf32> to vector<2x32xf32>
    %168 = math.tanh %167 : vector<2x32xf32>
    %169 = vector.extract_strided_slice %156 {offsets = [0, 32], sizes = [2, 32], strides = [1, 1]} : vector<2x96xf32> to vector<2x32xf32>
    %170 = arith.mulf %169, %127 : vector<2x32xf32>
    %171 = vector.extract_strided_slice %156 {offsets = [0, 0], sizes = [2, 32], strides = [1, 1]} : vector<2x96xf32> to vector<2x32xf32>
    %172 = arith.mulf %171, %158 : vector<2x32xf32>
    %173 = arith.addf %170, %172 : vector<2x32xf32>
    %174 = vector.extract_strided_slice %156 {offsets = [0, 64], sizes = [2, 32], strides = [1, 1]} : vector<2x96xf32> to vector<2x32xf32>
    %175 = math.tanh %173 : vector<2x32xf32>
    %176 = arith.mulf %174, %175 : vector<2x32xf32>
    %177 = vector.extract_strided_slice %166 {offsets = [0, 32], sizes = [2, 32], strides = [1, 1]} : vector<2x96xf32> to vector<2x32xf32>
    %178 = arith.mulf %177, %135 : vector<2x32xf32>
    %179 = vector.extract_strided_slice %166 {offsets = [0, 0], sizes = [2, 32], strides = [1, 1]} : vector<2x96xf32> to vector<2x32xf32>
    %180 = arith.mulf %179, %168 : vector<2x32xf32>
    %181 = arith.addf %178, %180 : vector<2x32xf32>
    %182 = vector.extract_strided_slice %166 {offsets = [0, 64], sizes = [2, 32], strides = [1, 1]} : vector<2x96xf32> to vector<2x32xf32>
    %183 = math.tanh %181 : vector<2x32xf32>
    %184 = arith.mulf %182, %183 : vector<2x32xf32>
    %185 = tpu.concatenate %176, %184 in 1 : vector<2x32xf32>, vector<2x32xf32> -> vector<2x64xf32>
    %cst_58 = arith.constant dense<0.000000e+00> : vector<2x256xf32>
    %186 = tpu.matmul %185, %88, %cst_58 {dimension_numbers = #tpu.dot_dimension_numbers<[1], [0], [0], [1], [0, 0, 1, 1], [], []>} : vector<2x64xf32>, vector<64x256xf32>, vector<2x256xf32> -> vector<2x256xf32>
    %187 = vector.extract_strided_slice %87 {offsets = [0, 2, 0], sizes = [2, 1, 128], strides = [1, 1, 1]} : vector<2x8x256xf32> to vector<2x1x128xf32>
    %188 = vector.shape_cast %187 : vector<2x1x128xf32> to vector<2x128xf32>
    %189 = vector.extract_strided_slice %186 {offsets = [0, 0], sizes = [2, 128], strides = [1, 1]} : vector<2x256xf32> to vector<2x128xf32>
    %190 = arith.addf %188, %189 : vector<2x128xf32>
    %191 = vector.extract_strided_slice %87 {offsets = [0, 5, 128], sizes = [2, 1, 128], strides = [1, 1, 1]} : vector<2x8x256xf32> to vector<2x1x128xf32>
    %192 = vector.shape_cast %191 : vector<2x1x128xf32> to vector<2x128xf32>
    %193 = vector.extract_strided_slice %186 {offsets = [0, 128], sizes = [2, 128], strides = [1, 1]} : vector<2x256xf32> to vector<2x128xf32>
    %194 = arith.addf %192, %193 : vector<2x128xf32>
    %195 = vector.extract_strided_slice %190 {offsets = [0, 0], sizes = [2, 96], strides = [1, 1]} : vector<2x128xf32> to vector<2x96xf32>
    %cst_59 = arith.constant 5.000000e-01 : f32
    %196 = vector.broadcast %cst_59 : f32 to vector<2x96xf32>
    %197 = arith.mulf %196, %195 : vector<2x96xf32>
    %198 = math.tanh %197 : vector<2x96xf32>
    %cst_60 = arith.constant 1.000000e+00 : f32
    %199 = vector.broadcast %cst_60 : f32 to vector<2x96xf32>
    %200 = arith.addf %198, %199 : vector<2x96xf32>
    %cst_61 = arith.constant 5.000000e-01 : f32
    %201 = vector.broadcast %cst_61 : f32 to vector<2x96xf32>
    %202 = arith.mulf %201, %200 : vector<2x96xf32>
    %203 = vector.extract_strided_slice %190 {offsets = [0, 96], sizes = [2, 32], strides = [1, 1]} : vector<2x128xf32> to vector<2x32xf32>
    %204 = math.tanh %203 : vector<2x32xf32>
    %205 = vector.extract_strided_slice %194 {offsets = [0, 0], sizes = [2, 96], strides = [1, 1]} : vector<2x128xf32> to vector<2x96xf32>
    %cst_62 = arith.constant 5.000000e-01 : f32
    %206 = vector.broadcast %cst_62 : f32 to vector<2x96xf32>
    %207 = arith.mulf %206, %205 : vector<2x96xf32>
    %208 = math.tanh %207 : vector<2x96xf32>
    %cst_63 = arith.constant 1.000000e+00 : f32
    %209 = vector.broadcast %cst_63 : f32 to vector<2x96xf32>
    %210 = arith.addf %208, %209 : vector<2x96xf32>
    %cst_64 = arith.constant 5.000000e-01 : f32
    %211 = vector.broadcast %cst_64 : f32 to vector<2x96xf32>
    %212 = arith.mulf %211, %210 : vector<2x96xf32>
    %213 = vector.extract_strided_slice %194 {offsets = [0, 96], sizes = [2, 32], strides = [1, 1]} : vector<2x128xf32> to vector<2x32xf32>
    %214 = math.tanh %213 : vector<2x32xf32>
    %215 = vector.extract_strided_slice %202 {offsets = [0, 32], sizes = [2, 32], strides = [1, 1]} : vector<2x96xf32> to vector<2x32xf32>
    %216 = arith.mulf %215, %173 : vector<2x32xf32>
    %217 = vector.extract_strided_slice %202 {offsets = [0, 0], sizes = [2, 32], strides = [1, 1]} : vector<2x96xf32> to vector<2x32xf32>
    %218 = arith.mulf %217, %204 : vector<2x32xf32>
    %219 = arith.addf %216, %218 : vector<2x32xf32>
    %220 = vector.extract_strided_slice %202 {offsets = [0, 64], sizes = [2, 32], strides = [1, 1]} : vector<2x96xf32> to vector<2x32xf32>
    %221 = math.tanh %219 : vector<2x32xf32>
    %222 = arith.mulf %220, %221 : vector<2x32xf32>
    %223 = vector.extract_strided_slice %212 {offsets = [0, 32], sizes = [2, 32], strides = [1, 1]} : vector<2x96xf32> to vector<2x32xf32>
    %224 = arith.mulf %223, %181 : vector<2x32xf32>
    %225 = vector.extract_strided_slice %212 {offsets = [0, 0], sizes = [2, 32], strides = [1, 1]} : vector<2x96xf32> to vector<2x32xf32>
    %226 = arith.mulf %225, %214 : vector<2x32xf32>
    %227 = arith.addf %224, %226 : vector<2x32xf32>
    %228 = vector.extract_strided_slice %212 {offsets = [0, 64], sizes = [2, 32], strides = [1, 1]} : vector<2x96xf32> to vector<2x32xf32>
    %229 = math.tanh %227 : vector<2x32xf32>
    %230 = arith.mulf %228, %229 : vector<2x32xf32>
    %231 = tpu.concatenate %222, %230 in 1 : vector<2x32xf32>, vector<2x32xf32> -> vector<2x64xf32>
    %cst_65 = arith.constant dense<0.000000e+00> : vector<2x256xf32>
    %232 = tpu.matmul %231, %88, %cst_65 {dimension_numbers = #tpu.dot_dimension_numbers<[1], [0], [0], [1], [0, 0, 1, 1], [], []>} : vector<2x64xf32>, vector<64x256xf32>, vector<2x256xf32> -> vector<2x256xf32>
    %233 = vector.extract_strided_slice %87 {offsets = [0, 3, 0], sizes = [2, 1, 128], strides = [1, 1, 1]} : vector<2x8x256xf32> to vector<2x1x128xf32>
    %234 = vector.shape_cast %233 : vector<2x1x128xf32> to vector<2x128xf32>
    %235 = vector.extract_strided_slice %232 {offsets = [0, 0], sizes = [2, 128], strides = [1, 1]} : vector<2x256xf32> to vector<2x128xf32>
    %236 = arith.addf %234, %235 : vector<2x128xf32>
    %237 = vector.extract_strided_slice %87 {offsets = [0, 4, 128], sizes = [2, 1, 128], strides = [1, 1, 1]} : vector<2x8x256xf32> to vector<2x1x128xf32>
    %238 = vector.shape_cast %237 : vector<2x1x128xf32> to vector<2x128xf32>
    %239 = vector.extract_strided_slice %232 {offsets = [0, 128], sizes = [2, 128], strides = [1, 1]} : vector<2x256xf32> to vector<2x128xf32>
    %240 = arith.addf %238, %239 : vector<2x128xf32>
    %241 = vector.extract_strided_slice %236 {offsets = [0, 0], sizes = [2, 96], strides = [1, 1]} : vector<2x128xf32> to vector<2x96xf32>
    %cst_66 = arith.constant 5.000000e-01 : f32
    %242 = vector.broadcast %cst_66 : f32 to vector<2x96xf32>
    %243 = arith.mulf %242, %241 : vector<2x96xf32>
    %244 = math.tanh %243 : vector<2x96xf32>
    %cst_67 = arith.constant 1.000000e+00 : f32
    %245 = vector.broadcast %cst_67 : f32 to vector<2x96xf32>
    %246 = arith.addf %244, %245 : vector<2x96xf32>
    %cst_68 = arith.constant 5.000000e-01 : f32
    %247 = vector.broadcast %cst_68 : f32 to vector<2x96xf32>
    %248 = arith.mulf %247, %246 : vector<2x96xf32>
    %249 = vector.extract_strided_slice %236 {offsets = [0, 96], sizes = [2, 32], strides = [1, 1]} : vector<2x128xf32> to vector<2x32xf32>
    %250 = math.tanh %249 : vector<2x32xf32>
    %251 = vector.extract_strided_slice %240 {offsets = [0, 0], sizes = [2, 96], strides = [1, 1]} : vector<2x128xf32> to vector<2x96xf32>
    %cst_69 = arith.constant 5.000000e-01 : f32
    %252 = vector.broadcast %cst_69 : f32 to vector<2x96xf32>
    %253 = arith.mulf %252, %251 : vector<2x96xf32>
    %254 = math.tanh %253 : vector<2x96xf32>
    %cst_70 = arith.constant 1.000000e+00 : f32
    %255 = vector.broadcast %cst_70 : f32 to vector<2x96xf32>
    %256 = arith.addf %254, %255 : vector<2x96xf32>
    %cst_71 = arith.constant 5.000000e-01 : f32
    %257 = vector.broadcast %cst_71 : f32 to vector<2x96xf32>
    %258 = arith.mulf %257, %256 : vector<2x96xf32>
    %259 = vector.extract_strided_slice %240 {offsets = [0, 96], sizes = [2, 32], strides = [1, 1]} : vector<2x128xf32> to vector<2x32xf32>
    %260 = math.tanh %259 : vector<2x32xf32>
    %261 = vector.extract_strided_slice %248 {offsets = [0, 32], sizes = [2, 32], strides = [1, 1]} : vector<2x96xf32> to vector<2x32xf32>
    %262 = arith.mulf %261, %219 : vector<2x32xf32>
    %263 = vector.extract_strided_slice %248 {offsets = [0, 0], sizes = [2, 32], strides = [1, 1]} : vector<2x96xf32> to vector<2x32xf32>
    %264 = arith.mulf %263, %250 : vector<2x32xf32>
    %265 = arith.addf %262, %264 : vector<2x32xf32>
    %266 = vector.extract_strided_slice %248 {offsets = [0, 64], sizes = [2, 32], strides = [1, 1]} : vector<2x96xf32> to vector<2x32xf32>
    %267 = math.tanh %265 : vector<2x32xf32>
    %268 = arith.mulf %266, %267 : vector<2x32xf32>
    %269 = vector.extract_strided_slice %258 {offsets = [0, 32], sizes = [2, 32], strides = [1, 1]} : vector<2x96xf32> to vector<2x32xf32>
    %270 = arith.mulf %269, %227 : vector<2x32xf32>
    %271 = vector.extract_strided_slice %258 {offsets = [0, 0], sizes = [2, 32], strides = [1, 1]} : vector<2x96xf32> to vector<2x32xf32>
    %272 = arith.mulf %271, %260 : vector<2x32xf32>
    %273 = arith.addf %270, %272 : vector<2x32xf32>
    %274 = vector.extract_strided_slice %258 {offsets = [0, 64], sizes = [2, 32], strides = [1, 1]} : vector<2x96xf32> to vector<2x32xf32>
    %275 = math.tanh %273 : vector<2x32xf32>
    %276 = arith.mulf %274, %275 : vector<2x32xf32>
    %277 = tpu.concatenate %268, %276 in 1 : vector<2x32xf32>, vector<2x32xf32> -> vector<2x64xf32>
    %cst_72 = arith.constant dense<0.000000e+00> : vector<2x256xf32>
    %278 = tpu.matmul %277, %88, %cst_72 {dimension_numbers = #tpu.dot_dimension_numbers<[1], [0], [0], [1], [0, 0, 1, 1], [], []>} : vector<2x64xf32>, vector<64x256xf32>, vector<2x256xf32> -> vector<2x256xf32>
    %279 = vector.extract_strided_slice %87 {offsets = [0, 4, 0], sizes = [2, 1, 128], strides = [1, 1, 1]} : vector<2x8x256xf32> to vector<2x1x128xf32>
    %280 = vector.shape_cast %279 : vector<2x1x128xf32> to vector<2x128xf32>
    %281 = vector.extract_strided_slice %278 {offsets = [0, 0], sizes = [2, 128], strides = [1, 1]} : vector<2x256xf32> to vector<2x128xf32>
    %282 = arith.addf %280, %281 : vector<2x128xf32>
    %283 = vector.extract_strided_slice %87 {offsets = [0, 3, 128], sizes = [2, 1, 128], strides = [1, 1, 1]} : vector<2x8x256xf32> to vector<2x1x128xf32>
    %284 = vector.shape_cast %283 : vector<2x1x128xf32> to vector<2x128xf32>
    %285 = vector.extract_strided_slice %278 {offsets = [0, 128], sizes = [2, 128], strides = [1, 1]} : vector<2x256xf32> to vector<2x128xf32>
    %286 = arith.addf %284, %285 : vector<2x128xf32>
    %287 = vector.extract_strided_slice %282 {offsets = [0, 0], sizes = [2, 96], strides = [1, 1]} : vector<2x128xf32> to vector<2x96xf32>
    %cst_73 = arith.constant 5.000000e-01 : f32
    %288 = vector.broadcast %cst_73 : f32 to vector<2x96xf32>
    %289 = arith.mulf %288, %287 : vector<2x96xf32>
    %290 = math.tanh %289 : vector<2x96xf32>
    %cst_74 = arith.constant 1.000000e+00 : f32
    %291 = vector.broadcast %cst_74 : f32 to vector<2x96xf32>
    %292 = arith.addf %290, %291 : vector<2x96xf32>
    %cst_75 = arith.constant 5.000000e-01 : f32
    %293 = vector.broadcast %cst_75 : f32 to vector<2x96xf32>
    %294 = arith.mulf %293, %292 : vector<2x96xf32>
    %295 = vector.extract_strided_slice %282 {offsets = [0, 96], sizes = [2, 32], strides = [1, 1]} : vector<2x128xf32> to vector<2x32xf32>
    %296 = math.tanh %295 : vector<2x32xf32>
    %297 = vector.extract_strided_slice %286 {offsets = [0, 0], sizes = [2, 96], strides = [1, 1]} : vector<2x128xf32> to vector<2x96xf32>
    %cst_76 = arith.constant 5.000000e-01 : f32
    %298 = vector.broadcast %cst_76 : f32 to vector<2x96xf32>
    %299 = arith.mulf %298, %297 : vector<2x96xf32>
    %300 = math.tanh %299 : vector<2x96xf32>
    %cst_77 = arith.constant 1.000000e+00 : f32
    %301 = vector.broadcast %cst_77 : f32 to vector<2x96xf32>
    %302 = arith.addf %300, %301 : vector<2x96xf32>
    %cst_78 = arith.constant 5.000000e-01 : f32
    %303 = vector.broadcast %cst_78 : f32 to vector<2x96xf32>
    %304 = arith.mulf %303, %302 : vector<2x96xf32>
    %305 = vector.extract_strided_slice %286 {offsets = [0, 96], sizes = [2, 32], strides = [1, 1]} : vector<2x128xf32> to vector<2x32xf32>
    %306 = math.tanh %305 : vector<2x32xf32>
    %307 = vector.extract_strided_slice %294 {offsets = [0, 32], sizes = [2, 32], strides = [1, 1]} : vector<2x96xf32> to vector<2x32xf32>
    %308 = arith.mulf %307, %265 : vector<2x32xf32>
    %309 = vector.extract_strided_slice %294 {offsets = [0, 0], sizes = [2, 32], strides = [1, 1]} : vector<2x96xf32> to vector<2x32xf32>
    %310 = arith.mulf %309, %296 : vector<2x32xf32>
    %311 = arith.addf %308, %310 : vector<2x32xf32>
    %312 = vector.extract_strided_slice %294 {offsets = [0, 64], sizes = [2, 32], strides = [1, 1]} : vector<2x96xf32> to vector<2x32xf32>
    %313 = math.tanh %311 : vector<2x32xf32>
    %314 = arith.mulf %312, %313 : vector<2x32xf32>
    %315 = vector.extract_strided_slice %304 {offsets = [0, 32], sizes = [2, 32], strides = [1, 1]} : vector<2x96xf32> to vector<2x32xf32>
    %316 = arith.mulf %315, %273 : vector<2x32xf32>
    %317 = vector.extract_strided_slice %304 {offsets = [0, 0], sizes = [2, 32], strides = [1, 1]} : vector<2x96xf32> to vector<2x32xf32>
    %318 = arith.mulf %317, %306 : vector<2x32xf32>
    %319 = arith.addf %316, %318 : vector<2x32xf32>
    %320 = vector.extract_strided_slice %304 {offsets = [0, 64], sizes = [2, 32], strides = [1, 1]} : vector<2x96xf32> to vector<2x32xf32>
    %321 = math.tanh %319 : vector<2x32xf32>
    %322 = arith.mulf %320, %321 : vector<2x32xf32>
    %323 = tpu.concatenate %314, %322 in 1 : vector<2x32xf32>, vector<2x32xf32> -> vector<2x64xf32>
    %cst_79 = arith.constant dense<0.000000e+00> : vector<2x256xf32>
    %324 = tpu.matmul %323, %88, %cst_79 {dimension_numbers = #tpu.dot_dimension_numbers<[1], [0], [0], [1], [0, 0, 1, 1], [], []>} : vector<2x64xf32>, vector<64x256xf32>, vector<2x256xf32> -> vector<2x256xf32>
    %325 = vector.extract_strided_slice %87 {offsets = [0, 5, 0], sizes = [2, 1, 128], strides = [1, 1, 1]} : vector<2x8x256xf32> to vector<2x1x128xf32>
    %326 = vector.shape_cast %325 : vector<2x1x128xf32> to vector<2x128xf32>
    %327 = vector.extract_strided_slice %324 {offsets = [0, 0], sizes = [2, 128], strides = [1, 1]} : vector<2x256xf32> to vector<2x128xf32>
    %328 = arith.addf %326, %327 : vector<2x128xf32>
    %329 = vector.extract_strided_slice %87 {offsets = [0, 2, 128], sizes = [2, 1, 128], strides = [1, 1, 1]} : vector<2x8x256xf32> to vector<2x1x128xf32>
    %330 = vector.shape_cast %329 : vector<2x1x128xf32> to vector<2x128xf32>
    %331 = vector.extract_strided_slice %324 {offsets = [0, 128], sizes = [2, 128], strides = [1, 1]} : vector<2x256xf32> to vector<2x128xf32>
    %332 = arith.addf %330, %331 : vector<2x128xf32>
    %333 = vector.extract_strided_slice %328 {offsets = [0, 0], sizes = [2, 96], strides = [1, 1]} : vector<2x128xf32> to vector<2x96xf32>
    %cst_80 = arith.constant 5.000000e-01 : f32
    %334 = vector.broadcast %cst_80 : f32 to vector<2x96xf32>
    %335 = arith.mulf %334, %333 : vector<2x96xf32>
    %336 = math.tanh %335 : vector<2x96xf32>
    %cst_81 = arith.constant 1.000000e+00 : f32
    %337 = vector.broadcast %cst_81 : f32 to vector<2x96xf32>
    %338 = arith.addf %336, %337 : vector<2x96xf32>
    %cst_82 = arith.constant 5.000000e-01 : f32
    %339 = vector.broadcast %cst_82 : f32 to vector<2x96xf32>
    %340 = arith.mulf %339, %338 : vector<2x96xf32>
    %341 = vector.extract_strided_slice %328 {offsets = [0, 96], sizes = [2, 32], strides = [1, 1]} : vector<2x128xf32> to vector<2x32xf32>
    %342 = math.tanh %341 : vector<2x32xf32>
    %343 = vector.extract_strided_slice %332 {offsets = [0, 0], sizes = [2, 96], strides = [1, 1]} : vector<2x128xf32> to vector<2x96xf32>
    %cst_83 = arith.constant 5.000000e-01 : f32
    %344 = vector.broadcast %cst_83 : f32 to vector<2x96xf32>
    %345 = arith.mulf %344, %343 : vector<2x96xf32>
    %346 = math.tanh %345 : vector<2x96xf32>
    %cst_84 = arith.constant 1.000000e+00 : f32
    %347 = vector.broadcast %cst_84 : f32 to vector<2x96xf32>
    %348 = arith.addf %346, %347 : vector<2x96xf32>
    %cst_85 = arith.constant 5.000000e-01 : f32
    %349 = vector.broadcast %cst_85 : f32 to vector<2x96xf32>
    %350 = arith.mulf %349, %348 : vector<2x96xf32>
    %351 = vector.extract_strided_slice %332 {offsets = [0, 96], sizes = [2, 32], strides = [1, 1]} : vector<2x128xf32> to vector<2x32xf32>
    %352 = math.tanh %351 : vector<2x32xf32>
    %353 = vector.extract_strided_slice %340 {offsets = [0, 32], sizes = [2, 32], strides = [1, 1]} : vector<2x96xf32> to vector<2x32xf32>
    %354 = arith.mulf %353, %311 : vector<2x32xf32>
    %355 = vector.extract_strided_slice %340 {offsets = [0, 0], sizes = [2, 32], strides = [1, 1]} : vector<2x96xf32> to vector<2x32xf32>
    %356 = arith.mulf %355, %342 : vector<2x32xf32>
    %357 = arith.addf %354, %356 : vector<2x32xf32>
    %358 = vector.extract_strided_slice %340 {offsets = [0, 64], sizes = [2, 32], strides = [1, 1]} : vector<2x96xf32> to vector<2x32xf32>
    %359 = math.tanh %357 : vector<2x32xf32>
    %360 = arith.mulf %358, %359 : vector<2x32xf32>
    %361 = vector.extract_strided_slice %350 {offsets = [0, 32], sizes = [2, 32], strides = [1, 1]} : vector<2x96xf32> to vector<2x32xf32>
    %362 = arith.mulf %361, %319 : vector<2x32xf32>
    %363 = vector.extract_strided_slice %350 {offsets = [0, 0], sizes = [2, 32], strides = [1, 1]} : vector<2x96xf32> to vector<2x32xf32>
    %364 = arith.mulf %363, %352 : vector<2x32xf32>
    %365 = arith.addf %362, %364 : vector<2x32xf32>
    %366 = vector.extract_strided_slice %350 {offsets = [0, 64], sizes = [2, 32], strides = [1, 1]} : vector<2x96xf32> to vector<2x32xf32>
    %367 = math.tanh %365 : vector<2x32xf32>
    %368 = arith.mulf %366, %367 : vector<2x32xf32>
    %369 = tpu.concatenate %360, %368 in 1 : vector<2x32xf32>, vector<2x32xf32> -> vector<2x64xf32>
    %cst_86 = arith.constant dense<0.000000e+00> : vector<2x256xf32>
    %370 = tpu.matmul %369, %88, %cst_86 {dimension_numbers = #tpu.dot_dimension_numbers<[1], [0], [0], [1], [0, 0, 1, 1], [], []>} : vector<2x64xf32>, vector<64x256xf32>, vector<2x256xf32> -> vector<2x256xf32>
    %371 = vector.extract_strided_slice %87 {offsets = [0, 6, 0], sizes = [2, 1, 128], strides = [1, 1, 1]} : vector<2x8x256xf32> to vector<2x1x128xf32>
    %372 = vector.shape_cast %371 : vector<2x1x128xf32> to vector<2x128xf32>
    %373 = vector.extract_strided_slice %370 {offsets = [0, 0], sizes = [2, 128], strides = [1, 1]} : vector<2x256xf32> to vector<2x128xf32>
    %374 = arith.addf %372, %373 : vector<2x128xf32>
    %375 = vector.extract_strided_slice %87 {offsets = [0, 1, 128], sizes = [2, 1, 128], strides = [1, 1, 1]} : vector<2x8x256xf32> to vector<2x1x128xf32>
    %376 = vector.shape_cast %375 : vector<2x1x128xf32> to vector<2x128xf32>
    %377 = vector.extract_strided_slice %370 {offsets = [0, 128], sizes = [2, 128], strides = [1, 1]} : vector<2x256xf32> to vector<2x128xf32>
    %378 = arith.addf %376, %377 : vector<2x128xf32>
    %379 = vector.extract_strided_slice %374 {offsets = [0, 0], sizes = [2, 96], strides = [1, 1]} : vector<2x128xf32> to vector<2x96xf32>
    %cst_87 = arith.constant 5.000000e-01 : f32
    %380 = vector.broadcast %cst_87 : f32 to vector<2x96xf32>
    %381 = arith.mulf %380, %379 : vector<2x96xf32>
    %382 = math.tanh %381 : vector<2x96xf32>
    %cst_88 = arith.constant 1.000000e+00 : f32
    %383 = vector.broadcast %cst_88 : f32 to vector<2x96xf32>
    %384 = arith.addf %382, %383 : vector<2x96xf32>
    %cst_89 = arith.constant 5.000000e-01 : f32
    %385 = vector.broadcast %cst_89 : f32 to vector<2x96xf32>
    %386 = arith.mulf %385, %384 : vector<2x96xf32>
    %387 = vector.extract_strided_slice %374 {offsets = [0, 96], sizes = [2, 32], strides = [1, 1]} : vector<2x128xf32> to vector<2x32xf32>
    %388 = math.tanh %387 : vector<2x32xf32>
    %389 = vector.extract_strided_slice %378 {offsets = [0, 0], sizes = [2, 96], strides = [1, 1]} : vector<2x128xf32> to vector<2x96xf32>
    %cst_90 = arith.constant 5.000000e-01 : f32
    %390 = vector.broadcast %cst_90 : f32 to vector<2x96xf32>
    %391 = arith.mulf %390, %389 : vector<2x96xf32>
    %392 = math.tanh %391 : vector<2x96xf32>
    %cst_91 = arith.constant 1.000000e+00 : f32
    %393 = vector.broadcast %cst_91 : f32 to vector<2x96xf32>
    %394 = arith.addf %392, %393 : vector<2x96xf32>
    %cst_92 = arith.constant 5.000000e-01 : f32
    %395 = vector.broadcast %cst_92 : f32 to vector<2x96xf32>
    %396 = arith.mulf %395, %394 : vector<2x96xf32>
    %397 = vector.extract_strided_slice %378 {offsets = [0, 96], sizes = [2, 32], strides = [1, 1]} : vector<2x128xf32> to vector<2x32xf32>
    %398 = math.tanh %397 : vector<2x32xf32>
    %399 = vector.extract_strided_slice %386 {offsets = [0, 32], sizes = [2, 32], strides = [1, 1]} : vector<2x96xf32> to vector<2x32xf32>
    %400 = arith.mulf %399, %357 : vector<2x32xf32>
    %401 = vector.extract_strided_slice %386 {offsets = [0, 0], sizes = [2, 32], strides = [1, 1]} : vector<2x96xf32> to vector<2x32xf32>
    %402 = arith.mulf %401, %388 : vector<2x32xf32>
    %403 = arith.addf %400, %402 : vector<2x32xf32>
    %404 = vector.extract_strided_slice %386 {offsets = [0, 64], sizes = [2, 32], strides = [1, 1]} : vector<2x96xf32> to vector<2x32xf32>
    %405 = math.tanh %403 : vector<2x32xf32>
    %406 = arith.mulf %404, %405 : vector<2x32xf32>
    %407 = vector.extract_strided_slice %396 {offsets = [0, 32], sizes = [2, 32], strides = [1, 1]} : vector<2x96xf32> to vector<2x32xf32>
    %408 = arith.mulf %407, %365 : vector<2x32xf32>
    %409 = vector.extract_strided_slice %396 {offsets = [0, 0], sizes = [2, 32], strides = [1, 1]} : vector<2x96xf32> to vector<2x32xf32>
    %410 = arith.mulf %409, %398 : vector<2x32xf32>
    %411 = arith.addf %408, %410 : vector<2x32xf32>
    %412 = vector.extract_strided_slice %396 {offsets = [0, 64], sizes = [2, 32], strides = [1, 1]} : vector<2x96xf32> to vector<2x32xf32>
    %413 = math.tanh %411 : vector<2x32xf32>
    %414 = arith.mulf %412, %413 : vector<2x32xf32>
    %415 = tpu.concatenate %406, %414 in 1 : vector<2x32xf32>, vector<2x32xf32> -> vector<2x64xf32>
    %cst_93 = arith.constant dense<0.000000e+00> : vector<2x256xf32>
    %416 = tpu.matmul %415, %88, %cst_93 {dimension_numbers = #tpu.dot_dimension_numbers<[1], [0], [0], [1], [0, 0, 1, 1], [], []>} : vector<2x64xf32>, vector<64x256xf32>, vector<2x256xf32> -> vector<2x256xf32>
    %417 = vector.extract_strided_slice %87 {offsets = [0, 7, 0], sizes = [2, 1, 128], strides = [1, 1, 1]} : vector<2x8x256xf32> to vector<2x1x128xf32>
    %418 = vector.shape_cast %417 : vector<2x1x128xf32> to vector<2x128xf32>
    %419 = vector.extract_strided_slice %416 {offsets = [0, 0], sizes = [2, 128], strides = [1, 1]} : vector<2x256xf32> to vector<2x128xf32>
    %420 = arith.addf %418, %419 : vector<2x128xf32>
    %421 = vector.extract_strided_slice %87 {offsets = [0, 0, 128], sizes = [2, 1, 128], strides = [1, 1, 1]} : vector<2x8x256xf32> to vector<2x1x128xf32>
    %422 = vector.shape_cast %421 : vector<2x1x128xf32> to vector<2x128xf32>
    %423 = vector.extract_strided_slice %416 {offsets = [0, 128], sizes = [2, 128], strides = [1, 1]} : vector<2x256xf32> to vector<2x128xf32>
    %424 = arith.addf %422, %423 : vector<2x128xf32>
    %425 = vector.extract_strided_slice %420 {offsets = [0, 0], sizes = [2, 96], strides = [1, 1]} : vector<2x128xf32> to vector<2x96xf32>
    %cst_94 = arith.constant 5.000000e-01 : f32
    %426 = vector.broadcast %cst_94 : f32 to vector<2x96xf32>
    %427 = arith.mulf %426, %425 : vector<2x96xf32>
    %428 = math.tanh %427 : vector<2x96xf32>
    %cst_95 = arith.constant 1.000000e+00 : f32
    %429 = vector.broadcast %cst_95 : f32 to vector<2x96xf32>
    %430 = arith.addf %428, %429 : vector<2x96xf32>
    %cst_96 = arith.constant 5.000000e-01 : f32
    %431 = vector.broadcast %cst_96 : f32 to vector<2x96xf32>
    %432 = arith.mulf %431, %430 : vector<2x96xf32>
    %433 = vector.extract_strided_slice %420 {offsets = [0, 96], sizes = [2, 32], strides = [1, 1]} : vector<2x128xf32> to vector<2x32xf32>
    %434 = math.tanh %433 : vector<2x32xf32>
    %435 = vector.extract_strided_slice %424 {offsets = [0, 0], sizes = [2, 96], strides = [1, 1]} : vector<2x128xf32> to vector<2x96xf32>
    %cst_97 = arith.constant 5.000000e-01 : f32
    %436 = vector.broadcast %cst_97 : f32 to vector<2x96xf32>
    %437 = arith.mulf %436, %435 : vector<2x96xf32>
    %438 = math.tanh %437 : vector<2x96xf32>
    %cst_98 = arith.constant 1.000000e+00 : f32
    %439 = vector.broadcast %cst_98 : f32 to vector<2x96xf32>
    %440 = arith.addf %438, %439 : vector<2x96xf32>
    %cst_99 = arith.constant 5.000000e-01 : f32
    %441 = vector.broadcast %cst_99 : f32 to vector<2x96xf32>
    %442 = arith.mulf %441, %440 : vector<2x96xf32>
    %443 = vector.extract_strided_slice %424 {offsets = [0, 96], sizes = [2, 32], strides = [1, 1]} : vector<2x128xf32> to vector<2x32xf32>
    %444 = math.tanh %443 : vector<2x32xf32>
    %445 = vector.extract_strided_slice %432 {offsets = [0, 32], sizes = [2, 32], strides = [1, 1]} : vector<2x96xf32> to vector<2x32xf32>
    %446 = arith.mulf %445, %403 : vector<2x32xf32>
    %447 = vector.extract_strided_slice %432 {offsets = [0, 0], sizes = [2, 32], strides = [1, 1]} : vector<2x96xf32> to vector<2x32xf32>
    %448 = arith.mulf %447, %434 : vector<2x32xf32>
    %449 = arith.addf %446, %448 : vector<2x32xf32>
    %450 = vector.extract_strided_slice %432 {offsets = [0, 64], sizes = [2, 32], strides = [1, 1]} : vector<2x96xf32> to vector<2x32xf32>
    %451 = math.tanh %449 : vector<2x32xf32>
    %452 = arith.mulf %450, %451 : vector<2x32xf32>
    %453 = vector.extract_strided_slice %442 {offsets = [0, 32], sizes = [2, 32], strides = [1, 1]} : vector<2x96xf32> to vector<2x32xf32>
    %454 = arith.mulf %453, %411 : vector<2x32xf32>
    %455 = vector.extract_strided_slice %442 {offsets = [0, 0], sizes = [2, 32], strides = [1, 1]} : vector<2x96xf32> to vector<2x32xf32>
    %456 = arith.mulf %455, %444 : vector<2x32xf32>
    %457 = arith.addf %454, %456 : vector<2x32xf32>
    %458 = vector.extract_strided_slice %442 {offsets = [0, 64], sizes = [2, 32], strides = [1, 1]} : vector<2x96xf32> to vector<2x32xf32>
    %459 = math.tanh %457 : vector<2x32xf32>
    %460 = arith.mulf %458, %459 : vector<2x32xf32>
    %461 = vector.shape_cast %130 : vector<2x32xf32> to vector<2x1x32xf32>
    %462 = vector.shape_cast %176 : vector<2x32xf32> to vector<2x1x32xf32>
    %463 = vector.shape_cast %222 : vector<2x32xf32> to vector<2x1x32xf32>
    %464 = vector.shape_cast %268 : vector<2x32xf32> to vector<2x1x32xf32>
    %465 = vector.shape_cast %314 : vector<2x32xf32> to vector<2x1x32xf32>
    %466 = vector.shape_cast %360 : vector<2x32xf32> to vector<2x1x32xf32>
    %467 = vector.shape_cast %406 : vector<2x32xf32> to vector<2x1x32xf32>
    %468 = vector.shape_cast %452 : vector<2x32xf32> to vector<2x1x32xf32>
    %469 = tpu.concatenate %461, %462, %463, %464, %465, %466, %467, %468 in 1 : vector<2x1x32xf32>, vector<2x1x32xf32>, vector<2x1x32xf32>, vector<2x1x32xf32>, vector<2x1x32xf32>, vector<2x1x32xf32>, vector<2x1x32xf32>, vector<2x1x32xf32> -> vector<2x8x32xf32>
    %470 = vector.shape_cast %460 : vector<2x32xf32> to vector<2x1x32xf32>
    %471 = vector.shape_cast %414 : vector<2x32xf32> to vector<2x1x32xf32>
    %472 = vector.shape_cast %368 : vector<2x32xf32> to vector<2x1x32xf32>
    %473 = vector.shape_cast %322 : vector<2x32xf32> to vector<2x1x32xf32>
    %474 = vector.shape_cast %276 : vector<2x32xf32> to vector<2x1x32xf32>
    %475 = vector.shape_cast %230 : vector<2x32xf32> to vector<2x1x32xf32>
    %476 = vector.shape_cast %184 : vector<2x32xf32> to vector<2x1x32xf32>
    %477 = vector.shape_cast %138 : vector<2x32xf32> to vector<2x1x32xf32>
    %478 = tpu.concatenate %470, %471, %472, %473, %474, %475, %476, %477 in 1 : vector<2x1x32xf32>, vector<2x1x32xf32>, vector<2x1x32xf32>, vector<2x1x32xf32>, vector<2x1x32xf32>, vector<2x1x32xf32>, vector<2x1x32xf32>, vector<2x1x32xf32> -> vector<2x8x32xf32>
    %479 = tpu.concatenate %469, %478 in 2 : vector<2x8x32xf32>, vector<2x8x32xf32> -> vector<2x8x64xf32>
    %480 = vector.shape_cast %479 : vector<2x8x64xf32> to vector<16x64xf32>
    %481 = vector.extract_strided_slice %16 {offsets = [0, 288], sizes = [16, 256], strides = [1, 1]} : vector<16x544xf32> to vector<16x256xf32>
    %c0_100 = arith.constant 0 : index
    %c0_101 = arith.constant 0 : index
    %482 = vector.load %arg10[%c0_100, %c0_101] : memref<64x256xf32, #tpu.memory_space<vmem>>, vector<64x256xf32>
    %cst_102 = arith.constant dense<0.000000e+00> : vector<16x256xf32>
    %483 = tpu.matmul %480, %482, %cst_102 {dimension_numbers = #tpu.dot_dimension_numbers<[1], [0], [0], [1], [0, 0, 1, 1], [], []>} : vector<16x64xf32>, vector<64x256xf32>, vector<16x256xf32> -> vector<16x256xf32>
    %484 = arith.addf %481, %483 : vector<16x256xf32>
    %485 = vector.shape_cast %484 : vector<16x256xf32> to vector<2x8x256xf32>
    %486 = vector.extract_strided_slice %81 {offsets = [0, 256], sizes = [2, 256], strides = [1, 1]} : vector<2x528xf32> to vector<2x256xf32>
    %487 = vector.shape_cast %486 : vector<2x256xf32> to vector<2x1x256xf32>
    %488 = vector.broadcast %487 : vector<2x1x256xf32> to vector<2x8x256xf32>
    %489 = arith.addf %485, %488 : vector<2x8x256xf32>
    %c64 = arith.constant 64 : index
    %c0_103 = arith.constant 0 : index
    %490 = vector.load %arg9[%c64, %c0_103] : memref<128x256xf32, #tpu.memory_space<vmem>>, vector<64x256xf32>
    %cst_104 = arith.constant 0.000000e+00 : f32
    %491 = vector.broadcast %cst_104 : f32 to vector<2x32xf32>
    %cst_105 = arith.constant 0.000000e+00 : f32
    %492 = vector.broadcast %cst_105 : f32 to vector<2x32xf32>
    %cst_106 = arith.constant 0.000000e+00 : f32
    %493 = vector.broadcast %cst_106 : f32 to vector<2x32xf32>
    %cst_107 = arith.constant 0.000000e+00 : f32
    %494 = vector.broadcast %cst_107 : f32 to vector<2x32xf32>
    %495 = tpu.concatenate %491, %493 in 1 : vector<2x32xf32>, vector<2x32xf32> -> vector<2x64xf32>
    %cst_108 = arith.constant dense<0.000000e+00> : vector<2x256xf32>
    %496 = tpu.matmul %495, %490, %cst_108 {dimension_numbers = #tpu.dot_dimension_numbers<[1], [0], [0], [1], [0, 0, 1, 1], [], []>} : vector<2x64xf32>, vector<64x256xf32>, vector<2x256xf32> -> vector<2x256xf32>
    %497 = vector.extract_strided_slice %489 {offsets = [0, 0, 0], sizes = [2, 1, 128], strides = [1, 1, 1]} : vector<2x8x256xf32> to vector<2x1x128xf32>
    %498 = vector.shape_cast %497 : vector<2x1x128xf32> to vector<2x128xf32>
    %499 = vector.extract_strided_slice %496 {offsets = [0, 0], sizes = [2, 128], strides = [1, 1]} : vector<2x256xf32> to vector<2x128xf32>
    %500 = arith.addf %498, %499 : vector<2x128xf32>
    %501 = vector.extract_strided_slice %489 {offsets = [0, 7, 128], sizes = [2, 1, 128], strides = [1, 1, 1]} : vector<2x8x256xf32> to vector<2x1x128xf32>
    %502 = vector.shape_cast %501 : vector<2x1x128xf32> to vector<2x128xf32>
    %503 = vector.extract_strided_slice %496 {offsets = [0, 128], sizes = [2, 128], strides = [1, 1]} : vector<2x256xf32> to vector<2x128xf32>
    %504 = arith.addf %502, %503 : vector<2x128xf32>
    %505 = vector.extract_strided_slice %500 {offsets = [0, 0], sizes = [2, 96], strides = [1, 1]} : vector<2x128xf32> to vector<2x96xf32>
    %cst_109 = arith.constant 5.000000e-01 : f32
    %506 = vector.broadcast %cst_109 : f32 to vector<2x96xf32>
    %507 = arith.mulf %506, %505 : vector<2x96xf32>
    %508 = math.tanh %507 : vector<2x96xf32>
    %cst_110 = arith.constant 1.000000e+00 : f32
    %509 = vector.broadcast %cst_110 : f32 to vector<2x96xf32>
    %510 = arith.addf %508, %509 : vector<2x96xf32>
    %cst_111 = arith.constant 5.000000e-01 : f32
    %511 = vector.broadcast %cst_111 : f32 to vector<2x96xf32>
    %512 = arith.mulf %511, %510 : vector<2x96xf32>
    %513 = vector.extract_strided_slice %500 {offsets = [0, 96], sizes = [2, 32], strides = [1, 1]} : vector<2x128xf32> to vector<2x32xf32>
    %514 = math.tanh %513 : vector<2x32xf32>
    %515 = vector.extract_strided_slice %504 {offsets = [0, 0], sizes = [2, 96], strides = [1, 1]} : vector<2x128xf32> to vector<2x96xf32>
    %cst_112 = arith.constant 5.000000e-01 : f32
    %516 = vector.broadcast %cst_112 : f32 to vector<2x96xf32>
    %517 = arith.mulf %516, %515 : vector<2x96xf32>
    %518 = math.tanh %517 : vector<2x96xf32>
    %cst_113 = arith.constant 1.000000e+00 : f32
    %519 = vector.broadcast %cst_113 : f32 to vector<2x96xf32>
    %520 = arith.addf %518, %519 : vector<2x96xf32>
    %cst_114 = arith.constant 5.000000e-01 : f32
    %521 = vector.broadcast %cst_114 : f32 to vector<2x96xf32>
    %522 = arith.mulf %521, %520 : vector<2x96xf32>
    %523 = vector.extract_strided_slice %504 {offsets = [0, 96], sizes = [2, 32], strides = [1, 1]} : vector<2x128xf32> to vector<2x32xf32>
    %524 = math.tanh %523 : vector<2x32xf32>
    %525 = vector.extract_strided_slice %512 {offsets = [0, 32], sizes = [2, 32], strides = [1, 1]} : vector<2x96xf32> to vector<2x32xf32>
    %526 = arith.mulf %525, %492 : vector<2x32xf32>
    %527 = vector.extract_strided_slice %512 {offsets = [0, 0], sizes = [2, 32], strides = [1, 1]} : vector<2x96xf32> to vector<2x32xf32>
    %528 = arith.mulf %527, %514 : vector<2x32xf32>
    %529 = arith.addf %526, %528 : vector<2x32xf32>
    %530 = vector.extract_strided_slice %512 {offsets = [0, 64], sizes = [2, 32], strides = [1, 1]} : vector<2x96xf32> to vector<2x32xf32>
    %531 = math.tanh %529 : vector<2x32xf32>
    %532 = arith.mulf %530, %531 : vector<2x32xf32>
    %533 = vector.extract_strided_slice %522 {offsets = [0, 32], sizes = [2, 32], strides = [1, 1]} : vector<2x96xf32> to vector<2x32xf32>
    %534 = arith.mulf %533, %494 : vector<2x32xf32>
    %535 = vector.extract_strided_slice %522 {offsets = [0, 0], sizes = [2, 32], strides = [1, 1]} : vector<2x96xf32> to vector<2x32xf32>
    %536 = arith.mulf %535, %524 : vector<2x32xf32>
    %537 = arith.addf %534, %536 : vector<2x32xf32>
    %538 = vector.extract_strided_slice %522 {offsets = [0, 64], sizes = [2, 32], strides = [1, 1]} : vector<2x96xf32> to vector<2x32xf32>
    %539 = math.tanh %537 : vector<2x32xf32>
    %540 = arith.mulf %538, %539 : vector<2x32xf32>
    %541 = tpu.concatenate %532, %540 in 1 : vector<2x32xf32>, vector<2x32xf32> -> vector<2x64xf32>
    %cst_115 = arith.constant dense<0.000000e+00> : vector<2x256xf32>
    %542 = tpu.matmul %541, %490, %cst_115 {dimension_numbers = #tpu.dot_dimension_numbers<[1], [0], [0], [1], [0, 0, 1, 1], [], []>} : vector<2x64xf32>, vector<64x256xf32>, vector<2x256xf32> -> vector<2x256xf32>
    %543 = vector.extract_strided_slice %489 {offsets = [0, 1, 0], sizes = [2, 1, 128], strides = [1, 1, 1]} : vector<2x8x256xf32> to vector<2x1x128xf32>
    %544 = vector.shape_cast %543 : vector<2x1x128xf32> to vector<2x128xf32>
    %545 = vector.extract_strided_slice %542 {offsets = [0, 0], sizes = [2, 128], strides = [1, 1]} : vector<2x256xf32> to vector<2x128xf32>
    %546 = arith.addf %544, %545 : vector<2x128xf32>
    %547 = vector.extract_strided_slice %489 {offsets = [0, 6, 128], sizes = [2, 1, 128], strides = [1, 1, 1]} : vector<2x8x256xf32> to vector<2x1x128xf32>
    %548 = vector.shape_cast %547 : vector<2x1x128xf32> to vector<2x128xf32>
    %549 = vector.extract_strided_slice %542 {offsets = [0, 128], sizes = [2, 128], strides = [1, 1]} : vector<2x256xf32> to vector<2x128xf32>
    %550 = arith.addf %548, %549 : vector<2x128xf32>
    %551 = vector.extract_strided_slice %546 {offsets = [0, 0], sizes = [2, 96], strides = [1, 1]} : vector<2x128xf32> to vector<2x96xf32>
    %cst_116 = arith.constant 5.000000e-01 : f32
    %552 = vector.broadcast %cst_116 : f32 to vector<2x96xf32>
    %553 = arith.mulf %552, %551 : vector<2x96xf32>
    %554 = math.tanh %553 : vector<2x96xf32>
    %cst_117 = arith.constant 1.000000e+00 : f32
    %555 = vector.broadcast %cst_117 : f32 to vector<2x96xf32>
    %556 = arith.addf %554, %555 : vector<2x96xf32>
    %cst_118 = arith.constant 5.000000e-01 : f32
    %557 = vector.broadcast %cst_118 : f32 to vector<2x96xf32>
    %558 = arith.mulf %557, %556 : vector<2x96xf32>
    %559 = vector.extract_strided_slice %546 {offsets = [0, 96], sizes = [2, 32], strides = [1, 1]} : vector<2x128xf32> to vector<2x32xf32>
    %560 = math.tanh %559 : vector<2x32xf32>
    %561 = vector.extract_strided_slice %550 {offsets = [0, 0], sizes = [2, 96], strides = [1, 1]} : vector<2x128xf32> to vector<2x96xf32>
    %cst_119 = arith.constant 5.000000e-01 : f32
    %562 = vector.broadcast %cst_119 : f32 to vector<2x96xf32>
    %563 = arith.mulf %562, %561 : vector<2x96xf32>
    %564 = math.tanh %563 : vector<2x96xf32>
    %cst_120 = arith.constant 1.000000e+00 : f32
    %565 = vector.broadcast %cst_120 : f32 to vector<2x96xf32>
    %566 = arith.addf %564, %565 : vector<2x96xf32>
    %cst_121 = arith.constant 5.000000e-01 : f32
    %567 = vector.broadcast %cst_121 : f32 to vector<2x96xf32>
    %568 = arith.mulf %567, %566 : vector<2x96xf32>
    %569 = vector.extract_strided_slice %550 {offsets = [0, 96], sizes = [2, 32], strides = [1, 1]} : vector<2x128xf32> to vector<2x32xf32>
    %570 = math.tanh %569 : vector<2x32xf32>
    %571 = vector.extract_strided_slice %558 {offsets = [0, 32], sizes = [2, 32], strides = [1, 1]} : vector<2x96xf32> to vector<2x32xf32>
    %572 = arith.mulf %571, %529 : vector<2x32xf32>
    %573 = vector.extract_strided_slice %558 {offsets = [0, 0], sizes = [2, 32], strides = [1, 1]} : vector<2x96xf32> to vector<2x32xf32>
    %574 = arith.mulf %573, %560 : vector<2x32xf32>
    %575 = arith.addf %572, %574 : vector<2x32xf32>
    %576 = vector.extract_strided_slice %558 {offsets = [0, 64], sizes = [2, 32], strides = [1, 1]} : vector<2x96xf32> to vector<2x32xf32>
    %577 = math.tanh %575 : vector<2x32xf32>
    %578 = arith.mulf %576, %577 : vector<2x32xf32>
    %579 = vector.extract_strided_slice %568 {offsets = [0, 32], sizes = [2, 32], strides = [1, 1]} : vector<2x96xf32> to vector<2x32xf32>
    %580 = arith.mulf %579, %537 : vector<2x32xf32>
    %581 = vector.extract_strided_slice %568 {offsets = [0, 0], sizes = [2, 32], strides = [1, 1]} : vector<2x96xf32> to vector<2x32xf32>
    %582 = arith.mulf %581, %570 : vector<2x32xf32>
    %583 = arith.addf %580, %582 : vector<2x32xf32>
    %584 = vector.extract_strided_slice %568 {offsets = [0, 64], sizes = [2, 32], strides = [1, 1]} : vector<2x96xf32> to vector<2x32xf32>
    %585 = math.tanh %583 : vector<2x32xf32>
    %586 = arith.mulf %584, %585 : vector<2x32xf32>
    %587 = tpu.concatenate %578, %586 in 1 : vector<2x32xf32>, vector<2x32xf32> -> vector<2x64xf32>
    %cst_122 = arith.constant dense<0.000000e+00> : vector<2x256xf32>
    %588 = tpu.matmul %587, %490, %cst_122 {dimension_numbers = #tpu.dot_dimension_numbers<[1], [0], [0], [1], [0, 0, 1, 1], [], []>} : vector<2x64xf32>, vector<64x256xf32>, vector<2x256xf32> -> vector<2x256xf32>
    %589 = vector.extract_strided_slice %489 {offsets = [0, 2, 0], sizes = [2, 1, 128], strides = [1, 1, 1]} : vector<2x8x256xf32> to vector<2x1x128xf32>
    %590 = vector.shape_cast %589 : vector<2x1x128xf32> to vector<2x128xf32>
    %591 = vector.extract_strided_slice %588 {offsets = [0, 0], sizes = [2, 128], strides = [1, 1]} : vector<2x256xf32> to vector<2x128xf32>
    %592 = arith.addf %590, %591 : vector<2x128xf32>
    %593 = vector.extract_strided_slice %489 {offsets = [0, 5, 128], sizes = [2, 1, 128], strides = [1, 1, 1]} : vector<2x8x256xf32> to vector<2x1x128xf32>
    %594 = vector.shape_cast %593 : vector<2x1x128xf32> to vector<2x128xf32>
    %595 = vector.extract_strided_slice %588 {offsets = [0, 128], sizes = [2, 128], strides = [1, 1]} : vector<2x256xf32> to vector<2x128xf32>
    %596 = arith.addf %594, %595 : vector<2x128xf32>
    %597 = vector.extract_strided_slice %592 {offsets = [0, 0], sizes = [2, 96], strides = [1, 1]} : vector<2x128xf32> to vector<2x96xf32>
    %cst_123 = arith.constant 5.000000e-01 : f32
    %598 = vector.broadcast %cst_123 : f32 to vector<2x96xf32>
    %599 = arith.mulf %598, %597 : vector<2x96xf32>
    %600 = math.tanh %599 : vector<2x96xf32>
    %cst_124 = arith.constant 1.000000e+00 : f32
    %601 = vector.broadcast %cst_124 : f32 to vector<2x96xf32>
    %602 = arith.addf %600, %601 : vector<2x96xf32>
    %cst_125 = arith.constant 5.000000e-01 : f32
    %603 = vector.broadcast %cst_125 : f32 to vector<2x96xf32>
    %604 = arith.mulf %603, %602 : vector<2x96xf32>
    %605 = vector.extract_strided_slice %592 {offsets = [0, 96], sizes = [2, 32], strides = [1, 1]} : vector<2x128xf32> to vector<2x32xf32>
    %606 = math.tanh %605 : vector<2x32xf32>
    %607 = vector.extract_strided_slice %596 {offsets = [0, 0], sizes = [2, 96], strides = [1, 1]} : vector<2x128xf32> to vector<2x96xf32>
    %cst_126 = arith.constant 5.000000e-01 : f32
    %608 = vector.broadcast %cst_126 : f32 to vector<2x96xf32>
    %609 = arith.mulf %608, %607 : vector<2x96xf32>
    %610 = math.tanh %609 : vector<2x96xf32>
    %cst_127 = arith.constant 1.000000e+00 : f32
    %611 = vector.broadcast %cst_127 : f32 to vector<2x96xf32>
    %612 = arith.addf %610, %611 : vector<2x96xf32>
    %cst_128 = arith.constant 5.000000e-01 : f32
    %613 = vector.broadcast %cst_128 : f32 to vector<2x96xf32>
    %614 = arith.mulf %613, %612 : vector<2x96xf32>
    %615 = vector.extract_strided_slice %596 {offsets = [0, 96], sizes = [2, 32], strides = [1, 1]} : vector<2x128xf32> to vector<2x32xf32>
    %616 = math.tanh %615 : vector<2x32xf32>
    %617 = vector.extract_strided_slice %604 {offsets = [0, 32], sizes = [2, 32], strides = [1, 1]} : vector<2x96xf32> to vector<2x32xf32>
    %618 = arith.mulf %617, %575 : vector<2x32xf32>
    %619 = vector.extract_strided_slice %604 {offsets = [0, 0], sizes = [2, 32], strides = [1, 1]} : vector<2x96xf32> to vector<2x32xf32>
    %620 = arith.mulf %619, %606 : vector<2x32xf32>
    %621 = arith.addf %618, %620 : vector<2x32xf32>
    %622 = vector.extract_strided_slice %604 {offsets = [0, 64], sizes = [2, 32], strides = [1, 1]} : vector<2x96xf32> to vector<2x32xf32>
    %623 = math.tanh %621 : vector<2x32xf32>
    %624 = arith.mulf %622, %623 : vector<2x32xf32>
    %625 = vector.extract_strided_slice %614 {offsets = [0, 32], sizes = [2, 32], strides = [1, 1]} : vector<2x96xf32> to vector<2x32xf32>
    %626 = arith.mulf %625, %583 : vector<2x32xf32>
    %627 = vector.extract_strided_slice %614 {offsets = [0, 0], sizes = [2, 32], strides = [1, 1]} : vector<2x96xf32> to vector<2x32xf32>
    %628 = arith.mulf %627, %616 : vector<2x32xf32>
    %629 = arith.addf %626, %628 : vector<2x32xf32>
    %630 = vector.extract_strided_slice %614 {offsets = [0, 64], sizes = [2, 32], strides = [1, 1]} : vector<2x96xf32> to vector<2x32xf32>
    %631 = math.tanh %629 : vector<2x32xf32>
    %632 = arith.mulf %630, %631 : vector<2x32xf32>
    %633 = tpu.concatenate %624, %632 in 1 : vector<2x32xf32>, vector<2x32xf32> -> vector<2x64xf32>
    %cst_129 = arith.constant dense<0.000000e+00> : vector<2x256xf32>
    %634 = tpu.matmul %633, %490, %cst_129 {dimension_numbers = #tpu.dot_dimension_numbers<[1], [0], [0], [1], [0, 0, 1, 1], [], []>} : vector<2x64xf32>, vector<64x256xf32>, vector<2x256xf32> -> vector<2x256xf32>
    %635 = vector.extract_strided_slice %489 {offsets = [0, 3, 0], sizes = [2, 1, 128], strides = [1, 1, 1]} : vector<2x8x256xf32> to vector<2x1x128xf32>
    %636 = vector.shape_cast %635 : vector<2x1x128xf32> to vector<2x128xf32>
    %637 = vector.extract_strided_slice %634 {offsets = [0, 0], sizes = [2, 128], strides = [1, 1]} : vector<2x256xf32> to vector<2x128xf32>
    %638 = arith.addf %636, %637 : vector<2x128xf32>
    %639 = vector.extract_strided_slice %489 {offsets = [0, 4, 128], sizes = [2, 1, 128], strides = [1, 1, 1]} : vector<2x8x256xf32> to vector<2x1x128xf32>
    %640 = vector.shape_cast %639 : vector<2x1x128xf32> to vector<2x128xf32>
    %641 = vector.extract_strided_slice %634 {offsets = [0, 128], sizes = [2, 128], strides = [1, 1]} : vector<2x256xf32> to vector<2x128xf32>
    %642 = arith.addf %640, %641 : vector<2x128xf32>
    %643 = vector.extract_strided_slice %638 {offsets = [0, 0], sizes = [2, 96], strides = [1, 1]} : vector<2x128xf32> to vector<2x96xf32>
    %cst_130 = arith.constant 5.000000e-01 : f32
    %644 = vector.broadcast %cst_130 : f32 to vector<2x96xf32>
    %645 = arith.mulf %644, %643 : vector<2x96xf32>
    %646 = math.tanh %645 : vector<2x96xf32>
    %cst_131 = arith.constant 1.000000e+00 : f32
    %647 = vector.broadcast %cst_131 : f32 to vector<2x96xf32>
    %648 = arith.addf %646, %647 : vector<2x96xf32>
    %cst_132 = arith.constant 5.000000e-01 : f32
    %649 = vector.broadcast %cst_132 : f32 to vector<2x96xf32>
    %650 = arith.mulf %649, %648 : vector<2x96xf32>
    %651 = vector.extract_strided_slice %638 {offsets = [0, 96], sizes = [2, 32], strides = [1, 1]} : vector<2x128xf32> to vector<2x32xf32>
    %652 = math.tanh %651 : vector<2x32xf32>
    %653 = vector.extract_strided_slice %642 {offsets = [0, 0], sizes = [2, 96], strides = [1, 1]} : vector<2x128xf32> to vector<2x96xf32>
    %cst_133 = arith.constant 5.000000e-01 : f32
    %654 = vector.broadcast %cst_133 : f32 to vector<2x96xf32>
    %655 = arith.mulf %654, %653 : vector<2x96xf32>
    %656 = math.tanh %655 : vector<2x96xf32>
    %cst_134 = arith.constant 1.000000e+00 : f32
    %657 = vector.broadcast %cst_134 : f32 to vector<2x96xf32>
    %658 = arith.addf %656, %657 : vector<2x96xf32>
    %cst_135 = arith.constant 5.000000e-01 : f32
    %659 = vector.broadcast %cst_135 : f32 to vector<2x96xf32>
    %660 = arith.mulf %659, %658 : vector<2x96xf32>
    %661 = vector.extract_strided_slice %642 {offsets = [0, 96], sizes = [2, 32], strides = [1, 1]} : vector<2x128xf32> to vector<2x32xf32>
    %662 = math.tanh %661 : vector<2x32xf32>
    %663 = vector.extract_strided_slice %650 {offsets = [0, 32], sizes = [2, 32], strides = [1, 1]} : vector<2x96xf32> to vector<2x32xf32>
    %664 = arith.mulf %663, %621 : vector<2x32xf32>
    %665 = vector.extract_strided_slice %650 {offsets = [0, 0], sizes = [2, 32], strides = [1, 1]} : vector<2x96xf32> to vector<2x32xf32>
    %666 = arith.mulf %665, %652 : vector<2x32xf32>
    %667 = arith.addf %664, %666 : vector<2x32xf32>
    %668 = vector.extract_strided_slice %650 {offsets = [0, 64], sizes = [2, 32], strides = [1, 1]} : vector<2x96xf32> to vector<2x32xf32>
    %669 = math.tanh %667 : vector<2x32xf32>
    %670 = arith.mulf %668, %669 : vector<2x32xf32>
    %671 = vector.extract_strided_slice %660 {offsets = [0, 32], sizes = [2, 32], strides = [1, 1]} : vector<2x96xf32> to vector<2x32xf32>
    %672 = arith.mulf %671, %629 : vector<2x32xf32>
    %673 = vector.extract_strided_slice %660 {offsets = [0, 0], sizes = [2, 32], strides = [1, 1]} : vector<2x96xf32> to vector<2x32xf32>
    %674 = arith.mulf %673, %662 : vector<2x32xf32>
    %675 = arith.addf %672, %674 : vector<2x32xf32>
    %676 = vector.extract_strided_slice %660 {offsets = [0, 64], sizes = [2, 32], strides = [1, 1]} : vector<2x96xf32> to vector<2x32xf32>
    %677 = math.tanh %675 : vector<2x32xf32>
    %678 = arith.mulf %676, %677 : vector<2x32xf32>
    %679 = tpu.concatenate %670, %678 in 1 : vector<2x32xf32>, vector<2x32xf32> -> vector<2x64xf32>
    %cst_136 = arith.constant dense<0.000000e+00> : vector<2x256xf32>
    %680 = tpu.matmul %679, %490, %cst_136 {dimension_numbers = #tpu.dot_dimension_numbers<[1], [0], [0], [1], [0, 0, 1, 1], [], []>} : vector<2x64xf32>, vector<64x256xf32>, vector<2x256xf32> -> vector<2x256xf32>
    %681 = vector.extract_strided_slice %489 {offsets = [0, 4, 0], sizes = [2, 1, 128], strides = [1, 1, 1]} : vector<2x8x256xf32> to vector<2x1x128xf32>
    %682 = vector.shape_cast %681 : vector<2x1x128xf32> to vector<2x128xf32>
    %683 = vector.extract_strided_slice %680 {offsets = [0, 0], sizes = [2, 128], strides = [1, 1]} : vector<2x256xf32> to vector<2x128xf32>
    %684 = arith.addf %682, %683 : vector<2x128xf32>
    %685 = vector.extract_strided_slice %489 {offsets = [0, 3, 128], sizes = [2, 1, 128], strides = [1, 1, 1]} : vector<2x8x256xf32> to vector<2x1x128xf32>
    %686 = vector.shape_cast %685 : vector<2x1x128xf32> to vector<2x128xf32>
    %687 = vector.extract_strided_slice %680 {offsets = [0, 128], sizes = [2, 128], strides = [1, 1]} : vector<2x256xf32> to vector<2x128xf32>
    %688 = arith.addf %686, %687 : vector<2x128xf32>
    %689 = vector.extract_strided_slice %684 {offsets = [0, 0], sizes = [2, 96], strides = [1, 1]} : vector<2x128xf32> to vector<2x96xf32>
    %cst_137 = arith.constant 5.000000e-01 : f32
    %690 = vector.broadcast %cst_137 : f32 to vector<2x96xf32>
    %691 = arith.mulf %690, %689 : vector<2x96xf32>
    %692 = math.tanh %691 : vector<2x96xf32>
    %cst_138 = arith.constant 1.000000e+00 : f32
    %693 = vector.broadcast %cst_138 : f32 to vector<2x96xf32>
    %694 = arith.addf %692, %693 : vector<2x96xf32>
    %cst_139 = arith.constant 5.000000e-01 : f32
    %695 = vector.broadcast %cst_139 : f32 to vector<2x96xf32>
    %696 = arith.mulf %695, %694 : vector<2x96xf32>
    %697 = vector.extract_strided_slice %684 {offsets = [0, 96], sizes = [2, 32], strides = [1, 1]} : vector<2x128xf32> to vector<2x32xf32>
    %698 = math.tanh %697 : vector<2x32xf32>
    %699 = vector.extract_strided_slice %688 {offsets = [0, 0], sizes = [2, 96], strides = [1, 1]} : vector<2x128xf32> to vector<2x96xf32>
    %cst_140 = arith.constant 5.000000e-01 : f32
    %700 = vector.broadcast %cst_140 : f32 to vector<2x96xf32>
    %701 = arith.mulf %700, %699 : vector<2x96xf32>
    %702 = math.tanh %701 : vector<2x96xf32>
    %cst_141 = arith.constant 1.000000e+00 : f32
    %703 = vector.broadcast %cst_141 : f32 to vector<2x96xf32>
    %704 = arith.addf %702, %703 : vector<2x96xf32>
    %cst_142 = arith.constant 5.000000e-01 : f32
    %705 = vector.broadcast %cst_142 : f32 to vector<2x96xf32>
    %706 = arith.mulf %705, %704 : vector<2x96xf32>
    %707 = vector.extract_strided_slice %688 {offsets = [0, 96], sizes = [2, 32], strides = [1, 1]} : vector<2x128xf32> to vector<2x32xf32>
    %708 = math.tanh %707 : vector<2x32xf32>
    %709 = vector.extract_strided_slice %696 {offsets = [0, 32], sizes = [2, 32], strides = [1, 1]} : vector<2x96xf32> to vector<2x32xf32>
    %710 = arith.mulf %709, %667 : vector<2x32xf32>
    %711 = vector.extract_strided_slice %696 {offsets = [0, 0], sizes = [2, 32], strides = [1, 1]} : vector<2x96xf32> to vector<2x32xf32>
    %712 = arith.mulf %711, %698 : vector<2x32xf32>
    %713 = arith.addf %710, %712 : vector<2x32xf32>
    %714 = vector.extract_strided_slice %696 {offsets = [0, 64], sizes = [2, 32], strides = [1, 1]} : vector<2x96xf32> to vector<2x32xf32>
    %715 = math.tanh %713 : vector<2x32xf32>
    %716 = arith.mulf %714, %715 : vector<2x32xf32>
    %717 = vector.extract_strided_slice %706 {offsets = [0, 32], sizes = [2, 32], strides = [1, 1]} : vector<2x96xf32> to vector<2x32xf32>
    %718 = arith.mulf %717, %675 : vector<2x32xf32>
    %719 = vector.extract_strided_slice %706 {offsets = [0, 0], sizes = [2, 32], strides = [1, 1]} : vector<2x96xf32> to vector<2x32xf32>
    %720 = arith.mulf %719, %708 : vector<2x32xf32>
    %721 = arith.addf %718, %720 : vector<2x32xf32>
    %722 = vector.extract_strided_slice %706 {offsets = [0, 64], sizes = [2, 32], strides = [1, 1]} : vector<2x96xf32> to vector<2x32xf32>
    %723 = math.tanh %721 : vector<2x32xf32>
    %724 = arith.mulf %722, %723 : vector<2x32xf32>
    %725 = tpu.concatenate %716, %724 in 1 : vector<2x32xf32>, vector<2x32xf32> -> vector<2x64xf32>
    %cst_143 = arith.constant dense<0.000000e+00> : vector<2x256xf32>
    %726 = tpu.matmul %725, %490, %cst_143 {dimension_numbers = #tpu.dot_dimension_numbers<[1], [0], [0], [1], [0, 0, 1, 1], [], []>} : vector<2x64xf32>, vector<64x256xf32>, vector<2x256xf32> -> vector<2x256xf32>
    %727 = vector.extract_strided_slice %489 {offsets = [0, 5, 0], sizes = [2, 1, 128], strides = [1, 1, 1]} : vector<2x8x256xf32> to vector<2x1x128xf32>
    %728 = vector.shape_cast %727 : vector<2x1x128xf32> to vector<2x128xf32>
    %729 = vector.extract_strided_slice %726 {offsets = [0, 0], sizes = [2, 128], strides = [1, 1]} : vector<2x256xf32> to vector<2x128xf32>
    %730 = arith.addf %728, %729 : vector<2x128xf32>
    %731 = vector.extract_strided_slice %489 {offsets = [0, 2, 128], sizes = [2, 1, 128], strides = [1, 1, 1]} : vector<2x8x256xf32> to vector<2x1x128xf32>
    %732 = vector.shape_cast %731 : vector<2x1x128xf32> to vector<2x128xf32>
    %733 = vector.extract_strided_slice %726 {offsets = [0, 128], sizes = [2, 128], strides = [1, 1]} : vector<2x256xf32> to vector<2x128xf32>
    %734 = arith.addf %732, %733 : vector<2x128xf32>
    %735 = vector.extract_strided_slice %730 {offsets = [0, 0], sizes = [2, 96], strides = [1, 1]} : vector<2x128xf32> to vector<2x96xf32>
    %cst_144 = arith.constant 5.000000e-01 : f32
    %736 = vector.broadcast %cst_144 : f32 to vector<2x96xf32>
    %737 = arith.mulf %736, %735 : vector<2x96xf32>
    %738 = math.tanh %737 : vector<2x96xf32>
    %cst_145 = arith.constant 1.000000e+00 : f32
    %739 = vector.broadcast %cst_145 : f32 to vector<2x96xf32>
    %740 = arith.addf %738, %739 : vector<2x96xf32>
    %cst_146 = arith.constant 5.000000e-01 : f32
    %741 = vector.broadcast %cst_146 : f32 to vector<2x96xf32>
    %742 = arith.mulf %741, %740 : vector<2x96xf32>
    %743 = vector.extract_strided_slice %730 {offsets = [0, 96], sizes = [2, 32], strides = [1, 1]} : vector<2x128xf32> to vector<2x32xf32>
    %744 = math.tanh %743 : vector<2x32xf32>
    %745 = vector.extract_strided_slice %734 {offsets = [0, 0], sizes = [2, 96], strides = [1, 1]} : vector<2x128xf32> to vector<2x96xf32>
    %cst_147 = arith.constant 5.000000e-01 : f32
    %746 = vector.broadcast %cst_147 : f32 to vector<2x96xf32>
    %747 = arith.mulf %746, %745 : vector<2x96xf32>
    %748 = math.tanh %747 : vector<2x96xf32>
    %cst_148 = arith.constant 1.000000e+00 : f32
    %749 = vector.broadcast %cst_148 : f32 to vector<2x96xf32>
    %750 = arith.addf %748, %749 : vector<2x96xf32>
    %cst_149 = arith.constant 5.000000e-01 : f32
    %751 = vector.broadcast %cst_149 : f32 to vector<2x96xf32>
    %752 = arith.mulf %751, %750 : vector<2x96xf32>
    %753 = vector.extract_strided_slice %734 {offsets = [0, 96], sizes = [2, 32], strides = [1, 1]} : vector<2x128xf32> to vector<2x32xf32>
    %754 = math.tanh %753 : vector<2x32xf32>
    %755 = vector.extract_strided_slice %742 {offsets = [0, 32], sizes = [2, 32], strides = [1, 1]} : vector<2x96xf32> to vector<2x32xf32>
    %756 = arith.mulf %755, %713 : vector<2x32xf32>
    %757 = vector.extract_strided_slice %742 {offsets = [0, 0], sizes = [2, 32], strides = [1, 1]} : vector<2x96xf32> to vector<2x32xf32>
    %758 = arith.mulf %757, %744 : vector<2x32xf32>
    %759 = arith.addf %756, %758 : vector<2x32xf32>
    %760 = vector.extract_strided_slice %742 {offsets = [0, 64], sizes = [2, 32], strides = [1, 1]} : vector<2x96xf32> to vector<2x32xf32>
    %761 = math.tanh %759 : vector<2x32xf32>
    %762 = arith.mulf %760, %761 : vector<2x32xf32>
    %763 = vector.extract_strided_slice %752 {offsets = [0, 32], sizes = [2, 32], strides = [1, 1]} : vector<2x96xf32> to vector<2x32xf32>
    %764 = arith.mulf %763, %721 : vector<2x32xf32>
    %765 = vector.extract_strided_slice %752 {offsets = [0, 0], sizes = [2, 32], strides = [1, 1]} : vector<2x96xf32> to vector<2x32xf32>
    %766 = arith.mulf %765, %754 : vector<2x32xf32>
    %767 = arith.addf %764, %766 : vector<2x32xf32>
    %768 = vector.extract_strided_slice %752 {offsets = [0, 64], sizes = [2, 32], strides = [1, 1]} : vector<2x96xf32> to vector<2x32xf32>
    %769 = math.tanh %767 : vector<2x32xf32>
    %770 = arith.mulf %768, %769 : vector<2x32xf32>
    %771 = tpu.concatenate %762, %770 in 1 : vector<2x32xf32>, vector<2x32xf32> -> vector<2x64xf32>
    %cst_150 = arith.constant dense<0.000000e+00> : vector<2x256xf32>
    %772 = tpu.matmul %771, %490, %cst_150 {dimension_numbers = #tpu.dot_dimension_numbers<[1], [0], [0], [1], [0, 0, 1, 1], [], []>} : vector<2x64xf32>, vector<64x256xf32>, vector<2x256xf32> -> vector<2x256xf32>
    %773 = vector.extract_strided_slice %489 {offsets = [0, 6, 0], sizes = [2, 1, 128], strides = [1, 1, 1]} : vector<2x8x256xf32> to vector<2x1x128xf32>
    %774 = vector.shape_cast %773 : vector<2x1x128xf32> to vector<2x128xf32>
    %775 = vector.extract_strided_slice %772 {offsets = [0, 0], sizes = [2, 128], strides = [1, 1]} : vector<2x256xf32> to vector<2x128xf32>
    %776 = arith.addf %774, %775 : vector<2x128xf32>
    %777 = vector.extract_strided_slice %489 {offsets = [0, 1, 128], sizes = [2, 1, 128], strides = [1, 1, 1]} : vector<2x8x256xf32> to vector<2x1x128xf32>
    %778 = vector.shape_cast %777 : vector<2x1x128xf32> to vector<2x128xf32>
    %779 = vector.extract_strided_slice %772 {offsets = [0, 128], sizes = [2, 128], strides = [1, 1]} : vector<2x256xf32> to vector<2x128xf32>
    %780 = arith.addf %778, %779 : vector<2x128xf32>
    %781 = vector.extract_strided_slice %776 {offsets = [0, 0], sizes = [2, 96], strides = [1, 1]} : vector<2x128xf32> to vector<2x96xf32>
    %cst_151 = arith.constant 5.000000e-01 : f32
    %782 = vector.broadcast %cst_151 : f32 to vector<2x96xf32>
    %783 = arith.mulf %782, %781 : vector<2x96xf32>
    %784 = math.tanh %783 : vector<2x96xf32>
    %cst_152 = arith.constant 1.000000e+00 : f32
    %785 = vector.broadcast %cst_152 : f32 to vector<2x96xf32>
    %786 = arith.addf %784, %785 : vector<2x96xf32>
    %cst_153 = arith.constant 5.000000e-01 : f32
    %787 = vector.broadcast %cst_153 : f32 to vector<2x96xf32>
    %788 = arith.mulf %787, %786 : vector<2x96xf32>
    %789 = vector.extract_strided_slice %776 {offsets = [0, 96], sizes = [2, 32], strides = [1, 1]} : vector<2x128xf32> to vector<2x32xf32>
    %790 = math.tanh %789 : vector<2x32xf32>
    %791 = vector.extract_strided_slice %780 {offsets = [0, 0], sizes = [2, 96], strides = [1, 1]} : vector<2x128xf32> to vector<2x96xf32>
    %cst_154 = arith.constant 5.000000e-01 : f32
    %792 = vector.broadcast %cst_154 : f32 to vector<2x96xf32>
    %793 = arith.mulf %792, %791 : vector<2x96xf32>
    %794 = math.tanh %793 : vector<2x96xf32>
    %cst_155 = arith.constant 1.000000e+00 : f32
    %795 = vector.broadcast %cst_155 : f32 to vector<2x96xf32>
    %796 = arith.addf %794, %795 : vector<2x96xf32>
    %cst_156 = arith.constant 5.000000e-01 : f32
    %797 = vector.broadcast %cst_156 : f32 to vector<2x96xf32>
    %798 = arith.mulf %797, %796 : vector<2x96xf32>
    %799 = vector.extract_strided_slice %780 {offsets = [0, 96], sizes = [2, 32], strides = [1, 1]} : vector<2x128xf32> to vector<2x32xf32>
    %800 = math.tanh %799 : vector<2x32xf32>
    %801 = vector.extract_strided_slice %788 {offsets = [0, 32], sizes = [2, 32], strides = [1, 1]} : vector<2x96xf32> to vector<2x32xf32>
    %802 = arith.mulf %801, %759 : vector<2x32xf32>
    %803 = vector.extract_strided_slice %788 {offsets = [0, 0], sizes = [2, 32], strides = [1, 1]} : vector<2x96xf32> to vector<2x32xf32>
    %804 = arith.mulf %803, %790 : vector<2x32xf32>
    %805 = arith.addf %802, %804 : vector<2x32xf32>
    %806 = vector.extract_strided_slice %788 {offsets = [0, 64], sizes = [2, 32], strides = [1, 1]} : vector<2x96xf32> to vector<2x32xf32>
    %807 = math.tanh %805 : vector<2x32xf32>
    %808 = arith.mulf %806, %807 : vector<2x32xf32>
    %809 = vector.extract_strided_slice %798 {offsets = [0, 32], sizes = [2, 32], strides = [1, 1]} : vector<2x96xf32> to vector<2x32xf32>
    %810 = arith.mulf %809, %767 : vector<2x32xf32>
    %811 = vector.extract_strided_slice %798 {offsets = [0, 0], sizes = [2, 32], strides = [1, 1]} : vector<2x96xf32> to vector<2x32xf32>
    %812 = arith.mulf %811, %800 : vector<2x32xf32>
    %813 = arith.addf %810, %812 : vector<2x32xf32>
    %814 = vector.extract_strided_slice %798 {offsets = [0, 64], sizes = [2, 32], strides = [1, 1]} : vector<2x96xf32> to vector<2x32xf32>
    %815 = math.tanh %813 : vector<2x32xf32>
    %816 = arith.mulf %814, %815 : vector<2x32xf32>
    %817 = tpu.concatenate %808, %816 in 1 : vector<2x32xf32>, vector<2x32xf32> -> vector<2x64xf32>
    %cst_157 = arith.constant dense<0.000000e+00> : vector<2x256xf32>
    %818 = tpu.matmul %817, %490, %cst_157 {dimension_numbers = #tpu.dot_dimension_numbers<[1], [0], [0], [1], [0, 0, 1, 1], [], []>} : vector<2x64xf32>, vector<64x256xf32>, vector<2x256xf32> -> vector<2x256xf32>
    %819 = vector.extract_strided_slice %489 {offsets = [0, 7, 0], sizes = [2, 1, 128], strides = [1, 1, 1]} : vector<2x8x256xf32> to vector<2x1x128xf32>
    %820 = vector.shape_cast %819 : vector<2x1x128xf32> to vector<2x128xf32>
    %821 = vector.extract_strided_slice %818 {offsets = [0, 0], sizes = [2, 128], strides = [1, 1]} : vector<2x256xf32> to vector<2x128xf32>
    %822 = arith.addf %820, %821 : vector<2x128xf32>
    %823 = vector.extract_strided_slice %489 {offsets = [0, 0, 128], sizes = [2, 1, 128], strides = [1, 1, 1]} : vector<2x8x256xf32> to vector<2x1x128xf32>
    %824 = vector.shape_cast %823 : vector<2x1x128xf32> to vector<2x128xf32>
    %825 = vector.extract_strided_slice %818 {offsets = [0, 128], sizes = [2, 128], strides = [1, 1]} : vector<2x256xf32> to vector<2x128xf32>
    %826 = arith.addf %824, %825 : vector<2x128xf32>
    %827 = vector.extract_strided_slice %822 {offsets = [0, 0], sizes = [2, 96], strides = [1, 1]} : vector<2x128xf32> to vector<2x96xf32>
    %cst_158 = arith.constant 5.000000e-01 : f32
    %828 = vector.broadcast %cst_158 : f32 to vector<2x96xf32>
    %829 = arith.mulf %828, %827 : vector<2x96xf32>
    %830 = math.tanh %829 : vector<2x96xf32>
    %cst_159 = arith.constant 1.000000e+00 : f32
    %831 = vector.broadcast %cst_159 : f32 to vector<2x96xf32>
    %832 = arith.addf %830, %831 : vector<2x96xf32>
    %cst_160 = arith.constant 5.000000e-01 : f32
    %833 = vector.broadcast %cst_160 : f32 to vector<2x96xf32>
    %834 = arith.mulf %833, %832 : vector<2x96xf32>
    %835 = vector.extract_strided_slice %822 {offsets = [0, 96], sizes = [2, 32], strides = [1, 1]} : vector<2x128xf32> to vector<2x32xf32>
    %836 = math.tanh %835 : vector<2x32xf32>
    %837 = vector.extract_strided_slice %826 {offsets = [0, 0], sizes = [2, 96], strides = [1, 1]} : vector<2x128xf32> to vector<2x96xf32>
    %cst_161 = arith.constant 5.000000e-01 : f32
    %838 = vector.broadcast %cst_161 : f32 to vector<2x96xf32>
    %839 = arith.mulf %838, %837 : vector<2x96xf32>
    %840 = math.tanh %839 : vector<2x96xf32>
    %cst_162 = arith.constant 1.000000e+00 : f32
    %841 = vector.broadcast %cst_162 : f32 to vector<2x96xf32>
    %842 = arith.addf %840, %841 : vector<2x96xf32>
    %cst_163 = arith.constant 5.000000e-01 : f32
    %843 = vector.broadcast %cst_163 : f32 to vector<2x96xf32>
    %844 = arith.mulf %843, %842 : vector<2x96xf32>
    %845 = vector.extract_strided_slice %826 {offsets = [0, 96], sizes = [2, 32], strides = [1, 1]} : vector<2x128xf32> to vector<2x32xf32>
    %846 = math.tanh %845 : vector<2x32xf32>
    %847 = vector.extract_strided_slice %834 {offsets = [0, 32], sizes = [2, 32], strides = [1, 1]} : vector<2x96xf32> to vector<2x32xf32>
    %848 = arith.mulf %847, %805 : vector<2x32xf32>
    %849 = vector.extract_strided_slice %834 {offsets = [0, 0], sizes = [2, 32], strides = [1, 1]} : vector<2x96xf32> to vector<2x32xf32>
    %850 = arith.mulf %849, %836 : vector<2x32xf32>
    %851 = arith.addf %848, %850 : vector<2x32xf32>
    %852 = vector.extract_strided_slice %834 {offsets = [0, 64], sizes = [2, 32], strides = [1, 1]} : vector<2x96xf32> to vector<2x32xf32>
    %853 = math.tanh %851 : vector<2x32xf32>
    %854 = arith.mulf %852, %853 : vector<2x32xf32>
    %855 = vector.extract_strided_slice %844 {offsets = [0, 32], sizes = [2, 32], strides = [1, 1]} : vector<2x96xf32> to vector<2x32xf32>
    %856 = arith.mulf %855, %813 : vector<2x32xf32>
    %857 = vector.extract_strided_slice %844 {offsets = [0, 0], sizes = [2, 32], strides = [1, 1]} : vector<2x96xf32> to vector<2x32xf32>
    %858 = arith.mulf %857, %846 : vector<2x32xf32>
    %859 = arith.addf %856, %858 : vector<2x32xf32>
    %860 = vector.extract_strided_slice %844 {offsets = [0, 64], sizes = [2, 32], strides = [1, 1]} : vector<2x96xf32> to vector<2x32xf32>
    %861 = math.tanh %859 : vector<2x32xf32>
    %862 = arith.mulf %860, %861 : vector<2x32xf32>
    %863 = vector.shape_cast %532 : vector<2x32xf32> to vector<2x1x32xf32>
    %864 = vector.shape_cast %578 : vector<2x32xf32> to vector<2x1x32xf32>
    %865 = vector.shape_cast %624 : vector<2x32xf32> to vector<2x1x32xf32>
    %866 = vector.shape_cast %670 : vector<2x32xf32> to vector<2x1x32xf32>
    %867 = vector.shape_cast %716 : vector<2x32xf32> to vector<2x1x32xf32>
    %868 = vector.shape_cast %762 : vector<2x32xf32> to vector<2x1x32xf32>
    %869 = vector.shape_cast %808 : vector<2x32xf32> to vector<2x1x32xf32>
    %870 = vector.shape_cast %854 : vector<2x32xf32> to vector<2x1x32xf32>
    %871 = tpu.concatenate %863, %864, %865, %866, %867, %868, %869, %870 in 1 : vector<2x1x32xf32>, vector<2x1x32xf32>, vector<2x1x32xf32>, vector<2x1x32xf32>, vector<2x1x32xf32>, vector<2x1x32xf32>, vector<2x1x32xf32>, vector<2x1x32xf32> -> vector<2x8x32xf32>
    %872 = vector.shape_cast %862 : vector<2x32xf32> to vector<2x1x32xf32>
    %873 = vector.shape_cast %816 : vector<2x32xf32> to vector<2x1x32xf32>
    %874 = vector.shape_cast %770 : vector<2x32xf32> to vector<2x1x32xf32>
    %875 = vector.shape_cast %724 : vector<2x32xf32> to vector<2x1x32xf32>
    %876 = vector.shape_cast %678 : vector<2x32xf32> to vector<2x1x32xf32>
    %877 = vector.shape_cast %632 : vector<2x32xf32> to vector<2x1x32xf32>
    %878 = vector.shape_cast %586 : vector<2x32xf32> to vector<2x1x32xf32>
    %879 = vector.shape_cast %540 : vector<2x32xf32> to vector<2x1x32xf32>
    %880 = tpu.concatenate %872, %873, %874, %875, %876, %877, %878, %879 in 1 : vector<2x1x32xf32>, vector<2x1x32xf32>, vector<2x1x32xf32>, vector<2x1x32xf32>, vector<2x1x32xf32>, vector<2x1x32xf32>, vector<2x1x32xf32>, vector<2x1x32xf32> -> vector<2x8x32xf32>
    %881 = tpu.concatenate %871, %880 in 2 : vector<2x8x32xf32>, vector<2x8x32xf32> -> vector<2x8x64xf32>
    %882 = vector.shape_cast %881 : vector<2x8x64xf32> to vector<16x64xf32>
    %c0_164 = arith.constant 0 : index
    %c0_165 = arith.constant 0 : index
    %883 = vector.load %arg11[%c0_164, %c0_165] : memref<64x5xf32, #tpu.memory_space<vmem>>, vector<64x2xf32>
    %cst_166 = arith.constant dense<0.000000e+00> : vector<16x2xf32>
    %884 = tpu.matmul %480, %883, %cst_166 {dimension_numbers = #tpu.dot_dimension_numbers<[1], [0], [0], [1], [0, 0, 1, 1], [], []>} : vector<16x64xf32>, vector<64x2xf32>, vector<16x2xf32> -> vector<16x2xf32>
    %885 = vector.shape_cast %884 : vector<16x2xf32> to vector<2x8x2xf32>
    %886 = vector.extract_strided_slice %13 {offsets = [0, 0], sizes = [1, 2], strides = [1, 1]} : vector<1x4xf32> to vector<1x2xf32>
    %887 = vector.shape_cast %886 : vector<1x2xf32> to vector<1x1x2xf32>
    %888 = vector.broadcast %887 : vector<1x1x2xf32> to vector<2x8x2xf32>
    %889 = arith.addf %885, %888 : vector<2x8x2xf32>
    %c0_167 = arith.constant 0 : index
    %c2 = arith.constant 2 : index
    %890 = vector.load %arg11[%c0_167, %c2] : memref<64x5xf32, #tpu.memory_space<vmem>>, vector<64x2xf32>
    %cst_168 = arith.constant dense<0.000000e+00> : vector<16x2xf32>
    %891 = tpu.matmul %882, %890, %cst_168 {dimension_numbers = #tpu.dot_dimension_numbers<[1], [0], [0], [1], [0, 0, 1, 1], [], []>} : vector<16x64xf32>, vector<64x2xf32>, vector<16x2xf32> -> vector<16x2xf32>
    %892 = vector.shape_cast %891 : vector<16x2xf32> to vector<2x8x2xf32>
    %893 = vector.extract_strided_slice %13 {offsets = [0, 2], sizes = [1, 2], strides = [1, 1]} : vector<1x4xf32> to vector<1x2xf32>
    %894 = vector.shape_cast %893 : vector<1x2xf32> to vector<1x1x2xf32>
    %895 = vector.broadcast %894 : vector<1x1x2xf32> to vector<2x8x2xf32>
    %896 = arith.addf %892, %895 : vector<2x8x2xf32>
    %897 = vector.extract_strided_slice %889 {offsets = [0, 0, 0], sizes = [2, 8, 1], strides = [1, 1, 1]} : vector<2x8x2xf32> to vector<2x8x1xf32>
    %898 = vector.shape_cast %897 : vector<2x8x1xf32> to vector<2x8xf32>
    %cst_169 = arith.constant -1.000000e+30 : f32
    %899 = vector.broadcast %cst_169 : f32 to vector<2x8xf32>
    %900 = arith.select %8, %899, %898 : vector<2x8xi1>, vector<2x8xf32>
    %cst_170 = arith.constant dense<0xFF800000> : vector<2xf32>
    %901 = vector.multi_reduction <maximumf>, %900, %cst_170 [1] : vector<2x8xf32> to vector<2xf32>
    %902 = vector.shape_cast %901 : vector<2xf32> to vector<2x1xf32>
    %903 = vector.broadcast %902 : vector<2x1xf32> to vector<2x8xf32>
    %904 = arith.subf %900, %903 : vector<2x8xf32>
    %905 = math.exp %904 : vector<2x8xf32>
    %cst_171 = arith.constant dense<0.000000e+00> : vector<2xf32>
    %906 = vector.multi_reduction <add>, %905, %cst_171 [1] : vector<2x8xf32> to vector<2xf32>
    %907 = vector.shape_cast %906 : vector<2xf32> to vector<2x1xf32>
    %908 = tpu.reciprocal %907 {approx = true} : vector<2x1xf32> -> vector<2x1xf32>
    %909 = vector.broadcast %908 : vector<2x1xf32> to vector<2x8xf32>
    %910 = arith.mulf %905, %909 : vector<2x8xf32>
    %911 = vector.extract_strided_slice %889 {offsets = [0, 0, 1], sizes = [2, 8, 1], strides = [1, 1, 1]} : vector<2x8x2xf32> to vector<2x8x1xf32>
    %912 = vector.shape_cast %911 : vector<2x8x1xf32> to vector<2x8xf32>
    %cst_172 = arith.constant -1.000000e+30 : f32
    %913 = vector.broadcast %cst_172 : f32 to vector<2x8xf32>
    %914 = arith.select %8, %913, %912 : vector<2x8xi1>, vector<2x8xf32>
    %cst_173 = arith.constant dense<0xFF800000> : vector<2xf32>
    %915 = vector.multi_reduction <maximumf>, %914, %cst_173 [1] : vector<2x8xf32> to vector<2xf32>
    %916 = vector.shape_cast %915 : vector<2xf32> to vector<2x1xf32>
    %917 = vector.broadcast %916 : vector<2x1xf32> to vector<2x8xf32>
    %918 = arith.subf %914, %917 : vector<2x8xf32>
    %919 = math.exp %918 : vector<2x8xf32>
    %cst_174 = arith.constant dense<0.000000e+00> : vector<2xf32>
    %920 = vector.multi_reduction <add>, %919, %cst_174 [1] : vector<2x8xf32> to vector<2xf32>
    %921 = vector.shape_cast %920 : vector<2xf32> to vector<2x1xf32>
    %922 = tpu.reciprocal %921 {approx = true} : vector<2x1xf32> -> vector<2x1xf32>
    %923 = vector.broadcast %922 : vector<2x1xf32> to vector<2x8xf32>
    %924 = arith.mulf %919, %923 : vector<2x8xf32>
    %925 = vector.extract_strided_slice %896 {offsets = [0, 0, 0], sizes = [2, 8, 1], strides = [1, 1, 1]} : vector<2x8x2xf32> to vector<2x8x1xf32>
    %926 = vector.shape_cast %925 : vector<2x8x1xf32> to vector<2x8xf32>
    %cst_175 = arith.constant -1.000000e+30 : f32
    %927 = vector.broadcast %cst_175 : f32 to vector<2x8xf32>
    %928 = arith.select %8, %927, %926 : vector<2x8xi1>, vector<2x8xf32>
    %cst_176 = arith.constant dense<0xFF800000> : vector<2xf32>
    %929 = vector.multi_reduction <maximumf>, %928, %cst_176 [1] : vector<2x8xf32> to vector<2xf32>
    %930 = vector.shape_cast %929 : vector<2xf32> to vector<2x1xf32>
    %931 = vector.broadcast %930 : vector<2x1xf32> to vector<2x8xf32>
    %932 = arith.subf %928, %931 : vector<2x8xf32>
    %933 = math.exp %932 : vector<2x8xf32>
    %cst_177 = arith.constant dense<0.000000e+00> : vector<2xf32>
    %934 = vector.multi_reduction <add>, %933, %cst_177 [1] : vector<2x8xf32> to vector<2xf32>
    %935 = vector.shape_cast %934 : vector<2xf32> to vector<2x1xf32>
    %936 = tpu.reciprocal %935 {approx = true} : vector<2x1xf32> -> vector<2x1xf32>
    %937 = vector.broadcast %936 : vector<2x1xf32> to vector<2x8xf32>
    %938 = arith.mulf %933, %937 : vector<2x8xf32>
    %939 = vector.extract_strided_slice %896 {offsets = [0, 0, 1], sizes = [2, 8, 1], strides = [1, 1, 1]} : vector<2x8x2xf32> to vector<2x8x1xf32>
    %940 = vector.shape_cast %939 : vector<2x8x1xf32> to vector<2x8xf32>
    %cst_178 = arith.constant -1.000000e+30 : f32
    %941 = vector.broadcast %cst_178 : f32 to vector<2x8xf32>
    %942 = arith.select %8, %941, %940 : vector<2x8xi1>, vector<2x8xf32>
    %cst_179 = arith.constant dense<0xFF800000> : vector<2xf32>
    %943 = vector.multi_reduction <maximumf>, %942, %cst_179 [1] : vector<2x8xf32> to vector<2xf32>
    %944 = vector.shape_cast %943 : vector<2xf32> to vector<2x1xf32>
    %945 = vector.broadcast %944 : vector<2x1xf32> to vector<2x8xf32>
    %946 = arith.subf %942, %945 : vector<2x8xf32>
    %947 = math.exp %946 : vector<2x8xf32>
    %cst_180 = arith.constant dense<0.000000e+00> : vector<2xf32>
    %948 = vector.multi_reduction <add>, %947, %cst_180 [1] : vector<2x8xf32> to vector<2xf32>
    %949 = vector.shape_cast %948 : vector<2xf32> to vector<2x1xf32>
    %950 = tpu.reciprocal %949 {approx = true} : vector<2x1xf32> -> vector<2x1xf32>
    %951 = vector.broadcast %950 : vector<2x1xf32> to vector<2x8xf32>
    %952 = arith.mulf %947, %951 : vector<2x8xf32>
    %953 = tpu.concatenate %910, %924, %938, %952 in 1 : vector<2x8xf32>, vector<2x8xf32>, vector<2x8xf32>, vector<2x8xf32> -> vector<2x32xf32>
    %c0_181 = arith.constant 0 : index
    %c0_182 = arith.constant 0 : index
    %954 = vector.load %arg15[%c0_181, %c0_182] : memref<2x32xf32, #tpu.memory_space<vmem>>, vector<2x32xf32>
    tpu.vector_store %arg15[%c0_181, %c0_182], %953 {strides = array<i32>} : memref<2x32xf32, #tpu.memory_space<vmem>>, vector<2x32xf32>,
    %955 = vector.shape_cast %924 : vector<2x8xf32> to vector<2x1x8xf32>
    %956 = vector.shape_cast %910 : vector<2x8xf32> to vector<2x1x8xf32>
    %957 = tpu.concatenate %955, %956 in 1 : vector<2x1x8xf32>, vector<2x1x8xf32> -> vector<2x2x8xf32>
    %958 = vector.shape_cast %952 : vector<2x8xf32> to vector<2x1x8xf32>
    %959 = vector.shape_cast %938 : vector<2x8xf32> to vector<2x1x8xf32>
    %960 = tpu.concatenate %958, %959 in 1 : vector<2x1x8xf32>, vector<2x1x8xf32> -> vector<2x2x8xf32>
    "tpu.trace_start"() <{level = 10 : i32, message = "bft,bth->bfh"}> : () -> ()
    %cst_183 = arith.constant dense<0.000000e+00> : vector<2x2x64xf32>
    %961 = tpu.matmul %957, %479, %cst_183 {dimension_numbers = #tpu.dot_dimension_numbers<[2], [1], [1], [2], [0, 0, 0, 1, 1, 2], [0], [0]>} : vector<2x2x8xf32>, vector<2x8x64xf32>, vector<2x2x64xf32> -> vector<2x2x64xf32>
    "tpu.trace_stop"() : () -> ()
    %962 = vector.shape_cast %961 : vector<2x2x64xf32> to vector<2x128xf32>
    "tpu.trace_start"() <{level = 10 : i32, message = "bft,bth->bfh"}> : () -> ()
    %cst_184 = arith.constant dense<0.000000e+00> : vector<2x2x64xf32>
    %963 = tpu.matmul %960, %881, %cst_184 {dimension_numbers = #tpu.dot_dimension_numbers<[2], [1], [1], [2], [0, 0, 0, 1, 1, 2], [0], [0]>} : vector<2x2x8xf32>, vector<2x8x64xf32>, vector<2x2x64xf32> -> vector<2x2x64xf32>
    "tpu.trace_stop"() : () -> ()
    %964 = vector.shape_cast %963 : vector<2x2x64xf32> to vector<2x128xf32>
    %965 = tpu.concatenate %962, %964 in 1 : vector<2x128xf32>, vector<2x128xf32> -> vector<2x256xf32>
    %c0_185 = arith.constant 0 : index
    %c0_186 = arith.constant 0 : index
    %966 = vector.load %arg17[%c0_185, %c0_186] : memref<2x256xf32, #tpu.memory_space<vmem>>, vector<2x256xf32>
    tpu.vector_store %arg17[%c0_185, %c0_186], %965 {strides = array<i32>} : memref<2x256xf32, #tpu.memory_space<vmem>>, vector<2x256xf32>,
    %967 = vector.extract_strided_slice %81 {offsets = [0, 512], sizes = [2, 16], strides = [1, 1]} : vector<2x528xf32> to vector<2x16xf32>
    %c0_187 = arith.constant 0 : index
    %c0_188 = arith.constant 0 : index
    %968 = vector.load %arg12[%c0_187, %c0_188] : memref<256x16xf32, #tpu.memory_space<vmem>>, vector<256x16xf32>
    %cst_189 = arith.constant dense<0.000000e+00> : vector<2x16xf32>
    %969 = tpu.matmul %965, %968, %cst_189 {dimension_numbers = #tpu.dot_dimension_numbers<[1], [0], [0], [1], [0, 0, 1, 1], [], []>} : vector<2x256xf32>, vector<256x16xf32>, vector<2x16xf32> -> vector<2x16xf32>
    %970 = arith.addf %967, %969 : vector<2x16xf32>
    %cst_190 = arith.constant dense<0xFF800000> : vector<2xf32>
    %971 = vector.multi_reduction <maximumf>, %970, %cst_190 [1] : vector<2x16xf32> to vector<2xf32>
    %972 = vector.shape_cast %971 : vector<2xf32> to vector<2x1xf32>
    %973 = vector.broadcast %972 : vector<2x1xf32> to vector<2x16xf32>
    %974 = arith.subf %970, %973 : vector<2x16xf32>
    %975 = math.exp %974 : vector<2x16xf32>
    %cst_191 = arith.constant dense<0.000000e+00> : vector<2xf32>
    %976 = vector.multi_reduction <add>, %975, %cst_191 [1] : vector<2x16xf32> to vector<2xf32>
    %977 = vector.shape_cast %976 : vector<2xf32> to vector<2x1xf32>
    %978 = tpu.reciprocal %977 {approx = true} : vector<2x1xf32> -> vector<2x1xf32>
    %979 = vector.broadcast %978 : vector<2x1xf32> to vector<2x16xf32>
    %980 = arith.mulf %975, %979 : vector<2x16xf32>
    %c0_192 = arith.constant 0 : index
    %c0_193 = arith.constant 0 : index
    %981 = vector.load %arg14[%c0_192, %c0_193] : memref<2x16xf32, #tpu.memory_space<vmem>>, vector<2x16xf32>
    tpu.vector_store %arg14[%c0_192, %c0_193], %980 {strides = array<i32>} : memref<2x16xf32, #tpu.memory_space<vmem>>, vector<2x16xf32>,
    return
  }
  func.func @transform_0(%arg0: i32) -> (i32, i32, i32) {
    %c0_i32 = arith.constant 0 : i32
    %c0_i32_0 = arith.constant 0 : i32
    %c0_i32_1 = arith.constant 0 : i32
    return %arg0, %c0_i32, %c0_i32_0 : i32, i32, i32
  }
  func.func @transform_1(%arg0: i32) -> (i32, i32) {
    %c0_i32 = arith.constant 0 : i32
    %c0_i32_0 = arith.constant 0 : i32
    return %arg0, %c0_i32 : i32, i32
  }
  func.func @transform_2(%arg0: i32) -> (i32, i32) {
    %c0_i32 = arith.constant 0 : i32
    %c0_i32_0 = arith.constant 0 : i32
    return %arg0, %c0_i32 : i32, i32
  }
  func.func @transform_3(%arg0: i32) -> (i32, i32) {
    %c0_i32 = arith.constant 0 : i32
    %c0_i32_0 = arith.constant 0 : i32
    return %arg0, %c0_i32 : i32, i32
  }
  func.func @transform_4(%arg0: i32) -> (i32, i32) {
    %c0_i32 = arith.constant 0 : i32
    %c0_i32_0 = arith.constant 0 : i32
    %c0_i32_1 = arith.constant 0 : i32
    return %c0_i32, %c0_i32_0 : i32, i32
  }
  func.func @transform_5(%arg0: i32) -> (i32, i32) {
    %c0_i32 = arith.constant 0 : i32
    %c0_i32_0 = arith.constant 0 : i32
    %c0_i32_1 = arith.constant 0 : i32
    return %c0_i32, %c0_i32_0 : i32, i32
  }
  func.func @transform_6(%arg0: i32) -> (i32, i32) {
    %c0_i32 = arith.constant 0 : i32
    %c0_i32_0 = arith.constant 0 : i32
    %c0_i32_1 = arith.constant 0 : i32
    return %c0_i32, %c0_i32_0 : i32, i32
  }
  func.func @transform_7(%arg0: i32) -> (i32, i32) {
    %c0_i32 = arith.constant 0 : i32
    %c0_i32_0 = arith.constant 0 : i32
    %c0_i32_1 = arith.constant 0 : i32
    return %c0_i32, %c0_i32_0 : i32, i32
  }
  func.func @transform_8(%arg0: i32) -> (i32, i32) {
    %c0_i32 = arith.constant 0 : i32
    %c0_i32_0 = arith.constant 0 : i32
    %c0_i32_1 = arith.constant 0 : i32
    return %c0_i32, %c0_i32_0 : i32, i32
  }
  func.func @transform_9(%arg0: i32) -> (i32, i32) {
    %c0_i32 = arith.constant 0 : i32
    %c0_i32_0 = arith.constant 0 : i32
    %c0_i32_1 = arith.constant 0 : i32
    return %c0_i32, %c0_i32_0 : i32, i32
  }
  func.func @transform_10(%arg0: i32) -> (i32, i32) {
    %c0_i32 = arith.constant 0 : i32
    %c0_i32_0 = arith.constant 0 : i32
    %c0_i32_1 = arith.constant 0 : i32
    return %c0_i32, %c0_i32_0 : i32, i32
  }
  func.func @transform_11(%arg0: i32) -> (i32, i32) {
    %c0_i32 = arith.constant 0 : i32
    %c0_i32_0 = arith.constant 0 : i32
    %c0_i32_1 = arith.constant 0 : i32
    return %c0_i32, %c0_i32_0 : i32, i32
  }
  func.func @transform_12(%arg0: i32) -> (i32, i32) {
    %c0_i32 = arith.constant 0 : i32
    %c0_i32_0 = arith.constant 0 : i32
    %c0_i32_1 = arith.constant 0 : i32
    return %c0_i32, %c0_i32_0 : i32, i32
  }
  func.func @transform_13(%arg0: i32) -> (i32, i32) {
    %c0_i32 = arith.constant 0 : i32
    %c0_i32_0 = arith.constant 0 : i32
    return %arg0, %c0_i32 : i32, i32
  }
  func.func @transform_14(%arg0: i32) -> (i32, i32) {
    %c0_i32 = arith.constant 0 : i32
    %c0_i32_0 = arith.constant 0 : i32
    return %arg0, %c0_i32 : i32, i32
  }
  func.func @transform_15(%arg0: i32) -> (i32, i32) {
    %c0_i32 = arith.constant 0 : i32
    %c0_i32_0 = arith.constant 0 : i32
    return %arg0, %c0_i32 : i32, i32
  }
  func.func @transform_16(%arg0: i32) -> (i32, i32) {
    %c0_i32 = arith.constant 0 : i32
    %c0_i32_0 = arith.constant 0 : i32
    return %arg0, %c0_i32 : i32, i32
  }
}

</mosaic_0001>

<llo_original>
// kernel: tpu_custom_call.1
$region0: #{tpu_custom_call.1}
  #allocation0 [shape = 'u32[]', space=smem, size = 0x4, offset = 0x4, fixed_abs, tag = 'smem constant byte address 0x4 - core index']
  #allocation1 [shape = 'u32[144,128]{1,0:T(1,128)}', space=vmem, size = 0x12000, scoped, tag = 'internal scratch']
  %s0 = inlined_call_operand.vmem [shape: f32[2,8,32], index: 0, kind: input, shape index: {}]
  %s1 = inlined_call_operand.hbm [shape: f32[2,64], index: 1, kind: input, shape index: {}]
  %s2 = inlined_call_operand.hbm [shape: f32[2,288], index: 2, kind: input, shape index: {}]
  %s3 = inlined_call_operand.hbm [shape: f32[2,8], index: 3, kind: input, shape index: {}]
  %s4 = inlined_call_operand.hbm [shape: f32[32,544], index: 4, kind: input, shape index: {}]
  %s5 = inlined_call_operand.hbm [shape: f32[32,160], index: 5, kind: input, shape index: {}]
  %s6 = inlined_call_operand.hbm [shape: f32[32,528], index: 6, kind: input, shape index: {}]
  %s7 = inlined_call_operand.vmem [shape: f32[320,128], index: 7, kind: input, shape index: {}]
  %s8 = inlined_call_operand.hbm [shape: f32[128,256], index: 8, kind: input, shape index: {}]
  %s9 = inlined_call_operand.hbm [shape: f32[64,256], index: 9, kind: input, shape index: {}]
  %s10 = inlined_call_operand.vmem [shape: f32[64,5], index: 10, kind: input, shape index: {}]
  %s11 = inlined_call_operand.vmem [shape: f32[256,16], index: 11, kind: input, shape index: {}]
  %s12 = inlined_call_operand.hbm [shape: f32[1,1024], index: 12, kind: input, shape index: {}]
  %s13 = inlined_call_operand.hbm [shape: f32[2,16], index: 13, kind: output, shape index: {0}]
  %s14 = inlined_call_operand.hbm [shape: f32[2,32], index: 14, kind: output, shape index: {1}]
  %s15 = inlined_call_operand.hbm [shape: f32[2,64], index: 15, kind: output, shape index: {2}]
  %s16 = inlined_call_operand.hbm [shape: f32[2,256], index: 16, kind: output, shape index: {3}]
  %17 = xla_tuple %s13, %s14, %s15, %s16
  %s18 = sld [smem:[#allocation0]]
  $region122: #{tpu_custom_call.1} parent=0
    _
  %s20 = ssub.s32 1, %s18
  %s21 = scalar_select 0, %s20, %s18
  $region1: #{tpu_custom_call.1} parent=0
    #allocation2 [shape = 'u8[1024]{0}', space=vmem, size = 0x400, scoped, tag = 'input window, operand 1, single buffered']
    #allocation3 [shape = 's32[1]{0}', space=sflag, size = 0x4, scoped, tag = 'scoped memory for tpu_custom_call.1']
    #allocation4 [shape = 's32[1]{0}', space=sflag, size = 0x4, scoped, tag = 'scoped memory for tpu_custom_call.1']
    #allocation5 [shape = 'u8[3072]{0}', space=vmem, size = 0xc00, scoped, tag = 'input window, operand 2, single buffered']
    #allocation6 [shape = 's32[1]{0}', space=sflag, size = 0x4, scoped, tag = 'scoped memory for tpu_custom_call.1']
    #allocation7 [shape = 'u8[1024]{0}', space=vmem, size = 0x400, scoped, tag = 'input window, operand 3, single buffered']
    #allocation8 [shape = 'u8[81920]{0}', space=vmem, size = 0x14000, scoped, tag = 'input window, operand 4, single buffered']
    #allocation9 [shape = 's32[1]{0}', space=sflag, size = 0x4, scoped, tag = 'scoped memory for tpu_custom_call.1']
    #allocation10 [shape = 'u8[32768]{0}', space=vmem, size = 0x8000, scoped, tag = 'input window, operand 5, single buffered']
    #allocation11 [shape = 'u8[81920]{0}', space=vmem, size = 0x14000, scoped, tag = 'input window, operand 6, single buffered']
    #allocation12 [shape = 's32[1]{0}', space=sflag, size = 0x4, scoped, tag = 'scoped memory for tpu_custom_call.1']
    #allocation13 [shape = 'u8[131072]{0}', space=vmem, size = 0x20000, scoped, tag = 'input window, operand 8, single buffered']
    #allocation14 [shape = 'u8[65536]{0}', space=vmem, size = 0x10000, scoped, tag = 'input window, operand 9, single buffered']
    #allocation15 [shape = 's32[1]{0}', space=sflag, size = 0x4, scoped, tag = 'scoped memory for tpu_custom_call.1']
    #allocation16 [shape = 'u8[4096]{0}', space=vmem, size = 0x1000, scoped, tag = 'input window, operand 12, single buffered']
    #allocation17 [shape = 'u8[1024]{0}', space=vmem, size = 0x400, scoped, tag = 'output window, operand 0, single buffered']
    #allocation18 [shape = 'u8[1024]{0}', space=vmem, size = 0x400, scoped, tag = 'output window, operand 1, single buffered']
    #allocation19 [shape = 's32[1]{0}', space=sflag, size = 0x4, scoped, tag = 'scoped memory for tpu_custom_call.1']
    #allocation20 [shape = 'u8[1024]{0}', space=vmem, size = 0x400, scoped, tag = 'output window, operand 2, single buffered']
    #allocation21 [shape = 'u8[2048]{0}', space=vmem, size = 0x800, scoped, tag = 'output window, operand 3, single buffered']
    #allocation22 [shape = 's32[1]{0}', space=sflag, size = 0x4, scoped, tag = 'scoped memory for tpu_custom_call.1']
    %22 = vsyncpa [#allocation3], 0
    %23 = vsyncpa [#allocation6], 0
    %24 = vsyncpa [#allocation9], 0
    %25 = vsyncpa [#allocation12], 0
    %26 = vsyncpa [#allocation15], 0
    %27 = vsyncpa [#allocation4], 0
    %28 = vsyncpa [#allocation19], 0
    %29 = vsyncpa [#allocation22], 0
    // Predicated region
    $region2: #{tpu_custom_call.1} parent=1 // pred_check
      _
    $region3: #{tpu_custom_call.1} parent=1 // pred_check_branch
      %31 = sbr.rel (0) target = $region5
    $region4: #{tpu_custom_call.1} parent=1 // pred_region
      _
    $region5: #{tpu_custom_call.1} parent=1 // pred_fallthru
      _
    // Predicated region
    $region6: #{tpu_custom_call.1} parent=1 // pred_check
      _
    $region7: #{tpu_custom_call.1} parent=1 // pred_check_branch
      %33 = sbr.rel (0) target = $region9
    $region8: #{tpu_custom_call.1} parent=1 // pred_region
      %s35 = ssub.s32 32, 32
      %36 = vsyncadd [#allocation3], %s35
      %s38 = sshll.u32 [#allocation2], 4
      %s39 = int_to_ptr.vmem [resolvable:$true] %s38
      %41 = dma.hbm_to_vmem [thread:$0]  %s1, 32, %s39, [#allocation3]
    $region9: #{tpu_custom_call.1} parent=1 // pred_fallthru
      _
    // Predicated region
    $region10: #{tpu_custom_call.1} parent=1 // pred_check
      _
    $region11: #{tpu_custom_call.1} parent=1 // pred_check_branch
      %43 = sbr.rel (0) target = $region13
    $region12: #{tpu_custom_call.1} parent=1 // pred_region
      %s45 = ssub.s32 96, 96
      %46 = vsyncadd [#allocation6], %s45
      %s48 = sshll.u32 [#allocation5], 4
      %s49 = int_to_ptr.vmem [resolvable:$true] %s48
      %51 = dma.hbm_to_vmem [thread:$0]  %s2, 96, %s49, [#allocation6]
    $region13: #{tpu_custom_call.1} parent=1 // pred_fallthru
      _
    // Predicated region
    $region14: #{tpu_custom_call.1} parent=1 // pred_check
      _
    $region15: #{tpu_custom_call.1} parent=1 // pred_check_branch
      %53 = sbr.rel (0) target = $region17
    $region16: #{tpu_custom_call.1} parent=1 // pred_region
      %s55 = ssub.s32 32, 32
      %56 = vsyncadd [#allocation6], %s55
      %s58 = sshll.u32 [#allocation7], 4
      %s59 = int_to_ptr.vmem [resolvable:$true] %s58
      %61 = dma.hbm_to_vmem [thread:$0]  %s3, 32, %s59, [#allocation6]
    $region17: #{tpu_custom_call.1} parent=1 // pred_fallthru
      _
    // Predicated region
    $region18: #{tpu_custom_call.1} parent=1 // pred_check
      _
    $region19: #{tpu_custom_call.1} parent=1 // pred_check_branch
      %63 = sbr.rel (0) target = $region21
    $region20: #{tpu_custom_call.1} parent=1 // pred_region
      %s65 = ssub.s32 2560, 2560
      %66 = vsyncadd [#allocation9], %s65
      %s67 = sshll.u32 [#allocation8], 4
      %s68 = int_to_ptr.vmem [resolvable:$true] %s67
      %73 = dma.hbm_to_vmem [thread:$0]  %s4, 2560, %s68, [#allocation9], 640, 640, 40
    $region21: #{tpu_custom_call.1} parent=1 // pred_fallthru
      _
    // Predicated region
    $region22: #{tpu_custom_call.1} parent=1 // pred_check
      _
    $region23: #{tpu_custom_call.1} parent=1 // pred_check_branch
      %75 = sbr.rel (0) target = $region25
    $region24: #{tpu_custom_call.1} parent=1 // pred_region
      %s77 = ssub.s32 1024, 1024
      %78 = vsyncadd [#allocation9], %s77
      %s79 = sshll.u32 [#allocation10], 4
      %s80 = int_to_ptr.vmem [resolvable:$true] %s79
      %85 = dma.hbm_to_vmem [thread:$0]  %s5, 1024, %s80, [#allocation9], 256, 256, 16
    $region25: #{tpu_custom_call.1} parent=1 // pred_fallthru
      _
    // Predicated region
    $region26: #{tpu_custom_call.1} parent=1 // pred_check
      _
    $region27: #{tpu_custom_call.1} parent=1 // pred_check_branch
      %87 = sbr.rel (0) target = $region29
    $region28: #{tpu_custom_call.1} parent=1 // pred_region
      %s89 = ssub.s32 2560, 2560
      %90 = vsyncadd [#allocation12], %s89
      %s91 = sshll.u32 [#allocation11], 4
      %s92 = int_to_ptr.vmem [resolvable:$true] %s91
      %97 = dma.hbm_to_vmem [thread:$0]  %s6, 2560, %s92, [#allocation12], 640, 640, 40
    $region29: #{tpu_custom_call.1} parent=1 // pred_fallthru
      _
    // Predicated region
    $region30: #{tpu_custom_call.1} parent=1 // pred_check
      _
    $region31: #{tpu_custom_call.1} parent=1 // pred_check_branch
      %99 = sbr.rel (0) target = $region33
    $region32: #{tpu_custom_call.1} parent=1 // pred_region
      _
    $region33: #{tpu_custom_call.1} parent=1 // pred_fallthru
      _
    // Predicated region
    $region34: #{tpu_custom_call.1} parent=1 // pred_check
      _
    $region35: #{tpu_custom_call.1} parent=1 // pred_check_branch
      %101 = sbr.rel (0) target = $region37
    $region36: #{tpu_custom_call.1} parent=1 // pred_region
      %s103 = ssub.s32 4096, 4096
      %104 = vsyncadd [#allocation12], %s103
      %s105 = sshll.u32 [#allocation13], 4
      %s106 = int_to_ptr.vmem [resolvable:$true] %s105
      %111 = dma.hbm_to_vmem [thread:$0]  %s8, 4096, %s106, [#allocation12], 256, 256, 16
    $region37: #{tpu_custom_call.1} parent=1 // pred_fallthru
      _
    // Predicated region
    $region38: #{tpu_custom_call.1} parent=1 // pred_check
      _
    $region39: #{tpu_custom_call.1} parent=1 // pred_check_branch
      %113 = sbr.rel (0) target = $region41
    $region40: #{tpu_custom_call.1} parent=1 // pred_region
      %s115 = ssub.s32 2048, 2048
      %116 = vsyncadd [#allocation15], %s115
      %s117 = sshll.u32 [#allocation14], 4
      %s118 = int_to_ptr.vmem [resolvable:$true] %s117
      %123 = dma.hbm_to_vmem [thread:$0]  %s9, 2048, %s118, [#allocation15], 256, 256, 16
    $region41: #{tpu_custom_call.1} parent=1 // pred_fallthru
      _
    // Predicated region
    $region42: #{tpu_custom_call.1} parent=1 // pred_check
      _
    $region43: #{tpu_custom_call.1} parent=1 // pred_check_branch
      %125 = sbr.rel (0) target = $region45
    $region44: #{tpu_custom_call.1} parent=1 // pred_region
      _
    $region45: #{tpu_custom_call.1} parent=1 // pred_fallthru
      _
    // Predicated region
    $region46: #{tpu_custom_call.1} parent=1 // pred_check
      _
    $region47: #{tpu_custom_call.1} parent=1 // pred_check_branch
      %127 = sbr.rel (0) target = $region49
    $region48: #{tpu_custom_call.1} parent=1 // pred_region
      _
    $region49: #{tpu_custom_call.1} parent=1 // pred_fallthru
      _
    // Predicated region
    $region50: #{tpu_custom_call.1} parent=1 // pred_check
      _
    $region51: #{tpu_custom_call.1} parent=1 // pred_check_branch
      %129 = sbr.rel (0) target = $region53
    $region52: #{tpu_custom_call.1} parent=1 // pred_region
      %s131 = ssub.s32 128, 128
      %132 = vsyncadd [#allocation15], %s131
      %s134 = sshll.u32 [#allocation16], 4
      %s135 = int_to_ptr.vmem [resolvable:$true] %s134
      %137 = dma.hbm_to_vmem [thread:$0]  %s12, 128, %s135, [#allocation15]
    $region53: #{tpu_custom_call.1} parent=1 // pred_fallthru
      _
    // Predicated region
    $region54: #{tpu_custom_call.1} parent=1 // pred_check
      _
    $region55: #{tpu_custom_call.1} parent=1 // pred_check_branch
      %139 = sbr.rel (0) target = $region57
    $region56: #{tpu_custom_call.1} parent=1 // pred_region
      %140 = dma.done [#allocation3], 32
    $region57: #{tpu_custom_call.1} parent=1 // pred_fallthru
      _
    // Predicated region
    $region58: #{tpu_custom_call.1} parent=1 // pred_check
      _
    $region59: #{tpu_custom_call.1} parent=1 // pred_check_branch
      %142 = sbr.rel (0) target = $region61
    $region60: #{tpu_custom_call.1} parent=1 // pred_region
      %143 = dma.done [#allocation6], 96
    $region61: #{tpu_custom_call.1} parent=1 // pred_fallthru
      _
    // Predicated region
    $region62: #{tpu_custom_call.1} parent=1 // pred_check
      _
    $region63: #{tpu_custom_call.1} parent=1 // pred_check_branch
      %145 = sbr.rel (0) target = $region65
    $region64: #{tpu_custom_call.1} parent=1 // pred_region
      %146 = dma.done [#allocation6], 32
    $region65: #{tpu_custom_call.1} parent=1 // pred_fallthru
      _
    // Predicated region
    $region66: #{tpu_custom_call.1} parent=1 // pred_check
      _
    $region67: #{tpu_custom_call.1} parent=1 // pred_check_branch
      %148 = sbr.rel (0) target = $region69
    $region68: #{tpu_custom_call.1} parent=1 // pred_region
      %149 = dma.done [#allocation9], 2560
    $region69: #{tpu_custom_call.1} parent=1 // pred_fallthru
      _
    // Predicated region
    $region70: #{tpu_custom_call.1} parent=1 // pred_check
      _
    $region71: #{tpu_custom_call.1} parent=1 // pred_check_branch
      %151 = sbr.rel (0) target = $region73
    $region72: #{tpu_custom_call.1} parent=1 // pred_region
      %152 = dma.done [#allocation9], 1024
    $region73: #{tpu_custom_call.1} parent=1 // pred_fallthru
      _
    // Predicated region
    $region74: #{tpu_custom_call.1} parent=1 // pred_check
      _
    $region75: #{tpu_custom_call.1} parent=1 // pred_check_branch
      %154 = sbr.rel (0) target = $region77
    $region76: #{tpu_custom_call.1} parent=1 // pred_region
      %155 = dma.done [#allocation12], 2560
    $region77: #{tpu_custom_call.1} parent=1 // pred_fallthru
      _
    // Predicated region
    $region78: #{tpu_custom_call.1} parent=1 // pred_check
      _
    $region79: #{tpu_custom_call.1} parent=1 // pred_check_branch
      %157 = sbr.rel (0) target = $region81
    $region80: #{tpu_custom_call.1} parent=1 // pred_region
      %158 = dma.done [#allocation12], 4096
    $region81: #{tpu_custom_call.1} parent=1 // pred_fallthru
      _
    // Predicated region
    $region82: #{tpu_custom_call.1} parent=1 // pred_check
      _
    $region83: #{tpu_custom_call.1} parent=1 // pred_check_branch
      %160 = sbr.rel (0) target = $region85
    $region84: #{tpu_custom_call.1} parent=1 // pred_region
      %161 = dma.done [#allocation15], 2048
    $region85: #{tpu_custom_call.1} parent=1 // pred_fallthru
      _
    // Predicated region
    $region86: #{tpu_custom_call.1} parent=1 // pred_check
      _
    $region87: #{tpu_custom_call.1} parent=1 // pred_check_branch
      %163 = sbr.rel (0) target = $region89
    $region88: #{tpu_custom_call.1} parent=1 // pred_region
      %164 = dma.done [#allocation15], 128
    $region89: #{tpu_custom_call.1} parent=1 // pred_fallthru
      _
    %v165 = vld [vmem:[%s0] sm:$0xff]
    %v166 = vld [vmem:[%s0 + $0x8] sm:$0xff]
    %v167 = vld [vmem:[#allocation2] sm:$0x3]
    %v168 = vld [vmem:[#allocation5] sm:$0x3f]
    %v169 = vld [vmem:[#allocation7] sm:$0x3]
    %vm170 = vcmp.gt.f32.partialorder %v169, 0.5
    %v171 = vld [vmem:[#allocation16] sm:$0x1]
    %v172 = vld [vmem:[#allocation16 + $0x1] sm:$0x1]
    %v173 = vld [vmem:[#allocation16 + $0x2] sm:$0x1f]
    %v174 = vld [vmem:[#allocation16 + $0x7] sm:$0x1]
    %v175 = vld [vmem:[#allocation8] sm:$0xff]
    %v176 = vld [vmem:[#allocation8 + $0x8] sm:$0xff]
    %v177 = vld [vmem:[#allocation8 + $0x10] sm:$0xff]
    %v178 = vld [vmem:[#allocation8 + $0x18] sm:$0xff]
    %v179 = vld [vmem:[#allocation8 + $0x20] sm:$0xff]
    %v180 = vld [vmem:[#allocation8 + $0x28] sm:$0xff]
    %v181 = vld [vmem:[#allocation8 + $0x30] sm:$0xff]
    %v182 = vld [vmem:[#allocation8 + $0x38] sm:$0xff]
    %v183 = vld [vmem:[#allocation8 + $0x40] sm:$0xff]
    %v184 = vld [vmem:[#allocation8 + $0x48] sm:$0xff]
    %v185 = vld [vmem:[#allocation8 + $0x50] sm:$0xff]
    %v186 = vld [vmem:[#allocation8 + $0x58] sm:$0xff]
    %v187 = vld [vmem:[#allocation8 + $0x60] sm:$0xff]
    %v188 = vld [vmem:[#allocation8 + $0x68] sm:$0xff]
    %v189 = vld [vmem:[#allocation8 + $0x70] sm:$0xff]
    %v190 = vld [vmem:[#allocation8 + $0x78] sm:$0xff]
    %v191 = vld [vmem:[#allocation8 + $0x80] sm:$0xff]
    %v192 = vld [vmem:[#allocation8 + $0x88] sm:$0xff]
    %v193 = vld [vmem:[#allocation8 + $0x90] sm:$0xff]
    %v194 = vld [vmem:[#allocation8 + $0x98] sm:$0xff]
    %vm195 = vcmask 261120
    %v197 = vsel %vm195, %v165, 0
    %v200 = vsel %vm195, %v166, 0
    %202 = vmatprep.subr.mxu0 0.0
    %203 = vmatpush1.msra.mxu0 0.0
    %204 = vmatprep.subr.mxu0 0.0
    %205 = vmatpush1.msra.mxu0 0.0
    %206 = vmatprep.subr.mxu0 0.0
    %207 = vmatpush1.msra.mxu0 0.0
    %208 = vmatprep.subr.mxu0 0.0
    %209 = vmatpush1.msra.mxu0 0.0
    %210 = vmatprep.subr.mxu0 0.0
    %211 = vmatpush1.msra.mxu0 0.0
    %212 = vmatprep.subr.mxu0 0.0
    %213 = vmatpush1.msra.mxu0 0.0
    %214 = vmatprep.subr.mxu0 0.0
    %215 = vmatpush1.msra.mxu0 0.0
    %216 = vmatprep.subr.mxu0 0.0
    %217 = vmatpush1.msra.mxu0 0.0
    %218 = vmatprep.subr.mxu0 0.0
    %219 = vmatpush1.msra.mxu0 0.0
    %220 = vmatprep.subr.mxu0 0.0
    %221 = vmatpush1.msra.mxu0 0.0
    %222 = vmatprep.subr.mxu0 0.0
    %223 = vmatpush1.msra.mxu0 0.0
    %224 = vmatprep.subr.mxu0 0.0
    %225 = vmatpush1.msra.mxu0 0.0
    %226 = vmatprep.subr.mxu0 %v191
    %227 = vmatpush1.msra.mxu0 %v190
    %228 = vmatprep.subr.mxu0 %v186
    %229 = vmatpush1.msra.mxu0 %v185
    %230 = vmatprep.subr.mxu0 %v181
    %231 = vmatpush1.msra.mxu0 %v180
    %232 = vmatprep.subr.mxu0 %v176
    %233 = vmatpush1.msra.mxu0 %v175
    %234 = vmatprep.subr.mxu0 0.0
    %235 = vmatpush2.msra.mxu0 0.0
    %236 = vmatprep.subr.mxu0 0.0
    %237 = vmatpush2.msra.mxu0 0.0
    %238 = vmatprep.subr.mxu0 0.0
    %239 = vmatpush2.msra.mxu0 0.0
    %240 = vmatprep.subr.mxu0 0.0
    %241 = vmatpush2.msra.mxu0 0.0
    %242 = vmatprep.subr.mxu0 0.0
    %243 = vmatpush2.msra.mxu0 0.0
    %244 = vmatprep.subr.mxu0 0.0
    %245 = vmatpush2.msra.mxu0 0.0
    %246 = vmatprep.subr.mxu0 0.0
    %247 = vmatpush2.msra.mxu0 0.0
    %248 = vmatprep.subr.mxu0 0.0
    %249 = vmatpush2.msra.mxu0 0.0
    %250 = vmatprep.subr.mxu0 0.0
    %251 = vmatpush2.msra.mxu0 0.0
    %252 = vmatprep.subr.mxu0 0.0
    %253 = vmatpush2.msra.mxu0 0.0
    %254 = vmatprep.subr.mxu0 0.0
    %255 = vmatpush2.msra.mxu0 0.0
    %256 = vmatprep.subr.mxu0 0.0
    %257 = vmatpush2.msra.mxu0 0.0
    %258 = vmatprep.subr.mxu0 0.0
    %259 = vmatpush2.msra.mxu0 0.0
    %260 = vmatprep.subr.mxu0 0.0
    %261 = vmatpush2.msra.mxu0 0.0
    %262 = vmatprep.subr.mxu0 0.0
    %263 = vmatpush2.msra.mxu0 0.0
    %264 = vmatprep.subr.mxu0 0.0
    %265 = vmatpush2.msra.mxu0 0.0
    %266 = vmatprep.mubr.f32.mxu0 0.0
    %267 = vmatmul.mubr.f32.gmra.mxu0 %v197
    %v268 = vpop.f32.mrf.mxu0
    %v269 = vadd.f32 0.0, %v268
    %v270 = vpop.f32.mrf.mxu0
    %v271 = vadd.f32 0.0, %v270
    %272 = vmatprep.mubr.f32.mxu0 0.0
    %273 = vmatmul.mubr.f32.gmra.mxu0 %v200
    %v274 = vpop.f32.mrf.mxu0
    %v275 = vadd.f32 0.0, %v274
    %v276 = vpop.f32.mrf.mxu0
    %v277 = vadd.f32 0.0, %v276
    %278 = vdwg.mxu0
    %279 = vmatprep.subr.mxu0 0.0
    %280 = vmatpush1.msra.mxu0 0.0
    %281 = vmatprep.subr.mxu0 0.0
    %282 = vmatpush1.msra.mxu0 0.0
    %283 = vmatprep.subr.mxu0 0.0
    %284 = vmatpush1.msra.mxu0 0.0
    %285 = vmatprep.subr.mxu0 0.0
    %286 = vmatpush1.msra.mxu0 0.0
    %287 = vmatprep.subr.mxu0 0.0
    %288 = vmatpush1.msra.mxu0 0.0
    %289 = vmatprep.subr.mxu0 0.0
    %290 = vmatpush1.msra.mxu0 0.0
    %291 = vmatprep.subr.mxu0 0.0
    %292 = vmatpush1.msra.mxu0 0.0
    %293 = vmatprep.subr.mxu0 0.0
    %294 = vmatpush1.msra.mxu0 0.0
    %295 = vmatprep.subr.mxu0 0.0
    %296 = vmatpush1.msra.mxu0 0.0
    %297 = vmatprep.subr.mxu0 0.0
    %298 = vmatpush1.msra.mxu0 0.0
    %299 = vmatprep.subr.mxu0 0.0
    %300 = vmatpush1.msra.mxu0 0.0
    %301 = vmatprep.subr.mxu0 0.0
    %302 = vmatpush1.msra.mxu0 0.0
    %303 = vmatprep.subr.mxu0 %v193
    %304 = vmatpush1.msra.mxu0 %v192
    %305 = vmatprep.subr.mxu0 %v188
    %306 = vmatpush1.msra.mxu0 %v187
    %307 = vmatprep.subr.mxu0 %v183
    %308 = vmatpush1.msra.mxu0 %v182
    %309 = vmatprep.subr.mxu0 %v178
    %310 = vmatpush1.msra.mxu0 %v177
    %311 = vmatprep.subr.mxu0 0.0
    %312 = vmatpush2.msra.mxu0 0.0
    %313 = vmatprep.subr.mxu0 0.0
    %314 = vmatpush2.msra.mxu0 0.0
    %315 = vmatprep.subr.mxu0 0.0
    %316 = vmatpush2.msra.mxu0 0.0
    %317 = vmatprep.subr.mxu0 0.0
    %318 = vmatpush2.msra.mxu0 0.0
    %319 = vmatprep.subr.mxu0 0.0
    %320 = vmatpush2.msra.mxu0 0.0
    %321 = vmatprep.subr.mxu0 0.0
    %322 = vmatpush2.msra.mxu0 0.0
    %323 = vmatprep.subr.mxu0 0.0
    %324 = vmatpush2.msra.mxu0 0.0
    %325 = vmatprep.subr.mxu0 0.0
    %326 = vmatpush2.msra.mxu0 0.0
    %327 = vmatprep.subr.mxu0 0.0
    %328 = vmatpush2.msra.mxu0 0.0
    %329 = vmatprep.subr.mxu0 0.0
    %330 = vmatpush2.msra.mxu0 0.0
    %331 = vmatprep.subr.mxu0 0.0
    %332 = vmatpush2.msra.mxu0 0.0
    %333 = vmatprep.subr.mxu0 0.0
    %334 = vmatpush2.msra.mxu0 0.0
    %335 = vmatprep.subr.mxu0 0.0
    %336 = vmatpush2.msra.mxu0 0.0
    %337 = vmatprep.subr.mxu0 0.0
    %338 = vmatpush2.msra.mxu0 0.0
    %339 = vmatprep.subr.mxu0 0.0
    %340 = vmatpush2.msra.mxu0 0.0
    %341 = vmatprep.subr.mxu0 0.0
    %342 = vmatpush2.msra.mxu0 0.0
    %343 = vmatprep.mubr.f32.mxu0 0.0
    %344 = vmatmul.mubr.f32.gmra.mxu0 %v197
    %v345 = vpop.f32.mrf.mxu0
    %v346 = vadd.f32 0.0, %v345
    %v347 = vpop.f32.mrf.mxu0
    %v348 = vadd.f32 0.0, %v347
    %349 = vmatprep.mubr.f32.mxu0 0.0
    %350 = vmatmul.mubr.f32.gmra.mxu0 %v200
    %v351 = vpop.f32.mrf.mxu0
    %v352 = vadd.f32 0.0, %v351
    %v353 = vpop.f32.mrf.mxu0
    %v354 = vadd.f32 0.0, %v353
    %355 = vdwg.mxu0
    %356 = vmatprep.subr.mxu0 0.0
    %357 = vmatpush1.msra.mxu0 0.0
    %358 = vmatprep.subr.mxu0 0.0
    %359 = vmatpush1.msra.mxu0 0.0
    %360 = vmatprep.subr.mxu0 0.0
    %361 = vmatpush1.msra.mxu0 0.0
    %362 = vmatprep.subr.mxu0 0.0
    %363 = vmatpush1.msra.mxu0 0.0
    %364 = vmatprep.subr.mxu0 0.0
    %365 = vmatpush1.msra.mxu0 0.0
    %366 = vmatprep.subr.mxu0 0.0
    %367 = vmatpush1.msra.mxu0 0.0
    %368 = vmatprep.subr.mxu0 0.0
    %369 = vmatpush1.msra.mxu0 0.0
    %370 = vmatprep.subr.mxu0 0.0
    %371 = vmatpush1.msra.mxu0 0.0
    %372 = vmatprep.subr.mxu0 0.0
    %373 = vmatpush1.msra.mxu0 0.0
    %374 = vmatprep.subr.mxu0 0.0
    %375 = vmatpush1.msra.mxu0 0.0
    %376 = vmatprep.subr.mxu0 0.0
    %377 = vmatpush1.msra.mxu0 0.0
    %378 = vmatprep.subr.mxu0 0.0
    %379 = vmatpush1.msra.mxu0 0.0
    %380 = vmatprep.subr.mxu0 0.0
    %381 = vmatpush1.msra.mxu0 %v194
    %382 = vmatprep.subr.mxu0 0.0
    %383 = vmatpush1.msra.mxu0 %v189
    %384 = vmatprep.subr.mxu0 0.0
    %385 = vmatpush1.msra.mxu0 %v184
    %386 = vmatprep.subr.mxu0 0.0
    %387 = vmatpush1.msra.mxu0 %v179
    %388 = vmatprep.subr.mxu0 0.0
    %389 = vmatpush2.msra.mxu0 0.0
    %390 = vmatprep.subr.mxu0 0.0
    %391 = vmatpush2.msra.mxu0 0.0
    %392 = vmatprep.subr.mxu0 0.0
    %393 = vmatpush2.msra.mxu0 0.0
    %394 = vmatprep.subr.mxu0 0.0
    %395 = vmatpush2.msra.mxu0 0.0
    %396 = vmatprep.subr.mxu0 0.0
    %397 = vmatpush2.msra.mxu0 0.0
    %398 = vmatprep.subr.mxu0 0.0
    %399 = vmatpush2.msra.mxu0 0.0
    %400 = vmatprep.subr.mxu0 0.0
    %401 = vmatpush2.msra.mxu0 0.0
    %402 = vmatprep.subr.mxu0 0.0
    %403 = vmatpush2.msra.mxu0 0.0
    %404 = vmatprep.subr.mxu0 0.0
    %405 = vmatpush2.msra.mxu0 0.0
    %406 = vmatprep.subr.mxu0 0.0
    %407 = vmatpush2.msra.mxu0 0.0
    %408 = vmatprep.subr.mxu0 0.0
    %409 = vmatpush2.msra.mxu0 0.0
    %410 = vmatprep.subr.mxu0 0.0
    %411 = vmatpush2.msra.mxu0 0.0
    %412 = vmatprep.subr.mxu0 0.0
    %413 = vmatpush2.msra.mxu0 0.0
    %414 = vmatprep.subr.mxu0 0.0
    %415 = vmatpush2.msra.mxu0 0.0
    %416 = vmatprep.subr.mxu0 0.0
    %417 = vmatpush2.msra.mxu0 0.0
    %418 = vmatprep.subr.mxu0 0.0
    %419 = vmatpush2.msra.mxu0 0.0
    %420 = vmatprep.mubr.f32.mxu0 0.0
    %421 = vmatmul.mubr.f32.gmra.mxu0 %v197
    %v422 = vpop.f32.mrf.mxu0
    %v423 = vadd.f32 0.0, %v422
    %v424 = vpop.f32.mrf.mxu0
    %425 = vmatprep.mubr.f32.mxu0 0.0
    %426 = vmatmul.mubr.f32.gmra.mxu0 %v200
    %v427 = vpop.f32.mrf.mxu0
    %v428 = vadd.f32 0.0, %v427
    %v429 = vpop.f32.mrf.mxu0
    %430 = vdwg.mxu0
    %v431 = vld [vmem:[#allocation10] sm:$0xff]
    %v432 = vld [vmem:[#allocation10 + $0x8] sm:$0xff]
    %v433 = vld [vmem:[#allocation10 + $0x10] sm:$0xff]
    %v434 = vld [vmem:[#allocation10 + $0x18] sm:$0xff]
    %v435 = vld [vmem:[#allocation10 + $0x20] sm:$0xff]
    %v436 = vld [vmem:[#allocation10 + $0x28] sm:$0xff]
    %v437 = vld [vmem:[#allocation10 + $0x30] sm:$0xff]
    %v438 = vld [vmem:[#allocation10 + $0x38] sm:$0xff]
    %v440 = vsel %vm195, %v167, 0
    %442 = vmatprep.subr.mxu0 0.0
    %443 = vmatpush1.msra.mxu0 0.0
    %444 = vmatprep.subr.mxu0 0.0
    %445 = vmatpush1.msra.mxu0 0.0
    %446 = vmatprep.subr.mxu0 0.0
    %447 = vmatpush1.msra.mxu0 0.0
    %448 = vmatprep.subr.mxu0 0.0
    %449 = vmatpush1.msra.mxu0 0.0
    %450 = vmatprep.subr.mxu0 0.0
    %451 = vmatpush1.msra.mxu0 0.0
    %452 = vmatprep.subr.mxu0 0.0
    %453 = vmatpush1.msra.mxu0 0.0
    %454 = vmatprep.subr.mxu0 0.0
    %455 = vmatpush1.msra.mxu0 0.0
    %456 = vmatprep.subr.mxu0 0.0
    %457 = vmatpush1.msra.mxu0 0.0
    %458 = vmatprep.subr.mxu0 0.0
    %459 = vmatpush1.msra.mxu0 0.0
    %460 = vmatprep.subr.mxu0 0.0
    %461 = vmatpush1.msra.mxu0 0.0
    %462 = vmatprep.subr.mxu0 0.0
    %463 = vmatpush1.msra.mxu0 0.0
    %464 = vmatprep.subr.mxu0 0.0
    %465 = vmatpush1.msra.mxu0 0.0
    %466 = vmatprep.subr.mxu0 %v438
    %467 = vmatpush1.msra.mxu0 %v437
    %468 = vmatprep.subr.mxu0 %v436
    %469 = vmatpush1.msra.mxu0 %v435
    %470 = vmatprep.subr.mxu0 %v434
    %471 = vmatpush1.msra.mxu0 %v433
    %472 = vmatprep.subr.mxu0 %v432
    %473 = vmatpush1.msra.mxu0 %v431
    %474 = vmatprep.subr.mxu0 0.0
    %475 = vmatpush2.msra.mxu0 0.0
    %476 = vmatprep.subr.mxu0 0.0
    %477 = vmatpush2.msra.mxu0 0.0
    %478 = vmatprep.subr.mxu0 0.0
    %479 = vmatpush2.msra.mxu0 0.0
    %480 = vmatprep.subr.mxu0 0.0
    %481 = vmatpush2.msra.mxu0 0.0
    %482 = vmatprep.subr.mxu0 0.0
    %483 = vmatpush2.msra.mxu0 0.0
    %484 = vmatprep.subr.mxu0 0.0
    %485 = vmatpush2.msra.mxu0 0.0
    %486 = vmatprep.subr.mxu0 0.0
    %487 = vmatpush2.msra.mxu0 0.0
    %488 = vmatprep.subr.mxu0 0.0
    %489 = vmatpush2.msra.mxu0 0.0
    %490 = vmatprep.subr.mxu0 0.0
    %491 = vmatpush2.msra.mxu0 0.0
    %492 = vmatprep.subr.mxu0 0.0
    %493 = vmatpush2.msra.mxu0 0.0
    %494 = vmatprep.subr.mxu0 0.0
    %495 = vmatpush2.msra.mxu0 0.0
    %496 = vmatprep.subr.mxu0 0.0
    %497 = vmatpush2.msra.mxu0 0.0
    %498 = vmatprep.subr.mxu0 0.0
    %499 = vmatpush2.msra.mxu0 0.0
    %500 = vmatprep.subr.mxu0 0.0
    %501 = vmatpush2.msra.mxu0 0.0
    %502 = vmatprep.subr.mxu0 0.0
    %503 = vmatpush2.msra.mxu0 0.0
    %504 = vmatprep.subr.mxu0 0.0
    %505 = vmatpush2.msra.mxu0 0.0
    %506 = vmatprep.mubr.f32.mxu0 0.0
    %507 = vmatmul.mubr.f32.gmra.mxu0 %v440
    %v508 = vpop.f32.mrf.mxu0
    %v509 = vadd.f32 0.0, %v508
    %v510 = vpop.f32.mrf.mxu0
    %v511 = vadd.f32 0.0, %v510
    %512 = vdwg.mxu0
    %v514 = vlaneseq
    %v515 = vshrl.u32 %v514, 7
    %v516 = vsub.s32 0, %v515
    %v517 = vrot.slane %v171, %v516
    %v519 = vadd.f32 %v509, %v517
    %v522 = vunpack.c.l.s4 1966171168
    %v523 = vunpack.c.0.s8 %v522
    %v524 = vlaneseq
    %v525 = vshrl.u32 %v524, 7
    %v526 = vsub.s32 %v523, %v525
    %v527 = vrot.slane %v519, %v526
    %v528 = vcombine.high %v527, %v527
    %v530 = vunpack.c.l.s4 1966171168
    %v531 = vunpack.c.0.s8 %v530
    %v532 = vlaneseq
    %v533 = vshrl.u32 %v532, 7
    %v534 = vsub.s32 %v531, %v533
    %v535 = vrot.slane %v527, %v534
    %v537 = vunpack.c.l.s4 1966171168
    %v538 = vunpack.c.0.s8 %v537
    %v539 = vlaneseq
    %v540 = vshrl.u32 %v539, 7
    %v541 = vsub.s32 %v538, %v540
    %v542 = vrot.slane %v528, %v541
    %v543 = vlaneseq
    %v544 = vshrl.u32 %v543, 7
    %v545 = vsub.s32 0, %v544
    %v546 = vrot.slane %v535, %v545
    %v547 = vlaneseq
    %v548 = vshrl.u32 %v547, 7
    %v549 = vsub.s32 0, %v548
    %v550 = vrot.slane %v542, %v549
    %v553 = vadd.f32 %v546, %v269
    %v554 = vadd.f32 %v550, %v275
    %v555 = vtanh.pop %v553
    %v556 = vtanh.pop %v554
    %v557 = vld [vmem:[%s10] sm:$0xff]
    %v558 = vld [vmem:[%s10 + $0x8] sm:$0xff]
    %v559 = vld [vmem:[%s10 + $0x10] sm:$0xff]
    %v560 = vld [vmem:[%s10 + $0x18] sm:$0xff]
    %565 = vrot.lane.b32.xlu0 %v557, 124
    %v566 = vpop.permute.xlu0 %565
    %567 = vrot.lane.b32.xlu0 %v558, 124
    %v568 = vpop.permute.xlu0 %567
    %569 = vrot.lane.b32.xlu0 %v559, 124
    %v570 = vpop.permute.xlu0 %569
    %571 = vrot.lane.b32.xlu0 %v560, 124
    %v572 = vpop.permute.xlu0 %571
    %v578 = vsel %vm195, %v555, 0
    %v581 = vsel %vm195, %v556, 0
    %583 = vmatprep.subr.mxu0 0.0
    %584 = vmatpush1.msra.mxu0 0.0
    %585 = vmatprep.subr.mxu0 0.0
    %586 = vmatpush1.msra.mxu0 0.0
    %587 = vmatprep.subr.mxu0 0.0
    %588 = vmatpush1.msra.mxu0 0.0
    %589 = vmatprep.subr.mxu0 0.0
    %590 = vmatpush1.msra.mxu0 0.0
    %591 = vmatprep.subr.mxu0 0.0
    %592 = vmatpush1.msra.mxu0 0.0
    %593 = vmatprep.subr.mxu0 0.0
    %594 = vmatpush1.msra.mxu0 0.0
    %595 = vmatprep.subr.mxu0 0.0
    %596 = vmatpush1.msra.mxu0 0.0
    %597 = vmatprep.subr.mxu0 0.0
    %598 = vmatpush1.msra.mxu0 0.0
    %599 = vmatprep.subr.mxu0 0.0
    %600 = vmatpush1.msra.mxu0 0.0
    %601 = vmatprep.subr.mxu0 0.0
    %602 = vmatpush1.msra.mxu0 0.0
    %603 = vmatprep.subr.mxu0 0.0
    %604 = vmatpush1.msra.mxu0 0.0
    %605 = vmatprep.subr.mxu0 0.0
    %606 = vmatpush1.msra.mxu0 0.0
    %607 = vmatprep.subr.mxu0 0.0
    %608 = vmatpush1.msra.mxu0 %v572
    %609 = vmatprep.subr.mxu0 0.0
    %610 = vmatpush1.msra.mxu0 %v570
    %611 = vmatprep.subr.mxu0 0.0
    %612 = vmatpush1.msra.mxu0 %v568
    %613 = vmatprep.subr.mxu0 0.0
    %614 = vmatpush1.msra.mxu0 %v566
    %615 = vmatprep.subr.mxu0 0.0
    %616 = vmatpush2.msra.mxu0 0.0
    %617 = vmatprep.subr.mxu0 0.0
    %618 = vmatpush2.msra.mxu0 0.0
    %619 = vmatprep.subr.mxu0 0.0
    %620 = vmatpush2.msra.mxu0 0.0
    %621 = vmatprep.subr.mxu0 0.0
    %622 = vmatpush2.msra.mxu0 0.0
    %623 = vmatprep.subr.mxu0 0.0
    %624 = vmatpush2.msra.mxu0 0.0
    %625 = vmatprep.subr.mxu0 0.0
    %626 = vmatpush2.msra.mxu0 0.0
    %627 = vmatprep.subr.mxu0 0.0
    %628 = vmatpush2.msra.mxu0 0.0
    %629 = vmatprep.subr.mxu0 0.0
    %630 = vmatpush2.msra.mxu0 0.0
    %631 = vmatprep.subr.mxu0 0.0
    %632 = vmatpush2.msra.mxu0 0.0
    %633 = vmatprep.subr.mxu0 0.0
    %634 = vmatpush2.msra.mxu0 0.0
    %635 = vmatprep.subr.mxu0 0.0
    %636 = vmatpush2.msra.mxu0 0.0
    %637 = vmatprep.subr.mxu0 0.0
    %638 = vmatpush2.msra.mxu0 0.0
    %639 = vmatprep.subr.mxu0 0.0
    %640 = vmatpush2.msra.mxu0 0.0
    %641 = vmatprep.subr.mxu0 0.0
    %642 = vmatpush2.msra.mxu0 0.0
    %643 = vmatprep.subr.mxu0 0.0
    %644 = vmatpush2.msra.mxu0 0.0
    %645 = vmatprep.subr.mxu0 0.0
    %646 = vmatpush2.msra.mxu0 0.0
    %647 = vmatprep.mubr.f32.mxu0 0.0
    %648 = vmatmul.mubr.f32.gmra.mxu0 %v578
    %v649 = vpop.f32.mrf.mxu0
    %v650 = vadd.f32 0.0, %v649
    %v651 = vpop.f32.mrf.mxu0
    %652 = vmatprep.mubr.f32.mxu0 0.0
    %653 = vmatmul.mubr.f32.gmra.mxu0 %v581
    %v654 = vpop.f32.mrf.mxu0
    %v655 = vadd.f32 0.0, %v654
    %v656 = vpop.f32.mrf.mxu0
    %657 = vdwg.mxu0
    %v659 = vlaneseq
    %v660 = vshrl.u32 %v659, 7
    %v661 = vsub.s32 0, %v660
    %v662 = vrot.slane %v174, %v661
    %663 = vset.pattern.permute.xlu0 4
    %664 = vperm.xlu0 %663, %v662
    %v665 = vpop.permute.xlu0 %664
    %v667 = vadd.f32 %v650, %v665
    %v668 = vadd.f32 %v655, %v665
    %671 = vset.pattern.permute.xlu0 0
    %672 = vperm.xlu0 %671, %v667
    %v673 = vpop.permute.xlu0 %672
    %674 = vset.pattern.permute.xlu0 0
    %675 = vperm.xlu0 %674, %v668
    %v676 = vpop.permute.xlu0 %675
    %v677 = vlaneseq
    %v678 = vand.u32 %v677, 127
    %v679 = vlaneseq
    %v680 = vshrl.u32 %v679, 7
    %v681 = vsub.s32 %v678, %v680
    %v682 = vrot.slane %v673, %v681
    %v683 = vlaneseq
    %v684 = vshrl.u32 %v683, 7
    %v685 = vsub.s32 %v678, %v684
    %v686 = vrot.slane %v676, %v685
    %vm687 = vcmask 1041409
    %v688 = vsel %vm687, %v686, %v682
    %v690 = vsel %vm170, -1e+30, %v688
    %vm691 = vcmask 58368
    %v692 = vsel %vm691, %v690, -inf
    %693 = vmax.xlane.f32.xlu0 %v692
    %v694 = vpop.xlane.xlu0 %693
    %v695 = vsub.f32 %v690, %v694
    %v696 = vmul.f32 %v695, 1.442695
    %v697 = vpow.pop %v696
    %v698 = vsel %vm691, %v697, 0.0
    %699 = vadd.xlane.f32.xlu0 %v698
    %v700 = vpop.xlane.xlu0 %699
    %v701 = vrcp.pop %v700
    %v702 = vmul.f32 %v697, %v701
    %v705 = vunpack.c.l.s4 1966171168
    %v706 = vunpack.c.0.s8 %v705
    %v707 = vlaneseq
    %v708 = vshrl.u32 %v707, 7
    %v709 = vsub.s32 %v706, %v708
    %v710 = vrot.slane %v702, %v709
    %v711 = vcombine.high %v710, %v710
    %v713 = vunpack.c.l.s4 1966171168
    %v714 = vunpack.c.0.s8 %v713
    %v715 = vlaneseq
    %v716 = vshrl.u32 %v715, 7
    %v717 = vsub.s32 %v714, %v716
    %v718 = vrot.slane %v710, %v717
    %v720 = vunpack.c.l.s4 1966171168
    %v721 = vunpack.c.0.s8 %v720
    %v722 = vlaneseq
    %v723 = vshrl.u32 %v722, 7
    %v724 = vsub.s32 %v721, %v723
    %v725 = vrot.slane %v711, %v724
    %vm726 = vcmask 64512
    %v727 = vsel %vm726, %v718, 0
    %729 = vmatprep.subr.mxu0 0.0
    %730 = vmatpush1.msra.mxu0 0.0
    %731 = vmatprep.subr.mxu0 0.0
    %732 = vmatpush1.msra.mxu0 0.0
    %733 = vmatprep.subr.mxu0 0.0
    %734 = vmatpush1.msra.mxu0 0.0
    %735 = vmatprep.subr.mxu0 0.0
    %736 = vmatpush1.msra.mxu0 0.0
    %737 = vmatprep.subr.mxu0 0.0
    %738 = vmatpush1.msra.mxu0 0.0
    %739 = vmatprep.subr.mxu0 0.0
    %740 = vmatpush1.msra.mxu0 0.0
    %741 = vmatprep.subr.mxu0 0.0
    %742 = vmatpush1.msra.mxu0 0.0
    %743 = vmatprep.subr.mxu0 0.0
    %744 = vmatpush1.msra.mxu0 0.0
    %745 = vmatprep.subr.mxu0 0.0
    %746 = vmatpush1.msra.mxu0 0.0
    %747 = vmatprep.subr.mxu0 0.0
    %748 = vmatpush1.msra.mxu0 0.0
    %749 = vmatprep.subr.mxu0 0.0
    %750 = vmatpush1.msra.mxu0 0.0
    %751 = vmatprep.subr.mxu0 0.0
    %752 = vmatpush1.msra.mxu0 0.0
    %753 = vmatprep.subr.mxu0 0.0
    %754 = vmatpush1.msra.mxu0 0.0
    %755 = vmatprep.subr.mxu0 0.0
    %756 = vmatpush1.msra.mxu0 0.0
    %757 = vmatprep.subr.mxu0 0.0
    %758 = vmatpush1.msra.mxu0 0.0
    %759 = vmatprep.subr.mxu0 0.0
    %760 = vmatpush1.msra.mxu0 %v165
    %761 = vmatprep.subr.mxu0 0.0
    %762 = vmatpush2.msra.mxu0 0.0
    %763 = vmatprep.subr.mxu0 0.0
    %764 = vmatpush2.msra.mxu0 0.0
    %765 = vmatprep.subr.mxu0 0.0
    %766 = vmatpush2.msra.mxu0 0.0
    %767 = vmatprep.subr.mxu0 0.0
    %768 = vmatpush2.msra.mxu0 0.0
    %769 = vmatprep.subr.mxu0 0.0
    %770 = vmatpush2.msra.mxu0 0.0
    %771 = vmatprep.subr.mxu0 0.0
    %772 = vmatpush2.msra.mxu0 0.0
    %773 = vmatprep.subr.mxu0 0.0
    %774 = vmatpush2.msra.mxu0 0.0
    %775 = vmatprep.subr.mxu0 0.0
    %776 = vmatpush2.msra.mxu0 0.0
    %777 = vmatprep.subr.mxu0 0.0
    %778 = vmatpush2.msra.mxu0 0.0
    %779 = vmatprep.subr.mxu0 0.0
    %780 = vmatpush2.msra.mxu0 0.0
    %781 = vmatprep.subr.mxu0 0.0
    %782 = vmatpush2.msra.mxu0 0.0
    %783 = vmatprep.subr.mxu0 0.0
    %784 = vmatpush2.msra.mxu0 0.0
    %785 = vmatprep.subr.mxu0 0.0
    %786 = vmatpush2.msra.mxu0 0.0
    %787 = vmatprep.subr.mxu0 0.0
    %788 = vmatpush2.msra.mxu0 0.0
    %789 = vmatprep.subr.mxu0 0.0
    %790 = vmatpush2.msra.mxu0 0.0
    %791 = vmatprep.subr.mxu0 0.0
    %792 = vmatpush2.msra.mxu0 0.0
    %793 = vmatprep.mubr.f32.mxu0 0.0
    %794 = vmatmul.mubr.f32.gmra.mxu0 %v727
    %v795 = vpop.f32.mrf.mxu0
    %v796 = vadd.f32 0.0, %v795
    %v797 = vpop.f32.mrf.mxu0
    %798 = vdwg.mxu0
    %v799 = vsel %vm726, %v725, 0
    %801 = vmatprep.subr.mxu0 0.0
    %802 = vmatpush1.msra.mxu0 0.0
    %803 = vmatprep.subr.mxu0 0.0
    %804 = vmatpush1.msra.mxu0 0.0
    %805 = vmatprep.subr.mxu0 0.0
    %806 = vmatpush1.msra.mxu0 0.0
    %807 = vmatprep.subr.mxu0 0.0
    %808 = vmatpush1.msra.mxu0 0.0
    %809 = vmatprep.subr.mxu0 0.0
    %810 = vmatpush1.msra.mxu0 0.0
    %811 = vmatprep.subr.mxu0 0.0
    %812 = vmatpush1.msra.mxu0 0.0
    %813 = vmatprep.subr.mxu0 0.0
    %814 = vmatpush1.msra.mxu0 0.0
    %815 = vmatprep.subr.mxu0 0.0
    %816 = vmatpush1.msra.mxu0 0.0
    %817 = vmatprep.subr.mxu0 0.0
    %818 = vmatpush1.msra.mxu0 0.0
    %819 = vmatprep.subr.mxu0 0.0
    %820 = vmatpush1.msra.mxu0 0.0
    %821 = vmatprep.subr.mxu0 0.0
    %822 = vmatpush1.msra.mxu0 0.0
    %823 = vmatprep.subr.mxu0 0.0
    %824 = vmatpush1.msra.mxu0 0.0
    %825 = vmatprep.subr.mxu0 0.0
    %826 = vmatpush1.msra.mxu0 0.0
    %827 = vmatprep.subr.mxu0 0.0
    %828 = vmatpush1.msra.mxu0 0.0
    %829 = vmatprep.subr.mxu0 0.0
    %830 = vmatpush1.msra.mxu0 0.0
    %831 = vmatprep.subr.mxu0 0.0
    %832 = vmatpush1.msra.mxu0 %v166
    %833 = vmatprep.subr.mxu0 0.0
    %834 = vmatpush2.msra.mxu0 0.0
    %835 = vmatprep.subr.mxu0 0.0
    %836 = vmatpush2.msra.mxu0 0.0
    %837 = vmatprep.subr.mxu0 0.0
    %838 = vmatpush2.msra.mxu0 0.0
    %839 = vmatprep.subr.mxu0 0.0
    %840 = vmatpush2.msra.mxu0 0.0
    %841 = vmatprep.subr.mxu0 0.0
    %842 = vmatpush2.msra.mxu0 0.0
    %843 = vmatprep.subr.mxu0 0.0
    %844 = vmatpush2.msra.mxu0 0.0
    %845 = vmatprep.subr.mxu0 0.0
    %846 = vmatpush2.msra.mxu0 0.0
    %847 = vmatprep.subr.mxu0 0.0
    %848 = vmatpush2.msra.mxu0 0.0
    %849 = vmatprep.subr.mxu0 0.0
    %850 = vmatpush2.msra.mxu0 0.0
    %851 = vmatprep.subr.mxu0 0.0
    %852 = vmatpush2.msra.mxu0 0.0
    %853 = vmatprep.subr.mxu0 0.0
    %854 = vmatpush2.msra.mxu0 0.0
    %855 = vmatprep.subr.mxu0 0.0
    %856 = vmatpush2.msra.mxu0 0.0
    %857 = vmatprep.subr.mxu0 0.0
    %858 = vmatpush2.msra.mxu0 0.0
    %859 = vmatprep.subr.mxu0 0.0
    %860 = vmatpush2.msra.mxu0 0.0
    %861 = vmatprep.subr.mxu0 0.0
    %862 = vmatpush2.msra.mxu0 0.0
    %863 = vmatprep.subr.mxu0 0.0
    %864 = vmatpush2.msra.mxu0 0.0
    %865 = vmatprep.mubr.f32.mxu0 0.0
    %866 = vmatmul.mubr.f32.gmra.mxu0 %v799
    %v867 = vpop.f32.mrf.mxu0
    %v868 = vadd.f32 0.0, %v867
    %v869 = vpop.f32.mrf.mxu0
    %870 = vdwg.mxu0
    %v871 = vld [vmem:[%s7] sm:$0xff]
    %v872 = vld [vmem:[%s7 + $0x8] sm:$0xff]
    %v873 = vld [vmem:[%s7 + $0x10] sm:$0xff]
    %v874 = vld [vmem:[%s7 + $0x18] sm:$0xff]
    %v875 = vld [vmem:[%s7 + $0x20] sm:$0xff]
    %v876 = vld [vmem:[%s7 + $0x28] sm:$0xff]
    %v877 = vld [vmem:[%s7 + $0x30] sm:$0xff]
    %v878 = vld [vmem:[%s7 + $0x38] sm:$0xff]
    %v879 = vld [vmem:[%s7 + $0x40] sm:$0xff]
    %v880 = vld [vmem:[%s7 + $0x48] sm:$0xff]
    %v881 = vld [vmem:[%s7 + $0x50] sm:$0xff]
    %v882 = vld [vmem:[%s7 + $0x58] sm:$0xff]
    %v883 = vld [vmem:[%s7 + $0x60] sm:$0xff]
    %v884 = vld [vmem:[%s7 + $0x68] sm:$0xff]
    %v885 = vld [vmem:[%s7 + $0x70] sm:$0xff]
    %v886 = vld [vmem:[%s7 + $0x78] sm:$0xff]
    %v887 = vld [vmem:[%s7 + $0x80] sm:$0xff]
    %v888 = vld [vmem:[%s7 + $0x88] sm:$0xff]
    %v889 = vld [vmem:[%s7 + $0x90] sm:$0xff]
    %v890 = vld [vmem:[%s7 + $0x98] sm:$0xff]
    %v891 = vld [vmem:[%s7 + $0xa0] sm:$0xff]
    %v892 = vld [vmem:[%s7 + $0xa8] sm:$0xff]
    %v893 = vld [vmem:[%s7 + $0xb0] sm:$0xff]
    %v894 = vld [vmem:[%s7 + $0xb8] sm:$0xff]
    %v895 = vld [vmem:[%s7 + $0xc0] sm:$0xff]
    %v896 = vld [vmem:[%s7 + $0xc8] sm:$0xff]
    %v897 = vld [vmem:[%s7 + $0xd0] sm:$0xff]
    %v898 = vld [vmem:[%s7 + $0xd8] sm:$0xff]
    %v899 = vld [vmem:[%s7 + $0xe0] sm:$0xff]
    %v900 = vld [vmem:[%s7 + $0xe8] sm:$0xff]
    %v901 = vld [vmem:[%s7 + $0xf0] sm:$0xff]
    %v902 = vld [vmem:[%s7 + $0xf8] sm:$0xff]
    %v903 = vld [vmem:[%s7 + $0x100] sm:$0xff]
    %v904 = vld [vmem:[%s7 + $0x108] sm:$0xff]
    %v905 = vld [vmem:[%s7 + $0x110] sm:$0xff]
    %v906 = vld [vmem:[%s7 + $0x118] sm:$0xff]
    %v907 = vld [vmem:[%s7 + $0x120] sm:$0xff]
    %v908 = vld [vmem:[%s7 + $0x128] sm:$0xff]
    %v909 = vld [vmem:[%s7 + $0x130] sm:$0xff]
    %v910 = vld [vmem:[%s7 + $0x138] sm:$0xff]
    %v913 = vrot.slane %v868, 7
    %v914 = vsel %vm687, %v913, %v796
    %v915 = vsel %vm195, %v914, 0
    %917 = vmatprep.subr.mxu0 0.0
    %918 = vmatpush1.msra.mxu0 0.0
    %919 = vmatprep.subr.mxu0 0.0
    %920 = vmatpush1.msra.mxu0 0.0
    %921 = vmatprep.subr.mxu0 0.0
    %922 = vmatpush1.msra.mxu0 0.0
    %923 = vmatprep.subr.mxu0 0.0
    %924 = vmatpush1.msra.mxu0 0.0
    %925 = vmatprep.subr.mxu0 0.0
    %926 = vmatpush1.msra.mxu0 0.0
    %927 = vmatprep.subr.mxu0 0.0
    %928 = vmatpush1.msra.mxu0 0.0
    %929 = vmatprep.subr.mxu0 0.0
    %930 = vmatpush1.msra.mxu0 0.0
    %931 = vmatprep.subr.mxu0 0.0
    %932 = vmatpush1.msra.mxu0 0.0
    %933 = vmatprep.subr.mxu0 0.0
    %934 = vmatpush1.msra.mxu0 0.0
    %935 = vmatprep.subr.mxu0 0.0
    %936 = vmatpush1.msra.mxu0 0.0
    %937 = vmatprep.subr.mxu0 0.0
    %938 = vmatpush1.msra.mxu0 0.0
    %939 = vmatprep.subr.mxu0 0.0
    %940 = vmatpush1.msra.mxu0 0.0
    %941 = vmatprep.subr.mxu0 0.0
    %942 = vmatpush1.msra.mxu0 %v910
    %943 = vmatprep.subr.mxu0 0.0
    %944 = vmatpush1.msra.mxu0 %v909
    %945 = vmatprep.subr.mxu0 0.0
    %946 = vmatpush1.msra.mxu0 %v908
    %947 = vmatprep.subr.mxu0 0.0
    %948 = vmatpush1.msra.mxu0 %v907
    %949 = vmatprep.subr.mxu0 0.0
    %950 = vmatpush2.msra.mxu0 0.0
    %951 = vmatprep.subr.mxu0 0.0
    %952 = vmatpush2.msra.mxu0 0.0
    %953 = vmatprep.subr.mxu0 0.0
    %954 = vmatpush2.msra.mxu0 0.0
    %955 = vmatprep.subr.mxu0 0.0
    %956 = vmatpush2.msra.mxu0 0.0
    %957 = vmatprep.subr.mxu0 0.0
    %958 = vmatpush2.msra.mxu0 0.0
    %959 = vmatprep.subr.mxu0 0.0
    %960 = vmatpush2.msra.mxu0 0.0
    %961 = vmatprep.subr.mxu0 0.0
    %962 = vmatpush2.msra.mxu0 0.0
    %963 = vmatprep.subr.mxu0 0.0
    %964 = vmatpush2.msra.mxu0 0.0
    %965 = vmatprep.subr.mxu0 0.0
    %966 = vmatpush2.msra.mxu0 0.0
    %967 = vmatprep.subr.mxu0 0.0
    %968 = vmatpush2.msra.mxu0 0.0
    %969 = vmatprep.subr.mxu0 0.0
    %970 = vmatpush2.msra.mxu0 0.0
    %971 = vmatprep.subr.mxu0 0.0
    %972 = vmatpush2.msra.mxu0 0.0
    %973 = vmatprep.subr.mxu0 0.0
    %974 = vmatpush2.msra.mxu0 0.0
    %975 = vmatprep.subr.mxu0 0.0
    %976 = vmatpush2.msra.mxu0 0.0
    %977 = vmatprep.subr.mxu0 0.0
    %978 = vmatpush2.msra.mxu0 0.0
    %979 = vmatprep.subr.mxu0 0.0
    %980 = vmatpush2.msra.mxu0 0.0
    %981 = vmatprep.mubr.f32.mxu0 0.0
    %982 = vmatmul.mubr.f32.gmra.mxu0 %v915
    %v983 = vpop.f32.mrf.mxu0
    %v984 = vadd.f32 0.0, %v983
    %v985 = vpop.f32.mrf.mxu0
    %986 = vdwg.mxu0
    %v988 = vcombine.high %v168, %v168
    %v990 = vunpack.c.l.s4 1983009808
    %v991 = vunpack.c.0.s8 %v990
    %v992 = vlaneseq
    %v993 = vshrl.u32 %v992, 7
    %v994 = vsub.s32 %v991, %v993
    %v995 = vrot.slane %v168, %v994
    %v997 = vunpack.c.l.s4 1983009808
    %v998 = vunpack.c.0.s8 %v997
    %v999 = vlaneseq
    %v1000 = vshrl.u32 %v999, 7
    %v1001 = vsub.s32 %v998, %v1000
    %v1002 = vrot.slane %v988, %v1001
    %v1003 = vcombine.high %v995, %v995
    %v1006 = vsel %vm195, %v1002, 0
    %1008 = vmatprep.subr.mxu0 0.0
    %1009 = vmatpush1.msra.mxu0 %v886
    %1010 = vmatprep.subr.mxu0 0.0
    %1011 = vmatpush1.msra.mxu0 %v885
    %1012 = vmatprep.subr.mxu0 0.0
    %1013 = vmatpush1.msra.mxu0 %v884
    %1014 = vmatprep.subr.mxu0 0.0
    %1015 = vmatpush1.msra.mxu0 %v883
    %1016 = vmatprep.subr.mxu0 0.0
    %1017 = vmatpush1.msra.mxu0 %v882
    %1018 = vmatprep.subr.mxu0 0.0
    %1019 = vmatpush1.msra.mxu0 %v881
    %1020 = vmatprep.subr.mxu0 0.0
    %1021 = vmatpush1.msra.mxu0 %v880
    %1022 = vmatprep.subr.mxu0 0.0
    %1023 = vmatpush1.msra.mxu0 %v879
    %1024 = vmatprep.subr.mxu0 0.0
    %1025 = vmatpush1.msra.mxu0 %v878
    %1026 = vmatprep.subr.mxu0 0.0
    %1027 = vmatpush1.msra.mxu0 %v877
    %1028 = vmatprep.subr.mxu0 0.0
    %1029 = vmatpush1.msra.mxu0 %v876
    %1030 = vmatprep.subr.mxu0 0.0
    %1031 = vmatpush1.msra.mxu0 %v875
    %1032 = vmatprep.subr.mxu0 0.0
    %1033 = vmatpush1.msra.mxu0 %v874
    %1034 = vmatprep.subr.mxu0 0.0
    %1035 = vmatpush1.msra.mxu0 %v873
    %1036 = vmatprep.subr.mxu0 0.0
    %1037 = vmatpush1.msra.mxu0 %v872
    %1038 = vmatprep.subr.mxu0 0.0
    %1039 = vmatpush1.msra.mxu0 %v871
    %1040 = vmatprep.subr.mxu0 0.0
    %1041 = vmatpush2.msra.mxu0 %v902
    %1042 = vmatprep.subr.mxu0 0.0
    %1043 = vmatpush2.msra.mxu0 %v901
    %1044 = vmatprep.subr.mxu0 0.0
    %1045 = vmatpush2.msra.mxu0 %v900
    %1046 = vmatprep.subr.mxu0 0.0
    %1047 = vmatpush2.msra.mxu0 %v899
    %1048 = vmatprep.subr.mxu0 0.0
    %1049 = vmatpush2.msra.mxu0 %v898
    %1050 = vmatprep.subr.mxu0 0.0
    %1051 = vmatpush2.msra.mxu0 %v897
    %1052 = vmatprep.subr.mxu0 0.0
    %1053 = vmatpush2.msra.mxu0 %v896
    %1054 = vmatprep.subr.mxu0 0.0
    %1055 = vmatpush2.msra.mxu0 %v895
    %1056 = vmatprep.subr.mxu0 0.0
    %1057 = vmatpush2.msra.mxu0 %v894
    %1058 = vmatprep.subr.mxu0 0.0
    %1059 = vmatpush2.msra.mxu0 %v893
    %1060 = vmatprep.subr.mxu0 0.0
    %1061 = vmatpush2.msra.mxu0 %v892
    %1062 = vmatprep.subr.mxu0 0.0
    %1063 = vmatpush2.msra.mxu0 %v891
    %1064 = vmatprep.subr.mxu0 0.0
    %1065 = vmatpush2.msra.mxu0 %v890
    %1066 = vmatprep.subr.mxu0 0.0
    %1067 = vmatpush2.msra.mxu0 %v889
    %1068 = vmatprep.subr.mxu0 0.0
    %1069 = vmatpush2.msra.mxu0 %v888
    %1070 = vmatprep.subr.mxu0 0.0
    %1071 = vmatpush2.msra.mxu0 %v887
    %1072 = vmatprep.mubr.f32.mxu0 %v1003
    %1073 = vmatmul.mubr.f32.gmra.mxu0 %v995
    %v1074 = vpop.f32.mrf.mxu0
    %v1075 = vadd.f32 %v984, %v1074
    %v1076 = vpop.f32.mrf.mxu0
    %1077 = vdwg.mxu0
    %1078 = vmatprep.subr.mxu0 0.0
    %1079 = vmatpush1.msra.mxu0 0.0
    %1080 = vmatprep.subr.mxu0 0.0
    %1081 = vmatpush1.msra.mxu0 0.0
    %1082 = vmatprep.subr.mxu0 0.0
    %1083 = vmatpush1.msra.mxu0 0.0
    %1084 = vmatprep.subr.mxu0 0.0
    %1085 = vmatpush1.msra.mxu0 0.0
    %1086 = vmatprep.subr.mxu0 0.0
    %1087 = vmatpush1.msra.mxu0 0.0
    %1088 = vmatprep.subr.mxu0 0.0
    %1089 = vmatpush1.msra.mxu0 0.0
    %1090 = vmatprep.subr.mxu0 0.0
    %1091 = vmatpush1.msra.mxu0 0.0
    %1092 = vmatprep.subr.mxu0 0.0
    %1093 = vmatpush1.msra.mxu0 0.0
    %1094 = vmatprep.subr.mxu0 0.0
    %1095 = vmatpush1.msra.mxu0 0.0
    %1096 = vmatprep.subr.mxu0 0.0
    %1097 = vmatpush1.msra.mxu0 0.0
    %1098 = vmatprep.subr.mxu0 0.0
    %1099 = vmatpush1.msra.mxu0 0.0
    %1100 = vmatprep.subr.mxu0 0.0
    %1101 = vmatpush1.msra.mxu0 0.0
    %1102 = vmatprep.subr.mxu0 0.0
    %1103 = vmatpush1.msra.mxu0 %v906
    %1104 = vmatprep.subr.mxu0 0.0
    %1105 = vmatpush1.msra.mxu0 %v905
    %1106 = vmatprep.subr.mxu0 0.0
    %1107 = vmatpush1.msra.mxu0 %v904
    %1108 = vmatprep.subr.mxu0 0.0
    %1109 = vmatpush1.msra.mxu0 %v903
    %1110 = vmatprep.subr.mxu0 0.0
    %1111 = vmatpush2.msra.mxu0 0.0
    %1112 = vmatprep.subr.mxu0 0.0
    %1113 = vmatpush2.msra.mxu0 0.0
    %1114 = vmatprep.subr.mxu0 0.0
    %1115 = vmatpush2.msra.mxu0 0.0
    %1116 = vmatprep.subr.mxu0 0.0
    %1117 = vmatpush2.msra.mxu0 0.0
    %1118 = vmatprep.subr.mxu0 0.0
    %1119 = vmatpush2.msra.mxu0 0.0
    %1120 = vmatprep.subr.mxu0 0.0
    %1121 = vmatpush2.msra.mxu0 0.0
    %1122 = vmatprep.subr.mxu0 0.0
    %1123 = vmatpush2.msra.mxu0 0.0
    %1124 = vmatprep.subr.mxu0 0.0
    %1125 = vmatpush2.msra.mxu0 0.0
    %1126 = vmatprep.subr.mxu0 0.0
    %1127 = vmatpush2.msra.mxu0 0.0
    %1128 = vmatprep.subr.mxu0 0.0
    %1129 = vmatpush2.msra.mxu0 0.0
    %1130 = vmatprep.subr.mxu0 0.0
    %1131 = vmatpush2.msra.mxu0 0.0
    %1132 = vmatprep.subr.mxu0 0.0
    %1133 = vmatpush2.msra.mxu0 0.0
    %1134 = vmatprep.subr.mxu0 0.0
    %1135 = vmatpush2.msra.mxu0 0.0
    %1136 = vmatprep.subr.mxu0 0.0
    %1137 = vmatpush2.msra.mxu0 0.0
    %1138 = vmatprep.subr.mxu0 0.0
    %1139 = vmatpush2.msra.mxu0 0.0
    %1140 = vmatprep.subr.mxu0 0.0
    %1141 = vmatpush2.msra.mxu0 0.0
    %1142 = vmatprep.mubr.f32.mxu0 0.0
    %1143 = vmatmul.mubr.f32.gmra.mxu0 %v1006
    %v1144 = vpop.f32.mrf.mxu0
    %v1145 = vadd.f32 %v1075, %v1144
    %v1146 = vpop.f32.mrf.mxu0
    %1147 = vdwg.mxu0
    %1150 = vrot.lane.b32.xlu0 %v509, 96
    %v1151 = vpop.permute.xlu0 %1150
    %1152 = vrot.lane.b32.xlu0 %v511, 96
    %v1153 = vpop.permute.xlu0 %1152
    %vm1154 = vcmask 785408
    %v1155 = vsel %vm1154, %v1151, %v1153
    %v1157 = vadd.f32 %v1145, %v1155
    %v1159 = vlaneseq
    %v1160 = vshrl.u32 %v1159, 7
    %v1161 = vsub.s32 0, %v1160
    %v1162 = vrot.slane %v172, %v1161
    %v1164 = vadd.f32 %v1157, %v1162
    %v1165 = vmul.f32 %v1164, 0.5
    %v1166 = vtanh.pop %v1165
    %v1167 = vadd.f32 %v1166, 1.0
    %v1168 = vmul.f32 %v1167, 0.5
    %v1169 = vtanh.pop %v1164
    %v1170 = vmul.f32 %v1168, %v167
    %1172 = vrot.lane.b32.xlu0 %v1169, 32
    %v1173 = vpop.permute.xlu0 %1172
    %v1175 = vmul.f32 %v1168, %v1173
    %1177 = vrot.lane.b32.xlu0 %v1175, 32
    %v1178 = vpop.permute.xlu0 %1177
    %v1180 = vadd.f32 %v1170, %v1178
    %v1181 = vtanh.pop %v1180
    %1183 = vrot.lane.b32.xlu0 %v1181, 32
    %v1184 = vpop.permute.xlu0 %1183
    %v1186 = vmul.f32 %v1168, %v1184
    %1188 = vrot.lane.b32.xlu0 %v1186, 64
    %v1189 = vpop.permute.xlu0 %1188
    %v1191 = vsel %vm195, %v1189, %v1180
    %vm1192 = vcmask 517120
    %1193 = vst.msk [vmem:[#allocation20] sm:$0x3] %vm1192, %v1191
    %v1194 = vld [vmem:[#allocation11] sm:$0xff]
    %v1195 = vld [vmem:[#allocation11 + $0x8] sm:$0xff]
    %v1196 = vld [vmem:[#allocation11 + $0x10] sm:$0xff]
    %v1197 = vld [vmem:[#allocation11 + $0x18] sm:$0xff]
    %v1198 = vld [vmem:[#allocation11 + $0x20] sm:$0xff]
    %v1199 = vld [vmem:[#allocation11 + $0x28] sm:$0xff]
    %v1200 = vld [vmem:[#allocation11 + $0x30] sm:$0xff]
    %v1201 = vld [vmem:[#allocation11 + $0x38] sm:$0xff]
    %v1202 = vld [vmem:[#allocation11 + $0x40] sm:$0xff]
    %v1203 = vld [vmem:[#allocation11 + $0x48] sm:$0xff]
    %v1204 = vld [vmem:[#allocation11 + $0x50] sm:$0xff]
    %v1205 = vld [vmem:[#allocation11 + $0x58] sm:$0xff]
    %v1206 = vld [vmem:[#allocation11 + $0x60] sm:$0xff]
    %v1207 = vld [vmem:[#allocation11 + $0x68] sm:$0xff]
    %v1208 = vld [vmem:[#allocation11 + $0x70] sm:$0xff]
    %v1209 = vld [vmem:[#allocation11 + $0x78] sm:$0xff]
    %v1210 = vld [vmem:[#allocation11 + $0x80] sm:$0xff]
    %v1211 = vld [vmem:[#allocation11 + $0x88] sm:$0xff]
    %v1212 = vld [vmem:[#allocation11 + $0x90] sm:$0xff]
    %v1213 = vld [vmem:[#allocation11 + $0x98] sm:$0xff]
    %v1215 = vlaneseq
    %v1216 = vshrl.u32 %v1215, 7
    %v1217 = vsub.s32 0, %v1216
    %v1218 = vrot.slane %v173, %v1217
    %v1219 = vlaneseq
    %v1220 = vshrl.u32 %v1219, 7
    %v1221 = vsub.s32 1, %v1220
    %v1222 = vrot.slane %v173, %v1221
    %v1223 = vlaneseq
    %v1224 = vshrl.u32 %v1223, 7
    %v1225 = vsub.s32 2, %v1224
    %v1226 = vrot.slane %v173, %v1225
    %v1227 = vlaneseq
    %v1228 = vshrl.u32 %v1227, 7
    %v1229 = vsub.s32 3, %v1228
    %v1230 = vrot.slane %v173, %v1229
    %v1231 = vlaneseq
    %v1232 = vshrl.u32 %v1231, 7
    %v1233 = vsub.s32 4, %v1232
    %v1234 = vrot.slane %v173, %v1233
    %v1240 = vsel %vm195, %v1189, 0
    %1242 = vmatprep.subr.mxu0 0.0
    %1243 = vmatpush1.msra.mxu0 0.0
    %1244 = vmatprep.subr.mxu0 0.0
    %1245 = vmatpush1.msra.mxu0 0.0
    %1246 = vmatprep.subr.mxu0 0.0
    %1247 = vmatpush1.msra.mxu0 0.0
    %1248 = vmatprep.subr.mxu0 0.0
    %1249 = vmatpush1.msra.mxu0 0.0
    %1250 = vmatprep.subr.mxu0 0.0
    %1251 = vmatpush1.msra.mxu0 0.0
    %1252 = vmatprep.subr.mxu0 0.0
    %1253 = vmatpush1.msra.mxu0 0.0
    %1254 = vmatprep.subr.mxu0 0.0
    %1255 = vmatpush1.msra.mxu0 0.0
    %1256 = vmatprep.subr.mxu0 0.0
    %1257 = vmatpush1.msra.mxu0 0.0
    %1258 = vmatprep.subr.mxu0 0.0
    %1259 = vmatpush1.msra.mxu0 0.0
    %1260 = vmatprep.subr.mxu0 0.0
    %1261 = vmatpush1.msra.mxu0 0.0
    %1262 = vmatprep.subr.mxu0 0.0
    %1263 = vmatpush1.msra.mxu0 0.0
    %1264 = vmatprep.subr.mxu0 0.0
    %1265 = vmatpush1.msra.mxu0 0.0
    %1266 = vmatprep.subr.mxu0 %v1210
    %1267 = vmatpush1.msra.mxu0 %v1209
    %1268 = vmatprep.subr.mxu0 %v1205
    %1269 = vmatpush1.msra.mxu0 %v1204
    %1270 = vmatprep.subr.mxu0 %v1200
    %1271 = vmatpush1.msra.mxu0 %v1199
    %1272 = vmatprep.subr.mxu0 %v1195
    %1273 = vmatpush1.msra.mxu0 %v1194
    %1274 = vmatprep.subr.mxu0 0.0
    %1275 = vmatpush2.msra.mxu0 0.0
    %1276 = vmatprep.subr.mxu0 0.0
    %1277 = vmatpush2.msra.mxu0 0.0
    %1278 = vmatprep.subr.mxu0 0.0
    %1279 = vmatpush2.msra.mxu0 0.0
    %1280 = vmatprep.subr.mxu0 0.0
    %1281 = vmatpush2.msra.mxu0 0.0
    %1282 = vmatprep.subr.mxu0 0.0
    %1283 = vmatpush2.msra.mxu0 0.0
    %1284 = vmatprep.subr.mxu0 0.0
    %1285 = vmatpush2.msra.mxu0 0.0
    %1286 = vmatprep.subr.mxu0 0.0
    %1287 = vmatpush2.msra.mxu0 0.0
    %1288 = vmatprep.subr.mxu0 0.0
    %1289 = vmatpush2.msra.mxu0 0.0
    %1290 = vmatprep.subr.mxu0 0.0
    %1291 = vmatpush2.msra.mxu0 0.0
    %1292 = vmatprep.subr.mxu0 0.0
    %1293 = vmatpush2.msra.mxu0 0.0
    %1294 = vmatprep.subr.mxu0 0.0
    %1295 = vmatpush2.msra.mxu0 0.0
    %1296 = vmatprep.subr.mxu0 0.0
    %1297 = vmatpush2.msra.mxu0 0.0
    %1298 = vmatprep.subr.mxu0 0.0
    %1299 = vmatpush2.msra.mxu0 0.0
    %1300 = vmatprep.subr.mxu0 0.0
    %1301 = vmatpush2.msra.mxu0 0.0
    %1302 = vmatprep.subr.mxu0 0.0
    %1303 = vmatpush2.msra.mxu0 0.0
    %1304 = vmatprep.subr.mxu0 0.0
    %1305 = vmatpush2.msra.mxu0 0.0
    %1306 = vmatprep.mubr.f32.mxu0 0.0
    %1307 = vmatmul.mubr.f32.gmra.mxu0 %v1240
    %v1308 = vpop.f32.mrf.mxu0
    %v1309 = vadd.f32 %v1218, %v1308
    %v1310 = vpop.f32.mrf.mxu0
    %v1311 = vadd.f32 %v1222, %v1310
    %1312 = vdwg.mxu0
    %1313 = vmatprep.subr.mxu0 0.0
    %1314 = vmatpush1.msra.mxu0 0.0
    %1315 = vmatprep.subr.mxu0 0.0
    %1316 = vmatpush1.msra.mxu0 0.0
    %1317 = vmatprep.subr.mxu0 0.0
    %1318 = vmatpush1.msra.mxu0 0.0
    %1319 = vmatprep.subr.mxu0 0.0
    %1320 = vmatpush1.msra.mxu0 0.0
    %1321 = vmatprep.subr.mxu0 0.0
    %1322 = vmatpush1.msra.mxu0 0.0
    %1323 = vmatprep.subr.mxu0 0.0
    %1324 = vmatpush1.msra.mxu0 0.0
    %1325 = vmatprep.subr.mxu0 0.0
    %1326 = vmatpush1.msra.mxu0 0.0
    %1327 = vmatprep.subr.mxu0 0.0
    %1328 = vmatpush1.msra.mxu0 0.0
    %1329 = vmatprep.subr.mxu0 0.0
    %1330 = vmatpush1.msra.mxu0 0.0
    %1331 = vmatprep.subr.mxu0 0.0
    %1332 = vmatpush1.msra.mxu0 0.0
    %1333 = vmatprep.subr.mxu0 0.0
    %1334 = vmatpush1.msra.mxu0 0.0
    %1335 = vmatprep.subr.mxu0 0.0
    %1336 = vmatpush1.msra.mxu0 0.0
    %1337 = vmatprep.subr.mxu0 %v1212
    %1338 = vmatpush1.msra.mxu0 %v1211
    %1339 = vmatprep.subr.mxu0 %v1207
    %1340 = vmatpush1.msra.mxu0 %v1206
    %1341 = vmatprep.subr.mxu0 %v1202
    %1342 = vmatpush1.msra.mxu0 %v1201
    %1343 = vmatprep.subr.mxu0 %v1197
    %1344 = vmatpush1.msra.mxu0 %v1196
    %1345 = vmatprep.subr.mxu0 0.0
    %1346 = vmatpush2.msra.mxu0 0.0
    %1347 = vmatprep.subr.mxu0 0.0
    %1348 = vmatpush2.msra.mxu0 0.0
    %1349 = vmatprep.subr.mxu0 0.0
    %1350 = vmatpush2.msra.mxu0 0.0
    %1351 = vmatprep.subr.mxu0 0.0
    %1352 = vmatpush2.msra.mxu0 0.0
    %1353 = vmatprep.subr.mxu0 0.0
    %1354 = vmatpush2.msra.mxu0 0.0
    %1355 = vmatprep.subr.mxu0 0.0
    %1356 = vmatpush2.msra.mxu0 0.0
    %1357 = vmatprep.subr.mxu0 0.0
    %1358 = vmatpush2.msra.mxu0 0.0
    %1359 = vmatprep.subr.mxu0 0.0
    %1360 = vmatpush2.msra.mxu0 0.0
    %1361 = vmatprep.subr.mxu0 0.0
    %1362 = vmatpush2.msra.mxu0 0.0
    %1363 = vmatprep.subr.mxu0 0.0
    %1364 = vmatpush2.msra.mxu0 0.0
    %1365 = vmatprep.subr.mxu0 0.0
    %1366 = vmatpush2.msra.mxu0 0.0
    %1367 = vmatprep.subr.mxu0 0.0
    %1368 = vmatpush2.msra.mxu0 0.0
    %1369 = vmatprep.subr.mxu0 0.0
    %1370 = vmatpush2.msra.mxu0 0.0
    %1371 = vmatprep.subr.mxu0 0.0
    %1372 = vmatpush2.msra.mxu0 0.0
    %1373 = vmatprep.subr.mxu0 0.0
    %1374 = vmatpush2.msra.mxu0 0.0
    %1375 = vmatprep.subr.mxu0 0.0
    %1376 = vmatpush2.msra.mxu0 0.0
    %1377 = vmatprep.mubr.f32.mxu0 0.0
    %1378 = vmatmul.mubr.f32.gmra.mxu0 %v1240
    %v1379 = vpop.f32.mrf.mxu0
    %v1380 = vadd.f32 %v1226, %v1379
    %v1381 = vpop.f32.mrf.mxu0
    %v1382 = vadd.f32 %v1230, %v1381
    %1383 = vdwg.mxu0
    %1384 = vmatprep.subr.mxu0 0.0
    %1385 = vmatpush1.msra.mxu0 0.0
    %1386 = vmatprep.subr.mxu0 0.0
    %1387 = vmatpush1.msra.mxu0 0.0
    %1388 = vmatprep.subr.mxu0 0.0
    %1389 = vmatpush1.msra.mxu0 0.0
    %1390 = vmatprep.subr.mxu0 0.0
    %1391 = vmatpush1.msra.mxu0 0.0
    %1392 = vmatprep.subr.mxu0 0.0
    %1393 = vmatpush1.msra.mxu0 0.0
    %1394 = vmatprep.subr.mxu0 0.0
    %1395 = vmatpush1.msra.mxu0 0.0
    %1396 = vmatprep.subr.mxu0 0.0
    %1397 = vmatpush1.msra.mxu0 0.0
    %1398 = vmatprep.subr.mxu0 0.0
    %1399 = vmatpush1.msra.mxu0 0.0
    %1400 = vmatprep.subr.mxu0 0.0
    %1401 = vmatpush1.msra.mxu0 0.0
    %1402 = vmatprep.subr.mxu0 0.0
    %1403 = vmatpush1.msra.mxu0 0.0
    %1404 = vmatprep.subr.mxu0 0.0
    %1405 = vmatpush1.msra.mxu0 0.0
    %1406 = vmatprep.subr.mxu0 0.0
    %1407 = vmatpush1.msra.mxu0 0.0
    %1408 = vmatprep.subr.mxu0 0.0
    %1409 = vmatpush1.msra.mxu0 %v1213
    %1410 = vmatprep.subr.mxu0 0.0
    %1411 = vmatpush1.msra.mxu0 %v1208
    %1412 = vmatprep.subr.mxu0 0.0
    %1413 = vmatpush1.msra.mxu0 %v1203
    %1414 = vmatprep.subr.mxu0 0.0
    %1415 = vmatpush1.msra.mxu0 %v1198
    %1416 = vmatprep.subr.mxu0 0.0
    %1417 = vmatpush2.msra.mxu0 0.0
    %1418 = vmatprep.subr.mxu0 0.0
    %1419 = vmatpush2.msra.mxu0 0.0
    %1420 = vmatprep.subr.mxu0 0.0
    %1421 = vmatpush2.msra.mxu0 0.0
    %1422 = vmatprep.subr.mxu0 0.0
    %1423 = vmatpush2.msra.mxu0 0.0
    %1424 = vmatprep.subr.mxu0 0.0
    %1425 = vmatpush2.msra.mxu0 0.0
    %1426 = vmatprep.subr.mxu0 0.0
    %1427 = vmatpush2.msra.mxu0 0.0
    %1428 = vmatprep.subr.mxu0 0.0
    %1429 = vmatpush2.msra.mxu0 0.0
    %1430 = vmatprep.subr.mxu0 0.0
    %1431 = vmatpush2.msra.mxu0 0.0
    %1432 = vmatprep.subr.mxu0 0.0
    %1433 = vmatpush2.msra.mxu0 0.0
    %1434 = vmatprep.subr.mxu0 0.0
    %1435 = vmatpush2.msra.mxu0 0.0
    %1436 = vmatprep.subr.mxu0 0.0
    %1437 = vmatpush2.msra.mxu0 0.0
    %1438 = vmatprep.subr.mxu0 0.0
    %1439 = vmatpush2.msra.mxu0 0.0
    %1440 = vmatprep.subr.mxu0 0.0
    %1441 = vmatpush2.msra.mxu0 0.0
    %1442 = vmatprep.subr.mxu0 0.0
    %1443 = vmatpush2.msra.mxu0 0.0
    %1444 = vmatprep.subr.mxu0 0.0
    %1445 = vmatpush2.msra.mxu0 0.0
    %1446 = vmatprep.subr.mxu0 0.0
    %1447 = vmatpush2.msra.mxu0 0.0
    %1448 = vmatprep.mubr.f32.mxu0 0.0
    %1449 = vmatmul.mubr.f32.gmra.mxu0 %v1240
    %v1450 = vpop.f32.mrf.mxu0
    %v1451 = vadd.f32 %v1234, %v1450
    %v1452 = vpop.f32.mrf.mxu0
    %1453 = vdwg.mxu0
    %v1456 = vcombine.low %v1309, %v1311
    %v1458 = vunpack.c.l.s4 1966171168
    %v1459 = vunpack.c.0.s8 %v1458
    %v1460 = vlaneseq
    %v1461 = vshrl.u32 %v1460, 7
    %v1462 = vsub.s32 %v1459, %v1461
    %v1463 = vrot.slane %v1456, %v1462
    %v1464 = vcombine.high %v1463, %v1463
    %v1466 = vunpack.c.l.s4 1966171168
    %v1467 = vunpack.c.0.s8 %v1466
    %v1468 = vlaneseq
    %v1469 = vshrl.u32 %v1468, 7
    %v1470 = vsub.s32 %v1467, %v1469
    %v1471 = vrot.slane %v1463, %v1470
    %v1473 = vunpack.c.l.s4 1966171168
    %v1474 = vunpack.c.0.s8 %v1473
    %v1475 = vlaneseq
    %v1476 = vshrl.u32 %v1475, 7
    %v1477 = vsub.s32 %v1474, %v1476
    %v1478 = vrot.slane %v1464, %v1477
    %v1479 = vlaneseq
    %v1480 = vshrl.u32 %v1479, 7
    %v1481 = vsub.s32 0, %v1480
    %v1482 = vrot.slane %v1471, %v1481
    %v1483 = vlaneseq
    %v1484 = vshrl.u32 %v1483, 7
    %v1485 = vsub.s32 1, %v1484
    %v1486 = vrot.slane %v1471, %v1485
    %v1487 = vlaneseq
    %v1488 = vshrl.u32 %v1487, 7
    %v1489 = vsub.s32 0, %v1488
    %v1490 = vrot.slane %v1478, %v1489
    %v1491 = vlaneseq
    %v1492 = vshrl.u32 %v1491, 7
    %v1493 = vsub.s32 1, %v1492
    %v1494 = vrot.slane %v1478, %v1493
    %1495 = vrot.lane.b32.xlu0 %v1482, 32
    %v1496 = vpop.permute.xlu0 %1495
    %1497 = vrot.lane.b32.xlu0 %v1486, 32
    %v1498 = vpop.permute.xlu0 %1497
    %1499 = vrot.lane.b32.xlu0 %v1490, 32
    %v1500 = vpop.permute.xlu0 %1499
    %1501 = vrot.lane.b32.xlu0 %v1494, 32
    %v1502 = vpop.permute.xlu0 %1501
    %v1503 = vsel %vm195, %v1496, %v1498
    %v1504 = vsel %vm195, %v1500, %v1502
    %v1511 = vadd.f32 %v269, %v1496
    %v1512 = vadd.f32 %v271, %v1503
    %v1513 = vadd.f32 %v346, %v1498
    %v1514 = vadd.f32 %v275, %v1500
    %v1515 = vadd.f32 %v277, %v1504
    %v1516 = vadd.f32 %v352, %v1502
    %v1517 = vld [vmem:[#allocation13] sm:$0xff]
    %v1518 = vld [vmem:[#allocation13 + $0x8] sm:$0xff]
    %v1519 = vld [vmem:[#allocation13 + $0x10] sm:$0xff]
    %v1520 = vld [vmem:[#allocation13 + $0x18] sm:$0xff]
    %v1521 = vld [vmem:[#allocation13 + $0x20] sm:$0xff]
    %v1522 = vld [vmem:[#allocation13 + $0x28] sm:$0xff]
    %v1523 = vld [vmem:[#allocation13 + $0x30] sm:$0xff]
    %v1524 = vld [vmem:[#allocation13 + $0x38] sm:$0xff]
    %v1525 = vld [vmem:[#allocation13 + $0x40] sm:$0xff]
    %v1526 = vld [vmem:[#allocation13 + $0x48] sm:$0xff]
    %v1527 = vld [vmem:[#allocation13 + $0x50] sm:$0xff]
    %v1528 = vld [vmem:[#allocation13 + $0x58] sm:$0xff]
    %v1529 = vld [vmem:[#allocation13 + $0x60] sm:$0xff]
    %v1530 = vld [vmem:[#allocation13 + $0x68] sm:$0xff]
    %v1531 = vld [vmem:[#allocation13 + $0x70] sm:$0xff]
    %v1532 = vld [vmem:[#allocation13 + $0x78] sm:$0xff]
    %vm1533 = vcmask 523264
    %v1535 = vsel %vm1533, 0.0, 0
    %1537 = vmatprep.subr.mxu0 0.0
    %1538 = vmatpush1.msra.mxu0 0.0
    %1539 = vmatprep.subr.mxu0 0.0
    %1540 = vmatpush1.msra.mxu0 0.0
    %1541 = vmatprep.subr.mxu0 0.0
    %1542 = vmatpush1.msra.mxu0 0.0
    %1543 = vmatprep.subr.mxu0 0.0
    %1544 = vmatpush1.msra.mxu0 0.0
    %1545 = vmatprep.subr.mxu0 0.0
    %1546 = vmatpush1.msra.mxu0 0.0
    %1547 = vmatprep.subr.mxu0 0.0
    %1548 = vmatpush1.msra.mxu0 0.0
    %1549 = vmatprep.subr.mxu0 0.0
    %1550 = vmatpush1.msra.mxu0 0.0
    %1551 = vmatprep.subr.mxu0 0.0
    %1552 = vmatpush1.msra.mxu0 0.0
    %1553 = vmatprep.subr.mxu0 %v1532
    %1554 = vmatpush1.msra.mxu0 %v1531
    %1555 = vmatprep.subr.mxu0 %v1530
    %1556 = vmatpush1.msra.mxu0 %v1529
    %1557 = vmatprep.subr.mxu0 %v1528
    %1558 = vmatpush1.msra.mxu0 %v1527
    %1559 = vmatprep.subr.mxu0 %v1526
    %1560 = vmatpush1.msra.mxu0 %v1525
    %1561 = vmatprep.subr.mxu0 %v1524
    %1562 = vmatpush1.msra.mxu0 %v1523
    %1563 = vmatprep.subr.mxu0 %v1522
    %1564 = vmatpush1.msra.mxu0 %v1521
    %1565 = vmatprep.subr.mxu0 %v1520
    %1566 = vmatpush1.msra.mxu0 %v1519
    %1567 = vmatprep.subr.mxu0 %v1518
    %1568 = vmatpush1.msra.mxu0 %v1517
    %1569 = vmatprep.subr.mxu0 0.0
    %1570 = vmatpush2.msra.mxu0 0.0
    %1571 = vmatprep.subr.mxu0 0.0
    %1572 = vmatpush2.msra.mxu0 0.0
    %1573 = vmatprep.subr.mxu0 0.0
    %1574 = vmatpush2.msra.mxu0 0.0
    %1575 = vmatprep.subr.mxu0 0.0
    %1576 = vmatpush2.msra.mxu0 0.0
    %1577 = vmatprep.subr.mxu0 0.0
    %1578 = vmatpush2.msra.mxu0 0.0
    %1579 = vmatprep.subr.mxu0 0.0
    %1580 = vmatpush2.msra.mxu0 0.0
    %1581 = vmatprep.subr.mxu0 0.0
    %1582 = vmatpush2.msra.mxu0 0.0
    %1583 = vmatprep.subr.mxu0 0.0
    %1584 = vmatpush2.msra.mxu0 0.0
    %1585 = vmatprep.subr.mxu0 0.0
    %1586 = vmatpush2.msra.mxu0 0.0
    %1587 = vmatprep.subr.mxu0 0.0
    %1588 = vmatpush2.msra.mxu0 0.0
    %1589 = vmatprep.subr.mxu0 0.0
    %1590 = vmatpush2.msra.mxu0 0.0
    %1591 = vmatprep.subr.mxu0 0.0
    %1592 = vmatpush2.msra.mxu0 0.0
    %1593 = vmatprep.subr.mxu0 0.0
    %1594 = vmatpush2.msra.mxu0 0.0
    %1595 = vmatprep.subr.mxu0 0.0
    %1596 = vmatpush2.msra.mxu0 0.0
    %1597 = vmatprep.subr.mxu0 0.0
    %1598 = vmatpush2.msra.mxu0 0.0
    %1599 = vmatprep.subr.mxu0 0.0
    %1600 = vmatpush2.msra.mxu0 0.0
    %1601 = vmatprep.mubr.f32.mxu0 0.0
    %1602 = vmatmul.mubr.f32.gmra.mxu0 %v1535
    %v1603 = vpop.f32.mrf.mxu0
    %v1604 = vadd.f32 0.0, %v1603
    %v1605 = vpop.f32.mrf.mxu0
    %v1606 = vadd.f32 0.0, %v1605
    %1607 = vdwg.mxu0
    %v1609 = vrot.slane %v1604, 1
    %1610 = vrot.lane.b32.xlu0 %v1604, 32
    %v1611 = vpop.permute.xlu0 %1610
    %1612 = vrot.lane.b32.xlu0 %v1609, 32
    %v1613 = vpop.permute.xlu0 %1612
    %v1616 = vadd.f32 %v1511, %v1611
    %v1617 = vadd.f32 %v1512, %v1611
    %v1618 = vadd.f32 %v1514, %v1613
    %v1619 = vadd.f32 %v1515, %v1613
    %v1621 = vrot.slane %v1606, 1
    %v1622 = vrot.slane %v1606, 2
    %1623 = vrot.lane.b32.xlu0 %v1621, 32
    %v1624 = vpop.permute.xlu0 %1623
    %1625 = vrot.lane.b32.xlu0 %v1622, 32
    %v1626 = vpop.permute.xlu0 %1625
    %v1629 = vadd.f32 %v1512, %v1624
    %v1630 = vadd.f32 %v1513, %v1624
    %v1631 = vadd.f32 %v1515, %v1626
    %v1632 = vadd.f32 %v1516, %v1626
    %v1633 = vmul.f32 %v1616, 0.5
    %v1634 = vmul.f32 %v1618, 0.5
    %v1635 = vtanh.pop %v1633
    %v1636 = vtanh.pop %v1634
    %v1637 = vadd.f32 %v1635, 1.0
    %v1638 = vadd.f32 %v1636, 1.0
    %v1639 = vmul.f32 %v1637, 0.5
    %v1640 = vmul.f32 %v1638, 0.5
    %v1641 = vtanh.pop %v1617
    %v1642 = vtanh.pop %v1619
    %v1643 = vmul.f32 %v1629, 0.5
    %v1644 = vmul.f32 %v1631, 0.5
    %v1645 = vtanh.pop %v1643
    %v1646 = vtanh.pop %v1644
    %v1647 = vadd.f32 %v1645, 1.0
    %v1648 = vadd.f32 %v1646, 1.0
    %v1649 = vmul.f32 %v1647, 0.5
    %v1650 = vmul.f32 %v1648, 0.5
    %v1651 = vtanh.pop %v1630
    %v1652 = vtanh.pop %v1632
    %v1653 = vmul.f32 %v1639, 0.0
    %v1654 = vmul.f32 %v1640, 0.0
    %1657 = vrot.lane.b32.xlu0 %v1641, 32
    %v1658 = vpop.permute.xlu0 %1657
    %1659 = vrot.lane.b32.xlu0 %v1642, 32
    %v1660 = vpop.permute.xlu0 %1659
    %v1663 = vmul.f32 %v1639, %v1658
    %v1664 = vmul.f32 %v1640, %v1660
    %1667 = vrot.lane.b32.xlu0 %v1663, 32
    %v1668 = vpop.permute.xlu0 %1667
    %1669 = vrot.lane.b32.xlu0 %v1664, 32
    %v1670 = vpop.permute.xlu0 %1669
    %v1673 = vadd.f32 %v1653, %v1668
    %v1674 = vadd.f32 %v1654, %v1670
    %v1675 = vtanh.pop %v1673
    %v1676 = vtanh.pop %v1674
    %1679 = vrot.lane.b32.xlu0 %v1675, 32
    %v1680 = vpop.permute.xlu0 %1679
    %1681 = vrot.lane.b32.xlu0 %v1676, 32
    %v1682 = vpop.permute.xlu0 %1681
    %v1685 = vmul.f32 %v1639, %v1680
    %v1686 = vmul.f32 %v1640, %v1682
    %v1687 = vmul.f32 %v1649, 0.0
    %v1688 = vmul.f32 %v1650, 0.0
    %1691 = vrot.lane.b32.xlu0 %v1651, 32
    %v1692 = vpop.permute.xlu0 %1691
    %1693 = vrot.lane.b32.xlu0 %v1652, 32
    %v1694 = vpop.permute.xlu0 %1693
    %v1697 = vmul.f32 %v1649, %v1692
    %v1698 = vmul.f32 %v1650, %v1694
    %1701 = vrot.lane.b32.xlu0 %v1697, 32
    %v1702 = vpop.permute.xlu0 %1701
    %1703 = vrot.lane.b32.xlu0 %v1698, 32
    %v1704 = vpop.permute.xlu0 %1703
    %v1707 = vadd.f32 %v1687, %v1702
    %v1708 = vadd.f32 %v1688, %v1704
    %v1709 = vtanh.pop %v1707
    %v1710 = vtanh.pop %v1708
    %1713 = vrot.lane.b32.xlu0 %v1709, 32
    %v1714 = vpop.permute.xlu0 %1713
    %1715 = vrot.lane.b32.xlu0 %v1710, 32
    %v1716 = vpop.permute.xlu0 %1715
    %v1719 = vmul.f32 %v1649, %v1714
    %v1720 = vmul.f32 %v1650, %v1716
    %v1723 = vrot.slane %v1686, 7
    %v1724 = vsel %vm687, %v1723, %v1685
    %1725 = vrot.lane.b32.xlu0 %v1724, 32
    %v1726 = vpop.permute.xlu0 %1725
    %v1730 = vrot.slane %v1719, 7
    %v1731 = vrot.slane %v1720, 6
    %v1732 = vsel %vm687, %v1731, %v1730
    %1733 = vrot.lane.b32.xlu0 %v1732, 64
    %v1734 = vpop.permute.xlu0 %1733
    %v1736 = vsel %vm195, %v1726, %v1734
    %v1738 = vsel %vm1533, %v1736, 0
    %1740 = vmatprep.subr.mxu0 0.0
    %1741 = vmatpush1.msra.mxu0 0.0
    %1742 = vmatprep.subr.mxu0 0.0
    %1743 = vmatpush1.msra.mxu0 0.0
    %1744 = vmatprep.subr.mxu0 0.0
    %1745 = vmatpush1.msra.mxu0 0.0
    %1746 = vmatprep.subr.mxu0 0.0
    %1747 = vmatpush1.msra.mxu0 0.0
    %1748 = vmatprep.subr.mxu0 0.0
    %1749 = vmatpush1.msra.mxu0 0.0
    %1750 = vmatprep.subr.mxu0 0.0
    %1751 = vmatpush1.msra.mxu0 0.0
    %1752 = vmatprep.subr.mxu0 0.0
    %1753 = vmatpush1.msra.mxu0 0.0
    %1754 = vmatprep.subr.mxu0 0.0
    %1755 = vmatpush1.msra.mxu0 0.0
    %1756 = vmatprep.subr.mxu0 %v1532
    %1757 = vmatpush1.msra.mxu0 %v1531
    %1758 = vmatprep.subr.mxu0 %v1530
    %1759 = vmatpush1.msra.mxu0 %v1529
    %1760 = vmatprep.subr.mxu0 %v1528
    %1761 = vmatpush1.msra.mxu0 %v1527
    %1762 = vmatprep.subr.mxu0 %v1526
    %1763 = vmatpush1.msra.mxu0 %v1525
    %1764 = vmatprep.subr.mxu0 %v1524
    %1765 = vmatpush1.msra.mxu0 %v1523
    %1766 = vmatprep.subr.mxu0 %v1522
    %1767 = vmatpush1.msra.mxu0 %v1521
    %1768 = vmatprep.subr.mxu0 %v1520
    %1769 = vmatpush1.msra.mxu0 %v1519
    %1770 = vmatprep.subr.mxu0 %v1518
    %1771 = vmatpush1.msra.mxu0 %v1517
    %1772 = vmatprep.subr.mxu0 0.0
    %1773 = vmatpush2.msra.mxu0 0.0
    %1774 = vmatprep.subr.mxu0 0.0
    %1775 = vmatpush2.msra.mxu0 0.0
    %1776 = vmatprep.subr.mxu0 0.0
    %1777 = vmatpush2.msra.mxu0 0.0
    %1778 = vmatprep.subr.mxu0 0.0
    %1779 = vmatpush2.msra.mxu0 0.0
    %1780 = vmatprep.subr.mxu0 0.0
    %1781 = vmatpush2.msra.mxu0 0.0
    %1782 = vmatprep.subr.mxu0 0.0
    %1783 = vmatpush2.msra.mxu0 0.0
    %1784 = vmatprep.subr.mxu0 0.0
    %1785 = vmatpush2.msra.mxu0 0.0
    %1786 = vmatprep.subr.mxu0 0.0
    %1787 = vmatpush2.msra.mxu0 0.0
    %1788 = vmatprep.subr.mxu0 0.0
    %1789 = vmatpush2.msra.mxu0 0.0
    %1790 = vmatprep.subr.mxu0 0.0
    %1791 = vmatpush2.msra.mxu0 0.0
    %1792 = vmatprep.subr.mxu0 0.0
    %1793 = vmatpush2.msra.mxu0 0.0
    %1794 = vmatprep.subr.mxu0 0.0
    %1795 = vmatpush2.msra.mxu0 0.0
    %1796 = vmatprep.subr.mxu0 0.0
    %1797 = vmatpush2.msra.mxu0 0.0
    %1798 = vmatprep.subr.mxu0 0.0
    %1799 = vmatpush2.msra.mxu0 0.0
    %1800 = vmatprep.subr.mxu0 0.0
    %1801 = vmatpush2.msra.mxu0 0.0
    %1802 = vmatprep.subr.mxu0 0.0
    %1803 = vmatpush2.msra.mxu0 0.0
    %1804 = vmatprep.mubr.f32.mxu0 0.0
    %1805 = vmatmul.mubr.f32.gmra.mxu0 %v1738
    %v1806 = vpop.f32.mrf.mxu0
    %v1807 = vadd.f32 0.0, %v1806
    %v1808 = vpop.f32.mrf.mxu0
    %v1809 = vadd.f32 0.0, %v1808
    %1810 = vdwg.mxu0
    %v1812 = vrot.slane %v1807, 7
    %1813 = vrot.lane.b32.xlu0 %v1812, 32
    %v1814 = vpop.permute.xlu0 %1813
    %1815 = vrot.lane.b32.xlu0 %v1807, 32
    %v1816 = vpop.permute.xlu0 %1815
    %v1819 = vadd.f32 %v1511, %v1814
    %v1820 = vadd.f32 %v1512, %v1814
    %v1821 = vadd.f32 %v1514, %v1816
    %v1822 = vadd.f32 %v1515, %v1816
    %v1824 = vrot.slane %v1809, 2
    %v1825 = vrot.slane %v1809, 3
    %1826 = vrot.lane.b32.xlu0 %v1824, 32
    %v1827 = vpop.permute.xlu0 %1826
    %1828 = vrot.lane.b32.xlu0 %v1825, 32
    %v1829 = vpop.permute.xlu0 %1828
    %v1832 = vadd.f32 %v1512, %v1827
    %v1833 = vadd.f32 %v1513, %v1827
    %v1834 = vadd.f32 %v1515, %v1829
    %v1835 = vadd.f32 %v1516, %v1829
    %v1836 = vmul.f32 %v1819, 0.5
    %v1837 = vmul.f32 %v1821, 0.5
    %v1838 = vtanh.pop %v1836
    %v1839 = vtanh.pop %v1837
    %v1840 = vadd.f32 %v1838, 1.0
    %v1841 = vadd.f32 %v1839, 1.0
    %v1842 = vmul.f32 %v1840, 0.5
    %v1843 = vmul.f32 %v1841, 0.5
    %v1844 = vtanh.pop %v1820
    %v1845 = vtanh.pop %v1822
    %v1846 = vmul.f32 %v1832, 0.5
    %v1847 = vmul.f32 %v1834, 0.5
    %v1848 = vtanh.pop %v1846
    %v1849 = vtanh.pop %v1847
    %v1850 = vadd.f32 %v1848, 1.0
    %v1851 = vadd.f32 %v1849, 1.0
    %v1852 = vmul.f32 %v1850, 0.5
    %v1853 = vmul.f32 %v1851, 0.5
    %v1854 = vtanh.pop %v1833
    %v1855 = vtanh.pop %v1835
    %v1858 = vrot.slane %v1673, 7
    %v1859 = vrot.slane %v1674, 7
    %v1862 = vmul.f32 %v1842, %v1858
    %v1863 = vmul.f32 %v1843, %v1859
    %1866 = vrot.lane.b32.xlu0 %v1844, 32
    %v1867 = vpop.permute.xlu0 %1866
    %1868 = vrot.lane.b32.xlu0 %v1845, 32
    %v1869 = vpop.permute.xlu0 %1868
    %v1872 = vmul.f32 %v1842, %v1867
    %v1873 = vmul.f32 %v1843, %v1869
    %1876 = vrot.lane.b32.xlu0 %v1872, 32
    %v1877 = vpop.permute.xlu0 %1876
    %1878 = vrot.lane.b32.xlu0 %v1873, 32
    %v1879 = vpop.permute.xlu0 %1878
    %v1882 = vadd.f32 %v1862, %v1877
    %v1883 = vadd.f32 %v1863, %v1879
    %v1884 = vtanh.pop %v1882
    %v1885 = vtanh.pop %v1883
    %1888 = vrot.lane.b32.xlu0 %v1884, 32
    %v1889 = vpop.permute.xlu0 %1888
    %1890 = vrot.lane.b32.xlu0 %v1885, 32
    %v1891 = vpop.permute.xlu0 %1890
    %v1894 = vmul.f32 %v1842, %v1889
    %v1895 = vmul.f32 %v1843, %v1891
    %v1898 = vrot.slane %v1707, 1
    %v1899 = vrot.slane %v1708, 1
    %v1902 = vmul.f32 %v1852, %v1898
    %v1903 = vmul.f32 %v1853, %v1899
    %1906 = vrot.lane.b32.xlu0 %v1854, 32
    %v1907 = vpop.permute.xlu0 %1906
    %1908 = vrot.lane.b32.xlu0 %v1855, 32
    %v1909 = vpop.permute.xlu0 %1908
    %v1912 = vmul.f32 %v1852, %v1907
    %v1913 = vmul.f32 %v1853, %v1909
    %1916 = vrot.lane.b32.xlu0 %v1912, 32
    %v1917 = vpop.permute.xlu0 %1916
    %1918 = vrot.lane.b32.xlu0 %v1913, 32
    %v1919 = vpop.permute.xlu0 %1918
    %v1922 = vadd.f32 %v1902, %v1917
    %v1923 = vadd.f32 %v1903, %v1919
    %v1924 = vtanh.pop %v1922
    %v1925 = vtanh.pop %v1923
    %1928 = vrot.lane.b32.xlu0 %v1924, 32
    %v1929 = vpop.permute.xlu0 %1928
    %1930 = vrot.lane.b32.xlu0 %v1925, 32
    %v1931 = vpop.permute.xlu0 %1930
    %v1934 = vmul.f32 %v1852, %v1929
    %v1935 = vmul.f32 %v1853, %v1931
    %v1938 = vrot.slane %v1895, 7
    %vm1939 = vcmask 1042434
    %v1940 = vsel %vm1939, %v1938, %v1894
    %1941 = vrot.lane.b32.xlu0 %v1940, 32
    %v1942 = vpop.permute.xlu0 %1941
    %v1946 = vrot.slane %v1934, 5
    %v1947 = vrot.slane %v1935, 4
    %v1948 = vsel %vm1939, %v1947, %v1946
    %1949 = vrot.lane.b32.xlu0 %v1948, 64
    %v1950 = vpop.permute.xlu0 %1949
    %v1952 = vsel %vm195, %v1942, %v1950
    %v1954 = vrot.slane %v1952, 1
    %v1955 = vsel %vm1533, %v1954, 0
    %1957 = vmatprep.subr.mxu0 0.0
    %1958 = vmatpush1.msra.mxu0 0.0
    %1959 = vmatprep.subr.mxu0 0.0
    %1960 = vmatpush1.msra.mxu0 0.0
    %1961 = vmatprep.subr.mxu0 0.0
    %1962 = vmatpush1.msra.mxu0 0.0
    %1963 = vmatprep.subr.mxu0 0.0
    %1964 = vmatpush1.msra.mxu0 0.0
    %1965 = vmatprep.subr.mxu0 0.0
    %1966 = vmatpush1.msra.mxu0 0.0
    %1967 = vmatprep.subr.mxu0 0.0
    %1968 = vmatpush1.msra.mxu0 0.0
    %1969 = vmatprep.subr.mxu0 0.0
    %1970 = vmatpush1.msra.mxu0 0.0
    %1971 = vmatprep.subr.mxu0 0.0
    %1972 = vmatpush1.msra.mxu0 0.0
    %1973 = vmatprep.subr.mxu0 %v1532
    %1974 = vmatpush1.msra.mxu0 %v1531
    %1975 = vmatprep.subr.mxu0 %v1530
    %1976 = vmatpush1.msra.mxu0 %v1529
    %1977 = vmatprep.subr.mxu0 %v1528
    %1978 = vmatpush1.msra.mxu0 %v1527
    %1979 = vmatprep.subr.mxu0 %v1526
    %1980 = vmatpush1.msra.mxu0 %v1525
    %1981 = vmatprep.subr.mxu0 %v1524
    %1982 = vmatpush1.msra.mxu0 %v1523
    %1983 = vmatprep.subr.mxu0 %v1522
    %1984 = vmatpush1.msra.mxu0 %v1521
    %1985 = vmatprep.subr.mxu0 %v1520
    %1986 = vmatpush1.msra.mxu0 %v1519
    %1987 = vmatprep.subr.mxu0 %v1518
    %1988 = vmatpush1.msra.mxu0 %v1517
    %1989 = vmatprep.subr.mxu0 0.0
    %1990 = vmatpush2.msra.mxu0 0.0
    %1991 = vmatprep.subr.mxu0 0.0
    %1992 = vmatpush2.msra.mxu0 0.0
    %1993 = vmatprep.subr.mxu0 0.0
    %1994 = vmatpush2.msra.mxu0 0.0
    %1995 = vmatprep.subr.mxu0 0.0
    %1996 = vmatpush2.msra.mxu0 0.0
    %1997 = vmatprep.subr.mxu0 0.0
    %1998 = vmatpush2.msra.mxu0 0.0
    %1999 = vmatprep.subr.mxu0 0.0
    %2000 = vmatpush2.msra.mxu0 0.0
    %2001 = vmatprep.subr.mxu0 0.0
    %2002 = vmatpush2.msra.mxu0 0.0
    %2003 = vmatprep.subr.mxu0 0.0
    %2004 = vmatpush2.msra.mxu0 0.0
    %2005 = vmatprep.subr.mxu0 0.0
    %2006 = vmatpush2.msra.mxu0 0.0
    %2007 = vmatprep.subr.mxu0 0.0
    %2008 = vmatpush2.msra.mxu0 0.0
    %2009 = vmatprep.subr.mxu0 0.0
    %2010 = vmatpush2.msra.mxu0 0.0
    %2011 = vmatprep.subr.mxu0 0.0
    %2012 = vmatpush2.msra.mxu0 0.0
    %2013 = vmatprep.subr.mxu0 0.0
    %2014 = vmatpush2.msra.mxu0 0.0
    %2015 = vmatprep.subr.mxu0 0.0
    %2016 = vmatpush2.msra.mxu0 0.0
    %2017 = vmatprep.subr.mxu0 0.0
    %2018 = vmatpush2.msra.mxu0 0.0
    %2019 = vmatprep.subr.mxu0 0.0
    %2020 = vmatpush2.msra.mxu0 0.0
    %2021 = vmatprep.mubr.f32.mxu0 0.0
    %2022 = vmatmul.mubr.f32.gmra.mxu0 %v1955
    %v2023 = vpop.f32.mrf.mxu0
    %v2024 = vadd.f32 0.0, %v2023
    %v2025 = vpop.f32.mrf.mxu0
    %v2026 = vadd.f32 0.0, %v2025
    %2027 = vdwg.mxu0
    %v2029 = vrot.slane %v2024, 6
    %v2030 = vrot.slane %v2024, 7
    %2031 = vrot.lane.b32.xlu0 %v2029, 32
    %v2032 = vpop.permute.xlu0 %2031
    %2033 = vrot.lane.b32.xlu0 %v2030, 32
    %v2034 = vpop.permute.xlu0 %2033
    %v2037 = vadd.f32 %v1511, %v2032
    %v2038 = vadd.f32 %v1512, %v2032
    %v2039 = vadd.f32 %v1514, %v2034
    %v2040 = vadd.f32 %v1515, %v2034
    %v2042 = vrot.slane %v2026, 3
    %v2043 = vrot.slane %v2026, 4
    %2044 = vrot.lane.b32.xlu0 %v2042, 32
    %v2045 = vpop.permute.xlu0 %2044
    %2046 = vrot.lane.b32.xlu0 %v2043, 32
    %v2047 = vpop.permute.xlu0 %2046
    %v2050 = vadd.f32 %v1512, %v2045
    %v2051 = vadd.f32 %v1513, %v2045
    %v2052 = vadd.f32 %v1515, %v2047
    %v2053 = vadd.f32 %v1516, %v2047
    %v2054 = vmul.f32 %v2037, 0.5
    %v2055 = vmul.f32 %v2039, 0.5
    %v2056 = vtanh.pop %v2054
    %v2057 = vtanh.pop %v2055
    %v2058 = vadd.f32 %v2056, 1.0
    %v2059 = vadd.f32 %v2057, 1.0
    %v2060 = vmul.f32 %v2058, 0.5
    %v2061 = vmul.f32 %v2059, 0.5
    %v2062 = vtanh.pop %v2038
    %v2063 = vtanh.pop %v2040
    %v2064 = vmul.f32 %v2050, 0.5
    %v2065 = vmul.f32 %v2052, 0.5
    %v2066 = vtanh.pop %v2064
    %v2067 = vtanh.pop %v2065
    %v2068 = vadd.f32 %v2066, 1.0
    %v2069 = vadd.f32 %v2067, 1.0
    %v2070 = vmul.f32 %v2068, 0.5
    %v2071 = vmul.f32 %v2069, 0.5
    %v2072 = vtanh.pop %v2051
    %v2073 = vtanh.pop %v2053
    %v2076 = vrot.slane %v1882, 7
    %v2077 = vrot.slane %v1883, 7
    %v2080 = vmul.f32 %v2060, %v2076
    %v2081 = vmul.f32 %v2061, %v2077
    %2084 = vrot.lane.b32.xlu0 %v2062, 32
    %v2085 = vpop.permute.xlu0 %2084
    %2086 = vrot.lane.b32.xlu0 %v2063, 32
    %v2087 = vpop.permute.xlu0 %2086
    %v2090 = vmul.f32 %v2060, %v2085
    %v2091 = vmul.f32 %v2061, %v2087
    %2094 = vrot.lane.b32.xlu0 %v2090, 32
    %v2095 = vpop.permute.xlu0 %2094
    %2096 = vrot.lane.b32.xlu0 %v2091, 32
    %v2097 = vpop.permute.xlu0 %2096
    %v2100 = vadd.f32 %v2080, %v2095
    %v2101 = vadd.f32 %v2081, %v2097
    %v2102 = vtanh.pop %v2100
    %v2103 = vtanh.pop %v2101
    %2106 = vrot.lane.b32.xlu0 %v2102, 32
    %v2107 = vpop.permute.xlu0 %2106
    %2108 = vrot.lane.b32.xlu0 %v2103, 32
    %v2109 = vpop.permute.xlu0 %2108
    %v2112 = vmul.f32 %v2060, %v2107
    %v2113 = vmul.f32 %v2061, %v2109
    %v2116 = vrot.slane %v1922, 1
    %v2117 = vrot.slane %v1923, 1
    %v2120 = vmul.f32 %v2070, %v2116
    %v2121 = vmul.f32 %v2071, %v2117
    %2124 = vrot.lane.b32.xlu0 %v2072, 32
    %v2125 = vpop.permute.xlu0 %2124
    %2126 = vrot.lane.b32.xlu0 %v2073, 32
    %v2127 = vpop.permute.xlu0 %2126
    %v2130 = vmul.f32 %v2070, %v2125
    %v2131 = vmul.f32 %v2071, %v2127
    %2134 = vrot.lane.b32.xlu0 %v2130, 32
    %v2135 = vpop.permute.xlu0 %2134
    %2136 = vrot.lane.b32.xlu0 %v2131, 32
    %v2137 = vpop.permute.xlu0 %2136
    %v2140 = vadd.f32 %v2120, %v2135
    %v2141 = vadd.f32 %v2121, %v2137
    %v2142 = vtanh.pop %v2140
    %v2143 = vtanh.pop %v2141
    %2146 = vrot.lane.b32.xlu0 %v2142, 32
    %v2147 = vpop.permute.xlu0 %2146
    %2148 = vrot.lane.b32.xlu0 %v2143, 32
    %v2149 = vpop.permute.xlu0 %2148
    %v2152 = vmul.f32 %v2070, %v2147
    %v2153 = vmul.f32 %v2071, %v2149
    %v2156 = vrot.slane %v2113, 7
    %vm2157 = vcmask 1043459
    %v2158 = vsel %vm2157, %v2156, %v2112
    %2159 = vrot.lane.b32.xlu0 %v2158, 32
    %v2160 = vpop.permute.xlu0 %2159
    %v2164 = vrot.slane %v2152, 3
    %v2165 = vrot.slane %v2153, 2
    %v2166 = vsel %vm2157, %v2165, %v2164
    %2167 = vrot.lane.b32.xlu0 %v2166, 64
    %v2168 = vpop.permute.xlu0 %2167
    %v2170 = vsel %vm195, %v2160, %v2168
    %v2172 = vrot.slane %v2170, 2
    %v2173 = vsel %vm1533, %v2172, 0
    %2175 = vmatprep.subr.mxu0 0.0
    %2176 = vmatpush1.msra.mxu0 0.0
    %2177 = vmatprep.subr.mxu0 0.0
    %2178 = vmatpush1.msra.mxu0 0.0
    %2179 = vmatprep.subr.mxu0 0.0
    %2180 = vmatpush1.msra.mxu0 0.0
    %2181 = vmatprep.subr.mxu0 0.0
    %2182 = vmatpush1.msra.mxu0 0.0
    %2183 = vmatprep.subr.mxu0 0.0
    %2184 = vmatpush1.msra.mxu0 0.0
    %2185 = vmatprep.subr.mxu0 0.0
    %2186 = vmatpush1.msra.mxu0 0.0
    %2187 = vmatprep.subr.mxu0 0.0
    %2188 = vmatpush1.msra.mxu0 0.0
    %2189 = vmatprep.subr.mxu0 0.0
    %2190 = vmatpush1.msra.mxu0 0.0
    %2191 = vmatprep.subr.mxu0 %v1532
    %2192 = vmatpush1.msra.mxu0 %v1531
    %2193 = vmatprep.subr.mxu0 %v1530
    %2194 = vmatpush1.msra.mxu0 %v1529
    %2195 = vmatprep.subr.mxu0 %v1528
    %2196 = vmatpush1.msra.mxu0 %v1527
    %2197 = vmatprep.subr.mxu0 %v1526
    %2198 = vmatpush1.msra.mxu0 %v1525
    %2199 = vmatprep.subr.mxu0 %v1524
    %2200 = vmatpush1.msra.mxu0 %v1523
    %2201 = vmatprep.subr.mxu0 %v1522
    %2202 = vmatpush1.msra.mxu0 %v1521
    %2203 = vmatprep.subr.mxu0 %v1520
    %2204 = vmatpush1.msra.mxu0 %v1519
    %2205 = vmatprep.subr.mxu0 %v1518
    %2206 = vmatpush1.msra.mxu0 %v1517
    %2207 = vmatprep.subr.mxu0 0.0
    %2208 = vmatpush2.msra.mxu0 0.0
    %2209 = vmatprep.subr.mxu0 0.0
    %2210 = vmatpush2.msra.mxu0 0.0
    %2211 = vmatprep.subr.mxu0 0.0
    %2212 = vmatpush2.msra.mxu0 0.0
    %2213 = vmatprep.subr.mxu0 0.0
    %2214 = vmatpush2.msra.mxu0 0.0
    %2215 = vmatprep.subr.mxu0 0.0
    %2216 = vmatpush2.msra.mxu0 0.0
    %2217 = vmatprep.subr.mxu0 0.0
    %2218 = vmatpush2.msra.mxu0 0.0
    %2219 = vmatprep.subr.mxu0 0.0
    %2220 = vmatpush2.msra.mxu0 0.0
    %2221 = vmatprep.subr.mxu0 0.0
    %2222 = vmatpush2.msra.mxu0 0.0
    %2223 = vmatprep.subr.mxu0 0.0
    %2224 = vmatpush2.msra.mxu0 0.0
    %2225 = vmatprep.subr.mxu0 0.0
    %2226 = vmatpush2.msra.mxu0 0.0
    %2227 = vmatprep.subr.mxu0 0.0
    %2228 = vmatpush2.msra.mxu0 0.0
    %2229 = vmatprep.subr.mxu0 0.0
    %2230 = vmatpush2.msra.mxu0 0.0
    %2231 = vmatprep.subr.mxu0 0.0
    %2232 = vmatpush2.msra.mxu0 0.0
    %2233 = vmatprep.subr.mxu0 0.0
    %2234 = vmatpush2.msra.mxu0 0.0
    %2235 = vmatprep.subr.mxu0 0.0
    %2236 = vmatpush2.msra.mxu0 0.0
    %2237 = vmatprep.subr.mxu0 0.0
    %2238 = vmatpush2.msra.mxu0 0.0
    %2239 = vmatprep.mubr.f32.mxu0 0.0
    %2240 = vmatmul.mubr.f32.gmra.mxu0 %v2173
    %v2241 = vpop.f32.mrf.mxu0
    %v2242 = vadd.f32 0.0, %v2241
    %v2243 = vpop.f32.mrf.mxu0
    %v2244 = vadd.f32 0.0, %v2243
    %2245 = vdwg.mxu0
    %v2247 = vrot.slane %v2242, 5
    %v2248 = vrot.slane %v2242, 6
    %2249 = vrot.lane.b32.xlu0 %v2247, 32
    %v2250 = vpop.permute.xlu0 %2249
    %2251 = vrot.lane.b32.xlu0 %v2248, 32
    %v2252 = vpop.permute.xlu0 %2251
    %v2255 = vadd.f32 %v1511, %v2250
    %v2256 = vadd.f32 %v1512, %v2250
    %v2257 = vadd.f32 %v1514, %v2252
    %v2258 = vadd.f32 %v1515, %v2252
    %v2260 = vrot.slane %v2244, 4
    %v2261 = vrot.slane %v2244, 5
    %2262 = vrot.lane.b32.xlu0 %v2260, 32
    %v2263 = vpop.permute.xlu0 %2262
    %2264 = vrot.lane.b32.xlu0 %v2261, 32
    %v2265 = vpop.permute.xlu0 %2264
    %v2268 = vadd.f32 %v1512, %v2263
    %v2269 = vadd.f32 %v1513, %v2263
    %v2270 = vadd.f32 %v1515, %v2265
    %v2271 = vadd.f32 %v1516, %v2265
    %v2272 = vmul.f32 %v2255, 0.5
    %v2273 = vmul.f32 %v2257, 0.5
    %v2274 = vtanh.pop %v2272
    %v2275 = vtanh.pop %v2273
    %v2276 = vadd.f32 %v2274, 1.0
    %v2277 = vadd.f32 %v2275, 1.0
    %v2278 = vmul.f32 %v2276, 0.5
    %v2279 = vmul.f32 %v2277, 0.5
    %v2280 = vtanh.pop %v2256
    %v2281 = vtanh.pop %v2258
    %v2282 = vmul.f32 %v2268, 0.5
    %v2283 = vmul.f32 %v2270, 0.5
    %v2284 = vtanh.pop %v2282
    %v2285 = vtanh.pop %v2283
    %v2286 = vadd.f32 %v2284, 1.0
    %v2287 = vadd.f32 %v2285, 1.0
    %v2288 = vmul.f32 %v2286, 0.5
    %v2289 = vmul.f32 %v2287, 0.5
    %v2290 = vtanh.pop %v2269
    %v2291 = vtanh.pop %v2271
    %v2294 = vrot.slane %v2100, 7
    %v2295 = vrot.slane %v2101, 7
    %v2298 = vmul.f32 %v2278, %v2294
    %v2299 = vmul.f32 %v2279, %v2295
    %2302 = vrot.lane.b32.xlu0 %v2280, 32
    %v2303 = vpop.permute.xlu0 %2302
    %2304 = vrot.lane.b32.xlu0 %v2281, 32
    %v2305 = vpop.permute.xlu0 %2304
    %v2308 = vmul.f32 %v2278, %v2303
    %v2309 = vmul.f32 %v2279, %v2305
    %2312 = vrot.lane.b32.xlu0 %v2308, 32
    %v2313 = vpop.permute.xlu0 %2312
    %2314 = vrot.lane.b32.xlu0 %v2309, 32
    %v2315 = vpop.permute.xlu0 %2314
    %v2318 = vadd.f32 %v2298, %v2313
    %v2319 = vadd.f32 %v2299, %v2315
    %v2320 = vtanh.pop %v2318
    %v2321 = vtanh.pop %v2319
    %2324 = vrot.lane.b32.xlu0 %v2320, 32
    %v2325 = vpop.permute.xlu0 %2324
    %2326 = vrot.lane.b32.xlu0 %v2321, 32
    %v2327 = vpop.permute.xlu0 %2326
    %v2330 = vmul.f32 %v2278, %v2325
    %v2331 = vmul.f32 %v2279, %v2327
    %v2334 = vrot.slane %v2140, 1
    %v2335 = vrot.slane %v2141, 1
    %v2338 = vmul.f32 %v2288, %v2334
    %v2339 = vmul.f32 %v2289, %v2335
    %2342 = vrot.lane.b32.xlu0 %v2290, 32
    %v2343 = vpop.permute.xlu0 %2342
    %2344 = vrot.lane.b32.xlu0 %v2291, 32
    %v2345 = vpop.permute.xlu0 %2344
    %v2348 = vmul.f32 %v2288, %v2343
    %v2349 = vmul.f32 %v2289, %v2345
    %2352 = vrot.lane.b32.xlu0 %v2348, 32
    %v2353 = vpop.permute.xlu0 %2352
    %2354 = vrot.lane.b32.xlu0 %v2349, 32
    %v2355 = vpop.permute.xlu0 %2354
    %v2358 = vadd.f32 %v2338, %v2353
    %v2359 = vadd.f32 %v2339, %v2355
    %v2360 = vtanh.pop %v2358
    %v2361 = vtanh.pop %v2359
    %2364 = vrot.lane.b32.xlu0 %v2360, 32
    %v2365 = vpop.permute.xlu0 %2364
    %2366 = vrot.lane.b32.xlu0 %v2361, 32
    %v2367 = vpop.permute.xlu0 %2366
    %v2370 = vmul.f32 %v2288, %v2365
    %v2371 = vmul.f32 %v2289, %v2367
    %v2374 = vrot.slane %v2331, 7
    %vm2375 = vcmask 1044484
    %v2376 = vsel %vm2375, %v2374, %v2330
    %2377 = vrot.lane.b32.xlu0 %v2376, 32
    %v2378 = vpop.permute.xlu0 %2377
    %v2382 = vrot.slane %v2370, 1
    %v2383 = vsel %vm2375, %v2371, %v2382
    %2384 = vrot.lane.b32.xlu0 %v2383, 64
    %v2385 = vpop.permute.xlu0 %2384
    %v2387 = vsel %vm195, %v2378, %v2385
    %v2389 = vrot.slane %v2387, 3
    %v2390 = vsel %vm1533, %v2389, 0
    %2392 = vmatprep.subr.mxu0 0.0
    %2393 = vmatpush1.msra.mxu0 0.0
    %2394 = vmatprep.subr.mxu0 0.0
    %2395 = vmatpush1.msra.mxu0 0.0
    %2396 = vmatprep.subr.mxu0 0.0
    %2397 = vmatpush1.msra.mxu0 0.0
    %2398 = vmatprep.subr.mxu0 0.0
    %2399 = vmatpush1.msra.mxu0 0.0
    %2400 = vmatprep.subr.mxu0 0.0
    %2401 = vmatpush1.msra.mxu0 0.0
    %2402 = vmatprep.subr.mxu0 0.0
    %2403 = vmatpush1.msra.mxu0 0.0
    %2404 = vmatprep.subr.mxu0 0.0
    %2405 = vmatpush1.msra.mxu0 0.0
    %2406 = vmatprep.subr.mxu0 0.0
    %2407 = vmatpush1.msra.mxu0 0.0
    %2408 = vmatprep.subr.mxu0 %v1532
    %2409 = vmatpush1.msra.mxu0 %v1531
    %2410 = vmatprep.subr.mxu0 %v1530
    %2411 = vmatpush1.msra.mxu0 %v1529
    %2412 = vmatprep.subr.mxu0 %v1528
    %2413 = vmatpush1.msra.mxu0 %v1527
    %2414 = vmatprep.subr.mxu0 %v1526
    %2415 = vmatpush1.msra.mxu0 %v1525
    %2416 = vmatprep.subr.mxu0 %v1524
    %2417 = vmatpush1.msra.mxu0 %v1523
    %2418 = vmatprep.subr.mxu0 %v1522
    %2419 = vmatpush1.msra.mxu0 %v1521
    %2420 = vmatprep.subr.mxu0 %v1520
    %2421 = vmatpush1.msra.mxu0 %v1519
    %2422 = vmatprep.subr.mxu0 %v1518
    %2423 = vmatpush1.msra.mxu0 %v1517
    %2424 = vmatprep.subr.mxu0 0.0
    %2425 = vmatpush2.msra.mxu0 0.0
    %2426 = vmatprep.subr.mxu0 0.0
    %2427 = vmatpush2.msra.mxu0 0.0
    %2428 = vmatprep.subr.mxu0 0.0
    %2429 = vmatpush2.msra.mxu0 0.0
    %2430 = vmatprep.subr.mxu0 0.0
    %2431 = vmatpush2.msra.mxu0 0.0
    %2432 = vmatprep.subr.mxu0 0.0
    %2433 = vmatpush2.msra.mxu0 0.0
    %2434 = vmatprep.subr.mxu0 0.0
    %2435 = vmatpush2.msra.mxu0 0.0
    %2436 = vmatprep.subr.mxu0 0.0
    %2437 = vmatpush2.msra.mxu0 0.0
    %2438 = vmatprep.subr.mxu0 0.0
    %2439 = vmatpush2.msra.mxu0 0.0
    %2440 = vmatprep.subr.mxu0 0.0
    %2441 = vmatpush2.msra.mxu0 0.0
    %2442 = vmatprep.subr.mxu0 0.0
    %2443 = vmatpush2.msra.mxu0 0.0
    %2444 = vmatprep.subr.mxu0 0.0
    %2445 = vmatpush2.msra.mxu0 0.0
    %2446 = vmatprep.subr.mxu0 0.0
    %2447 = vmatpush2.msra.mxu0 0.0
    %2448 = vmatprep.subr.mxu0 0.0
    %2449 = vmatpush2.msra.mxu0 0.0
    %2450 = vmatprep.subr.mxu0 0.0
    %2451 = vmatpush2.msra.mxu0 0.0
    %2452 = vmatprep.subr.mxu0 0.0
    %2453 = vmatpush2.msra.mxu0 0.0
    %2454 = vmatprep.subr.mxu0 0.0
    %2455 = vmatpush2.msra.mxu0 0.0
    %2456 = vmatprep.mubr.f32.mxu0 0.0
    %2457 = vmatmul.mubr.f32.gmra.mxu0 %v2390
    %v2458 = vpop.f32.mrf.mxu0
    %v2459 = vadd.f32 0.0, %v2458
    %v2460 = vpop.f32.mrf.mxu0
    %v2461 = vadd.f32 0.0, %v2460
    %2462 = vdwg.mxu0
    %v2464 = vrot.slane %v2459, 4
    %v2465 = vrot.slane %v2459, 5
    %2466 = vrot.lane.b32.xlu0 %v2464, 32
    %v2467 = vpop.permute.xlu0 %2466
    %2468 = vrot.lane.b32.xlu0 %v2465, 32
    %v2469 = vpop.permute.xlu0 %2468
    %v2472 = vadd.f32 %v1511, %v2467
    %v2473 = vadd.f32 %v1512, %v2467
    %v2474 = vadd.f32 %v1514, %v2469
    %v2475 = vadd.f32 %v1515, %v2469
    %v2477 = vrot.slane %v2461, 5
    %v2478 = vrot.slane %v2461, 6
    %2479 = vrot.lane.b32.xlu0 %v2477, 32
    %v2480 = vpop.permute.xlu0 %2479
    %2481 = vrot.lane.b32.xlu0 %v2478, 32
    %v2482 = vpop.permute.xlu0 %2481
    %v2485 = vadd.f32 %v1512, %v2480
    %v2486 = vadd.f32 %v1513, %v2480
    %v2487 = vadd.f32 %v1515, %v2482
    %v2488 = vadd.f32 %v1516, %v2482
    %v2489 = vmul.f32 %v2472, 0.5
    %v2490 = vmul.f32 %v2474, 0.5
    %v2491 = vtanh.pop %v2489
    %v2492 = vtanh.pop %v2490
    %v2493 = vadd.f32 %v2491, 1.0
    %v2494 = vadd.f32 %v2492, 1.0
    %v2495 = vmul.f32 %v2493, 0.5
    %v2496 = vmul.f32 %v2494, 0.5
    %v2497 = vtanh.pop %v2473
    %v2498 = vtanh.pop %v2475
    %v2499 = vmul.f32 %v2485, 0.5
    %v2500 = vmul.f32 %v2487, 0.5
    %v2501 = vtanh.pop %v2499
    %v2502 = vtanh.pop %v2500
    %v2503 = vadd.f32 %v2501, 1.0
    %v2504 = vadd.f32 %v2502, 1.0
    %v2505 = vmul.f32 %v2503, 0.5
    %v2506 = vmul.f32 %v2504, 0.5
    %v2507 = vtanh.pop %v2486
    %v2508 = vtanh.pop %v2488
    %v2511 = vrot.slane %v2318, 7
    %v2512 = vrot.slane %v2319, 7
    %v2515 = vmul.f32 %v2495, %v2511
    %v2516 = vmul.f32 %v2496, %v2512
    %2519 = vrot.lane.b32.xlu0 %v2497, 32
    %v2520 = vpop.permute.xlu0 %2519
    %2521 = vrot.lane.b32.xlu0 %v2498, 32
    %v2522 = vpop.permute.xlu0 %2521
    %v2525 = vmul.f32 %v2495, %v2520
    %v2526 = vmul.f32 %v2496, %v2522
    %2529 = vrot.lane.b32.xlu0 %v2525, 32
    %v2530 = vpop.permute.xlu0 %2529
    %2531 = vrot.lane.b32.xlu0 %v2526, 32
    %v2532 = vpop.permute.xlu0 %2531
    %v2535 = vadd.f32 %v2515, %v2530
    %v2536 = vadd.f32 %v2516, %v2532
    %v2537 = vtanh.pop %v2535
    %v2538 = vtanh.pop %v2536
    %2541 = vrot.lane.b32.xlu0 %v2537, 32
    %v2542 = vpop.permute.xlu0 %2541
    %2543 = vrot.lane.b32.xlu0 %v2538, 32
    %v2544 = vpop.permute.xlu0 %2543
    %v2547 = vmul.f32 %v2495, %v2542
    %v2548 = vmul.f32 %v2496, %v2544
    %v2551 = vrot.slane %v2358, 1
    %v2552 = vrot.slane %v2359, 1
    %v2555 = vmul.f32 %v2505, %v2551
    %v2556 = vmul.f32 %v2506, %v2552
    %2559 = vrot.lane.b32.xlu0 %v2507, 32
    %v2560 = vpop.permute.xlu0 %2559
    %2561 = vrot.lane.b32.xlu0 %v2508, 32
    %v2562 = vpop.permute.xlu0 %2561
    %v2565 = vmul.f32 %v2505, %v2560
    %v2566 = vmul.f32 %v2506, %v2562
    %2569 = vrot.lane.b32.xlu0 %v2565, 32
    %v2570 = vpop.permute.xlu0 %2569
    %2571 = vrot.lane.b32.xlu0 %v2566, 32
    %v2572 = vpop.permute.xlu0 %2571
    %v2575 = vadd.f32 %v2555, %v2570
    %v2576 = vadd.f32 %v2556, %v2572
    %v2577 = vtanh.pop %v2575
    %v2578 = vtanh.pop %v2576
    %2581 = vrot.lane.b32.xlu0 %v2577, 32
    %v2582 = vpop.permute.xlu0 %2581
    %2583 = vrot.lane.b32.xlu0 %v2578, 32
    %v2584 = vpop.permute.xlu0 %2583
    %v2587 = vmul.f32 %v2505, %v2582
    %v2588 = vmul.f32 %v2506, %v2584
    %v2591 = vrot.slane %v2548, 7
    %vm2592 = vcmask 1045509
    %v2593 = vsel %vm2592, %v2591, %v2547
    %2594 = vrot.lane.b32.xlu0 %v2593, 32
    %v2595 = vpop.permute.xlu0 %2594
    %v2599 = vrot.slane %v2587, 7
    %v2600 = vrot.slane %v2588, 6
    %v2601 = vsel %vm2592, %v2600, %v2599
    %2602 = vrot.lane.b32.xlu0 %v2601, 64
    %v2603 = vpop.permute.xlu0 %2602
    %v2605 = vsel %vm195, %v2595, %v2603
    %v2607 = vrot.slane %v2605, 4
    %v2608 = vsel %vm1533, %v2607, 0
    %2610 = vmatprep.subr.mxu0 0.0
    %2611 = vmatpush1.msra.mxu0 0.0
    %2612 = vmatprep.subr.mxu0 0.0
    %2613 = vmatpush1.msra.mxu0 0.0
    %2614 = vmatprep.subr.mxu0 0.0
    %2615 = vmatpush1.msra.mxu0 0.0
    %2616 = vmatprep.subr.mxu0 0.0
    %2617 = vmatpush1.msra.mxu0 0.0
    %2618 = vmatprep.subr.mxu0 0.0
    %2619 = vmatpush1.msra.mxu0 0.0
    %2620 = vmatprep.subr.mxu0 0.0
    %2621 = vmatpush1.msra.mxu0 0.0
    %2622 = vmatprep.subr.mxu0 0.0
    %2623 = vmatpush1.msra.mxu0 0.0
    %2624 = vmatprep.subr.mxu0 0.0
    %2625 = vmatpush1.msra.mxu0 0.0
    %2626 = vmatprep.subr.mxu0 %v1532
    %2627 = vmatpush1.msra.mxu0 %v1531
    %2628 = vmatprep.subr.mxu0 %v1530
    %2629 = vmatpush1.msra.mxu0 %v1529
    %2630 = vmatprep.subr.mxu0 %v1528
    %2631 = vmatpush1.msra.mxu0 %v1527
    %2632 = vmatprep.subr.mxu0 %v1526
    %2633 = vmatpush1.msra.mxu0 %v1525
    %2634 = vmatprep.subr.mxu0 %v1524
    %2635 = vmatpush1.msra.mxu0 %v1523
    %2636 = vmatprep.subr.mxu0 %v1522
    %2637 = vmatpush1.msra.mxu0 %v1521
    %2638 = vmatprep.subr.mxu0 %v1520
    %2639 = vmatpush1.msra.mxu0 %v1519
    %2640 = vmatprep.subr.mxu0 %v1518
    %2641 = vmatpush1.msra.mxu0 %v1517
    %2642 = vmatprep.subr.mxu0 0.0
    %2643 = vmatpush2.msra.mxu0 0.0
    %2644 = vmatprep.subr.mxu0 0.0
    %2645 = vmatpush2.msra.mxu0 0.0
    %2646 = vmatprep.subr.mxu0 0.0
    %2647 = vmatpush2.msra.mxu0 0.0
    %2648 = vmatprep.subr.mxu0 0.0
    %2649 = vmatpush2.msra.mxu0 0.0
    %2650 = vmatprep.subr.mxu0 0.0
    %2651 = vmatpush2.msra.mxu0 0.0
    %2652 = vmatprep.subr.mxu0 0.0
    %2653 = vmatpush2.msra.mxu0 0.0
    %2654 = vmatprep.subr.mxu0 0.0
    %2655 = vmatpush2.msra.mxu0 0.0
    %2656 = vmatprep.subr.mxu0 0.0
    %2657 = vmatpush2.msra.mxu0 0.0
    %2658 = vmatprep.subr.mxu0 0.0
    %2659 = vmatpush2.msra.mxu0 0.0
    %2660 = vmatprep.subr.mxu0 0.0
    %2661 = vmatpush2.msra.mxu0 0.0
    %2662 = vmatprep.subr.mxu0 0.0
    %2663 = vmatpush2.msra.mxu0 0.0
    %2664 = vmatprep.subr.mxu0 0.0
    %2665 = vmatpush2.msra.mxu0 0.0
    %2666 = vmatprep.subr.mxu0 0.0
    %2667 = vmatpush2.msra.mxu0 0.0
    %2668 = vmatprep.subr.mxu0 0.0
    %2669 = vmatpush2.msra.mxu0 0.0
    %2670 = vmatprep.subr.mxu0 0.0
    %2671 = vmatpush2.msra.mxu0 0.0
    %2672 = vmatprep.subr.mxu0 0.0
    %2673 = vmatpush2.msra.mxu0 0.0
    %2674 = vmatprep.mubr.f32.mxu0 0.0
    %2675 = vmatmul.mubr.f32.gmra.mxu0 %v2608
    %v2676 = vpop.f32.mrf.mxu0
    %v2677 = vadd.f32 0.0, %v2676
    %v2678 = vpop.f32.mrf.mxu0
    %v2679 = vadd.f32 0.0, %v2678
    %2680 = vdwg.mxu0
    %v2682 = vrot.slane %v2677, 3
    %v2683 = vrot.slane %v2677, 4
    %2684 = vrot.lane.b32.xlu0 %v2682, 32
    %v2685 = vpop.permute.xlu0 %2684
    %2686 = vrot.lane.b32.xlu0 %v2683, 32
    %v2687 = vpop.permute.xlu0 %2686
    %v2690 = vadd.f32 %v1511, %v2685
    %v2691 = vadd.f32 %v1512, %v2685
    %v2692 = vadd.f32 %v1514, %v2687
    %v2693 = vadd.f32 %v1515, %v2687
    %v2695 = vrot.slane %v2679, 6
    %v2696 = vrot.slane %v2679, 7
    %2697 = vrot.lane.b32.xlu0 %v2695, 32
    %v2698 = vpop.permute.xlu0 %2697
    %2699 = vrot.lane.b32.xlu0 %v2696, 32
    %v2700 = vpop.permute.xlu0 %2699
    %v2703 = vadd.f32 %v1512, %v2698
    %v2704 = vadd.f32 %v1513, %v2698
    %v2705 = vadd.f32 %v1515, %v2700
    %v2706 = vadd.f32 %v1516, %v2700
    %v2707 = vmul.f32 %v2690, 0.5
    %v2708 = vmul.f32 %v2692, 0.5
    %v2709 = vtanh.pop %v2707
    %v2710 = vtanh.pop %v2708
    %v2711 = vadd.f32 %v2709, 1.0
    %v2712 = vadd.f32 %v2710, 1.0
    %v2713 = vmul.f32 %v2711, 0.5
    %v2714 = vmul.f32 %v2712, 0.5
    %v2715 = vtanh.pop %v2691
    %v2716 = vtanh.pop %v2693
    %v2717 = vmul.f32 %v2703, 0.5
    %v2718 = vmul.f32 %v2705, 0.5
    %v2719 = vtanh.pop %v2717
    %v2720 = vtanh.pop %v2718
    %v2721 = vadd.f32 %v2719, 1.0
    %v2722 = vadd.f32 %v2720, 1.0
    %v2723 = vmul.f32 %v2721, 0.5
    %v2724 = vmul.f32 %v2722, 0.5
    %v2725 = vtanh.pop %v2704
    %v2726 = vtanh.pop %v2706
    %v2729 = vrot.slane %v2535, 7
    %v2730 = vrot.slane %v2536, 7
    %v2733 = vmul.f32 %v2713, %v2729
    %v2734 = vmul.f32 %v2714, %v2730
    %2737 = vrot.lane.b32.xlu0 %v2715, 32
    %v2738 = vpop.permute.xlu0 %2737
    %2739 = vrot.lane.b32.xlu0 %v2716, 32
    %v2740 = vpop.permute.xlu0 %2739
    %v2743 = vmul.f32 %v2713, %v2738
    %v2744 = vmul.f32 %v2714, %v2740
    %2747 = vrot.lane.b32.xlu0 %v2743, 32
    %v2748 = vpop.permute.xlu0 %2747
    %2749 = vrot.lane.b32.xlu0 %v2744, 32
    %v2750 = vpop.permute.xlu0 %2749
    %v2753 = vadd.f32 %v2733, %v2748
    %v2754 = vadd.f32 %v2734, %v2750
    %v2755 = vtanh.pop %v2753
    %v2756 = vtanh.pop %v2754
    %2759 = vrot.lane.b32.xlu0 %v2755, 32
    %v2760 = vpop.permute.xlu0 %2759
    %2761 = vrot.lane.b32.xlu0 %v2756, 32
    %v2762 = vpop.permute.xlu0 %2761
    %v2765 = vmul.f32 %v2713, %v2760
    %v2766 = vmul.f32 %v2714, %v2762
    %v2769 = vrot.slane %v2575, 1
    %v2770 = vrot.slane %v2576, 1
    %v2773 = vmul.f32 %v2723, %v2769
    %v2774 = vmul.f32 %v2724, %v2770
    %2777 = vrot.lane.b32.xlu0 %v2725, 32
    %v2778 = vpop.permute.xlu0 %2777
    %2779 = vrot.lane.b32.xlu0 %v2726, 32
    %v2780 = vpop.permute.xlu0 %2779
    %v2783 = vmul.f32 %v2723, %v2778
    %v2784 = vmul.f32 %v2724, %v2780
    %2787 = vrot.lane.b32.xlu0 %v2783, 32
    %v2788 = vpop.permute.xlu0 %2787
    %2789 = vrot.lane.b32.xlu0 %v2784, 32
    %v2790 = vpop.permute.xlu0 %2789
    %v2793 = vadd.f32 %v2773, %v2788
    %v2794 = vadd.f32 %v2774, %v2790
    %v2795 = vtanh.pop %v2793
    %v2796 = vtanh.pop %v2794
    %2799 = vrot.lane.b32.xlu0 %v2795, 32
    %v2800 = vpop.permute.xlu0 %2799
    %2801 = vrot.lane.b32.xlu0 %v2796, 32
    %v2802 = vpop.permute.xlu0 %2801
    %v2805 = vmul.f32 %v2723, %v2800
    %v2806 = vmul.f32 %v2724, %v2802
    %v2809 = vrot.slane %v2766, 7
    %vm2810 = vcmask 1046534
    %v2811 = vsel %vm2810, %v2809, %v2765
    %2812 = vrot.lane.b32.xlu0 %v2811, 32
    %v2813 = vpop.permute.xlu0 %2812
    %v2817 = vrot.slane %v2805, 5
    %v2818 = vrot.slane %v2806, 4
    %v2819 = vsel %vm2810, %v2818, %v2817
    %2820 = vrot.lane.b32.xlu0 %v2819, 64
    %v2821 = vpop.permute.xlu0 %2820
    %v2823 = vsel %vm195, %v2813, %v2821
    %v2825 = vrot.slane %v2823, 5
    %v2826 = vsel %vm1533, %v2825, 0
    %2828 = vmatprep.subr.mxu0 0.0
    %2829 = vmatpush1.msra.mxu0 0.0
    %2830 = vmatprep.subr.mxu0 0.0
    %2831 = vmatpush1.msra.mxu0 0.0
    %2832 = vmatprep.subr.mxu0 0.0
    %2833 = vmatpush1.msra.mxu0 0.0
    %2834 = vmatprep.subr.mxu0 0.0
    %2835 = vmatpush1.msra.mxu0 0.0
    %2836 = vmatprep.subr.mxu0 0.0
    %2837 = vmatpush1.msra.mxu0 0.0
    %2838 = vmatprep.subr.mxu0 0.0
    %2839 = vmatpush1.msra.mxu0 0.0
    %2840 = vmatprep.subr.mxu0 0.0
    %2841 = vmatpush1.msra.mxu0 0.0
    %2842 = vmatprep.subr.mxu0 0.0
    %2843 = vmatpush1.msra.mxu0 0.0
    %2844 = vmatprep.subr.mxu0 %v1532
    %2845 = vmatpush1.msra.mxu0 %v1531
    %2846 = vmatprep.subr.mxu0 %v1530
    %2847 = vmatpush1.msra.mxu0 %v1529
    %2848 = vmatprep.subr.mxu0 %v1528
    %2849 = vmatpush1.msra.mxu0 %v1527
    %2850 = vmatprep.subr.mxu0 %v1526
    %2851 = vmatpush1.msra.mxu0 %v1525
    %2852 = vmatprep.subr.mxu0 %v1524
    %2853 = vmatpush1.msra.mxu0 %v1523
    %2854 = vmatprep.subr.mxu0 %v1522
    %2855 = vmatpush1.msra.mxu0 %v1521
    %2856 = vmatprep.subr.mxu0 %v1520
    %2857 = vmatpush1.msra.mxu0 %v1519
    %2858 = vmatprep.subr.mxu0 %v1518
    %2859 = vmatpush1.msra.mxu0 %v1517
    %2860 = vmatprep.subr.mxu0 0.0
    %2861 = vmatpush2.msra.mxu0 0.0
    %2862 = vmatprep.subr.mxu0 0.0
    %2863 = vmatpush2.msra.mxu0 0.0
    %2864 = vmatprep.subr.mxu0 0.0
    %2865 = vmatpush2.msra.mxu0 0.0
    %2866 = vmatprep.subr.mxu0 0.0
    %2867 = vmatpush2.msra.mxu0 0.0
    %2868 = vmatprep.subr.mxu0 0.0
    %2869 = vmatpush2.msra.mxu0 0.0
    %2870 = vmatprep.subr.mxu0 0.0
    %2871 = vmatpush2.msra.mxu0 0.0
    %2872 = vmatprep.subr.mxu0 0.0
    %2873 = vmatpush2.msra.mxu0 0.0
    %2874 = vmatprep.subr.mxu0 0.0
    %2875 = vmatpush2.msra.mxu0 0.0
    %2876 = vmatprep.subr.mxu0 0.0
    %2877 = vmatpush2.msra.mxu0 0.0
    %2878 = vmatprep.subr.mxu0 0.0
    %2879 = vmatpush2.msra.mxu0 0.0
    %2880 = vmatprep.subr.mxu0 0.0
    %2881 = vmatpush2.msra.mxu0 0.0
    %2882 = vmatprep.subr.mxu0 0.0
    %2883 = vmatpush2.msra.mxu0 0.0
    %2884 = vmatprep.subr.mxu0 0.0
    %2885 = vmatpush2.msra.mxu0 0.0
    %2886 = vmatprep.subr.mxu0 0.0
    %2887 = vmatpush2.msra.mxu0 0.0
    %2888 = vmatprep.subr.mxu0 0.0
    %2889 = vmatpush2.msra.mxu0 0.0
    %2890 = vmatprep.subr.mxu0 0.0
    %2891 = vmatpush2.msra.mxu0 0.0
    %2892 = vmatprep.mubr.f32.mxu0 0.0
    %2893 = vmatmul.mubr.f32.gmra.mxu0 %v2826
    %v2894 = vpop.f32.mrf.mxu0
    %v2895 = vadd.f32 0.0, %v2894
    %v2896 = vpop.f32.mrf.mxu0
    %v2897 = vadd.f32 0.0, %v2896
    %2898 = vdwg.mxu0
    %v2900 = vrot.slane %v2895, 2
    %v2901 = vrot.slane %v2895, 3
    %2902 = vrot.lane.b32.xlu0 %v2900, 32
    %v2903 = vpop.permute.xlu0 %2902
    %2904 = vrot.lane.b32.xlu0 %v2901, 32
    %v2905 = vpop.permute.xlu0 %2904
    %v2908 = vadd.f32 %v1511, %v2903
    %v2909 = vadd.f32 %v1512, %v2903
    %v2910 = vadd.f32 %v1514, %v2905
    %v2911 = vadd.f32 %v1515, %v2905
    %v2913 = vrot.slane %v2897, 7
    %2914 = vrot.lane.b32.xlu0 %v2913, 32
    %v2915 = vpop.permute.xlu0 %2914
    %2916 = vrot.lane.b32.xlu0 %v2897, 32
    %v2917 = vpop.permute.xlu0 %2916
    %v2920 = vadd.f32 %v1512, %v2915
    %v2921 = vadd.f32 %v1513, %v2915
    %v2922 = vadd.f32 %v1515, %v2917
    %v2923 = vadd.f32 %v1516, %v2917
    %v2924 = vmul.f32 %v2908, 0.5
    %v2925 = vmul.f32 %v2910, 0.5
    %v2926 = vtanh.pop %v2924
    %v2927 = vtanh.pop %v2925
    %v2928 = vadd.f32 %v2926, 1.0
    %v2929 = vadd.f32 %v2927, 1.0
    %v2930 = vmul.f32 %v2928, 0.5
    %v2931 = vmul.f32 %v2929, 0.5
    %v2932 = vtanh.pop %v2909
    %v2933 = vtanh.pop %v2911
    %v2934 = vmul.f32 %v2920, 0.5
    %v2935 = vmul.f32 %v2922, 0.5
    %v2936 = vtanh.pop %v2934
    %v2937 = vtanh.pop %v2935
    %v2938 = vadd.f32 %v2936, 1.0
    %v2939 = vadd.f32 %v2937, 1.0
    %v2940 = vmul.f32 %v2938, 0.5
    %v2941 = vmul.f32 %v2939, 0.5
    %v2942 = vtanh.pop %v2921
    %v2943 = vtanh.pop %v2923
    %v2946 = vrot.slane %v2753, 7
    %v2947 = vrot.slane %v2754, 7
    %v2950 = vmul.f32 %v2930, %v2946
    %v2951 = vmul.f32 %v2931, %v2947
    %2954 = vrot.lane.b32.xlu0 %v2932, 32
    %v2955 = vpop.permute.xlu0 %2954
    %2956 = vrot.lane.b32.xlu0 %v2933, 32
    %v2957 = vpop.permute.xlu0 %2956
    %v2960 = vmul.f32 %v2930, %v2955
    %v2961 = vmul.f32 %v2931, %v2957
    %2964 = vrot.lane.b32.xlu0 %v2960, 32
    %v2965 = vpop.permute.xlu0 %2964
    %2966 = vrot.lane.b32.xlu0 %v2961, 32
    %v2967 = vpop.permute.xlu0 %2966
    %v2970 = vadd.f32 %v2950, %v2965
    %v2971 = vadd.f32 %v2951, %v2967
    %v2972 = vtanh.pop %v2970
    %v2973 = vtanh.pop %v2971
    %2976 = vrot.lane.b32.xlu0 %v2972, 32
    %v2977 = vpop.permute.xlu0 %2976
    %2978 = vrot.lane.b32.xlu0 %v2973, 32
    %v2979 = vpop.permute.xlu0 %2978
    %v2982 = vmul.f32 %v2930, %v2977
    %v2983 = vmul.f32 %v2931, %v2979
    %v2986 = vrot.slane %v2793, 1
    %v2987 = vrot.slane %v2794, 1
    %v2990 = vmul.f32 %v2940, %v2986
    %v2991 = vmul.f32 %v2941, %v2987
    %2994 = vrot.lane.b32.xlu0 %v2942, 32
    %v2995 = vpop.permute.xlu0 %2994
    %2996 = vrot.lane.b32.xlu0 %v2943, 32
    %v2997 = vpop.permute.xlu0 %2996
    %v3000 = vmul.f32 %v2940, %v2995
    %v3001 = vmul.f32 %v2941, %v2997
    %3004 = vrot.lane.b32.xlu0 %v3000, 32
    %v3005 = vpop.permute.xlu0 %3004
    %3006 = vrot.lane.b32.xlu0 %v3001, 32
    %v3007 = vpop.permute.xlu0 %3006
    %v3010 = vadd.f32 %v2990, %v3005
    %v3011 = vadd.f32 %v2991, %v3007
    %v3012 = vtanh.pop %v3010
    %v3013 = vtanh.pop %v3011
    %3016 = vrot.lane.b32.xlu0 %v3012, 32
    %v3017 = vpop.permute.xlu0 %3016
    %3018 = vrot.lane.b32.xlu0 %v3013, 32
    %v3019 = vpop.permute.xlu0 %3018
    %v3022 = vmul.f32 %v2940, %v3017
    %v3023 = vmul.f32 %v2941, %v3019
    %v3026 = vrot.slane %v2983, 7
    %vm3027 = vcmask 1047559
    %v3028 = vsel %vm3027, %v3026, %v2982
    %3029 = vrot.lane.b32.xlu0 %v3028, 32
    %v3030 = vpop.permute.xlu0 %3029
    %v3034 = vrot.slane %v3022, 3
    %v3035 = vrot.slane %v3023, 2
    %v3036 = vsel %vm3027, %v3035, %v3034
    %3037 = vrot.lane.b32.xlu0 %v3036, 64
    %v3038 = vpop.permute.xlu0 %3037
    %v3040 = vsel %vm195, %v3030, %v3038
    %v3042 = vrot.slane %v3040, 6
    %v3043 = vsel %vm1533, %v3042, 0
    %3045 = vmatprep.subr.mxu0 0.0
    %3046 = vmatpush1.msra.mxu0 0.0
    %3047 = vmatprep.subr.mxu0 0.0
    %3048 = vmatpush1.msra.mxu0 0.0
    %3049 = vmatprep.subr.mxu0 0.0
    %3050 = vmatpush1.msra.mxu0 0.0
    %3051 = vmatprep.subr.mxu0 0.0
    %3052 = vmatpush1.msra.mxu0 0.0
    %3053 = vmatprep.subr.mxu0 0.0
    %3054 = vmatpush1.msra.mxu0 0.0
    %3055 = vmatprep.subr.mxu0 0.0
    %3056 = vmatpush1.msra.mxu0 0.0
    %3057 = vmatprep.subr.mxu0 0.0
    %3058 = vmatpush1.msra.mxu0 0.0
    %3059 = vmatprep.subr.mxu0 0.0
    %3060 = vmatpush1.msra.mxu0 0.0
    %3061 = vmatprep.subr.mxu0 %v1532
    %3062 = vmatpush1.msra.mxu0 %v1531
    %3063 = vmatprep.subr.mxu0 %v1530
    %3064 = vmatpush1.msra.mxu0 %v1529
    %3065 = vmatprep.subr.mxu0 %v1528
    %3066 = vmatpush1.msra.mxu0 %v1527
    %3067 = vmatprep.subr.mxu0 %v1526
    %3068 = vmatpush1.msra.mxu0 %v1525
    %3069 = vmatprep.subr.mxu0 %v1524
    %3070 = vmatpush1.msra.mxu0 %v1523
    %3071 = vmatprep.subr.mxu0 %v1522
    %3072 = vmatpush1.msra.mxu0 %v1521
    %3073 = vmatprep.subr.mxu0 %v1520
    %3074 = vmatpush1.msra.mxu0 %v1519
    %3075 = vmatprep.subr.mxu0 %v1518
    %3076 = vmatpush1.msra.mxu0 %v1517
    %3077 = vmatprep.subr.mxu0 0.0
    %3078 = vmatpush2.msra.mxu0 0.0
    %3079 = vmatprep.subr.mxu0 0.0
    %3080 = vmatpush2.msra.mxu0 0.0
    %3081 = vmatprep.subr.mxu0 0.0
    %3082 = vmatpush2.msra.mxu0 0.0
    %3083 = vmatprep.subr.mxu0 0.0
    %3084 = vmatpush2.msra.mxu0 0.0
    %3085 = vmatprep.subr.mxu0 0.0
    %3086 = vmatpush2.msra.mxu0 0.0
    %3087 = vmatprep.subr.mxu0 0.0
    %3088 = vmatpush2.msra.mxu0 0.0
    %3089 = vmatprep.subr.mxu0 0.0
    %3090 = vmatpush2.msra.mxu0 0.0
    %3091 = vmatprep.subr.mxu0 0.0
    %3092 = vmatpush2.msra.mxu0 0.0
    %3093 = vmatprep.subr.mxu0 0.0
    %3094 = vmatpush2.msra.mxu0 0.0
    %3095 = vmatprep.subr.mxu0 0.0
    %3096 = vmatpush2.msra.mxu0 0.0
    %3097 = vmatprep.subr.mxu0 0.0
    %3098 = vmatpush2.msra.mxu0 0.0
    %3099 = vmatprep.subr.mxu0 0.0
    %3100 = vmatpush2.msra.mxu0 0.0
    %3101 = vmatprep.subr.mxu0 0.0
    %3102 = vmatpush2.msra.mxu0 0.0
    %3103 = vmatprep.subr.mxu0 0.0
    %3104 = vmatpush2.msra.mxu0 0.0
    %3105 = vmatprep.subr.mxu0 0.0
    %3106 = vmatpush2.msra.mxu0 0.0
    %3107 = vmatprep.subr.mxu0 0.0
    %3108 = vmatpush2.msra.mxu0 0.0
    %3109 = vmatprep.mubr.f32.mxu0 0.0
    %3110 = vmatmul.mubr.f32.gmra.mxu0 %v3043
    %v3111 = vpop.f32.mrf.mxu0
    %v3112 = vadd.f32 0.0, %v3111
    %v3113 = vpop.f32.mrf.mxu0
    %v3114 = vadd.f32 0.0, %v3113
    %3115 = vdwg.mxu0
    %v3117 = vrot.slane %v3112, 1
    %v3118 = vrot.slane %v3112, 2
    %3119 = vrot.lane.b32.xlu0 %v3117, 32
    %v3120 = vpop.permute.xlu0 %3119
    %3121 = vrot.lane.b32.xlu0 %v3118, 32
    %v3122 = vpop.permute.xlu0 %3121
    %v3125 = vadd.f32 %v1511, %v3120
    %v3126 = vadd.f32 %v1512, %v3120
    %v3127 = vadd.f32 %v1514, %v3122
    %v3128 = vadd.f32 %v1515, %v3122
    %v3130 = vrot.slane %v3114, 1
    %3131 = vrot.lane.b32.xlu0 %v3114, 32
    %v3132 = vpop.permute.xlu0 %3131
    %3133 = vrot.lane.b32.xlu0 %v3130, 32
    %v3134 = vpop.permute.xlu0 %3133
    %v3137 = vadd.f32 %v1512, %v3132
    %v3138 = vadd.f32 %v1513, %v3132
    %v3139 = vadd.f32 %v1515, %v3134
    %v3140 = vadd.f32 %v1516, %v3134
    %v3141 = vmul.f32 %v3125, 0.5
    %v3142 = vmul.f32 %v3127, 0.5
    %v3143 = vtanh.pop %v3141
    %v3144 = vtanh.pop %v3142
    %v3145 = vadd.f32 %v3143, 1.0
    %v3146 = vadd.f32 %v3144, 1.0
    %v3147 = vmul.f32 %v3145, 0.5
    %v3148 = vmul.f32 %v3146, 0.5
    %v3149 = vtanh.pop %v3126
    %v3150 = vtanh.pop %v3128
    %v3151 = vmul.f32 %v3137, 0.5
    %v3152 = vmul.f32 %v3139, 0.5
    %v3153 = vtanh.pop %v3151
    %v3154 = vtanh.pop %v3152
    %v3155 = vadd.f32 %v3153, 1.0
    %v3156 = vadd.f32 %v3154, 1.0
    %v3157 = vmul.f32 %v3155, 0.5
    %v3158 = vmul.f32 %v3156, 0.5
    %v3159 = vtanh.pop %v3138
    %v3160 = vtanh.pop %v3140
    %v3163 = vrot.slane %v2970, 7
    %v3164 = vrot.slane %v2971, 7
    %v3167 = vmul.f32 %v3147, %v3163
    %v3168 = vmul.f32 %v3148, %v3164
    %3171 = vrot.lane.b32.xlu0 %v3149, 32
    %v3172 = vpop.permute.xlu0 %3171
    %3173 = vrot.lane.b32.xlu0 %v3150, 32
    %v3174 = vpop.permute.xlu0 %3173
    %v3177 = vmul.f32 %v3147, %v3172
    %v3178 = vmul.f32 %v3148, %v3174
    %3181 = vrot.lane.b32.xlu0 %v3177, 32
    %v3182 = vpop.permute.xlu0 %3181
    %3183 = vrot.lane.b32.xlu0 %v3178, 32
    %v3184 = vpop.permute.xlu0 %3183
    %v3187 = vadd.f32 %v3167, %v3182
    %v3188 = vadd.f32 %v3168, %v3184
    %v3189 = vtanh.pop %v3187
    %v3190 = vtanh.pop %v3188
    %3193 = vrot.lane.b32.xlu0 %v3189, 32
    %v3194 = vpop.permute.xlu0 %3193
    %3195 = vrot.lane.b32.xlu0 %v3190, 32
    %v3196 = vpop.permute.xlu0 %3195
    %v3199 = vmul.f32 %v3147, %v3194
    %v3200 = vmul.f32 %v3148, %v3196
    %v3203 = vrot.slane %v3010, 1
    %v3204 = vrot.slane %v3011, 1
    %v3207 = vmul.f32 %v3157, %v3203
    %v3208 = vmul.f32 %v3158, %v3204
    %3211 = vrot.lane.b32.xlu0 %v3159, 32
    %v3212 = vpop.permute.xlu0 %3211
    %3213 = vrot.lane.b32.xlu0 %v3160, 32
    %v3214 = vpop.permute.xlu0 %3213
    %v3217 = vmul.f32 %v3157, %v3212
    %v3218 = vmul.f32 %v3158, %v3214
    %3221 = vrot.lane.b32.xlu0 %v3217, 32
    %v3222 = vpop.permute.xlu0 %3221
    %3223 = vrot.lane.b32.xlu0 %v3218, 32
    %v3224 = vpop.permute.xlu0 %3223
    %v3227 = vadd.f32 %v3207, %v3222
    %v3228 = vadd.f32 %v3208, %v3224
    %v3229 = vtanh.pop %v3227
    %v3230 = vtanh.pop %v3228
    %3233 = vrot.lane.b32.xlu0 %v3229, 32
    %v3234 = vpop.permute.xlu0 %3233
    %3235 = vrot.lane.b32.xlu0 %v3230, 32
    %v3236 = vpop.permute.xlu0 %3235
    %v3239 = vmul.f32 %v3157, %v3234
    %v3240 = vmul.f32 %v3158, %v3236
    %vm3241 = vcmask 1040384
    %v3242 = vsel %vm3241, %v1685, %v1894
    %v3243 = vsel %vm3241, %v1686, %v1895
    %vm3244 = vcmask 1041408
    %v3245 = vsel %vm3244, %v3242, %v2112
    %v3246 = vsel %vm3244, %v3243, %v2113
    %vm3247 = vcmask 1042432
    %v3248 = vsel %vm3247, %v3245, %v2330
    %v3249 = vsel %vm3247, %v3246, %v2331
    %vm3250 = vcmask 1043456
    %v3251 = vsel %vm3250, %v3248, %v2547
    %v3252 = vsel %vm3250, %v3249, %v2548
    %vm3253 = vcmask 1044480
    %v3254 = vsel %vm3253, %v3251, %v2765
    %v3255 = vsel %vm3253, %v3252, %v2766
    %vm3256 = vcmask 1045504
    %v3257 = vsel %vm3256, %v3254, %v2982
    %v3258 = vsel %vm3256, %v3255, %v2983
    %vm3259 = vcmask 1046528
    %v3260 = vsel %vm3259, %v3257, %v3199
    %v3261 = vsel %vm3259, %v3258, %v3200
    %v3262 = vsel %vm3241, %v3239, %v3022
    %v3263 = vsel %vm3241, %v3240, %v3023
    %v3264 = vsel %vm3244, %v3262, %v2805
    %v3265 = vsel %vm3244, %v3263, %v2806
    %v3266 = vsel %vm3247, %v3264, %v2587
    %v3267 = vsel %vm3247, %v3265, %v2588
    %v3268 = vsel %vm3250, %v3266, %v2370
    %v3269 = vsel %vm3250, %v3267, %v2371
    %v3270 = vsel %vm3253, %v3268, %v2152
    %v3271 = vsel %vm3253, %v3269, %v2153
    %v3272 = vsel %vm3256, %v3270, %v1934
    %v3273 = vsel %vm3256, %v3271, %v1935
    %v3274 = vsel %vm3259, %v3272, %v1719
    %v3275 = vsel %vm3259, %v3273, %v1720
    %3278 = vrot.lane.b32.xlu0 %v3260, 32
    %v3279 = vpop.permute.xlu0 %3278
    %3280 = vrot.lane.b32.xlu0 %v3261, 32
    %v3281 = vpop.permute.xlu0 %3280
    %3286 = vrot.lane.b32.xlu0 %v3274, 64
    %v3287 = vpop.permute.xlu0 %3286
    %3288 = vrot.lane.b32.xlu0 %v3275, 64
    %v3289 = vpop.permute.xlu0 %3288
    %v3292 = vsel %vm195, %v3279, %v3287
    %v3293 = vsel %vm195, %v3281, %v3289
    %v3294 = vld [vmem:[#allocation14] sm:$0xff]
    %v3295 = vld [vmem:[#allocation14 + $0x8] sm:$0xff]
    %v3296 = vld [vmem:[#allocation14 + $0x10] sm:$0xff]
    %v3297 = vld [vmem:[#allocation14 + $0x18] sm:$0xff]
    %v3298 = vld [vmem:[#allocation14 + $0x20] sm:$0xff]
    %v3299 = vld [vmem:[#allocation14 + $0x28] sm:$0xff]
    %v3300 = vld [vmem:[#allocation14 + $0x30] sm:$0xff]
    %v3301 = vld [vmem:[#allocation14 + $0x38] sm:$0xff]
    %v3302 = vld [vmem:[#allocation14 + $0x40] sm:$0xff]
    %v3303 = vld [vmem:[#allocation14 + $0x48] sm:$0xff]
    %v3304 = vld [vmem:[#allocation14 + $0x50] sm:$0xff]
    %v3305 = vld [vmem:[#allocation14 + $0x58] sm:$0xff]
    %v3306 = vld [vmem:[#allocation14 + $0x60] sm:$0xff]
    %v3307 = vld [vmem:[#allocation14 + $0x68] sm:$0xff]
    %v3308 = vld [vmem:[#allocation14 + $0x70] sm:$0xff]
    %v3309 = vld [vmem:[#allocation14 + $0x78] sm:$0xff]
    %v3311 = vsel %vm1533, %v3292, 0
    %v3314 = vsel %vm1533, %v3293, 0
    %3316 = vmatprep.subr.mxu0 0.0
    %3317 = vmatpush1.msra.mxu0 0.0
    %3318 = vmatprep.subr.mxu0 0.0
    %3319 = vmatpush1.msra.mxu0 0.0
    %3320 = vmatprep.subr.mxu0 0.0
    %3321 = vmatpush1.msra.mxu0 0.0
    %3322 = vmatprep.subr.mxu0 0.0
    %3323 = vmatpush1.msra.mxu0 0.0
    %3324 = vmatprep.subr.mxu0 0.0
    %3325 = vmatpush1.msra.mxu0 0.0
    %3326 = vmatprep.subr.mxu0 0.0
    %3327 = vmatpush1.msra.mxu0 0.0
    %3328 = vmatprep.subr.mxu0 0.0
    %3329 = vmatpush1.msra.mxu0 0.0
    %3330 = vmatprep.subr.mxu0 0.0
    %3331 = vmatpush1.msra.mxu0 0.0
    %3332 = vmatprep.subr.mxu0 %v3309
    %3333 = vmatpush1.msra.mxu0 %v3308
    %3334 = vmatprep.subr.mxu0 %v3307
    %3335 = vmatpush1.msra.mxu0 %v3306
    %3336 = vmatprep.subr.mxu0 %v3305
    %3337 = vmatpush1.msra.mxu0 %v3304
    %3338 = vmatprep.subr.mxu0 %v3303
    %3339 = vmatpush1.msra.mxu0 %v3302
    %3340 = vmatprep.subr.mxu0 %v3301
    %3341 = vmatpush1.msra.mxu0 %v3300
    %3342 = vmatprep.subr.mxu0 %v3299
    %3343 = vmatpush1.msra.mxu0 %v3298
    %3344 = vmatprep.subr.mxu0 %v3297
    %3345 = vmatpush1.msra.mxu0 %v3296
    %3346 = vmatprep.subr.mxu0 %v3295
    %3347 = vmatpush1.msra.mxu0 %v3294
    %3348 = vmatprep.subr.mxu0 0.0
    %3349 = vmatpush2.msra.mxu0 0.0
    %3350 = vmatprep.subr.mxu0 0.0
    %3351 = vmatpush2.msra.mxu0 0.0
    %3352 = vmatprep.subr.mxu0 0.0
    %3353 = vmatpush2.msra.mxu0 0.0
    %3354 = vmatprep.subr.mxu0 0.0
    %3355 = vmatpush2.msra.mxu0 0.0
    %3356 = vmatprep.subr.mxu0 0.0
    %3357 = vmatpush2.msra.mxu0 0.0
    %3358 = vmatprep.subr.mxu0 0.0
    %3359 = vmatpush2.msra.mxu0 0.0
    %3360 = vmatprep.subr.mxu0 0.0
    %3361 = vmatpush2.msra.mxu0 0.0
    %3362 = vmatprep.subr.mxu0 0.0
    %3363 = vmatpush2.msra.mxu0 0.0
    %3364 = vmatprep.subr.mxu0 0.0
    %3365 = vmatpush2.msra.mxu0 0.0
    %3366 = vmatprep.subr.mxu0 0.0
    %3367 = vmatpush2.msra.mxu0 0.0
    %3368 = vmatprep.subr.mxu0 0.0
    %3369 = vmatpush2.msra.mxu0 0.0
    %3370 = vmatprep.subr.mxu0 0.0
    %3371 = vmatpush2.msra.mxu0 0.0
    %3372 = vmatprep.subr.mxu0 0.0
    %3373 = vmatpush2.msra.mxu0 0.0
    %3374 = vmatprep.subr.mxu0 0.0
    %3375 = vmatpush2.msra.mxu0 0.0
    %3376 = vmatprep.subr.mxu0 0.0
    %3377 = vmatpush2.msra.mxu0 0.0
    %3378 = vmatprep.subr.mxu0 0.0
    %3379 = vmatpush2.msra.mxu0 0.0
    %3380 = vmatprep.mubr.f32.mxu0 0.0
    %3381 = vmatmul.mubr.f32.gmra.mxu0 %v3311
    %v3382 = vpop.f32.mrf.mxu0
    %v3383 = vadd.f32 0.0, %v3382
    %v3384 = vpop.f32.mrf.mxu0
    %v3385 = vadd.f32 0.0, %v3384
    %3386 = vmatprep.mubr.f32.mxu0 0.0
    %3387 = vmatmul.mubr.f32.gmra.mxu0 %v3314
    %v3388 = vpop.f32.mrf.mxu0
    %v3389 = vadd.f32 0.0, %v3388
    %v3390 = vpop.f32.mrf.mxu0
    %v3391 = vadd.f32 0.0, %v3390
    %3392 = vdwg.mxu0
    %3397 = vrot.lane.b32.xlu0 %v3383, 32
    %v3398 = vpop.permute.xlu0 %3397
    %3399 = vrot.lane.b32.xlu0 %v3385, 32
    %v3400 = vpop.permute.xlu0 %3399
    %3401 = vrot.lane.b32.xlu0 %v3389, 32
    %v3402 = vpop.permute.xlu0 %3401
    %3403 = vrot.lane.b32.xlu0 %v3391, 32
    %v3404 = vpop.permute.xlu0 %3403
    %v3405 = vsel %vm195, %v3398, %v3400
    %v3406 = vsel %vm195, %v3402, %v3404
    %v3413 = vadd.f32 %v346, %v3398
    %v3414 = vadd.f32 %v348, %v3405
    %v3415 = vadd.f32 %v423, %v3400
    %v3416 = vadd.f32 %v352, %v3402
    %v3417 = vadd.f32 %v354, %v3406
    %v3418 = vadd.f32 %v428, %v3404
    %v3421 = vcombine.low %v1380, %v1382
    %v3423 = vunpack.c.l.s4 1966171168
    %v3424 = vunpack.c.0.s8 %v3423
    %v3425 = vlaneseq
    %v3426 = vshrl.u32 %v3425, 7
    %v3427 = vsub.s32 %v3424, %v3426
    %v3428 = vrot.slane %v3421, %v3427
    %v3429 = vcombine.high %v3428, %v3428
    %v3431 = vunpack.c.l.s4 1966171168
    %v3432 = vunpack.c.0.s8 %v3431
    %v3433 = vlaneseq
    %v3434 = vshrl.u32 %v3433, 7
    %v3435 = vsub.s32 %v3432, %v3434
    %v3436 = vrot.slane %v3428, %v3435
    %v3438 = vunpack.c.l.s4 1966171168
    %v3439 = vunpack.c.0.s8 %v3438
    %v3440 = vlaneseq
    %v3441 = vshrl.u32 %v3440, 7
    %v3442 = vsub.s32 %v3439, %v3441
    %v3443 = vrot.slane %v3429, %v3442
    %v3444 = vlaneseq
    %v3445 = vshrl.u32 %v3444, 7
    %v3446 = vsub.s32 0, %v3445
    %v3447 = vrot.slane %v3436, %v3446
    %v3448 = vlaneseq
    %v3449 = vshrl.u32 %v3448, 7
    %v3450 = vsub.s32 1, %v3449
    %v3451 = vrot.slane %v3436, %v3450
    %v3452 = vlaneseq
    %v3453 = vshrl.u32 %v3452, 7
    %v3454 = vsub.s32 0, %v3453
    %v3455 = vrot.slane %v3443, %v3454
    %v3456 = vlaneseq
    %v3457 = vshrl.u32 %v3456, 7
    %v3458 = vsub.s32 1, %v3457
    %v3459 = vrot.slane %v3443, %v3458
    %3460 = vrot.lane.b32.xlu0 %v3447, 32
    %v3461 = vpop.permute.xlu0 %3460
    %3462 = vrot.lane.b32.xlu0 %v3451, 32
    %v3463 = vpop.permute.xlu0 %3462
    %3464 = vrot.lane.b32.xlu0 %v3455, 32
    %v3465 = vpop.permute.xlu0 %3464
    %3466 = vrot.lane.b32.xlu0 %v3459, 32
    %v3467 = vpop.permute.xlu0 %3466
    %v3468 = vsel %vm195, %v3461, %v3463
    %v3469 = vsel %vm195, %v3465, %v3467
    %v3476 = vadd.f32 %v3413, %v3461
    %v3477 = vadd.f32 %v3414, %v3468
    %v3478 = vadd.f32 %v3415, %v3463
    %v3479 = vadd.f32 %v3416, %v3465
    %v3480 = vadd.f32 %v3417, %v3469
    %v3481 = vadd.f32 %v3418, %v3467
    %v3482 = vld [vmem:[#allocation13 + $0x80] sm:$0xff]
    %v3483 = vld [vmem:[#allocation13 + $0x88] sm:$0xff]
    %v3484 = vld [vmem:[#allocation13 + $0x90] sm:$0xff]
    %v3485 = vld [vmem:[#allocation13 + $0x98] sm:$0xff]
    %v3486 = vld [vmem:[#allocation13 + $0xa0] sm:$0xff]
    %v3487 = vld [vmem:[#allocation13 + $0xa8] sm:$0xff]
    %v3488 = vld [vmem:[#allocation13 + $0xb0] sm:$0xff]
    %v3489 = vld [vmem:[#allocation13 + $0xb8] sm:$0xff]
    %v3490 = vld [vmem:[#allocation13 + $0xc0] sm:$0xff]
    %v3491 = vld [vmem:[#allocation13 + $0xc8] sm:$0xff]
    %v3492 = vld [vmem:[#allocation13 + $0xd0] sm:$0xff]
    %v3493 = vld [vmem:[#allocation13 + $0xd8] sm:$0xff]
    %v3494 = vld [vmem:[#allocation13 + $0xe0] sm:$0xff]
    %v3495 = vld [vmem:[#allocation13 + $0xe8] sm:$0xff]
    %v3496 = vld [vmem:[#allocation13 + $0xf0] sm:$0xff]
    %v3497 = vld [vmem:[#allocation13 + $0xf8] sm:$0xff]
    %3498 = vmatprep.subr.mxu0 0.0
    %3499 = vmatpush1.msra.mxu0 0.0
    %3500 = vmatprep.subr.mxu0 0.0
    %3501 = vmatpush1.msra.mxu0 0.0
    %3502 = vmatprep.subr.mxu0 0.0
    %3503 = vmatpush1.msra.mxu0 0.0
    %3504 = vmatprep.subr.mxu0 0.0
    %3505 = vmatpush1.msra.mxu0 0.0
    %3506 = vmatprep.subr.mxu0 0.0
    %3507 = vmatpush1.msra.mxu0 0.0
    %3508 = vmatprep.subr.mxu0 0.0
    %3509 = vmatpush1.msra.mxu0 0.0
    %3510 = vmatprep.subr.mxu0 0.0
    %3511 = vmatpush1.msra.mxu0 0.0
    %3512 = vmatprep.subr.mxu0 0.0
    %3513 = vmatpush1.msra.mxu0 0.0
    %3514 = vmatprep.subr.mxu0 %v3497
    %3515 = vmatpush1.msra.mxu0 %v3496
    %3516 = vmatprep.subr.mxu0 %v3495
    %3517 = vmatpush1.msra.mxu0 %v3494
    %3518 = vmatprep.subr.mxu0 %v3493
    %3519 = vmatpush1.msra.mxu0 %v3492
    %3520 = vmatprep.subr.mxu0 %v3491
    %3521 = vmatpush1.msra.mxu0 %v3490
    %3522 = vmatprep.subr.mxu0 %v3489
    %3523 = vmatpush1.msra.mxu0 %v3488
    %3524 = vmatprep.subr.mxu0 %v3487
    %3525 = vmatpush1.msra.mxu0 %v3486
    %3526 = vmatprep.subr.mxu0 %v3485
    %3527 = vmatpush1.msra.mxu0 %v3484
    %3528 = vmatprep.subr.mxu0 %v3483
    %3529 = vmatpush1.msra.mxu0 %v3482
    %3530 = vmatprep.subr.mxu0 0.0
    %3531 = vmatpush2.msra.mxu0 0.0
    %3532 = vmatprep.subr.mxu0 0.0
    %3533 = vmatpush2.msra.mxu0 0.0
    %3534 = vmatprep.subr.mxu0 0.0
    %3535 = vmatpush2.msra.mxu0 0.0
    %3536 = vmatprep.subr.mxu0 0.0
    %3537 = vmatpush2.msra.mxu0 0.0
    %3538 = vmatprep.subr.mxu0 0.0
    %3539 = vmatpush2.msra.mxu0 0.0
    %3540 = vmatprep.subr.mxu0 0.0
    %3541 = vmatpush2.msra.mxu0 0.0
    %3542 = vmatprep.subr.mxu0 0.0
    %3543 = vmatpush2.msra.mxu0 0.0
    %3544 = vmatprep.subr.mxu0 0.0
    %3545 = vmatpush2.msra.mxu0 0.0
    %3546 = vmatprep.subr.mxu0 0.0
    %3547 = vmatpush2.msra.mxu0 0.0
    %3548 = vmatprep.subr.mxu0 0.0
    %3549 = vmatpush2.msra.mxu0 0.0
    %3550 = vmatprep.subr.mxu0 0.0
    %3551 = vmatpush2.msra.mxu0 0.0
    %3552 = vmatprep.subr.mxu0 0.0
    %3553 = vmatpush2.msra.mxu0 0.0
    %3554 = vmatprep.subr.mxu0 0.0
    %3555 = vmatpush2.msra.mxu0 0.0
    %3556 = vmatprep.subr.mxu0 0.0
    %3557 = vmatpush2.msra.mxu0 0.0
    %3558 = vmatprep.subr.mxu0 0.0
    %3559 = vmatpush2.msra.mxu0 0.0
    %3560 = vmatprep.subr.mxu0 0.0
    %3561 = vmatpush2.msra.mxu0 0.0
    %3562 = vmatprep.mubr.f32.mxu0 0.0
    %3563 = vmatmul.mubr.f32.gmra.mxu0 %v1535
    %v3564 = vpop.f32.mrf.mxu0
    %v3565 = vadd.f32 0.0, %v3564
    %v3566 = vpop.f32.mrf.mxu0
    %v3567 = vadd.f32 0.0, %v3566
    %3568 = vdwg.mxu0
    %v3570 = vrot.slane %v3565, 1
    %3571 = vrot.lane.b32.xlu0 %v3565, 32
    %v3572 = vpop.permute.xlu0 %3571
    %3573 = vrot.lane.b32.xlu0 %v3570, 32
    %v3574 = vpop.permute.xlu0 %3573
    %v3577 = vadd.f32 %v3476, %v3572
    %v3578 = vadd.f32 %v3477, %v3572
    %v3579 = vadd.f32 %v3479, %v3574
    %v3580 = vadd.f32 %v3480, %v3574
    %v3582 = vrot.slane %v3567, 1
    %v3583 = vrot.slane %v3567, 2
    %3584 = vrot.lane.b32.xlu0 %v3582, 32
    %v3585 = vpop.permute.xlu0 %3584
    %3586 = vrot.lane.b32.xlu0 %v3583, 32
    %v3587 = vpop.permute.xlu0 %3586
    %v3590 = vadd.f32 %v3477, %v3585
    %v3591 = vadd.f32 %v3478, %v3585
    %v3592 = vadd.f32 %v3480, %v3587
    %v3593 = vadd.f32 %v3481, %v3587
    %v3594 = vmul.f32 %v3577, 0.5
    %v3595 = vmul.f32 %v3579, 0.5
    %v3596 = vtanh.pop %v3594
    %v3597 = vtanh.pop %v3595
    %v3598 = vadd.f32 %v3596, 1.0
    %v3599 = vadd.f32 %v3597, 1.0
    %v3600 = vmul.f32 %v3598, 0.5
    %v3601 = vmul.f32 %v3599, 0.5
    %v3602 = vtanh.pop %v3578
    %v3603 = vtanh.pop %v3580
    %v3604 = vmul.f32 %v3590, 0.5
    %v3605 = vmul.f32 %v3592, 0.5
    %v3606 = vtanh.pop %v3604
    %v3607 = vtanh.pop %v3605
    %v3608 = vadd.f32 %v3606, 1.0
    %v3609 = vadd.f32 %v3607, 1.0
    %v3610 = vmul.f32 %v3608, 0.5
    %v3611 = vmul.f32 %v3609, 0.5
    %v3612 = vtanh.pop %v3591
    %v3613 = vtanh.pop %v3593
    %v3614 = vmul.f32 %v3600, 0.0
    %v3615 = vmul.f32 %v3601, 0.0
    %3618 = vrot.lane.b32.xlu0 %v3602, 32
    %v3619 = vpop.permute.xlu0 %3618
    %3620 = vrot.lane.b32.xlu0 %v3603, 32
    %v3621 = vpop.permute.xlu0 %3620
    %v3624 = vmul.f32 %v3600, %v3619
    %v3625 = vmul.f32 %v3601, %v3621
    %3628 = vrot.lane.b32.xlu0 %v3624, 32
    %v3629 = vpop.permute.xlu0 %3628
    %3630 = vrot.lane.b32.xlu0 %v3625, 32
    %v3631 = vpop.permute.xlu0 %3630
    %v3634 = vadd.f32 %v3614, %v3629
    %v3635 = vadd.f32 %v3615, %v3631
    %v3636 = vtanh.pop %v3634
    %v3637 = vtanh.pop %v3635
    %3640 = vrot.lane.b32.xlu0 %v3636, 32
    %v3641 = vpop.permute.xlu0 %3640
    %3642 = vrot.lane.b32.xlu0 %v3637, 32
    %v3643 = vpop.permute.xlu0 %3642
    %v3646 = vmul.f32 %v3600, %v3641
    %v3647 = vmul.f32 %v3601, %v3643
    %v3648 = vmul.f32 %v3610, 0.0
    %v3649 = vmul.f32 %v3611, 0.0
    %3652 = vrot.lane.b32.xlu0 %v3612, 32
    %v3653 = vpop.permute.xlu0 %3652
    %3654 = vrot.lane.b32.xlu0 %v3613, 32
    %v3655 = vpop.permute.xlu0 %3654
    %v3658 = vmul.f32 %v3610, %v3653
    %v3659 = vmul.f32 %v3611, %v3655
    %3662 = vrot.lane.b32.xlu0 %v3658, 32
    %v3663 = vpop.permute.xlu0 %3662
    %3664 = vrot.lane.b32.xlu0 %v3659, 32
    %v3665 = vpop.permute.xlu0 %3664
    %v3668 = vadd.f32 %v3648, %v3663
    %v3669 = vadd.f32 %v3649, %v3665
    %v3670 = vtanh.pop %v3668
    %v3671 = vtanh.pop %v3669
    %3674 = vrot.lane.b32.xlu0 %v3670, 32
    %v3675 = vpop.permute.xlu0 %3674
    %3676 = vrot.lane.b32.xlu0 %v3671, 32
    %v3677 = vpop.permute.xlu0 %3676
    %v3680 = vmul.f32 %v3610, %v3675
    %v3681 = vmul.f32 %v3611, %v3677
    %v3684 = vrot.slane %v3647, 7
    %v3685 = vsel %vm687, %v3684, %v3646
    %3686 = vrot.lane.b32.xlu0 %v3685, 32
    %v3687 = vpop.permute.xlu0 %3686
    %v3691 = vrot.slane %v3680, 7
    %v3692 = vrot.slane %v3681, 6
    %v3693 = vsel %vm687, %v3692, %v3691
    %3694 = vrot.lane.b32.xlu0 %v3693, 64
    %v3695 = vpop.permute.xlu0 %3694
    %v3697 = vsel %vm195, %v3687, %v3695
    %v3699 = vsel %vm1533, %v3697, 0
    %3701 = vmatprep.subr.mxu0 0.0
    %3702 = vmatpush1.msra.mxu0 0.0
    %3703 = vmatprep.subr.mxu0 0.0
    %3704 = vmatpush1.msra.mxu0 0.0
    %3705 = vmatprep.subr.mxu0 0.0
    %3706 = vmatpush1.msra.mxu0 0.0
    %3707 = vmatprep.subr.mxu0 0.0
    %3708 = vmatpush1.msra.mxu0 0.0
    %3709 = vmatprep.subr.mxu0 0.0
    %3710 = vmatpush1.msra.mxu0 0.0
    %3711 = vmatprep.subr.mxu0 0.0
    %3712 = vmatpush1.msra.mxu0 0.0
    %3713 = vmatprep.subr.mxu0 0.0
    %3714 = vmatpush1.msra.mxu0 0.0
    %3715 = vmatprep.subr.mxu0 0.0
    %3716 = vmatpush1.msra.mxu0 0.0
    %3717 = vmatprep.subr.mxu0 %v3497
    %3718 = vmatpush1.msra.mxu0 %v3496
    %3719 = vmatprep.subr.mxu0 %v3495
    %3720 = vmatpush1.msra.mxu0 %v3494
    %3721 = vmatprep.subr.mxu0 %v3493
    %3722 = vmatpush1.msra.mxu0 %v3492
    %3723 = vmatprep.subr.mxu0 %v3491
    %3724 = vmatpush1.msra.mxu0 %v3490
    %3725 = vmatprep.subr.mxu0 %v3489
    %3726 = vmatpush1.msra.mxu0 %v3488
    %3727 = vmatprep.subr.mxu0 %v3487
    %3728 = vmatpush1.msra.mxu0 %v3486
    %3729 = vmatprep.subr.mxu0 %v3485
    %3730 = vmatpush1.msra.mxu0 %v3484
    %3731 = vmatprep.subr.mxu0 %v3483
    %3732 = vmatpush1.msra.mxu0 %v3482
    %3733 = vmatprep.subr.mxu0 0.0
    %3734 = vmatpush2.msra.mxu0 0.0
    %3735 = vmatprep.subr.mxu0 0.0
    %3736 = vmatpush2.msra.mxu0 0.0
    %3737 = vmatprep.subr.mxu0 0.0
    %3738 = vmatpush2.msra.mxu0 0.0
    %3739 = vmatprep.subr.mxu0 0.0
    %3740 = vmatpush2.msra.mxu0 0.0
    %3741 = vmatprep.subr.mxu0 0.0
    %3742 = vmatpush2.msra.mxu0 0.0
    %3743 = vmatprep.subr.mxu0 0.0
    %3744 = vmatpush2.msra.mxu0 0.0
    %3745 = vmatprep.subr.mxu0 0.0
    %3746 = vmatpush2.msra.mxu0 0.0
    %3747 = vmatprep.subr.mxu0 0.0
    %3748 = vmatpush2.msra.mxu0 0.0
    %3749 = vmatprep.subr.mxu0 0.0
    %3750 = vmatpush2.msra.mxu0 0.0
    %3751 = vmatprep.subr.mxu0 0.0
    %3752 = vmatpush2.msra.mxu0 0.0
    %3753 = vmatprep.subr.mxu0 0.0
    %3754 = vmatpush2.msra.mxu0 0.0
    %3755 = vmatprep.subr.mxu0 0.0
    %3756 = vmatpush2.msra.mxu0 0.0
    %3757 = vmatprep.subr.mxu0 0.0
    %3758 = vmatpush2.msra.mxu0 0.0
    %3759 = vmatprep.subr.mxu0 0.0
    %3760 = vmatpush2.msra.mxu0 0.0
    %3761 = vmatprep.subr.mxu0 0.0
    %3762 = vmatpush2.msra.mxu0 0.0
    %3763 = vmatprep.subr.mxu0 0.0
    %3764 = vmatpush2.msra.mxu0 0.0
    %3765 = vmatprep.mubr.f32.mxu0 0.0
    %3766 = vmatmul.mubr.f32.gmra.mxu0 %v3699
    %v3767 = vpop.f32.mrf.mxu0
    %v3768 = vadd.f32 0.0, %v3767
    %v3769 = vpop.f32.mrf.mxu0
    %v3770 = vadd.f32 0.0, %v3769
    %3771 = vdwg.mxu0
    %v3773 = vrot.slane %v3768, 7
    %3774 = vrot.lane.b32.xlu0 %v3773, 32
    %v3775 = vpop.permute.xlu0 %3774
    %3776 = vrot.lane.b32.xlu0 %v3768, 32
    %v3777 = vpop.permute.xlu0 %3776
    %v3780 = vadd.f32 %v3476, %v3775
    %v3781 = vadd.f32 %v3477, %v3775
    %v3782 = vadd.f32 %v3479, %v3777
    %v3783 = vadd.f32 %v3480, %v3777
    %v3785 = vrot.slane %v3770, 2
    %v3786 = vrot.slane %v3770, 3
    %3787 = vrot.lane.b32.xlu0 %v3785, 32
    %v3788 = vpop.permute.xlu0 %3787
    %3789 = vrot.lane.b32.xlu0 %v3786, 32
    %v3790 = vpop.permute.xlu0 %3789
    %v3793 = vadd.f32 %v3477, %v3788
    %v3794 = vadd.f32 %v3478, %v3788
    %v3795 = vadd.f32 %v3480, %v3790
    %v3796 = vadd.f32 %v3481, %v3790
    %v3797 = vmul.f32 %v3780, 0.5
    %v3798 = vmul.f32 %v3782, 0.5
    %v3799 = vtanh.pop %v3797
    %v3800 = vtanh.pop %v3798
    %v3801 = vadd.f32 %v3799, 1.0
    %v3802 = vadd.f32 %v3800, 1.0
    %v3803 = vmul.f32 %v3801, 0.5
    %v3804 = vmul.f32 %v3802, 0.5
    %v3805 = vtanh.pop %v3781
    %v3806 = vtanh.pop %v3783
    %v3807 = vmul.f32 %v3793, 0.5
    %v3808 = vmul.f32 %v3795, 0.5
    %v3809 = vtanh.pop %v3807
    %v3810 = vtanh.pop %v3808
    %v3811 = vadd.f32 %v3809, 1.0
    %v3812 = vadd.f32 %v3810, 1.0
    %v3813 = vmul.f32 %v3811, 0.5
    %v3814 = vmul.f32 %v3812, 0.5
    %v3815 = vtanh.pop %v3794
    %v3816 = vtanh.pop %v3796
    %v3819 = vrot.slane %v3634, 7
    %v3820 = vrot.slane %v3635, 7
    %v3823 = vmul.f32 %v3803, %v3819
    %v3824 = vmul.f32 %v3804, %v3820
    %3827 = vrot.lane.b32.xlu0 %v3805, 32
    %v3828 = vpop.permute.xlu0 %3827
    %3829 = vrot.lane.b32.xlu0 %v3806, 32
    %v3830 = vpop.permute.xlu0 %3829
    %v3833 = vmul.f32 %v3803, %v3828
    %v3834 = vmul.f32 %v3804, %v3830
    %3837 = vrot.lane.b32.xlu0 %v3833, 32
    %v3838 = vpop.permute.xlu0 %3837
    %3839 = vrot.lane.b32.xlu0 %v3834, 32
    %v3840 = vpop.permute.xlu0 %3839
    %v3843 = vadd.f32 %v3823, %v3838
    %v3844 = vadd.f32 %v3824, %v3840
    %v3845 = vtanh.pop %v3843
    %v3846 = vtanh.pop %v3844
    %3849 = vrot.lane.b32.xlu0 %v3845, 32
    %v3850 = vpop.permute.xlu0 %3849
    %3851 = vrot.lane.b32.xlu0 %v3846, 32
    %v3852 = vpop.permute.xlu0 %3851
    %v3855 = vmul.f32 %v3803, %v3850
    %v3856 = vmul.f32 %v3804, %v3852
    %v3859 = vrot.slane %v3668, 1
    %v3860 = vrot.slane %v3669, 1
    %v3863 = vmul.f32 %v3813, %v3859
    %v3864 = vmul.f32 %v3814, %v3860
    %3867 = vrot.lane.b32.xlu0 %v3815, 32
    %v3868 = vpop.permute.xlu0 %3867
    %3869 = vrot.lane.b32.xlu0 %v3816, 32
    %v3870 = vpop.permute.xlu0 %3869
    %v3873 = vmul.f32 %v3813, %v3868
    %v3874 = vmul.f32 %v3814, %v3870
    %3877 = vrot.lane.b32.xlu0 %v3873, 32
    %v3878 = vpop.permute.xlu0 %3877
    %3879 = vrot.lane.b32.xlu0 %v3874, 32
    %v3880 = vpop.permute.xlu0 %3879
    %v3883 = vadd.f32 %v3863, %v3878
    %v3884 = vadd.f32 %v3864, %v3880
    %v3885 = vtanh.pop %v3883
    %v3886 = vtanh.pop %v3884
    %3889 = vrot.lane.b32.xlu0 %v3885, 32
    %v3890 = vpop.permute.xlu0 %3889
    %3891 = vrot.lane.b32.xlu0 %v3886, 32
    %v3892 = vpop.permute.xlu0 %3891
    %v3895 = vmul.f32 %v3813, %v3890
    %v3896 = vmul.f32 %v3814, %v3892
    %v3899 = vrot.slane %v3856, 7
    %v3900 = vsel %vm1939, %v3899, %v3855
    %3901 = vrot.lane.b32.xlu0 %v3900, 32
    %v3902 = vpop.permute.xlu0 %3901
    %v3906 = vrot.slane %v3895, 5
    %v3907 = vrot.slane %v3896, 4
    %v3908 = vsel %vm1939, %v3907, %v3906
    %3909 = vrot.lane.b32.xlu0 %v3908, 64
    %v3910 = vpop.permute.xlu0 %3909
    %v3912 = vsel %vm195, %v3902, %v3910
    %v3914 = vrot.slane %v3912, 1
    %v3915 = vsel %vm1533, %v3914, 0
    %3917 = vmatprep.subr.mxu0 0.0
    %3918 = vmatpush1.msra.mxu0 0.0
    %3919 = vmatprep.subr.mxu0 0.0
    %3920 = vmatpush1.msra.mxu0 0.0
    %3921 = vmatprep.subr.mxu0 0.0
    %3922 = vmatpush1.msra.mxu0 0.0
    %3923 = vmatprep.subr.mxu0 0.0
    %3924 = vmatpush1.msra.mxu0 0.0
    %3925 = vmatprep.subr.mxu0 0.0
    %3926 = vmatpush1.msra.mxu0 0.0
    %3927 = vmatprep.subr.mxu0 0.0
    %3928 = vmatpush1.msra.mxu0 0.0
    %3929 = vmatprep.subr.mxu0 0.0
    %3930 = vmatpush1.msra.mxu0 0.0
    %3931 = vmatprep.subr.mxu0 0.0
    %3932 = vmatpush1.msra.mxu0 0.0
    %3933 = vmatprep.subr.mxu0 %v3497
    %3934 = vmatpush1.msra.mxu0 %v3496
    %3935 = vmatprep.subr.mxu0 %v3495
    %3936 = vmatpush1.msra.mxu0 %v3494
    %3937 = vmatprep.subr.mxu0 %v3493
    %3938 = vmatpush1.msra.mxu0 %v3492
    %3939 = vmatprep.subr.mxu0 %v3491
    %3940 = vmatpush1.msra.mxu0 %v3490
    %3941 = vmatprep.subr.mxu0 %v3489
    %3942 = vmatpush1.msra.mxu0 %v3488
    %3943 = vmatprep.subr.mxu0 %v3487
    %3944 = vmatpush1.msra.mxu0 %v3486
    %3945 = vmatprep.subr.mxu0 %v3485
    %3946 = vmatpush1.msra.mxu0 %v3484
    %3947 = vmatprep.subr.mxu0 %v3483
    %3948 = vmatpush1.msra.mxu0 %v3482
    %3949 = vmatprep.subr.mxu0 0.0
    %3950 = vmatpush2.msra.mxu0 0.0
    %3951 = vmatprep.subr.mxu0 0.0
    %3952 = vmatpush2.msra.mxu0 0.0
    %3953 = vmatprep.subr.mxu0 0.0
    %3954 = vmatpush2.msra.mxu0 0.0
    %3955 = vmatprep.subr.mxu0 0.0
    %3956 = vmatpush2.msra.mxu0 0.0
    %3957 = vmatprep.subr.mxu0 0.0
    %3958 = vmatpush2.msra.mxu0 0.0
    %3959 = vmatprep.subr.mxu0 0.0
    %3960 = vmatpush2.msra.mxu0 0.0
    %3961 = vmatprep.subr.mxu0 0.0
    %3962 = vmatpush2.msra.mxu0 0.0
    %3963 = vmatprep.subr.mxu0 0.0
    %3964 = vmatpush2.msra.mxu0 0.0
    %3965 = vmatprep.subr.mxu0 0.0
    %3966 = vmatpush2.msra.mxu0 0.0
    %3967 = vmatprep.subr.mxu0 0.0
    %3968 = vmatpush2.msra.mxu0 0.0
    %3969 = vmatprep.subr.mxu0 0.0
    %3970 = vmatpush2.msra.mxu0 0.0
    %3971 = vmatprep.subr.mxu0 0.0
    %3972 = vmatpush2.msra.mxu0 0.0
    %3973 = vmatprep.subr.mxu0 0.0
    %3974 = vmatpush2.msra.mxu0 0.0
    %3975 = vmatprep.subr.mxu0 0.0
    %3976 = vmatpush2.msra.mxu0 0.0
    %3977 = vmatprep.subr.mxu0 0.0
    %3978 = vmatpush2.msra.mxu0 0.0
    %3979 = vmatprep.subr.mxu0 0.0
    %3980 = vmatpush2.msra.mxu0 0.0
    %3981 = vmatprep.mubr.f32.mxu0 0.0
    %3982 = vmatmul.mubr.f32.gmra.mxu0 %v3915
    %v3983 = vpop.f32.mrf.mxu0
    %v3984 = vadd.f32 0.0, %v3983
    %v3985 = vpop.f32.mrf.mxu0
    %v3986 = vadd.f32 0.0, %v3985
    %3987 = vdwg.mxu0
    %v3989 = vrot.slane %v3984, 6
    %v3990 = vrot.slane %v3984, 7
    %3991 = vrot.lane.b32.xlu0 %v3989, 32
    %v3992 = vpop.permute.xlu0 %3991
    %3993 = vrot.lane.b32.xlu0 %v3990, 32
    %v3994 = vpop.permute.xlu0 %3993
    %v3997 = vadd.f32 %v3476, %v3992
    %v3998 = vadd.f32 %v3477, %v3992
    %v3999 = vadd.f32 %v3479, %v3994
    %v4000 = vadd.f32 %v3480, %v3994
    %v4002 = vrot.slane %v3986, 3
    %v4003 = vrot.slane %v3986, 4
    %4004 = vrot.lane.b32.xlu0 %v4002, 32
    %v4005 = vpop.permute.xlu0 %4004
    %4006 = vrot.lane.b32.xlu0 %v4003, 32
    %v4007 = vpop.permute.xlu0 %4006
    %v4010 = vadd.f32 %v3477, %v4005
    %v4011 = vadd.f32 %v3478, %v4005
    %v4012 = vadd.f32 %v3480, %v4007
    %v4013 = vadd.f32 %v3481, %v4007
    %v4014 = vmul.f32 %v3997, 0.5
    %v4015 = vmul.f32 %v3999, 0.5
    %v4016 = vtanh.pop %v4014
    %v4017 = vtanh.pop %v4015
    %v4018 = vadd.f32 %v4016, 1.0
    %v4019 = vadd.f32 %v4017, 1.0
    %v4020 = vmul.f32 %v4018, 0.5
    %v4021 = vmul.f32 %v4019, 0.5
    %v4022 = vtanh.pop %v3998
    %v4023 = vtanh.pop %v4000
    %v4024 = vmul.f32 %v4010, 0.5
    %v4025 = vmul.f32 %v4012, 0.5
    %v4026 = vtanh.pop %v4024
    %v4027 = vtanh.pop %v4025
    %v4028 = vadd.f32 %v4026, 1.0
    %v4029 = vadd.f32 %v4027, 1.0
    %v4030 = vmul.f32 %v4028, 0.5
    %v4031 = vmul.f32 %v4029, 0.5
    %v4032 = vtanh.pop %v4011
    %v4033 = vtanh.pop %v4013
    %v4036 = vrot.slane %v3843, 7
    %v4037 = vrot.slane %v3844, 7
    %v4040 = vmul.f32 %v4020, %v4036
    %v4041 = vmul.f32 %v4021, %v4037
    %4044 = vrot.lane.b32.xlu0 %v4022, 32
    %v4045 = vpop.permute.xlu0 %4044
    %4046 = vrot.lane.b32.xlu0 %v4023, 32
    %v4047 = vpop.permute.xlu0 %4046
    %v4050 = vmul.f32 %v4020, %v4045
    %v4051 = vmul.f32 %v4021, %v4047
    %4054 = vrot.lane.b32.xlu0 %v4050, 32
    %v4055 = vpop.permute.xlu0 %4054
    %4056 = vrot.lane.b32.xlu0 %v4051, 32
    %v4057 = vpop.permute.xlu0 %4056
    %v4060 = vadd.f32 %v4040, %v4055
    %v4061 = vadd.f32 %v4041, %v4057
    %v4062 = vtanh.pop %v4060
    %v4063 = vtanh.pop %v4061
    %4066 = vrot.lane.b32.xlu0 %v4062, 32
    %v4067 = vpop.permute.xlu0 %4066
    %4068 = vrot.lane.b32.xlu0 %v4063, 32
    %v4069 = vpop.permute.xlu0 %4068
    %v4072 = vmul.f32 %v4020, %v4067
    %v4073 = vmul.f32 %v4021, %v4069
    %v4076 = vrot.slane %v3883, 1
    %v4077 = vrot.slane %v3884, 1
    %v4080 = vmul.f32 %v4030, %v4076
    %v4081 = vmul.f32 %v4031, %v4077
    %4084 = vrot.lane.b32.xlu0 %v4032, 32
    %v4085 = vpop.permute.xlu0 %4084
    %4086 = vrot.lane.b32.xlu0 %v4033, 32
    %v4087 = vpop.permute.xlu0 %4086
    %v4090 = vmul.f32 %v4030, %v4085
    %v4091 = vmul.f32 %v4031, %v4087
    %4094 = vrot.lane.b32.xlu0 %v4090, 32
    %v4095 = vpop.permute.xlu0 %4094
    %4096 = vrot.lane.b32.xlu0 %v4091, 32
    %v4097 = vpop.permute.xlu0 %4096
    %v4100 = vadd.f32 %v4080, %v4095
    %v4101 = vadd.f32 %v4081, %v4097
    %v4102 = vtanh.pop %v4100
    %v4103 = vtanh.pop %v4101
    %4106 = vrot.lane.b32.xlu0 %v4102, 32
    %v4107 = vpop.permute.xlu0 %4106
    %4108 = vrot.lane.b32.xlu0 %v4103, 32
    %v4109 = vpop.permute.xlu0 %4108
    %v4112 = vmul.f32 %v4030, %v4107
    %v4113 = vmul.f32 %v4031, %v4109
    %v4116 = vrot.slane %v4073, 7
    %v4117 = vsel %vm2157, %v4116, %v4072
    %4118 = vrot.lane.b32.xlu0 %v4117, 32
    %v4119 = vpop.permute.xlu0 %4118
    %v4123 = vrot.slane %v4112, 3
    %v4124 = vrot.slane %v4113, 2
    %v4125 = vsel %vm2157, %v4124, %v4123
    %4126 = vrot.lane.b32.xlu0 %v4125, 64
    %v4127 = vpop.permute.xlu0 %4126
    %v4129 = vsel %vm195, %v4119, %v4127
    %v4131 = vrot.slane %v4129, 2
    %v4132 = vsel %vm1533, %v4131, 0
    %4134 = vmatprep.subr.mxu0 0.0
    %4135 = vmatpush1.msra.mxu0 0.0
    %4136 = vmatprep.subr.mxu0 0.0
    %4137 = vmatpush1.msra.mxu0 0.0
    %4138 = vmatprep.subr.mxu0 0.0
    %4139 = vmatpush1.msra.mxu0 0.0
    %4140 = vmatprep.subr.mxu0 0.0
    %4141 = vmatpush1.msra.mxu0 0.0
    %4142 = vmatprep.subr.mxu0 0.0
    %4143 = vmatpush1.msra.mxu0 0.0
    %4144 = vmatprep.subr.mxu0 0.0
    %4145 = vmatpush1.msra.mxu0 0.0
    %4146 = vmatprep.subr.mxu0 0.0
    %4147 = vmatpush1.msra.mxu0 0.0
    %4148 = vmatprep.subr.mxu0 0.0
    %4149 = vmatpush1.msra.mxu0 0.0
    %4150 = vmatprep.subr.mxu0 %v3497
    %4151 = vmatpush1.msra.mxu0 %v3496
    %4152 = vmatprep.subr.mxu0 %v3495
    %4153 = vmatpush1.msra.mxu0 %v3494
    %4154 = vmatprep.subr.mxu0 %v3493
    %4155 = vmatpush1.msra.mxu0 %v3492
    %4156 = vmatprep.subr.mxu0 %v3491
    %4157 = vmatpush1.msra.mxu0 %v3490
    %4158 = vmatprep.subr.mxu0 %v3489
    %4159 = vmatpush1.msra.mxu0 %v3488
    %4160 = vmatprep.subr.mxu0 %v3487
    %4161 = vmatpush1.msra.mxu0 %v3486
    %4162 = vmatprep.subr.mxu0 %v3485
    %4163 = vmatpush1.msra.mxu0 %v3484
    %4164 = vmatprep.subr.mxu0 %v3483
    %4165 = vmatpush1.msra.mxu0 %v3482
    %4166 = vmatprep.subr.mxu0 0.0
    %4167 = vmatpush2.msra.mxu0 0.0
    %4168 = vmatprep.subr.mxu0 0.0
    %4169 = vmatpush2.msra.mxu0 0.0
    %4170 = vmatprep.subr.mxu0 0.0
    %4171 = vmatpush2.msra.mxu0 0.0
    %4172 = vmatprep.subr.mxu0 0.0
    %4173 = vmatpush2.msra.mxu0 0.0
    %4174 = vmatprep.subr.mxu0 0.0
    %4175 = vmatpush2.msra.mxu0 0.0
    %4176 = vmatprep.subr.mxu0 0.0
    %4177 = vmatpush2.msra.mxu0 0.0
    %4178 = vmatprep.subr.mxu0 0.0
    %4179 = vmatpush2.msra.mxu0 0.0
    %4180 = vmatprep.subr.mxu0 0.0
    %4181 = vmatpush2.msra.mxu0 0.0
    %4182 = vmatprep.subr.mxu0 0.0
    %4183 = vmatpush2.msra.mxu0 0.0
    %4184 = vmatprep.subr.mxu0 0.0
    %4185 = vmatpush2.msra.mxu0 0.0
    %4186 = vmatprep.subr.mxu0 0.0
    %4187 = vmatpush2.msra.mxu0 0.0
    %4188 = vmatprep.subr.mxu0 0.0
    %4189 = vmatpush2.msra.mxu0 0.0
    %4190 = vmatprep.subr.mxu0 0.0
    %4191 = vmatpush2.msra.mxu0 0.0
    %4192 = vmatprep.subr.mxu0 0.0
    %4193 = vmatpush2.msra.mxu0 0.0
    %4194 = vmatprep.subr.mxu0 0.0
    %4195 = vmatpush2.msra.mxu0 0.0
    %4196 = vmatprep.subr.mxu0 0.0
    %4197 = vmatpush2.msra.mxu0 0.0
    %4198 = vmatprep.mubr.f32.mxu0 0.0
    %4199 = vmatmul.mubr.f32.gmra.mxu0 %v4132
    %v4200 = vpop.f32.mrf.mxu0
    %v4201 = vadd.f32 0.0, %v4200
    %v4202 = vpop.f32.mrf.mxu0
    %v4203 = vadd.f32 0.0, %v4202
    %4204 = vdwg.mxu0
    %v4206 = vrot.slane %v4201, 5
    %v4207 = vrot.slane %v4201, 6
    %4208 = vrot.lane.b32.xlu0 %v4206, 32
    %v4209 = vpop.permute.xlu0 %4208
    %4210 = vrot.lane.b32.xlu0 %v4207, 32
    %v4211 = vpop.permute.xlu0 %4210
    %v4214 = vadd.f32 %v3476, %v4209
    %v4215 = vadd.f32 %v3477, %v4209
    %v4216 = vadd.f32 %v3479, %v4211
    %v4217 = vadd.f32 %v3480, %v4211
    %v4219 = vrot.slane %v4203, 4
    %v4220 = vrot.slane %v4203, 5
    %4221 = vrot.lane.b32.xlu0 %v4219, 32
    %v4222 = vpop.permute.xlu0 %4221
    %4223 = vrot.lane.b32.xlu0 %v4220, 32
    %v4224 = vpop.permute.xlu0 %4223
    %v4227 = vadd.f32 %v3477, %v4222
    %v4228 = vadd.f32 %v3478, %v4222
    %v4229 = vadd.f32 %v3480, %v4224
    %v4230 = vadd.f32 %v3481, %v4224
    %v4231 = vmul.f32 %v4214, 0.5
    %v4232 = vmul.f32 %v4216, 0.5
    %v4233 = vtanh.pop %v4231
    %v4234 = vtanh.pop %v4232
    %v4235 = vadd.f32 %v4233, 1.0
    %v4236 = vadd.f32 %v4234, 1.0
    %v4237 = vmul.f32 %v4235, 0.5
    %v4238 = vmul.f32 %v4236, 0.5
    %v4239 = vtanh.pop %v4215
    %v4240 = vtanh.pop %v4217
    %v4241 = vmul.f32 %v4227, 0.5
    %v4242 = vmul.f32 %v4229, 0.5
    %v4243 = vtanh.pop %v4241
    %v4244 = vtanh.pop %v4242
    %v4245 = vadd.f32 %v4243, 1.0
    %v4246 = vadd.f32 %v4244, 1.0
    %v4247 = vmul.f32 %v4245, 0.5
    %v4248 = vmul.f32 %v4246, 0.5
    %v4249 = vtanh.pop %v4228
    %v4250 = vtanh.pop %v4230
    %v4253 = vrot.slane %v4060, 7
    %v4254 = vrot.slane %v4061, 7
    %v4257 = vmul.f32 %v4237, %v4253
    %v4258 = vmul.f32 %v4238, %v4254
    %4261 = vrot.lane.b32.xlu0 %v4239, 32
    %v4262 = vpop.permute.xlu0 %4261
    %4263 = vrot.lane.b32.xlu0 %v4240, 32
    %v4264 = vpop.permute.xlu0 %4263
    %v4267 = vmul.f32 %v4237, %v4262
    %v4268 = vmul.f32 %v4238, %v4264
    %4271 = vrot.lane.b32.xlu0 %v4267, 32
    %v4272 = vpop.permute.xlu0 %4271
    %4273 = vrot.lane.b32.xlu0 %v4268, 32
    %v4274 = vpop.permute.xlu0 %4273
    %v4277 = vadd.f32 %v4257, %v4272
    %v4278 = vadd.f32 %v4258, %v4274
    %v4279 = vtanh.pop %v4277
    %v4280 = vtanh.pop %v4278
    %4283 = vrot.lane.b32.xlu0 %v4279, 32
    %v4284 = vpop.permute.xlu0 %4283
    %4285 = vrot.lane.b32.xlu0 %v4280, 32
    %v4286 = vpop.permute.xlu0 %4285
    %v4289 = vmul.f32 %v4237, %v4284
    %v4290 = vmul.f32 %v4238, %v4286
    %v4293 = vrot.slane %v4100, 1
    %v4294 = vrot.slane %v4101, 1
    %v4297 = vmul.f32 %v4247, %v4293
    %v4298 = vmul.f32 %v4248, %v4294
    %4301 = vrot.lane.b32.xlu0 %v4249, 32
    %v4302 = vpop.permute.xlu0 %4301
    %4303 = vrot.lane.b32.xlu0 %v4250, 32
    %v4304 = vpop.permute.xlu0 %4303
    %v4307 = vmul.f32 %v4247, %v4302
    %v4308 = vmul.f32 %v4248, %v4304
    %4311 = vrot.lane.b32.xlu0 %v4307, 32
    %v4312 = vpop.permute.xlu0 %4311
    %4313 = vrot.lane.b32.xlu0 %v4308, 32
    %v4314 = vpop.permute.xlu0 %4313
    %v4317 = vadd.f32 %v4297, %v4312
    %v4318 = vadd.f32 %v4298, %v4314
    %v4319 = vtanh.pop %v4317
    %v4320 = vtanh.pop %v4318
    %4323 = vrot.lane.b32.xlu0 %v4319, 32
    %v4324 = vpop.permute.xlu0 %4323
    %4325 = vrot.lane.b32.xlu0 %v4320, 32
    %v4326 = vpop.permute.xlu0 %4325
    %v4329 = vmul.f32 %v4247, %v4324
    %v4330 = vmul.f32 %v4248, %v4326
    %v4333 = vrot.slane %v4290, 7
    %v4334 = vsel %vm2375, %v4333, %v4289
    %4335 = vrot.lane.b32.xlu0 %v4334, 32
    %v4336 = vpop.permute.xlu0 %4335
    %v4340 = vrot.slane %v4329, 1
    %v4341 = vsel %vm2375, %v4330, %v4340
    %4342 = vrot.lane.b32.xlu0 %v4341, 64
    %v4343 = vpop.permute.xlu0 %4342
    %v4345 = vsel %vm195, %v4336, %v4343
    %v4347 = vrot.slane %v4345, 3
    %v4348 = vsel %vm1533, %v4347, 0
    %4350 = vmatprep.subr.mxu0 0.0
    %4351 = vmatpush1.msra.mxu0 0.0
    %4352 = vmatprep.subr.mxu0 0.0
    %4353 = vmatpush1.msra.mxu0 0.0
    %4354 = vmatprep.subr.mxu0 0.0
    %4355 = vmatpush1.msra.mxu0 0.0
    %4356 = vmatprep.subr.mxu0 0.0
    %4357 = vmatpush1.msra.mxu0 0.0
    %4358 = vmatprep.subr.mxu0 0.0
    %4359 = vmatpush1.msra.mxu0 0.0
    %4360 = vmatprep.subr.mxu0 0.0
    %4361 = vmatpush1.msra.mxu0 0.0
    %4362 = vmatprep.subr.mxu0 0.0
    %4363 = vmatpush1.msra.mxu0 0.0
    %4364 = vmatprep.subr.mxu0 0.0
    %4365 = vmatpush1.msra.mxu0 0.0
    %4366 = vmatprep.subr.mxu0 %v3497
    %4367 = vmatpush1.msra.mxu0 %v3496
    %4368 = vmatprep.subr.mxu0 %v3495
    %4369 = vmatpush1.msra.mxu0 %v3494
    %4370 = vmatprep.subr.mxu0 %v3493
    %4371 = vmatpush1.msra.mxu0 %v3492
    %4372 = vmatprep.subr.mxu0 %v3491
    %4373 = vmatpush1.msra.mxu0 %v3490
    %4374 = vmatprep.subr.mxu0 %v3489
    %4375 = vmatpush1.msra.mxu0 %v3488
    %4376 = vmatprep.subr.mxu0 %v3487
    %4377 = vmatpush1.msra.mxu0 %v3486
    %4378 = vmatprep.subr.mxu0 %v3485
    %4379 = vmatpush1.msra.mxu0 %v3484
    %4380 = vmatprep.subr.mxu0 %v3483
    %4381 = vmatpush1.msra.mxu0 %v3482
    %4382 = vmatprep.subr.mxu0 0.0
    %4383 = vmatpush2.msra.mxu0 0.0
    %4384 = vmatprep.subr.mxu0 0.0
    %4385 = vmatpush2.msra.mxu0 0.0
    %4386 = vmatprep.subr.mxu0 0.0
    %4387 = vmatpush2.msra.mxu0 0.0
    %4388 = vmatprep.subr.mxu0 0.0
    %4389 = vmatpush2.msra.mxu0 0.0
    %4390 = vmatprep.subr.mxu0 0.0
    %4391 = vmatpush2.msra.mxu0 0.0
    %4392 = vmatprep.subr.mxu0 0.0
    %4393 = vmatpush2.msra.mxu0 0.0
    %4394 = vmatprep.subr.mxu0 0.0
    %4395 = vmatpush2.msra.mxu0 0.0
    %4396 = vmatprep.subr.mxu0 0.0
    %4397 = vmatpush2.msra.mxu0 0.0
    %4398 = vmatprep.subr.mxu0 0.0
    %4399 = vmatpush2.msra.mxu0 0.0
    %4400 = vmatprep.subr.mxu0 0.0
    %4401 = vmatpush2.msra.mxu0 0.0
    %4402 = vmatprep.subr.mxu0 0.0
    %4403 = vmatpush2.msra.mxu0 0.0
    %4404 = vmatprep.subr.mxu0 0.0
    %4405 = vmatpush2.msra.mxu0 0.0
    %4406 = vmatprep.subr.mxu0 0.0
    %4407 = vmatpush2.msra.mxu0 0.0
    %4408 = vmatprep.subr.mxu0 0.0
    %4409 = vmatpush2.msra.mxu0 0.0
    %4410 = vmatprep.subr.mxu0 0.0
    %4411 = vmatpush2.msra.mxu0 0.0
    %4412 = vmatprep.subr.mxu0 0.0
    %4413 = vmatpush2.msra.mxu0 0.0
    %4414 = vmatprep.mubr.f32.mxu0 0.0
    %4415 = vmatmul.mubr.f32.gmra.mxu0 %v4348
    %v4416 = vpop.f32.mrf.mxu0
    %v4417 = vadd.f32 0.0, %v4416
    %v4418 = vpop.f32.mrf.mxu0
    %v4419 = vadd.f32 0.0, %v4418
    %4420 = vdwg.mxu0
    %v4422 = vrot.slane %v4417, 4
    %v4423 = vrot.slane %v4417, 5
    %4424 = vrot.lane.b32.xlu0 %v4422, 32
    %v4425 = vpop.permute.xlu0 %4424
    %4426 = vrot.lane.b32.xlu0 %v4423, 32
    %v4427 = vpop.permute.xlu0 %4426
    %v4430 = vadd.f32 %v3476, %v4425
    %v4431 = vadd.f32 %v3477, %v4425
    %v4432 = vadd.f32 %v3479, %v4427
    %v4433 = vadd.f32 %v3480, %v4427
    %v4435 = vrot.slane %v4419, 5
    %v4436 = vrot.slane %v4419, 6
    %4437 = vrot.lane.b32.xlu0 %v4435, 32
    %v4438 = vpop.permute.xlu0 %4437
    %4439 = vrot.lane.b32.xlu0 %v4436, 32
    %v4440 = vpop.permute.xlu0 %4439
    %v4443 = vadd.f32 %v3477, %v4438
    %v4444 = vadd.f32 %v3478, %v4438
    %v4445 = vadd.f32 %v3480, %v4440
    %v4446 = vadd.f32 %v3481, %v4440
    %v4447 = vmul.f32 %v4430, 0.5
    %v4448 = vmul.f32 %v4432, 0.5
    %v4449 = vtanh.pop %v4447
    %v4450 = vtanh.pop %v4448
    %v4451 = vadd.f32 %v4449, 1.0
    %v4452 = vadd.f32 %v4450, 1.0
    %v4453 = vmul.f32 %v4451, 0.5
    %v4454 = vmul.f32 %v4452, 0.5
    %v4455 = vtanh.pop %v4431
    %v4456 = vtanh.pop %v4433
    %v4457 = vmul.f32 %v4443, 0.5
    %v4458 = vmul.f32 %v4445, 0.5
    %v4459 = vtanh.pop %v4457
    %v4460 = vtanh.pop %v4458
    %v4461 = vadd.f32 %v4459, 1.0
    %v4462 = vadd.f32 %v4460, 1.0
    %v4463 = vmul.f32 %v4461, 0.5
    %v4464 = vmul.f32 %v4462, 0.5
    %v4465 = vtanh.pop %v4444
    %v4466 = vtanh.pop %v4446
    %v4469 = vrot.slane %v4277, 7
    %v4470 = vrot.slane %v4278, 7
    %v4473 = vmul.f32 %v4453, %v4469
    %v4474 = vmul.f32 %v4454, %v4470
    %4477 = vrot.lane.b32.xlu0 %v4455, 32
    %v4478 = vpop.permute.xlu0 %4477
    %4479 = vrot.lane.b32.xlu0 %v4456, 32
    %v4480 = vpop.permute.xlu0 %4479
    %v4483 = vmul.f32 %v4453, %v4478
    %v4484 = vmul.f32 %v4454, %v4480
    %4487 = vrot.lane.b32.xlu0 %v4483, 32
    %v4488 = vpop.permute.xlu0 %4487
    %4489 = vrot.lane.b32.xlu0 %v4484, 32
    %v4490 = vpop.permute.xlu0 %4489
    %v4493 = vadd.f32 %v4473, %v4488
    %v4494 = vadd.f32 %v4474, %v4490
    %v4495 = vtanh.pop %v4493
    %v4496 = vtanh.pop %v4494
    %4499 = vrot.lane.b32.xlu0 %v4495, 32
    %v4500 = vpop.permute.xlu0 %4499
    %4501 = vrot.lane.b32.xlu0 %v4496, 32
    %v4502 = vpop.permute.xlu0 %4501
    %v4505 = vmul.f32 %v4453, %v4500
    %v4506 = vmul.f32 %v4454, %v4502
    %v4509 = vrot.slane %v4317, 1
    %v4510 = vrot.slane %v4318, 1
    %v4513 = vmul.f32 %v4463, %v4509
    %v4514 = vmul.f32 %v4464, %v4510
    %4517 = vrot.lane.b32.xlu0 %v4465, 32
    %v4518 = vpop.permute.xlu0 %4517
    %4519 = vrot.lane.b32.xlu0 %v4466, 32
    %v4520 = vpop.permute.xlu0 %4519
    %v4523 = vmul.f32 %v4463, %v4518
    %v4524 = vmul.f32 %v4464, %v4520
    %4527 = vrot.lane.b32.xlu0 %v4523, 32
    %v4528 = vpop.permute.xlu0 %4527
    %4529 = vrot.lane.b32.xlu0 %v4524, 32
    %v4530 = vpop.permute.xlu0 %4529
    %v4533 = vadd.f32 %v4513, %v4528
    %v4534 = vadd.f32 %v4514, %v4530
    %v4535 = vtanh.pop %v4533
    %v4536 = vtanh.pop %v4534
    %4539 = vrot.lane.b32.xlu0 %v4535, 32
    %v4540 = vpop.permute.xlu0 %4539
    %4541 = vrot.lane.b32.xlu0 %v4536, 32
    %v4542 = vpop.permute.xlu0 %4541
    %v4545 = vmul.f32 %v4463, %v4540
    %v4546 = vmul.f32 %v4464, %v4542
    %v4549 = vrot.slane %v4506, 7
    %v4550 = vsel %vm2592, %v4549, %v4505
    %4551 = vrot.lane.b32.xlu0 %v4550, 32
    %v4552 = vpop.permute.xlu0 %4551
    %v4556 = vrot.slane %v4545, 7
    %v4557 = vrot.slane %v4546, 6
    %v4558 = vsel %vm2592, %v4557, %v4556
    %4559 = vrot.lane.b32.xlu0 %v4558, 64
    %v4560 = vpop.permute.xlu0 %4559
    %v4562 = vsel %vm195, %v4552, %v4560
    %v4564 = vrot.slane %v4562, 4
    %v4565 = vsel %vm1533, %v4564, 0
    %4567 = vmatprep.subr.mxu0 0.0
    %4568 = vmatpush1.msra.mxu0 0.0
    %4569 = vmatprep.subr.mxu0 0.0
    %4570 = vmatpush1.msra.mxu0 0.0
    %4571 = vmatprep.subr.mxu0 0.0
    %4572 = vmatpush1.msra.mxu0 0.0
    %4573 = vmatprep.subr.mxu0 0.0
    %4574 = vmatpush1.msra.mxu0 0.0
    %4575 = vmatprep.subr.mxu0 0.0
    %4576 = vmatpush1.msra.mxu0 0.0
    %4577 = vmatprep.subr.mxu0 0.0
    %4578 = vmatpush1.msra.mxu0 0.0
    %4579 = vmatprep.subr.mxu0 0.0
    %4580 = vmatpush1.msra.mxu0 0.0
    %4581 = vmatprep.subr.mxu0 0.0
    %4582 = vmatpush1.msra.mxu0 0.0
    %4583 = vmatprep.subr.mxu0 %v3497
    %4584 = vmatpush1.msra.mxu0 %v3496
    %4585 = vmatprep.subr.mxu0 %v3495
    %4586 = vmatpush1.msra.mxu0 %v3494
    %4587 = vmatprep.subr.mxu0 %v3493
    %4588 = vmatpush1.msra.mxu0 %v3492
    %4589 = vmatprep.subr.mxu0 %v3491
    %4590 = vmatpush1.msra.mxu0 %v3490
    %4591 = vmatprep.subr.mxu0 %v3489
    %4592 = vmatpush1.msra.mxu0 %v3488
    %4593 = vmatprep.subr.mxu0 %v3487
    %4594 = vmatpush1.msra.mxu0 %v3486
    %4595 = vmatprep.subr.mxu0 %v3485
    %4596 = vmatpush1.msra.mxu0 %v3484
    %4597 = vmatprep.subr.mxu0 %v3483
    %4598 = vmatpush1.msra.mxu0 %v3482
    %4599 = vmatprep.subr.mxu0 0.0
    %4600 = vmatpush2.msra.mxu0 0.0
    %4601 = vmatprep.subr.mxu0 0.0
    %4602 = vmatpush2.msra.mxu0 0.0
    %4603 = vmatprep.subr.mxu0 0.0
    %4604 = vmatpush2.msra.mxu0 0.0
    %4605 = vmatprep.subr.mxu0 0.0
    %4606 = vmatpush2.msra.mxu0 0.0
    %4607 = vmatprep.subr.mxu0 0.0
    %4608 = vmatpush2.msra.mxu0 0.0
    %4609 = vmatprep.subr.mxu0 0.0
    %4610 = vmatpush2.msra.mxu0 0.0
    %4611 = vmatprep.subr.mxu0 0.0
    %4612 = vmatpush2.msra.mxu0 0.0
    %4613 = vmatprep.subr.mxu0 0.0
    %4614 = vmatpush2.msra.mxu0 0.0
    %4615 = vmatprep.subr.mxu0 0.0
    %4616 = vmatpush2.msra.mxu0 0.0
    %4617 = vmatprep.subr.mxu0 0.0
    %4618 = vmatpush2.msra.mxu0 0.0
    %4619 = vmatprep.subr.mxu0 0.0
    %4620 = vmatpush2.msra.mxu0 0.0
    %4621 = vmatprep.subr.mxu0 0.0
    %4622 = vmatpush2.msra.mxu0 0.0
    %4623 = vmatprep.subr.mxu0 0.0
    %4624 = vmatpush2.msra.mxu0 0.0
    %4625 = vmatprep.subr.mxu0 0.0
    %4626 = vmatpush2.msra.mxu0 0.0
    %4627 = vmatprep.subr.mxu0 0.0
    %4628 = vmatpush2.msra.mxu0 0.0
    %4629 = vmatprep.subr.mxu0 0.0
    %4630 = vmatpush2.msra.mxu0 0.0
    %4631 = vmatprep.mubr.f32.mxu0 0.0
    %4632 = vmatmul.mubr.f32.gmra.mxu0 %v4565
    %v4633 = vpop.f32.mrf.mxu0
    %v4634 = vadd.f32 0.0, %v4633
    %v4635 = vpop.f32.mrf.mxu0
    %v4636 = vadd.f32 0.0, %v4635
    %4637 = vdwg.mxu0
    %v4639 = vrot.slane %v4634, 3
    %v4640 = vrot.slane %v4634, 4
    %4641 = vrot.lane.b32.xlu0 %v4639, 32
    %v4642 = vpop.permute.xlu0 %4641
    %4643 = vrot.lane.b32.xlu0 %v4640, 32
    %v4644 = vpop.permute.xlu0 %4643
    %v4647 = vadd.f32 %v3476, %v4642
    %v4648 = vadd.f32 %v3477, %v4642
    %v4649 = vadd.f32 %v3479, %v4644
    %v4650 = vadd.f32 %v3480, %v4644
    %v4652 = vrot.slane %v4636, 6
    %v4653 = vrot.slane %v4636, 7
    %4654 = vrot.lane.b32.xlu0 %v4652, 32
    %v4655 = vpop.permute.xlu0 %4654
    %4656 = vrot.lane.b32.xlu0 %v4653, 32
    %v4657 = vpop.permute.xlu0 %4656
    %v4660 = vadd.f32 %v3477, %v4655
    %v4661 = vadd.f32 %v3478, %v4655
    %v4662 = vadd.f32 %v3480, %v4657
    %v4663 = vadd.f32 %v3481, %v4657
    %v4664 = vmul.f32 %v4647, 0.5
    %v4665 = vmul.f32 %v4649, 0.5
    %v4666 = vtanh.pop %v4664
    %v4667 = vtanh.pop %v4665
    %v4668 = vadd.f32 %v4666, 1.0
    %v4669 = vadd.f32 %v4667, 1.0
    %v4670 = vmul.f32 %v4668, 0.5
    %v4671 = vmul.f32 %v4669, 0.5
    %v4672 = vtanh.pop %v4648
    %v4673 = vtanh.pop %v4650
    %v4674 = vmul.f32 %v4660, 0.5
    %v4675 = vmul.f32 %v4662, 0.5
    %v4676 = vtanh.pop %v4674
    %v4677 = vtanh.pop %v4675
    %v4678 = vadd.f32 %v4676, 1.0
    %v4679 = vadd.f32 %v4677, 1.0
    %v4680 = vmul.f32 %v4678, 0.5
    %v4681 = vmul.f32 %v4679, 0.5
    %v4682 = vtanh.pop %v4661
    %v4683 = vtanh.pop %v4663
    %v4686 = vrot.slane %v4493, 7
    %v4687 = vrot.slane %v4494, 7
    %v4690 = vmul.f32 %v4670, %v4686
    %v4691 = vmul.f32 %v4671, %v4687
    %4694 = vrot.lane.b32.xlu0 %v4672, 32
    %v4695 = vpop.permute.xlu0 %4694
    %4696 = vrot.lane.b32.xlu0 %v4673, 32
    %v4697 = vpop.permute.xlu0 %4696
    %v4700 = vmul.f32 %v4670, %v4695
    %v4701 = vmul.f32 %v4671, %v4697
    %4704 = vrot.lane.b32.xlu0 %v4700, 32
    %v4705 = vpop.permute.xlu0 %4704
    %4706 = vrot.lane.b32.xlu0 %v4701, 32
    %v4707 = vpop.permute.xlu0 %4706
    %v4710 = vadd.f32 %v4690, %v4705
    %v4711 = vadd.f32 %v4691, %v4707
    %v4712 = vtanh.pop %v4710
    %v4713 = vtanh.pop %v4711
    %4716 = vrot.lane.b32.xlu0 %v4712, 32
    %v4717 = vpop.permute.xlu0 %4716
    %4718 = vrot.lane.b32.xlu0 %v4713, 32
    %v4719 = vpop.permute.xlu0 %4718
    %v4722 = vmul.f32 %v4670, %v4717
    %v4723 = vmul.f32 %v4671, %v4719
    %v4726 = vrot.slane %v4533, 1
    %v4727 = vrot.slane %v4534, 1
    %v4730 = vmul.f32 %v4680, %v4726
    %v4731 = vmul.f32 %v4681, %v4727
    %4734 = vrot.lane.b32.xlu0 %v4682, 32
    %v4735 = vpop.permute.xlu0 %4734
    %4736 = vrot.lane.b32.xlu0 %v4683, 32
    %v4737 = vpop.permute.xlu0 %4736
    %v4740 = vmul.f32 %v4680, %v4735
    %v4741 = vmul.f32 %v4681, %v4737
    %4744 = vrot.lane.b32.xlu0 %v4740, 32
    %v4745 = vpop.permute.xlu0 %4744
    %4746 = vrot.lane.b32.xlu0 %v4741, 32
    %v4747 = vpop.permute.xlu0 %4746
    %v4750 = vadd.f32 %v4730, %v4745
    %v4751 = vadd.f32 %v4731, %v4747
    %v4752 = vtanh.pop %v4750
    %v4753 = vtanh.pop %v4751
    %4756 = vrot.lane.b32.xlu0 %v4752, 32
    %v4757 = vpop.permute.xlu0 %4756
    %4758 = vrot.lane.b32.xlu0 %v4753, 32
    %v4759 = vpop.permute.xlu0 %4758
    %v4762 = vmul.f32 %v4680, %v4757
    %v4763 = vmul.f32 %v4681, %v4759
    %v4766 = vrot.slane %v4723, 7
    %v4767 = vsel %vm2810, %v4766, %v4722
    %4768 = vrot.lane.b32.xlu0 %v4767, 32
    %v4769 = vpop.permute.xlu0 %4768
    %v4773 = vrot.slane %v4762, 5
    %v4774 = vrot.slane %v4763, 4
    %v4775 = vsel %vm2810, %v4774, %v4773
    %4776 = vrot.lane.b32.xlu0 %v4775, 64
    %v4777 = vpop.permute.xlu0 %4776
    %v4779 = vsel %vm195, %v4769, %v4777
    %v4781 = vrot.slane %v4779, 5
    %v4782 = vsel %vm1533, %v4781, 0
    %4784 = vmatprep.subr.mxu0 0.0
    %4785 = vmatpush1.msra.mxu0 0.0
    %4786 = vmatprep.subr.mxu0 0.0
    %4787 = vmatpush1.msra.mxu0 0.0
    %4788 = vmatprep.subr.mxu0 0.0
    %4789 = vmatpush1.msra.mxu0 0.0
    %4790 = vmatprep.subr.mxu0 0.0
    %4791 = vmatpush1.msra.mxu0 0.0
    %4792 = vmatprep.subr.mxu0 0.0
    %4793 = vmatpush1.msra.mxu0 0.0
    %4794 = vmatprep.subr.mxu0 0.0
    %4795 = vmatpush1.msra.mxu0 0.0
    %4796 = vmatprep.subr.mxu0 0.0
    %4797 = vmatpush1.msra.mxu0 0.0
    %4798 = vmatprep.subr.mxu0 0.0
    %4799 = vmatpush1.msra.mxu0 0.0
    %4800 = vmatprep.subr.mxu0 %v3497
    %4801 = vmatpush1.msra.mxu0 %v3496
    %4802 = vmatprep.subr.mxu0 %v3495
    %4803 = vmatpush1.msra.mxu0 %v3494
    %4804 = vmatprep.subr.mxu0 %v3493
    %4805 = vmatpush1.msra.mxu0 %v3492
    %4806 = vmatprep.subr.mxu0 %v3491
    %4807 = vmatpush1.msra.mxu0 %v3490
    %4808 = vmatprep.subr.mxu0 %v3489
    %4809 = vmatpush1.msra.mxu0 %v3488
    %4810 = vmatprep.subr.mxu0 %v3487
    %4811 = vmatpush1.msra.mxu0 %v3486
    %4812 = vmatprep.subr.mxu0 %v3485
    %4813 = vmatpush1.msra.mxu0 %v3484
    %4814 = vmatprep.subr.mxu0 %v3483
    %4815 = vmatpush1.msra.mxu0 %v3482
    %4816 = vmatprep.subr.mxu0 0.0
    %4817 = vmatpush2.msra.mxu0 0.0
    %4818 = vmatprep.subr.mxu0 0.0
    %4819 = vmatpush2.msra.mxu0 0.0
    %4820 = vmatprep.subr.mxu0 0.0
    %4821 = vmatpush2.msra.mxu0 0.0
    %4822 = vmatprep.subr.mxu0 0.0
    %4823 = vmatpush2.msra.mxu0 0.0
    %4824 = vmatprep.subr.mxu0 0.0
    %4825 = vmatpush2.msra.mxu0 0.0
    %4826 = vmatprep.subr.mxu0 0.0
    %4827 = vmatpush2.msra.mxu0 0.0
    %4828 = vmatprep.subr.mxu0 0.0
    %4829 = vmatpush2.msra.mxu0 0.0
    %4830 = vmatprep.subr.mxu0 0.0
    %4831 = vmatpush2.msra.mxu0 0.0
    %4832 = vmatprep.subr.mxu0 0.0
    %4833 = vmatpush2.msra.mxu0 0.0
    %4834 = vmatprep.subr.mxu0 0.0
    %4835 = vmatpush2.msra.mxu0 0.0
    %4836 = vmatprep.subr.mxu0 0.0
    %4837 = vmatpush2.msra.mxu0 0.0
    %4838 = vmatprep.subr.mxu0 0.0
    %4839 = vmatpush2.msra.mxu0 0.0
    %4840 = vmatprep.subr.mxu0 0.0
    %4841 = vmatpush2.msra.mxu0 0.0
    %4842 = vmatprep.subr.mxu0 0.0
    %4843 = vmatpush2.msra.mxu0 0.0
    %4844 = vmatprep.subr.mxu0 0.0
    %4845 = vmatpush2.msra.mxu0 0.0
    %4846 = vmatprep.subr.mxu0 0.0
    %4847 = vmatpush2.msra.mxu0 0.0
    %4848 = vmatprep.mubr.f32.mxu0 0.0
    %4849 = vmatmul.mubr.f32.gmra.mxu0 %v4782
    %v4850 = vpop.f32.mrf.mxu0
    %v4851 = vadd.f32 0.0, %v4850
    %v4852 = vpop.f32.mrf.mxu0
    %v4853 = vadd.f32 0.0, %v4852
    %4854 = vdwg.mxu0
    %v4856 = vrot.slane %v4851, 2
    %v4857 = vrot.slane %v4851, 3
    %4858 = vrot.lane.b32.xlu0 %v4856, 32
    %v4859 = vpop.permute.xlu0 %4858
    %4860 = vrot.lane.b32.xlu0 %v4857, 32
    %v4861 = vpop.permute.xlu0 %4860
    %v4864 = vadd.f32 %v3476, %v4859
    %v4865 = vadd.f32 %v3477, %v4859
    %v4866 = vadd.f32 %v3479, %v4861
    %v4867 = vadd.f32 %v3480, %v4861
    %v4869 = vrot.slane %v4853, 7
    %4870 = vrot.lane.b32.xlu0 %v4869, 32
    %v4871 = vpop.permute.xlu0 %4870
    %4872 = vrot.lane.b32.xlu0 %v4853, 32
    %v4873 = vpop.permute.xlu0 %4872
    %v4876 = vadd.f32 %v3477, %v4871
    %v4877 = vadd.f32 %v3478, %v4871
    %v4878 = vadd.f32 %v3480, %v4873
    %v4879 = vadd.f32 %v3481, %v4873
    %v4880 = vmul.f32 %v4864, 0.5
    %v4881 = vmul.f32 %v4866, 0.5
    %v4882 = vtanh.pop %v4880
    %v4883 = vtanh.pop %v4881
    %v4884 = vadd.f32 %v4882, 1.0
    %v4885 = vadd.f32 %v4883, 1.0
    %v4886 = vmul.f32 %v4884, 0.5
    %v4887 = vmul.f32 %v4885, 0.5
    %v4888 = vtanh.pop %v4865
    %v4889 = vtanh.pop %v4867
    %v4890 = vmul.f32 %v4876, 0.5
    %v4891 = vmul.f32 %v4878, 0.5
    %v4892 = vtanh.pop %v4890
    %v4893 = vtanh.pop %v4891
    %v4894 = vadd.f32 %v4892, 1.0
    %v4895 = vadd.f32 %v4893, 1.0
    %v4896 = vmul.f32 %v4894, 0.5
    %v4897 = vmul.f32 %v4895, 0.5
    %v4898 = vtanh.pop %v4877
    %v4899 = vtanh.pop %v4879
    %v4902 = vrot.slane %v4710, 7
    %v4903 = vrot.slane %v4711, 7
    %v4906 = vmul.f32 %v4886, %v4902
    %v4907 = vmul.f32 %v4887, %v4903
    %4910 = vrot.lane.b32.xlu0 %v4888, 32
    %v4911 = vpop.permute.xlu0 %4910
    %4912 = vrot.lane.b32.xlu0 %v4889, 32
    %v4913 = vpop.permute.xlu0 %4912
    %v4916 = vmul.f32 %v4886, %v4911
    %v4917 = vmul.f32 %v4887, %v4913
    %4920 = vrot.lane.b32.xlu0 %v4916, 32
    %v4921 = vpop.permute.xlu0 %4920
    %4922 = vrot.lane.b32.xlu0 %v4917, 32
    %v4923 = vpop.permute.xlu0 %4922
    %v4926 = vadd.f32 %v4906, %v4921
    %v4927 = vadd.f32 %v4907, %v4923
    %v4928 = vtanh.pop %v4926
    %v4929 = vtanh.pop %v4927
    %4932 = vrot.lane.b32.xlu0 %v4928, 32
    %v4933 = vpop.permute.xlu0 %4932
    %4934 = vrot.lane.b32.xlu0 %v4929, 32
    %v4935 = vpop.permute.xlu0 %4934
    %v4938 = vmul.f32 %v4886, %v4933
    %v4939 = vmul.f32 %v4887, %v4935
    %v4942 = vrot.slane %v4750, 1
    %v4943 = vrot.slane %v4751, 1
    %v4946 = vmul.f32 %v4896, %v4942
    %v4947 = vmul.f32 %v4897, %v4943
    %4950 = vrot.lane.b32.xlu0 %v4898, 32
    %v4951 = vpop.permute.xlu0 %4950
    %4952 = vrot.lane.b32.xlu0 %v4899, 32
    %v4953 = vpop.permute.xlu0 %4952
    %v4956 = vmul.f32 %v4896, %v4951
    %v4957 = vmul.f32 %v4897, %v4953
    %4960 = vrot.lane.b32.xlu0 %v4956, 32
    %v4961 = vpop.permute.xlu0 %4960
    %4962 = vrot.lane.b32.xlu0 %v4957, 32
    %v4963 = vpop.permute.xlu0 %4962
    %v4966 = vadd.f32 %v4946, %v4961
    %v4967 = vadd.f32 %v4947, %v4963
    %v4968 = vtanh.pop %v4966
    %v4969 = vtanh.pop %v4967
    %4972 = vrot.lane.b32.xlu0 %v4968, 32
    %v4973 = vpop.permute.xlu0 %4972
    %4974 = vrot.lane.b32.xlu0 %v4969, 32
    %v4975 = vpop.permute.xlu0 %4974
    %v4978 = vmul.f32 %v4896, %v4973
    %v4979 = vmul.f32 %v4897, %v4975
    %v4982 = vrot.slane %v4939, 7
    %v4983 = vsel %vm3027, %v4982, %v4938
    %4984 = vrot.lane.b32.xlu0 %v4983, 32
    %v4985 = vpop.permute.xlu0 %4984
    %v4989 = vrot.slane %v4978, 3
    %v4990 = vrot.slane %v4979, 2
    %v4991 = vsel %vm3027, %v4990, %v4989
    %4992 = vrot.lane.b32.xlu0 %v4991, 64
    %v4993 = vpop.permute.xlu0 %4992
    %v4995 = vsel %vm195, %v4985, %v4993
    %v4997 = vrot.slane %v4995, 6
    %v4998 = vsel %vm1533, %v4997, 0
    %5000 = vmatprep.subr.mxu0 0.0
    %5001 = vmatpush1.msra.mxu0 0.0
    %5002 = vmatprep.subr.mxu0 0.0
    %5003 = vmatpush1.msra.mxu0 0.0
    %5004 = vmatprep.subr.mxu0 0.0
    %5005 = vmatpush1.msra.mxu0 0.0
    %5006 = vmatprep.subr.mxu0 0.0
    %5007 = vmatpush1.msra.mxu0 0.0
    %5008 = vmatprep.subr.mxu0 0.0
    %5009 = vmatpush1.msra.mxu0 0.0
    %5010 = vmatprep.subr.mxu0 0.0
    %5011 = vmatpush1.msra.mxu0 0.0
    %5012 = vmatprep.subr.mxu0 0.0
    %5013 = vmatpush1.msra.mxu0 0.0
    %5014 = vmatprep.subr.mxu0 0.0
    %5015 = vmatpush1.msra.mxu0 0.0
    %5016 = vmatprep.subr.mxu0 %v3497
    %5017 = vmatpush1.msra.mxu0 %v3496
    %5018 = vmatprep.subr.mxu0 %v3495
    %5019 = vmatpush1.msra.mxu0 %v3494
    %5020 = vmatprep.subr.mxu0 %v3493
    %5021 = vmatpush1.msra.mxu0 %v3492
    %5022 = vmatprep.subr.mxu0 %v3491
    %5023 = vmatpush1.msra.mxu0 %v3490
    %5024 = vmatprep.subr.mxu0 %v3489
    %5025 = vmatpush1.msra.mxu0 %v3488
    %5026 = vmatprep.subr.mxu0 %v3487
    %5027 = vmatpush1.msra.mxu0 %v3486
    %5028 = vmatprep.subr.mxu0 %v3485
    %5029 = vmatpush1.msra.mxu0 %v3484
    %5030 = vmatprep.subr.mxu0 %v3483
    %5031 = vmatpush1.msra.mxu0 %v3482
    %5032 = vmatprep.subr.mxu0 0.0
    %5033 = vmatpush2.msra.mxu0 0.0
    %5034 = vmatprep.subr.mxu0 0.0
    %5035 = vmatpush2.msra.mxu0 0.0
    %5036 = vmatprep.subr.mxu0 0.0
    %5037 = vmatpush2.msra.mxu0 0.0
    %5038 = vmatprep.subr.mxu0 0.0
    %5039 = vmatpush2.msra.mxu0 0.0
    %5040 = vmatprep.subr.mxu0 0.0
    %5041 = vmatpush2.msra.mxu0 0.0
    %5042 = vmatprep.subr.mxu0 0.0
    %5043 = vmatpush2.msra.mxu0 0.0
    %5044 = vmatprep.subr.mxu0 0.0
    %5045 = vmatpush2.msra.mxu0 0.0
    %5046 = vmatprep.subr.mxu0 0.0
    %5047 = vmatpush2.msra.mxu0 0.0
    %5048 = vmatprep.subr.mxu0 0.0
    %5049 = vmatpush2.msra.mxu0 0.0
    %5050 = vmatprep.subr.mxu0 0.0
    %5051 = vmatpush2.msra.mxu0 0.0
    %5052 = vmatprep.subr.mxu0 0.0
    %5053 = vmatpush2.msra.mxu0 0.0
    %5054 = vmatprep.subr.mxu0 0.0
    %5055 = vmatpush2.msra.mxu0 0.0
    %5056 = vmatprep.subr.mxu0 0.0
    %5057 = vmatpush2.msra.mxu0 0.0
    %5058 = vmatprep.subr.mxu0 0.0
    %5059 = vmatpush2.msra.mxu0 0.0
    %5060 = vmatprep.subr.mxu0 0.0
    %5061 = vmatpush2.msra.mxu0 0.0
    %5062 = vmatprep.subr.mxu0 0.0
    %5063 = vmatpush2.msra.mxu0 0.0
    %5064 = vmatprep.mubr.f32.mxu0 0.0
    %5065 = vmatmul.mubr.f32.gmra.mxu0 %v4998
    %v5066 = vpop.f32.mrf.mxu0
    %v5067 = vadd.f32 0.0, %v5066
    %v5068 = vpop.f32.mrf.mxu0
    %v5069 = vadd.f32 0.0, %v5068
    %5070 = vdwg.mxu0
    %v5072 = vrot.slane %v5067, 1
    %v5073 = vrot.slane %v5067, 2
    %5074 = vrot.lane.b32.xlu0 %v5072, 32
    %v5075 = vpop.permute.xlu0 %5074
    %5076 = vrot.lane.b32.xlu0 %v5073, 32
    %v5077 = vpop.permute.xlu0 %5076
    %v5080 = vadd.f32 %v3476, %v5075
    %v5081 = vadd.f32 %v3477, %v5075
    %v5082 = vadd.f32 %v3479, %v5077
    %v5083 = vadd.f32 %v3480, %v5077
    %v5085 = vrot.slane %v5069, 1
    %5086 = vrot.lane.b32.xlu0 %v5069, 32
    %v5087 = vpop.permute.xlu0 %5086
    %5088 = vrot.lane.b32.xlu0 %v5085, 32
    %v5089 = vpop.permute.xlu0 %5088
    %v5092 = vadd.f32 %v3477, %v5087
    %v5093 = vadd.f32 %v3478, %v5087
    %v5094 = vadd.f32 %v3480, %v5089
    %v5095 = vadd.f32 %v3481, %v5089
    %v5096 = vmul.f32 %v5080, 0.5
    %v5097 = vmul.f32 %v5082, 0.5
    %v5098 = vtanh.pop %v5096
    %v5099 = vtanh.pop %v5097
    %v5100 = vadd.f32 %v5098, 1.0
    %v5101 = vadd.f32 %v5099, 1.0
    %v5102 = vmul.f32 %v5100, 0.5
    %v5103 = vmul.f32 %v5101, 0.5
    %v5104 = vtanh.pop %v5081
    %v5105 = vtanh.pop %v5083
    %v5106 = vmul.f32 %v5092, 0.5
    %v5107 = vmul.f32 %v5094, 0.5
    %v5108 = vtanh.pop %v5106
    %v5109 = vtanh.pop %v5107
    %v5110 = vadd.f32 %v5108, 1.0
    %v5111 = vadd.f32 %v5109, 1.0
    %v5112 = vmul.f32 %v5110, 0.5
    %v5113 = vmul.f32 %v5111, 0.5
    %v5114 = vtanh.pop %v5093
    %v5115 = vtanh.pop %v5095
    %v5118 = vrot.slane %v4926, 7
    %v5119 = vrot.slane %v4927, 7
    %v5122 = vmul.f32 %v5102, %v5118
    %v5123 = vmul.f32 %v5103, %v5119
    %5126 = vrot.lane.b32.xlu0 %v5104, 32
    %v5127 = vpop.permute.xlu0 %5126
    %5128 = vrot.lane.b32.xlu0 %v5105, 32
    %v5129 = vpop.permute.xlu0 %5128
    %v5132 = vmul.f32 %v5102, %v5127
    %v5133 = vmul.f32 %v5103, %v5129
    %5136 = vrot.lane.b32.xlu0 %v5132, 32
    %v5137 = vpop.permute.xlu0 %5136
    %5138 = vrot.lane.b32.xlu0 %v5133, 32
    %v5139 = vpop.permute.xlu0 %5138
    %v5142 = vadd.f32 %v5122, %v5137
    %v5143 = vadd.f32 %v5123, %v5139
    %v5144 = vtanh.pop %v5142
    %v5145 = vtanh.pop %v5143
    %5148 = vrot.lane.b32.xlu0 %v5144, 32
    %v5149 = vpop.permute.xlu0 %5148
    %5150 = vrot.lane.b32.xlu0 %v5145, 32
    %v5151 = vpop.permute.xlu0 %5150
    %v5154 = vmul.f32 %v5102, %v5149
    %v5155 = vmul.f32 %v5103, %v5151
    %v5158 = vrot.slane %v4966, 1
    %v5159 = vrot.slane %v4967, 1
    %v5162 = vmul.f32 %v5112, %v5158
    %v5163 = vmul.f32 %v5113, %v5159
    %5166 = vrot.lane.b32.xlu0 %v5114, 32
    %v5167 = vpop.permute.xlu0 %5166
    %5168 = vrot.lane.b32.xlu0 %v5115, 32
    %v5169 = vpop.permute.xlu0 %5168
    %v5172 = vmul.f32 %v5112, %v5167
    %v5173 = vmul.f32 %v5113, %v5169
    %5176 = vrot.lane.b32.xlu0 %v5172, 32
    %v5177 = vpop.permute.xlu0 %5176
    %5178 = vrot.lane.b32.xlu0 %v5173, 32
    %v5179 = vpop.permute.xlu0 %5178
    %v5182 = vadd.f32 %v5162, %v5177
    %v5183 = vadd.f32 %v5163, %v5179
    %v5184 = vtanh.pop %v5182
    %v5185 = vtanh.pop %v5183
    %5188 = vrot.lane.b32.xlu0 %v5184, 32
    %v5189 = vpop.permute.xlu0 %5188
    %5190 = vrot.lane.b32.xlu0 %v5185, 32
    %v5191 = vpop.permute.xlu0 %5190
    %v5194 = vmul.f32 %v5112, %v5189
    %v5195 = vmul.f32 %v5113, %v5191
    %v5196 = vsel %vm3241, %v3646, %v3855
    %v5197 = vsel %vm3241, %v3647, %v3856
    %v5198 = vsel %vm3244, %v5196, %v4072
    %v5199 = vsel %vm3244, %v5197, %v4073
    %v5200 = vsel %vm3247, %v5198, %v4289
    %v5201 = vsel %vm3247, %v5199, %v4290
    %v5202 = vsel %vm3250, %v5200, %v4505
    %v5203 = vsel %vm3250, %v5201, %v4506
    %v5204 = vsel %vm3253, %v5202, %v4722
    %v5205 = vsel %vm3253, %v5203, %v4723
    %v5206 = vsel %vm3256, %v5204, %v4938
    %v5207 = vsel %vm3256, %v5205, %v4939
    %v5208 = vsel %vm3259, %v5206, %v5154
    %v5209 = vsel %vm3259, %v5207, %v5155
    %v5210 = vsel %vm3241, %v5194, %v4978
    %v5211 = vsel %vm3241, %v5195, %v4979
    %v5212 = vsel %vm3244, %v5210, %v4762
    %v5213 = vsel %vm3244, %v5211, %v4763
    %v5214 = vsel %vm3247, %v5212, %v4545
    %v5215 = vsel %vm3247, %v5213, %v4546
    %v5216 = vsel %vm3250, %v5214, %v4329
    %v5217 = vsel %vm3250, %v5215, %v4330
    %v5218 = vsel %vm3253, %v5216, %v4112
    %v5219 = vsel %vm3253, %v5217, %v4113
    %v5220 = vsel %vm3256, %v5218, %v3895
    %v5221 = vsel %vm3256, %v5219, %v3896
    %v5222 = vsel %vm3259, %v5220, %v3680
    %v5223 = vsel %vm3259, %v5221, %v3681
    %5226 = vrot.lane.b32.xlu0 %v5208, 32
    %v5227 = vpop.permute.xlu0 %5226
    %5228 = vrot.lane.b32.xlu0 %v5209, 32
    %v5229 = vpop.permute.xlu0 %5228
    %5234 = vrot.lane.b32.xlu0 %v5222, 64
    %v5235 = vpop.permute.xlu0 %5234
    %5236 = vrot.lane.b32.xlu0 %v5223, 64
    %v5237 = vpop.permute.xlu0 %5236
    %v5240 = vsel %vm195, %v5227, %v5235
    %v5241 = vsel %vm195, %v5229, %v5237
    %v5242 = vld [vmem:[%s10] sm:$0xff]
    %v5243 = vld [vmem:[%s10 + $0x8] sm:$0xff]
    %v5244 = vld [vmem:[%s10 + $0x10] sm:$0xff]
    %v5245 = vld [vmem:[%s10 + $0x18] sm:$0xff]
    %v5246 = vld [vmem:[%s10 + $0x20] sm:$0xff]
    %v5247 = vld [vmem:[%s10 + $0x28] sm:$0xff]
    %v5248 = vld [vmem:[%s10 + $0x30] sm:$0xff]
    %v5249 = vld [vmem:[%s10 + $0x38] sm:$0xff]
    %5250 = vmatprep.subr.mxu0 0.0
    %5251 = vmatpush1.msra.mxu0 0.0
    %5252 = vmatprep.subr.mxu0 0.0
    %5253 = vmatpush1.msra.mxu0 0.0
    %5254 = vmatprep.subr.mxu0 0.0
    %5255 = vmatpush1.msra.mxu0 0.0
    %5256 = vmatprep.subr.mxu0 0.0
    %5257 = vmatpush1.msra.mxu0 0.0
    %5258 = vmatprep.subr.mxu0 0.0
    %5259 = vmatpush1.msra.mxu0 0.0
    %5260 = vmatprep.subr.mxu0 0.0
    %5261 = vmatpush1.msra.mxu0 0.0
    %5262 = vmatprep.subr.mxu0 0.0
    %5263 = vmatpush1.msra.mxu0 0.0
    %5264 = vmatprep.subr.mxu0 0.0
    %5265 = vmatpush1.msra.mxu0 0.0
    %5266 = vmatprep.subr.mxu0 0.0
    %5267 = vmatpush1.msra.mxu0 %v5249
    %5268 = vmatprep.subr.mxu0 0.0
    %5269 = vmatpush1.msra.mxu0 %v5248
    %5270 = vmatprep.subr.mxu0 0.0
    %5271 = vmatpush1.msra.mxu0 %v5247
    %5272 = vmatprep.subr.mxu0 0.0
    %5273 = vmatpush1.msra.mxu0 %v5246
    %5274 = vmatprep.subr.mxu0 0.0
    %5275 = vmatpush1.msra.mxu0 %v5245
    %5276 = vmatprep.subr.mxu0 0.0
    %5277 = vmatpush1.msra.mxu0 %v5244
    %5278 = vmatprep.subr.mxu0 0.0
    %5279 = vmatpush1.msra.mxu0 %v5243
    %5280 = vmatprep.subr.mxu0 0.0
    %5281 = vmatpush1.msra.mxu0 %v5242
    %5282 = vmatprep.subr.mxu0 0.0
    %5283 = vmatpush2.msra.mxu0 0.0
    %5284 = vmatprep.subr.mxu0 0.0
    %5285 = vmatpush2.msra.mxu0 0.0
    %5286 = vmatprep.subr.mxu0 0.0
    %5287 = vmatpush2.msra.mxu0 0.0
    %5288 = vmatprep.subr.mxu0 0.0
    %5289 = vmatpush2.msra.mxu0 0.0
    %5290 = vmatprep.subr.mxu0 0.0
    %5291 = vmatpush2.msra.mxu0 0.0
    %5292 = vmatprep.subr.mxu0 0.0
    %5293 = vmatpush2.msra.mxu0 0.0
    %5294 = vmatprep.subr.mxu0 0.0
    %5295 = vmatpush2.msra.mxu0 0.0
    %5296 = vmatprep.subr.mxu0 0.0
    %5297 = vmatpush2.msra.mxu0 0.0
    %5298 = vmatprep.subr.mxu0 0.0
    %5299 = vmatpush2.msra.mxu0 0.0
    %5300 = vmatprep.subr.mxu0 0.0
    %5301 = vmatpush2.msra.mxu0 0.0
    %5302 = vmatprep.subr.mxu0 0.0
    %5303 = vmatpush2.msra.mxu0 0.0
    %5304 = vmatprep.subr.mxu0 0.0
    %5305 = vmatpush2.msra.mxu0 0.0
    %5306 = vmatprep.subr.mxu0 0.0
    %5307 = vmatpush2.msra.mxu0 0.0
    %5308 = vmatprep.subr.mxu0 0.0
    %5309 = vmatpush2.msra.mxu0 0.0
    %5310 = vmatprep.subr.mxu0 0.0
    %5311 = vmatpush2.msra.mxu0 0.0
    %5312 = vmatprep.subr.mxu0 0.0
    %5313 = vmatpush2.msra.mxu0 0.0
    %5314 = vmatprep.mubr.f32.mxu0 0.0
    %5315 = vmatmul.mubr.f32.gmra.mxu0 %v3311
    %v5316 = vpop.f32.mrf.mxu0
    %v5317 = vadd.f32 0.0, %v5316
    %v5318 = vpop.f32.mrf.mxu0
    %5319 = vmatprep.mubr.f32.mxu0 0.0
    %5320 = vmatmul.mubr.f32.gmra.mxu0 %v3314
    %v5321 = vpop.f32.mrf.mxu0
    %v5322 = vadd.f32 0.0, %v5321
    %v5323 = vpop.f32.mrf.mxu0
    %5324 = vdwg.mxu0
    %v5326 = vadd.f32 %v5317, %v662
    %v5327 = vadd.f32 %v5322, %v662
    %5336 = vrot.lane.b32.xlu0 %v5242, 126
    %v5337 = vpop.permute.xlu0 %5336
    %5338 = vrot.lane.b32.xlu0 %v5243, 126
    %v5339 = vpop.permute.xlu0 %5338
    %5340 = vrot.lane.b32.xlu0 %v5244, 126
    %v5341 = vpop.permute.xlu0 %5340
    %5342 = vrot.lane.b32.xlu0 %v5245, 126
    %v5343 = vpop.permute.xlu0 %5342
    %5344 = vrot.lane.b32.xlu0 %v5246, 126
    %v5345 = vpop.permute.xlu0 %5344
    %5346 = vrot.lane.b32.xlu0 %v5247, 126
    %v5347 = vpop.permute.xlu0 %5346
    %5348 = vrot.lane.b32.xlu0 %v5248, 126
    %v5349 = vpop.permute.xlu0 %5348
    %5350 = vrot.lane.b32.xlu0 %v5249, 126
    %v5351 = vpop.permute.xlu0 %5350
    %v5361 = vsel %vm1533, %v5240, 0
    %v5364 = vsel %vm1533, %v5241, 0
    %5366 = vmatprep.subr.mxu0 0.0
    %5367 = vmatpush1.msra.mxu0 0.0
    %5368 = vmatprep.subr.mxu0 0.0
    %5369 = vmatpush1.msra.mxu0 0.0
    %5370 = vmatprep.subr.mxu0 0.0
    %5371 = vmatpush1.msra.mxu0 0.0
    %5372 = vmatprep.subr.mxu0 0.0
    %5373 = vmatpush1.msra.mxu0 0.0
    %5374 = vmatprep.subr.mxu0 0.0
    %5375 = vmatpush1.msra.mxu0 0.0
    %5376 = vmatprep.subr.mxu0 0.0
    %5377 = vmatpush1.msra.mxu0 0.0
    %5378 = vmatprep.subr.mxu0 0.0
    %5379 = vmatpush1.msra.mxu0 0.0
    %5380 = vmatprep.subr.mxu0 0.0
    %5381 = vmatpush1.msra.mxu0 0.0
    %5382 = vmatprep.subr.mxu0 0.0
    %5383 = vmatpush1.msra.mxu0 %v5351
    %5384 = vmatprep.subr.mxu0 0.0
    %5385 = vmatpush1.msra.mxu0 %v5349
    %5386 = vmatprep.subr.mxu0 0.0
    %5387 = vmatpush1.msra.mxu0 %v5347
    %5388 = vmatprep.subr.mxu0 0.0
    %5389 = vmatpush1.msra.mxu0 %v5345
    %5390 = vmatprep.subr.mxu0 0.0
    %5391 = vmatpush1.msra.mxu0 %v5343
    %5392 = vmatprep.subr.mxu0 0.0
    %5393 = vmatpush1.msra.mxu0 %v5341
    %5394 = vmatprep.subr.mxu0 0.0
    %5395 = vmatpush1.msra.mxu0 %v5339
    %5396 = vmatprep.subr.mxu0 0.0
    %5397 = vmatpush1.msra.mxu0 %v5337
    %5398 = vmatprep.subr.mxu0 0.0
    %5399 = vmatpush2.msra.mxu0 0.0
    %5400 = vmatprep.subr.mxu0 0.0
    %5401 = vmatpush2.msra.mxu0 0.0
    %5402 = vmatprep.subr.mxu0 0.0
    %5403 = vmatpush2.msra.mxu0 0.0
    %5404 = vmatprep.subr.mxu0 0.0
    %5405 = vmatpush2.msra.mxu0 0.0
    %5406 = vmatprep.subr.mxu0 0.0
    %5407 = vmatpush2.msra.mxu0 0.0
    %5408 = vmatprep.subr.mxu0 0.0
    %5409 = vmatpush2.msra.mxu0 0.0
    %5410 = vmatprep.subr.mxu0 0.0
    %5411 = vmatpush2.msra.mxu0 0.0
    %5412 = vmatprep.subr.mxu0 0.0
    %5413 = vmatpush2.msra.mxu0 0.0
    %5414 = vmatprep.subr.mxu0 0.0
    %5415 = vmatpush2.msra.mxu0 0.0
    %5416 = vmatprep.subr.mxu0 0.0
    %5417 = vmatpush2.msra.mxu0 0.0
    %5418 = vmatprep.subr.mxu0 0.0
    %5419 = vmatpush2.msra.mxu0 0.0
    %5420 = vmatprep.subr.mxu0 0.0
    %5421 = vmatpush2.msra.mxu0 0.0
    %5422 = vmatprep.subr.mxu0 0.0
    %5423 = vmatpush2.msra.mxu0 0.0
    %5424 = vmatprep.subr.mxu0 0.0
    %5425 = vmatpush2.msra.mxu0 0.0
    %5426 = vmatprep.subr.mxu0 0.0
    %5427 = vmatpush2.msra.mxu0 0.0
    %5428 = vmatprep.subr.mxu0 0.0
    %5429 = vmatpush2.msra.mxu0 0.0
    %5430 = vmatprep.mubr.f32.mxu0 0.0
    %5431 = vmatmul.mubr.f32.gmra.mxu0 %v5361
    %v5432 = vpop.f32.mrf.mxu0
    %v5433 = vadd.f32 0.0, %v5432
    %v5434 = vpop.f32.mrf.mxu0
    %5435 = vmatprep.mubr.f32.mxu0 0.0
    %5436 = vmatmul.mubr.f32.gmra.mxu0 %v5364
    %v5437 = vpop.f32.mrf.mxu0
    %v5438 = vadd.f32 0.0, %v5437
    %v5439 = vpop.f32.mrf.mxu0
    %5440 = vdwg.mxu0
    %5441 = vrot.lane.b32.xlu0 %v662, 126
    %v5442 = vpop.permute.xlu0 %5441
    %v5444 = vadd.f32 %v5433, %v5442
    %v5445 = vadd.f32 %v5438, %v5442
    %5448 = vset.pattern.permute.xlu0 0
    %5449 = vperm.xlu0 %5448, %v5326
    %v5450 = vpop.permute.xlu0 %5449
    %5451 = vset.pattern.permute.xlu0 0
    %5452 = vperm.xlu0 %5451, %v5327
    %v5453 = vpop.permute.xlu0 %5452
    %v5454 = vlaneseq
    %v5455 = vshrl.u32 %v5454, 7
    %v5456 = vsub.s32 %v678, %v5455
    %v5457 = vrot.slane %v5450, %v5456
    %v5458 = vlaneseq
    %v5459 = vshrl.u32 %v5458, 7
    %v5460 = vsub.s32 %v678, %v5459
    %v5461 = vrot.slane %v5453, %v5460
    %v5462 = vsel %vm687, %v5461, %v5457
    %v5464 = vsel %vm170, -1e+30, %v5462
    %v5465 = vsel %vm691, %v5464, -inf
    %5466 = vmax.xlane.f32.xlu0 %v5465
    %v5467 = vpop.xlane.xlu0 %5466
    %v5468 = vsub.f32 %v5464, %v5467
    %v5469 = vmul.f32 %v5468, 1.442695
    %v5470 = vpow.pop %v5469
    %v5471 = vsel %vm691, %v5470, 0.0
    %5472 = vadd.xlane.f32.xlu0 %v5471
    %v5473 = vpop.xlane.xlu0 %5472
    %v5474 = vrcp.pop %v5473
    %v5475 = vmul.f32 %v5470, %v5474
    %5476 = vset.pattern.permute.xlu0 1
    %5477 = vperm.xlu0 %5476, %v5326
    %v5478 = vpop.permute.xlu0 %5477
    %5479 = vset.pattern.permute.xlu0 1
    %5480 = vperm.xlu0 %5479, %v5327
    %v5481 = vpop.permute.xlu0 %5480
    %v5482 = vlaneseq
    %v5483 = vshrl.u32 %v5482, 7
    %v5484 = vsub.s32 %v678, %v5483
    %v5485 = vrot.slane %v5478, %v5484
    %v5486 = vlaneseq
    %v5487 = vshrl.u32 %v5486, 7
    %v5488 = vsub.s32 %v678, %v5487
    %v5489 = vrot.slane %v5481, %v5488
    %v5490 = vsel %vm687, %v5489, %v5485
    %v5492 = vsel %vm170, -1e+30, %v5490
    %v5493 = vsel %vm691, %v5492, -inf
    %5494 = vmax.xlane.f32.xlu0 %v5493
    %v5495 = vpop.xlane.xlu0 %5494
    %v5496 = vsub.f32 %v5492, %v5495
    %v5497 = vmul.f32 %v5496, 1.442695
    %v5498 = vpow.pop %v5497
    %v5499 = vsel %vm691, %v5498, 0.0
    %5500 = vadd.xlane.f32.xlu0 %v5499
    %v5501 = vpop.xlane.xlu0 %5500
    %v5502 = vrcp.pop %v5501
    %v5503 = vmul.f32 %v5498, %v5502
    %5506 = vset.pattern.permute.xlu0 0
    %5507 = vperm.xlu0 %5506, %v5444
    %v5508 = vpop.permute.xlu0 %5507
    %5509 = vset.pattern.permute.xlu0 0
    %5510 = vperm.xlu0 %5509, %v5445
    %v5511 = vpop.permute.xlu0 %5510
    %v5512 = vlaneseq
    %v5513 = vshrl.u32 %v5512, 7
    %v5514 = vsub.s32 %v678, %v5513
    %v5515 = vrot.slane %v5508, %v5514
    %v5516 = vlaneseq
    %v5517 = vshrl.u32 %v5516, 7
    %v5518 = vsub.s32 %v678, %v5517
    %v5519 = vrot.slane %v5511, %v5518
    %v5520 = vsel %vm687, %v5519, %v5515
    %v5522 = vsel %vm170, -1e+30, %v5520
    %v5523 = vsel %vm691, %v5522, -inf
    %5524 = vmax.xlane.f32.xlu0 %v5523
    %v5525 = vpop.xlane.xlu0 %5524
    %v5526 = vsub.f32 %v5522, %v5525
    %v5527 = vmul.f32 %v5526, 1.442695
    %v5528 = vpow.pop %v5527
    %v5529 = vsel %vm691, %v5528, 0.0
    %5530 = vadd.xlane.f32.xlu0 %v5529
    %v5531 = vpop.xlane.xlu0 %5530
    %v5532 = vrcp.pop %v5531
    %v5533 = vmul.f32 %v5528, %v5532
    %5534 = vset.pattern.permute.xlu0 1
    %5535 = vperm.xlu0 %5534, %v5444
    %v5536 = vpop.permute.xlu0 %5535
    %5537 = vset.pattern.permute.xlu0 1
    %5538 = vperm.xlu0 %5537, %v5445
    %v5539 = vpop.permute.xlu0 %5538
    %v5540 = vlaneseq
    %v5541 = vshrl.u32 %v5540, 7
    %v5542 = vsub.s32 %v678, %v5541
    %v5543 = vrot.slane %v5536, %v5542
    %v5544 = vlaneseq
    %v5545 = vshrl.u32 %v5544, 7
    %v5546 = vsub.s32 %v678, %v5545
    %v5547 = vrot.slane %v5539, %v5546
    %v5548 = vsel %vm687, %v5547, %v5543
    %v5550 = vsel %vm170, -1e+30, %v5548
    %v5551 = vsel %vm691, %v5550, -inf
    %5552 = vmax.xlane.f32.xlu0 %v5551
    %v5553 = vpop.xlane.xlu0 %5552
    %v5554 = vsub.f32 %v5550, %v5553
    %v5555 = vmul.f32 %v5554, 1.442695
    %v5556 = vpow.pop %v5555
    %v5557 = vsel %vm691, %v5556, 0.0
    %5558 = vadd.xlane.f32.xlu0 %v5557
    %v5559 = vpop.xlane.xlu0 %5558
    %v5560 = vrcp.pop %v5559
    %v5561 = vmul.f32 %v5556, %v5560
    %5563 = vrot.lane.b32.xlu0 %v5503, 8
    %v5564 = vpop.permute.xlu0 %5563
    %5567 = vrot.lane.b32.xlu0 %v5533, 16
    %v5568 = vpop.permute.xlu0 %5567
    %5571 = vrot.lane.b32.xlu0 %v5561, 24
    %v5572 = vpop.permute.xlu0 %5571
    %v5574 = vsel %vm726, %v5475, %v5564
    %vm5575 = vcmask 130048
    %v5576 = vsel %vm5575, %v5574, %v5568
    %vm5577 = vcmask 195584
    %v5578 = vsel %vm5577, %v5576, %v5572
    %vm5579 = vcmask 254976
    %5580 = vst.msk [vmem:[#allocation18] sm:$0x3] %vm5579, %v5578
    %v5582 = vunpack.c.l.s4 1966171168
    %v5583 = vunpack.c.0.s8 %v5582
    %v5584 = vlaneseq
    %v5585 = vshrl.u32 %v5584, 7
    %v5586 = vsub.s32 %v5583, %v5585
    %v5587 = vrot.slane %v5503, %v5586
    %v5588 = vcombine.high %v5587, %v5587
    %v5590 = vunpack.c.l.s4 1966171168
    %v5591 = vunpack.c.0.s8 %v5590
    %v5592 = vlaneseq
    %v5593 = vshrl.u32 %v5592, 7
    %v5594 = vsub.s32 %v5591, %v5593
    %v5595 = vrot.slane %v5587, %v5594
    %v5597 = vunpack.c.l.s4 1966171168
    %v5598 = vunpack.c.0.s8 %v5597
    %v5599 = vlaneseq
    %v5600 = vshrl.u32 %v5599, 7
    %v5601 = vsub.s32 %v5598, %v5600
    %v5602 = vrot.slane %v5588, %v5601
    %v5607 = vunpack.c.l.s4 1966171168
    %v5608 = vunpack.c.0.s8 %v5607
    %v5609 = vlaneseq
    %v5610 = vshrl.u32 %v5609, 7
    %v5611 = vsub.s32 %v5608, %v5610
    %v5612 = vrot.slane %v5475, %v5611
    %v5613 = vcombine.high %v5612, %v5612
    %v5615 = vunpack.c.l.s4 1966171168
    %v5616 = vunpack.c.0.s8 %v5615
    %v5617 = vlaneseq
    %v5618 = vshrl.u32 %v5617, 7
    %v5619 = vsub.s32 %v5616, %v5618
    %v5620 = vrot.slane %v5612, %v5619
    %v5622 = vunpack.c.l.s4 1966171168
    %v5623 = vunpack.c.0.s8 %v5622
    %v5624 = vlaneseq
    %v5625 = vshrl.u32 %v5624, 7
    %v5626 = vsub.s32 %v5623, %v5625
    %v5627 = vrot.slane %v5613, %v5626
    %v5628 = vlaneseq
    %v5629 = vshrl.u32 %v5628, 7
    %v5630 = vsub.s32 0, %v5629
    %v5631 = vrot.slane %v5620, %v5630
    %v5632 = vlaneseq
    %v5633 = vshrl.u32 %v5632, 7
    %v5634 = vsub.s32 0, %v5633
    %v5635 = vrot.slane %v5627, %v5634
    %v5638 = vsel %vm3241, %v5595, %v5631
    %v5639 = vsel %vm3241, %v5602, %v5635
    %v5641 = vunpack.c.l.s4 1966171168
    %v5642 = vunpack.c.0.s8 %v5641
    %v5643 = vlaneseq
    %v5644 = vshrl.u32 %v5643, 7
    %v5645 = vsub.s32 %v5642, %v5644
    %v5646 = vrot.slane %v5561, %v5645
    %v5647 = vcombine.high %v5646, %v5646
    %v5649 = vunpack.c.l.s4 1966171168
    %v5650 = vunpack.c.0.s8 %v5649
    %v5651 = vlaneseq
    %v5652 = vshrl.u32 %v5651, 7
    %v5653 = vsub.s32 %v5650, %v5652
    %v5654 = vrot.slane %v5646, %v5653
    %v5656 = vunpack.c.l.s4 1966171168
    %v5657 = vunpack.c.0.s8 %v5656
    %v5658 = vlaneseq
    %v5659 = vshrl.u32 %v5658, 7
    %v5660 = vsub.s32 %v5657, %v5659
    %v5661 = vrot.slane %v5647, %v5660
    %v5665 = vunpack.c.l.s4 1966171168
    %v5666 = vunpack.c.0.s8 %v5665
    %v5667 = vlaneseq
    %v5668 = vshrl.u32 %v5667, 7
    %v5669 = vsub.s32 %v5666, %v5668
    %v5670 = vrot.slane %v5533, %v5669
    %v5671 = vcombine.high %v5670, %v5670
    %v5673 = vunpack.c.l.s4 1966171168
    %v5674 = vunpack.c.0.s8 %v5673
    %v5675 = vlaneseq
    %v5676 = vshrl.u32 %v5675, 7
    %v5677 = vsub.s32 %v5674, %v5676
    %v5678 = vrot.slane %v5670, %v5677
    %v5680 = vunpack.c.l.s4 1966171168
    %v5681 = vunpack.c.0.s8 %v5680
    %v5682 = vlaneseq
    %v5683 = vshrl.u32 %v5682, 7
    %v5684 = vsub.s32 %v5681, %v5683
    %v5685 = vrot.slane %v5671, %v5684
    %v5686 = vlaneseq
    %v5687 = vshrl.u32 %v5686, 7
    %v5688 = vsub.s32 0, %v5687
    %v5689 = vrot.slane %v5678, %v5688
    %v5690 = vlaneseq
    %v5691 = vshrl.u32 %v5690, 7
    %v5692 = vsub.s32 0, %v5691
    %v5693 = vrot.slane %v5685, %v5692
    %v5696 = vsel %vm3241, %v5654, %v5689
    %v5697 = vsel %vm3241, %v5661, %v5693
    %v5699 = vsel %vm726, %v5638, 0
    %5701 = vmatprep.subr.mxu0 0.0
    %5702 = vmatpush1.msra.mxu0 0.0
    %5703 = vmatprep.subr.mxu0 0.0
    %5704 = vmatpush1.msra.mxu0 0.0
    %5705 = vmatprep.subr.mxu0 0.0
    %5706 = vmatpush1.msra.mxu0 0.0
    %5707 = vmatprep.subr.mxu0 0.0
    %5708 = vmatpush1.msra.mxu0 0.0
    %5709 = vmatprep.subr.mxu0 0.0
    %5710 = vmatpush1.msra.mxu0 0.0
    %5711 = vmatprep.subr.mxu0 0.0
    %5712 = vmatpush1.msra.mxu0 0.0
    %5713 = vmatprep.subr.mxu0 0.0
    %5714 = vmatpush1.msra.mxu0 0.0
    %5715 = vmatprep.subr.mxu0 0.0
    %5716 = vmatpush1.msra.mxu0 0.0
    %5717 = vmatprep.subr.mxu0 0.0
    %5718 = vmatpush1.msra.mxu0 0.0
    %5719 = vmatprep.subr.mxu0 0.0
    %5720 = vmatpush1.msra.mxu0 0.0
    %5721 = vmatprep.subr.mxu0 0.0
    %5722 = vmatpush1.msra.mxu0 0.0
    %5723 = vmatprep.subr.mxu0 0.0
    %5724 = vmatpush1.msra.mxu0 0.0
    %5725 = vmatprep.subr.mxu0 0.0
    %5726 = vmatpush1.msra.mxu0 0.0
    %5727 = vmatprep.subr.mxu0 0.0
    %5728 = vmatpush1.msra.mxu0 0.0
    %5729 = vmatprep.subr.mxu0 0.0
    %5730 = vmatpush1.msra.mxu0 0.0
    %5731 = vmatprep.subr.mxu0 0.0
    %5732 = vmatpush1.msra.mxu0 %v3292
    %5733 = vmatprep.subr.mxu0 0.0
    %5734 = vmatpush2.msra.mxu0 0.0
    %5735 = vmatprep.subr.mxu0 0.0
    %5736 = vmatpush2.msra.mxu0 0.0
    %5737 = vmatprep.subr.mxu0 0.0
    %5738 = vmatpush2.msra.mxu0 0.0
    %5739 = vmatprep.subr.mxu0 0.0
    %5740 = vmatpush2.msra.mxu0 0.0
    %5741 = vmatprep.subr.mxu0 0.0
    %5742 = vmatpush2.msra.mxu0 0.0
    %5743 = vmatprep.subr.mxu0 0.0
    %5744 = vmatpush2.msra.mxu0 0.0
    %5745 = vmatprep.subr.mxu0 0.0
    %5746 = vmatpush2.msra.mxu0 0.0
    %5747 = vmatprep.subr.mxu0 0.0
    %5748 = vmatpush2.msra.mxu0 0.0
    %5749 = vmatprep.subr.mxu0 0.0
    %5750 = vmatpush2.msra.mxu0 0.0
    %5751 = vmatprep.subr.mxu0 0.0
    %5752 = vmatpush2.msra.mxu0 0.0
    %5753 = vmatprep.subr.mxu0 0.0
    %5754 = vmatpush2.msra.mxu0 0.0
    %5755 = vmatprep.subr.mxu0 0.0
    %5756 = vmatpush2.msra.mxu0 0.0
    %5757 = vmatprep.subr.mxu0 0.0
    %5758 = vmatpush2.msra.mxu0 0.0
    %5759 = vmatprep.subr.mxu0 0.0
    %5760 = vmatpush2.msra.mxu0 0.0
    %5761 = vmatprep.subr.mxu0 0.0
    %5762 = vmatpush2.msra.mxu0 0.0
    %5763 = vmatprep.subr.mxu0 0.0
    %5764 = vmatpush2.msra.mxu0 0.0
    %5765 = vmatprep.mubr.f32.mxu0 0.0
    %5766 = vmatmul.mubr.f32.gmra.mxu0 %v5699
    %v5767 = vpop.f32.mrf.mxu0
    %v5768 = vadd.f32 0.0, %v5767
    %v5769 = vpop.f32.mrf.mxu0
    %5770 = vdwg.mxu0
    %v5772 = vsel %vm726, %v5639, 0
    %5774 = vmatprep.subr.mxu0 0.0
    %5775 = vmatpush1.msra.mxu0 0.0
    %5776 = vmatprep.subr.mxu0 0.0
    %5777 = vmatpush1.msra.mxu0 0.0
    %5778 = vmatprep.subr.mxu0 0.0
    %5779 = vmatpush1.msra.mxu0 0.0
    %5780 = vmatprep.subr.mxu0 0.0
    %5781 = vmatpush1.msra.mxu0 0.0
    %5782 = vmatprep.subr.mxu0 0.0
    %5783 = vmatpush1.msra.mxu0 0.0
    %5784 = vmatprep.subr.mxu0 0.0
    %5785 = vmatpush1.msra.mxu0 0.0
    %5786 = vmatprep.subr.mxu0 0.0
    %5787 = vmatpush1.msra.mxu0 0.0
    %5788 = vmatprep.subr.mxu0 0.0
    %5789 = vmatpush1.msra.mxu0 0.0
    %5790 = vmatprep.subr.mxu0 0.0
    %5791 = vmatpush1.msra.mxu0 0.0
    %5792 = vmatprep.subr.mxu0 0.0
    %5793 = vmatpush1.msra.mxu0 0.0
    %5794 = vmatprep.subr.mxu0 0.0
    %5795 = vmatpush1.msra.mxu0 0.0
    %5796 = vmatprep.subr.mxu0 0.0
    %5797 = vmatpush1.msra.mxu0 0.0
    %5798 = vmatprep.subr.mxu0 0.0
    %5799 = vmatpush1.msra.mxu0 0.0
    %5800 = vmatprep.subr.mxu0 0.0
    %5801 = vmatpush1.msra.mxu0 0.0
    %5802 = vmatprep.subr.mxu0 0.0
    %5803 = vmatpush1.msra.mxu0 0.0
    %5804 = vmatprep.subr.mxu0 0.0
    %5805 = vmatpush1.msra.mxu0 %v3293
    %5806 = vmatprep.subr.mxu0 0.0
    %5807 = vmatpush2.msra.mxu0 0.0
    %5808 = vmatprep.subr.mxu0 0.0
    %5809 = vmatpush2.msra.mxu0 0.0
    %5810 = vmatprep.subr.mxu0 0.0
    %5811 = vmatpush2.msra.mxu0 0.0
    %5812 = vmatprep.subr.mxu0 0.0
    %5813 = vmatpush2.msra.mxu0 0.0
    %5814 = vmatprep.subr.mxu0 0.0
    %5815 = vmatpush2.msra.mxu0 0.0
    %5816 = vmatprep.subr.mxu0 0.0
    %5817 = vmatpush2.msra.mxu0 0.0
    %5818 = vmatprep.subr.mxu0 0.0
    %5819 = vmatpush2.msra.mxu0 0.0
    %5820 = vmatprep.subr.mxu0 0.0
    %5821 = vmatpush2.msra.mxu0 0.0
    %5822 = vmatprep.subr.mxu0 0.0
    %5823 = vmatpush2.msra.mxu0 0.0
    %5824 = vmatprep.subr.mxu0 0.0
    %5825 = vmatpush2.msra.mxu0 0.0
    %5826 = vmatprep.subr.mxu0 0.0
    %5827 = vmatpush2.msra.mxu0 0.0
    %5828 = vmatprep.subr.mxu0 0.0
    %5829 = vmatpush2.msra.mxu0 0.0
    %5830 = vmatprep.subr.mxu0 0.0
    %5831 = vmatpush2.msra.mxu0 0.0
    %5832 = vmatprep.subr.mxu0 0.0
    %5833 = vmatpush2.msra.mxu0 0.0
    %5834 = vmatprep.subr.mxu0 0.0
    %5835 = vmatpush2.msra.mxu0 0.0
    %5836 = vmatprep.subr.mxu0 0.0
    %5837 = vmatpush2.msra.mxu0 0.0
    %5838 = vmatprep.mubr.f32.mxu0 0.0
    %5839 = vmatmul.mubr.f32.gmra.mxu0 %v5772
    %v5840 = vpop.f32.mrf.mxu0
    %v5841 = vadd.f32 0.0, %v5840
    %v5842 = vpop.f32.mrf.mxu0
    %5843 = vdwg.mxu0
    %v5844 = vcombine.low %v5768, %v5841
    %v5846 = vunpack.c.l.s4 1934713408
    %v5847 = vunpack.c.0.s8 %v5846
    %v5848 = vlaneseq
    %v5849 = vshrl.u32 %v5848, 7
    %v5850 = vsub.s32 %v5847, %v5849
    %v5851 = vrot.slane %v5844, %v5850
    %v5852 = vcombine.high %v5851, 0.0
    %5854 = vrot.lane.b32.xlu0 %v5852, 64
    %v5855 = vpop.permute.xlu0 %5854
    %v5857 = vsel %vm1533, %v5851, %v5855
    %v5859 = vsel %vm726, %v5696, 0
    %5861 = vmatprep.subr.mxu0 0.0
    %5862 = vmatpush1.msra.mxu0 0.0
    %5863 = vmatprep.subr.mxu0 0.0
    %5864 = vmatpush1.msra.mxu0 0.0
    %5865 = vmatprep.subr.mxu0 0.0
    %5866 = vmatpush1.msra.mxu0 0.0
    %5867 = vmatprep.subr.mxu0 0.0
    %5868 = vmatpush1.msra.mxu0 0.0
    %5869 = vmatprep.subr.mxu0 0.0
    %5870 = vmatpush1.msra.mxu0 0.0
    %5871 = vmatprep.subr.mxu0 0.0
    %5872 = vmatpush1.msra.mxu0 0.0
    %5873 = vmatprep.subr.mxu0 0.0
    %5874 = vmatpush1.msra.mxu0 0.0
    %5875 = vmatprep.subr.mxu0 0.0
    %5876 = vmatpush1.msra.mxu0 0.0
    %5877 = vmatprep.subr.mxu0 0.0
    %5878 = vmatpush1.msra.mxu0 0.0
    %5879 = vmatprep.subr.mxu0 0.0
    %5880 = vmatpush1.msra.mxu0 0.0
    %5881 = vmatprep.subr.mxu0 0.0
    %5882 = vmatpush1.msra.mxu0 0.0
    %5883 = vmatprep.subr.mxu0 0.0
    %5884 = vmatpush1.msra.mxu0 0.0
    %5885 = vmatprep.subr.mxu0 0.0
    %5886 = vmatpush1.msra.mxu0 0.0
    %5887 = vmatprep.subr.mxu0 0.0
    %5888 = vmatpush1.msra.mxu0 0.0
    %5889 = vmatprep.subr.mxu0 0.0
    %5890 = vmatpush1.msra.mxu0 0.0
    %5891 = vmatprep.subr.mxu0 0.0
    %5892 = vmatpush1.msra.mxu0 %v5240
    %5893 = vmatprep.subr.mxu0 0.0
    %5894 = vmatpush2.msra.mxu0 0.0
    %5895 = vmatprep.subr.mxu0 0.0
    %5896 = vmatpush2.msra.mxu0 0.0
    %5897 = vmatprep.subr.mxu0 0.0
    %5898 = vmatpush2.msra.mxu0 0.0
    %5899 = vmatprep.subr.mxu0 0.0
    %5900 = vmatpush2.msra.mxu0 0.0
    %5901 = vmatprep.subr.mxu0 0.0
    %5902 = vmatpush2.msra.mxu0 0.0
    %5903 = vmatprep.subr.mxu0 0.0
    %5904 = vmatpush2.msra.mxu0 0.0
    %5905 = vmatprep.subr.mxu0 0.0
    %5906 = vmatpush2.msra.mxu0 0.0
    %5907 = vmatprep.subr.mxu0 0.0
    %5908 = vmatpush2.msra.mxu0 0.0
    %5909 = vmatprep.subr.mxu0 0.0
    %5910 = vmatpush2.msra.mxu0 0.0
    %5911 = vmatprep.subr.mxu0 0.0
    %5912 = vmatpush2.msra.mxu0 0.0
    %5913 = vmatprep.subr.mxu0 0.0
    %5914 = vmatpush2.msra.mxu0 0.0
    %5915 = vmatprep.subr.mxu0 0.0
    %5916 = vmatpush2.msra.mxu0 0.0
    %5917 = vmatprep.subr.mxu0 0.0
    %5918 = vmatpush2.msra.mxu0 0.0
    %5919 = vmatprep.subr.mxu0 0.0
    %5920 = vmatpush2.msra.mxu0 0.0
    %5921 = vmatprep.subr.mxu0 0.0
    %5922 = vmatpush2.msra.mxu0 0.0
    %5923 = vmatprep.subr.mxu0 0.0
    %5924 = vmatpush2.msra.mxu0 0.0
    %5925 = vmatprep.mubr.f32.mxu0 0.0
    %5926 = vmatmul.mubr.f32.gmra.mxu0 %v5859
    %v5927 = vpop.f32.mrf.mxu0
    %v5928 = vadd.f32 0.0, %v5927
    %v5929 = vpop.f32.mrf.mxu0
    %5930 = vdwg.mxu0
    %v5932 = vsel %vm726, %v5697, 0
    %5934 = vmatprep.subr.mxu0 0.0
    %5935 = vmatpush1.msra.mxu0 0.0
    %5936 = vmatprep.subr.mxu0 0.0
    %5937 = vmatpush1.msra.mxu0 0.0
    %5938 = vmatprep.subr.mxu0 0.0
    %5939 = vmatpush1.msra.mxu0 0.0
    %5940 = vmatprep.subr.mxu0 0.0
    %5941 = vmatpush1.msra.mxu0 0.0
    %5942 = vmatprep.subr.mxu0 0.0
    %5943 = vmatpush1.msra.mxu0 0.0
    %5944 = vmatprep.subr.mxu0 0.0
    %5945 = vmatpush1.msra.mxu0 0.0
    %5946 = vmatprep.subr.mxu0 0.0
    %5947 = vmatpush1.msra.mxu0 0.0
    %5948 = vmatprep.subr.mxu0 0.0
    %5949 = vmatpush1.msra.mxu0 0.0
    %5950 = vmatprep.subr.mxu0 0.0
    %5951 = vmatpush1.msra.mxu0 0.0
    %5952 = vmatprep.subr.mxu0 0.0
    %5953 = vmatpush1.msra.mxu0 0.0
    %5954 = vmatprep.subr.mxu0 0.0
    %5955 = vmatpush1.msra.mxu0 0.0
    %5956 = vmatprep.subr.mxu0 0.0
    %5957 = vmatpush1.msra.mxu0 0.0
    %5958 = vmatprep.subr.mxu0 0.0
    %5959 = vmatpush1.msra.mxu0 0.0
    %5960 = vmatprep.subr.mxu0 0.0
    %5961 = vmatpush1.msra.mxu0 0.0
    %5962 = vmatprep.subr.mxu0 0.0
    %5963 = vmatpush1.msra.mxu0 0.0
    %5964 = vmatprep.subr.mxu0 0.0
    %5965 = vmatpush1.msra.mxu0 %v5241
    %5966 = vmatprep.subr.mxu0 0.0
    %5967 = vmatpush2.msra.mxu0 0.0
    %5968 = vmatprep.subr.mxu0 0.0
    %5969 = vmatpush2.msra.mxu0 0.0
    %5970 = vmatprep.subr.mxu0 0.0
    %5971 = vmatpush2.msra.mxu0 0.0
    %5972 = vmatprep.subr.mxu0 0.0
    %5973 = vmatpush2.msra.mxu0 0.0
    %5974 = vmatprep.subr.mxu0 0.0
    %5975 = vmatpush2.msra.mxu0 0.0
    %5976 = vmatprep.subr.mxu0 0.0
    %5977 = vmatpush2.msra.mxu0 0.0
    %5978 = vmatprep.subr.mxu0 0.0
    %5979 = vmatpush2.msra.mxu0 0.0
    %5980 = vmatprep.subr.mxu0 0.0
    %5981 = vmatpush2.msra.mxu0 0.0
    %5982 = vmatprep.subr.mxu0 0.0
    %5983 = vmatpush2.msra.mxu0 0.0
    %5984 = vmatprep.subr.mxu0 0.0
    %5985 = vmatpush2.msra.mxu0 0.0
    %5986 = vmatprep.subr.mxu0 0.0
    %5987 = vmatpush2.msra.mxu0 0.0
    %5988 = vmatprep.subr.mxu0 0.0
    %5989 = vmatpush2.msra.mxu0 0.0
    %5990 = vmatprep.subr.mxu0 0.0
    %5991 = vmatpush2.msra.mxu0 0.0
    %5992 = vmatprep.subr.mxu0 0.0
    %5993 = vmatpush2.msra.mxu0 0.0
    %5994 = vmatprep.subr.mxu0 0.0
    %5995 = vmatpush2.msra.mxu0 0.0
    %5996 = vmatprep.subr.mxu0 0.0
    %5997 = vmatpush2.msra.mxu0 0.0
    %5998 = vmatprep.mubr.f32.mxu0 0.0
    %5999 = vmatmul.mubr.f32.gmra.mxu0 %v5932
    %v6000 = vpop.f32.mrf.mxu0
    %v6001 = vadd.f32 0.0, %v6000
    %v6002 = vpop.f32.mrf.mxu0
    %6003 = vdwg.mxu0
    %v6004 = vcombine.low %v5928, %v6001
    %v6006 = vunpack.c.l.s4 1934713408
    %v6007 = vunpack.c.0.s8 %v6006
    %v6008 = vlaneseq
    %v6009 = vshrl.u32 %v6008, 7
    %v6010 = vsub.s32 %v6007, %v6009
    %v6011 = vrot.slane %v6004, %v6010
    %v6012 = vcombine.high %v6011, 0.0
    %6014 = vrot.lane.b32.xlu0 %v6012, 64
    %v6015 = vpop.permute.xlu0 %6014
    %v6017 = vsel %vm1533, %v6011, %v6015
    %v6020 = vcombine.low %v5857, %v6017
    %v6022 = vunpack.c.l.s4 1983009808
    %v6023 = vunpack.c.0.s8 %v6022
    %v6024 = vlaneseq
    %v6025 = vshrl.u32 %v6024, 7
    %v6026 = vsub.s32 %v6023, %v6025
    %v6027 = vrot.slane %v6020, %v6026
    %6029 = vst [vmem:[#allocation21] sm:$0xf] %v6027
    %v6030 = vld [vmem:[%s11] sm:$0xff]
    %v6031 = vld [vmem:[%s11 + $0x8] sm:$0xff]
    %v6032 = vld [vmem:[%s11 + $0x10] sm:$0xff]
    %v6033 = vld [vmem:[%s11 + $0x18] sm:$0xff]
    %v6034 = vld [vmem:[%s11 + $0x20] sm:$0xff]
    %v6035 = vld [vmem:[%s11 + $0x28] sm:$0xff]
    %v6036 = vld [vmem:[%s11 + $0x30] sm:$0xff]
    %v6037 = vld [vmem:[%s11 + $0x38] sm:$0xff]
    %v6038 = vld [vmem:[%s11 + $0x40] sm:$0xff]
    %v6039 = vld [vmem:[%s11 + $0x48] sm:$0xff]
    %v6040 = vld [vmem:[%s11 + $0x50] sm:$0xff]
    %v6041 = vld [vmem:[%s11 + $0x58] sm:$0xff]
    %v6042 = vld [vmem:[%s11 + $0x60] sm:$0xff]
    %v6043 = vld [vmem:[%s11 + $0x68] sm:$0xff]
    %v6044 = vld [vmem:[%s11 + $0x70] sm:$0xff]
    %v6045 = vld [vmem:[%s11 + $0x78] sm:$0xff]
    %v6046 = vld [vmem:[%s11 + $0x80] sm:$0xff]
    %v6047 = vld [vmem:[%s11 + $0x88] sm:$0xff]
    %v6048 = vld [vmem:[%s11 + $0x90] sm:$0xff]
    %v6049 = vld [vmem:[%s11 + $0x98] sm:$0xff]
    %v6050 = vld [vmem:[%s11 + $0xa0] sm:$0xff]
    %v6051 = vld [vmem:[%s11 + $0xa8] sm:$0xff]
    %v6052 = vld [vmem:[%s11 + $0xb0] sm:$0xff]
    %v6053 = vld [vmem:[%s11 + $0xb8] sm:$0xff]
    %v6054 = vld [vmem:[%s11 + $0xc0] sm:$0xff]
    %v6055 = vld [vmem:[%s11 + $0xc8] sm:$0xff]
    %v6056 = vld [vmem:[%s11 + $0xd0] sm:$0xff]
    %v6057 = vld [vmem:[%s11 + $0xd8] sm:$0xff]
    %v6058 = vld [vmem:[%s11 + $0xe0] sm:$0xff]
    %v6059 = vld [vmem:[%s11 + $0xe8] sm:$0xff]
    %v6060 = vld [vmem:[%s11 + $0xf0] sm:$0xff]
    %v6061 = vld [vmem:[%s11 + $0xf8] sm:$0xff]
    %6062 = vmatprep.subr.mxu0 0.0
    %6063 = vmatpush1.msra.mxu0 %v6045
    %6064 = vmatprep.subr.mxu0 0.0
    %6065 = vmatpush1.msra.mxu0 %v6044
    %6066 = vmatprep.subr.mxu0 0.0
    %6067 = vmatpush1.msra.mxu0 %v6043
    %6068 = vmatprep.subr.mxu0 0.0
    %6069 = vmatpush1.msra.mxu0 %v6042
    %6070 = vmatprep.subr.mxu0 0.0
    %6071 = vmatpush1.msra.mxu0 %v6041
    %6072 = vmatprep.subr.mxu0 0.0
    %6073 = vmatpush1.msra.mxu0 %v6040
    %6074 = vmatprep.subr.mxu0 0.0
    %6075 = vmatpush1.msra.mxu0 %v6039
    %6076 = vmatprep.subr.mxu0 0.0
    %6077 = vmatpush1.msra.mxu0 %v6038
    %6078 = vmatprep.subr.mxu0 0.0
    %6079 = vmatpush1.msra.mxu0 %v6037
    %6080 = vmatprep.subr.mxu0 0.0
    %6081 = vmatpush1.msra.mxu0 %v6036
    %6082 = vmatprep.subr.mxu0 0.0
    %6083 = vmatpush1.msra.mxu0 %v6035
    %6084 = vmatprep.subr.mxu0 0.0
    %6085 = vmatpush1.msra.mxu0 %v6034
    %6086 = vmatprep.subr.mxu0 0.0
    %6087 = vmatpush1.msra.mxu0 %v6033
    %6088 = vmatprep.subr.mxu0 0.0
    %6089 = vmatpush1.msra.mxu0 %v6032
    %6090 = vmatprep.subr.mxu0 0.0
    %6091 = vmatpush1.msra.mxu0 %v6031
    %6092 = vmatprep.subr.mxu0 0.0
    %6093 = vmatpush1.msra.mxu0 %v6030
    %6094 = vmatprep.subr.mxu0 0.0
    %6095 = vmatpush2.msra.mxu0 %v6061
    %6096 = vmatprep.subr.mxu0 0.0
    %6097 = vmatpush2.msra.mxu0 %v6060
    %6098 = vmatprep.subr.mxu0 0.0
    %6099 = vmatpush2.msra.mxu0 %v6059
    %6100 = vmatprep.subr.mxu0 0.0
    %6101 = vmatpush2.msra.mxu0 %v6058
    %6102 = vmatprep.subr.mxu0 0.0
    %6103 = vmatpush2.msra.mxu0 %v6057
    %6104 = vmatprep.subr.mxu0 0.0
    %6105 = vmatpush2.msra.mxu0 %v6056
    %6106 = vmatprep.subr.mxu0 0.0
    %6107 = vmatpush2.msra.mxu0 %v6055
    %6108 = vmatprep.subr.mxu0 0.0
    %6109 = vmatpush2.msra.mxu0 %v6054
    %6110 = vmatprep.subr.mxu0 0.0
    %6111 = vmatpush2.msra.mxu0 %v6053
    %6112 = vmatprep.subr.mxu0 0.0
    %6113 = vmatpush2.msra.mxu0 %v6052
    %6114 = vmatprep.subr.mxu0 0.0
    %6115 = vmatpush2.msra.mxu0 %v6051
    %6116 = vmatprep.subr.mxu0 0.0
    %6117 = vmatpush2.msra.mxu0 %v6050
    %6118 = vmatprep.subr.mxu0 0.0
    %6119 = vmatpush2.msra.mxu0 %v6049
    %6120 = vmatprep.subr.mxu0 0.0
    %6121 = vmatpush2.msra.mxu0 %v6048
    %6122 = vmatprep.subr.mxu0 0.0
    %6123 = vmatpush2.msra.mxu0 %v6047
    %6124 = vmatprep.subr.mxu0 0.0
    %6125 = vmatpush2.msra.mxu0 %v6046
    %6126 = vmatprep.mubr.f32.mxu0 %v6017
    %6127 = vmatmul.mubr.f32.gmra.mxu0 %v5857
    %v6128 = vpop.f32.mrf.mxu0
    %v6129 = vadd.f32 0.0, %v6128
    %v6130 = vpop.f32.mrf.mxu0
    %6131 = vdwg.mxu0
    %v6132 = vadd.f32 %v1451, %v6129
    %vm6133 = vcmask 123904
    %v6134 = vsel %vm6133, %v6132, -inf
    %6135 = vmax.xlane.f32.xlu0 %v6134
    %v6136 = vpop.xlane.xlu0 %6135
    %v6137 = vsub.f32 %v6132, %v6136
    %v6138 = vmul.f32 %v6137, 1.442695
    %v6139 = vpow.pop %v6138
    %v6140 = vsel %vm6133, %v6139, 0.0
    %6141 = vadd.xlane.f32.xlu0 %v6140
    %v6142 = vpop.xlane.xlu0 %6141
    %v6143 = vrcp.pop %v6142
    %v6144 = vmul.f32 %v6139, %v6143
    %6145 = vst.msk [vmem:[#allocation17] sm:$0x3] %vm6133, %v6144
    // Predicated region
    $region90: #{tpu_custom_call.1} parent=1 // pred_check
      _
    $region91: #{tpu_custom_call.1} parent=1 // pred_check_branch
      %6147 = sbr.rel (0) target = $region93
    $region92: #{tpu_custom_call.1} parent=1 // pred_region
      %s6149 = ssub.s32 32, 32
      %6150 = vsyncadd [#allocation4], %s6149
      %s6152 = sshll.u32 [#allocation17], 4
      %s6153 = int_to_ptr.vmem [resolvable:$true] %s6152
      %6155 = dma.vmem_to_hbm [thread:$0]  %s6153, 32, %s13, [#allocation4]
    $region93: #{tpu_custom_call.1} parent=1 // pred_fallthru
      _
    // Predicated region
    $region94: #{tpu_custom_call.1} parent=1 // pred_check
      _
    $region95: #{tpu_custom_call.1} parent=1 // pred_check_branch
      %6157 = sbr.rel (0) target = $region97
    $region96: #{tpu_custom_call.1} parent=1 // pred_region
      %s6159 = ssub.s32 32, 32
      %6160 = vsyncadd [#allocation19], %s6159
      %s6162 = sshll.u32 [#allocation18], 4
      %s6163 = int_to_ptr.vmem [resolvable:$true] %s6162
      %6165 = dma.vmem_to_hbm [thread:$0]  %s6163, 32, %s14, [#allocation19]
    $region97: #{tpu_custom_call.1} parent=1 // pred_fallthru
      _
    // Predicated region
    $region98: #{tpu_custom_call.1} parent=1 // pred_check
      _
    $region99: #{tpu_custom_call.1} parent=1 // pred_check_branch
      %6167 = sbr.rel (0) target = $region101
    $region100: #{tpu_custom_call.1} parent=1 // pred_region
      %s6169 = ssub.s32 32, 32
      %6170 = vsyncadd [#allocation19], %s6169
      %s6172 = sshll.u32 [#allocation20], 4
      %s6173 = int_to_ptr.vmem [resolvable:$true] %s6172
      %6175 = dma.vmem_to_hbm [thread:$0]  %s6173, 32, %s15, [#allocation19]
    $region101: #{tpu_custom_call.1} parent=1 // pred_fallthru
      _
    // Predicated region
    $region102: #{tpu_custom_call.1} parent=1 // pred_check
      _
    $region103: #{tpu_custom_call.1} parent=1 // pred_check_branch
      %6177 = sbr.rel (0) target = $region105
    $region104: #{tpu_custom_call.1} parent=1 // pred_region
      %s6179 = ssub.s32 64, 64
      %6180 = vsyncadd [#allocation22], %s6179
      %s6182 = sshll.u32 [#allocation21], 4
      %s6183 = int_to_ptr.vmem [resolvable:$true] %s6182
      %6185 = dma.vmem_to_hbm [thread:$0]  %s6183, 64, %s16, [#allocation22]
    $region105: #{tpu_custom_call.1} parent=1 // pred_fallthru
      _
    // Predicated region
    $region106: #{tpu_custom_call.1} parent=1 // pred_check
      _
    $region107: #{tpu_custom_call.1} parent=1 // pred_check_branch
      %6187 = sbr.rel (0) target = $region109
    $region108: #{tpu_custom_call.1} parent=1 // pred_region
      %6188 = dma.done [#allocation4], 32
    $region109: #{tpu_custom_call.1} parent=1 // pred_fallthru
      _
    // Predicated region
    $region110: #{tpu_custom_call.1} parent=1 // pred_check
      _
    $region111: #{tpu_custom_call.1} parent=1 // pred_check_branch
      %6190 = sbr.rel (0) target = $region113
    $region112: #{tpu_custom_call.1} parent=1 // pred_region
      %6191 = dma.done [#allocation19], 32
    $region113: #{tpu_custom_call.1} parent=1 // pred_fallthru
      _
    // Predicated region
    $region114: #{tpu_custom_call.1} parent=1 // pred_check
      _
    $region115: #{tpu_custom_call.1} parent=1 // pred_check_branch
      %6193 = sbr.rel (0) target = $region117
    $region116: #{tpu_custom_call.1} parent=1 // pred_region
      %6194 = dma.done [#allocation19], 32
    $region117: #{tpu_custom_call.1} parent=1 // pred_fallthru
      _
    // Predicated region
    $region118: #{tpu_custom_call.1} parent=1 // pred_check
      _
    $region119: #{tpu_custom_call.1} parent=1 // pred_check_branch
      %6196 = sbr.rel (0) target = $region121
    $region120: #{tpu_custom_call.1} parent=1 // pred_region
      %6197 = dma.done [#allocation22], 64
    $region121: #{tpu_custom_call.1} parent=1 // pred_fallthru
      _
    %6198 = vsyncpa [#allocation3], 1
    %6199 = vsyncpa [#allocation6], 1
    %6200 = vsyncpa [#allocation9], 1
    %6201 = vsyncpa [#allocation12], 1
    %6202 = vsyncpa [#allocation15], 1
    %6203 = vsyncpa [#allocation4], 1
    %6204 = vsyncpa [#allocation19], 1
    %6205 = vsyncpa [#allocation22], 1

</llo_original>
